<compile_context>
chip_gen: v6e
topology: v6e:2x2x1
jax: 0.10.0
libtpu: 0.0.40
codegen_flags: <defaults>
</compile_context>

<pallas_src>
import jax
import jax.numpy as jnp
import numpy as np
from jax.experimental import pallas as pl
from jax.experimental.pallas import tpu as pltpu


def _lstm_block_kernel(len_ref, gx_ref, whh_ref,
                       hs_ref, hy_ref, cy_ref,
                       h_sc, c_sc):
    blk = pl.program_id(0)
    TB = gx_ref.shape[0]
    H = h_sc.shape[-1]

    @pl.when(blk == 0)
    def _():
        h_sc[...] = jnp.zeros_like(h_sc)
        c_sc[...] = jnp.zeros_like(c_sc)

    lens = len_ref[...]                       # (B, 1) int32
    t0 = blk * TB                             # global time offset of this block

    h = h_sc[...]                             # (B, H) f32, carried in vregs
    c = c_sc[...]
    for s in range(TB):                       # static, fully unrolled
        gx = gx_ref[s].astype(jnp.float32)    # (B, 4H): bf16 stream -> f32
        # recurrent matmul: bf16 MXU inputs, f32 accumulation
        rec = jnp.dot(h.astype(jnp.bfloat16), whh_ref[...],
                      preferred_element_type=jnp.float32)
        gates = gx + rec                      # permuted gate order [i | f | o | g]

        # one contiguous sigmoid slab (B, 3H): sig(x) = 1 / (1 + exp(-x)), approx EUP recip
        sig = pl.reciprocal(1.0 + jnp.exp(-gates[:, :3 * H]), approx=True)
        i_g = sig[:, 0 * H:1 * H]
        f_g = sig[:, 1 * H:2 * H]
        o_g = sig[:, 2 * H:3 * H]
        g_g = jnp.tanh(gates[:, 3 * H:])

        c_new = f_g * c + i_g * g_g
        h_new = o_g * jnp.tanh(c_new)

        # length mask: only update state / emit output while t < lengths[b]
        mask = (t0 + s) < lens                # (B, 1) -> vsel
        hs_ref[:, s, :] = jnp.where(mask, h_new, 0.0).astype(hs_ref.dtype)
        h = jnp.where(mask, h_new, h)
        c = jnp.where(mask, c_new, c)

    h_sc[...] = h
    c_sc[...] = c

    @pl.when(blk == pl.num_programs(0) - 1)
    def _():
        hy_ref[...] = h.astype(hy_ref.dtype)
        cy_ref[...] = c.astype(cy_ref.dtype)


def lstm_pallas(xs, lengths, w_ih, w_hh, b_ih, b_hh, dropout_p=0.0,
                time_block=16, hs_dtype=None):
    """xs: [B, T, E] f32, lengths: [B] int32.
    Returns (hs [B, T, H], (hy [1, B, H], cy [1, B, H]))."""
    assert dropout_p == 0.0  # F.dropout with p=0.0 is identity (see TODO above)
    B, T, E = xs.shape
    H = w_hh.shape[1]
    G = 4 * H
    hs_dtype = xs.dtype if hs_dtype is None else hs_dtype

    # PyTorch gate order [i|f|g|o] -> [i|f|o|g] so sigmoids act on one contiguous slab.
    perm = jnp.concatenate([jnp.arange(0, 2 * H),
                            jnp.arange(3 * H, 4 * H),
                            jnp.arange(2 * H, 3 * H)])
    w_ih_p = w_ih[perm]
    w_hh_p = w_hh[perm]
    bias_p = (b_ih + b_hh)[perm]

    # Hoisted input projection: one MXU-saturating GEMM in XLA, emitted time-major
    # (no standalone transpose), bias folded in, streamed to the kernel as bf16.
    gx = (jnp.einsum('bte,ge->tbg', xs, w_ih_p) + bias_p).astype(jnp.bfloat16)  # (T, B, 4H)

    whh_t = jnp.transpose(w_hh_p).astype(jnp.bfloat16)   # (H, 4H) bf16 MXU RHS, resident
    len2d = lengths.reshape(B, 1).astype(jnp.int32)      # (B, 1)

    TB = max(1, min(time_block, T))
    n_blocks = pl.cdiv(T, TB)   # no jnp.pad: ragged tail is masked (lengths <= T)

    # VMEM budget: double-buffered gx/hs blocks + resident weights / carries, 2x headroom.
    hs_bytes = np.dtype(hs_dtype).itemsize
    vmem_needed = (2 * TB * B * G * 2            # gx blocks (bf16), double-buffered
                   + 2 * TB * B * H * hs_bytes   # hs blocks, double-buffered
                   + 2 * H * G * 2               # W_hh^T (bf16)
                   + 6 * B * H * 4               # hy/cy blocks + h/c scratch (f32)
                   + 4 * B * 4)                  # lengths
    vmem_limit = int(min(64 * 2**20, max(32 * 2**20, 2 * vmem_needed)))

    hs, hy, cy = pl.pallas_call(
        _lstm_block_kernel,
        out_shape=(
            jax.ShapeDtypeStruct((B, T, H), hs_dtype),
            jax.ShapeDtypeStruct((B, H), xs.dtype),
            jax.ShapeDtypeStruct((B, H), xs.dtype),
        ),
        grid_spec=pltpu.PrefetchScalarGridSpec(
            num_scalar_prefetch=0,
            grid=(n_blocks,),
            in_specs=[
                pl.BlockSpec((B, 1), lambda i: (0, 0)),         # lengths (resident)
                pl.BlockSpec((TB, B, G), lambda i: (i, 0, 0)),  # bf16 pre-activation slab
                pl.BlockSpec((H, G), lambda i: (0, 0)),         # W_hh^T (resident)
            ],
            out_specs=[
                pl.BlockSpec((B, TB, H), lambda i: (0, i, 0)),  # hs, batch-first slab
                pl.BlockSpec((B, H), lambda i: (0, 0)),         # hy (written last block)
                pl.BlockSpec((B, H), lambda i: (0, 0)),         # cy (written last block)
            ],
            scratch_shapes=[
                pltpu.VMEM((B, H), jnp.float32),  # h carry
                pltpu.VMEM((B, H), jnp.float32),  # c carry
            ],
        ),
        compiler_params=pltpu.CompilerParams(
            dimension_semantics=("arbitrary",),   # sequential time recurrence
            vmem_limit_bytes=vmem_limit,
        ),
    )(len2d, gx, whh_t)

    return hs, (hy[None], cy[None])               # (num_layers * num_dirs, B, H)


def lstm_ref(xs, lengths, w_ih, w_hh, b_ih, b_hh):
    """Pure-JAX f32 reference (masked LSTM), for a correctness check."""
    B, T, E = xs.shape
    H = w_hh.shape[1]

    def step(carry, inp):
        h, c = carry
        x_t, t = inp
        gates = x_t @ w_ih.T + b_ih + h @ w_hh.T + b_hh
        i, f, g, o = jnp.split(gates, 4, axis=-1)
        i, f, o = jax.nn.sigmoid(i), jax.nn.sigmoid(f), jax.nn.sigmoid(o)
        g = jnp.tanh(g)
        c_new = f * c + i * g
        h_new = o * jnp.tanh(c_new)
        m = (t < lengths)[:, None].astype(xs.dtype)
        h2 = m * h_new + (1 - m) * h
        c2 = m * c_new + (1 - m) * c
        return (h2, c2), m * h_new

    x_tm = jnp.transpose(xs, (1, 0, 2))
    (hN, cN), hs_tm = jax.lax.scan(
        step, (jnp.zeros((B, H), xs.dtype), jnp.zeros((B, H), xs.dtype)),
        (x_tm, jnp.arange(T)))
    return jnp.transpose(hs_tm, (1, 0, 2)), hN, cN


if __name__ == "__main__":
    # Small but tile-friendly shapes: B multiple of 8, H multiple of 128.
    B, T, E, H = 8, 32, 16, 128
    key = jax.random.PRNGKey(0)
    k1, k2, k3, k4, k5 = jax.random.split(key, 5)

    xs = jax.random.normal(k1, (B, T, E), dtype=jnp.float32)
    lengths = jnp.array([32, 20, 11, 32, 1, 17, 25, 8], dtype=jnp.int32)

    scale = 1.0 / jnp.sqrt(H)
    w_ih = jax.random.uniform(k2, (4 * H, E), minval=-scale, maxval=scale, dtype=jnp.float32)
    w_hh = jax.random.uniform(k3, (4 * H, H), minval=-scale, maxval=scale, dtype=jnp.float32)
    b_ih = jax.random.uniform(k4, (4 * H,), minval=-scale, maxval=scale, dtype=jnp.float32)
    b_hh = jax.random.uniform(k5, (4 * H,), minval=-scale, maxval=scale, dtype=jnp.float32)

    hs, (hy, cy) = lstm_pallas(xs, lengths, w_ih, w_hh, b_ih, b_hh,
                               dropout_p=0.0, time_block=16)
    jax.block_until_ready((hs, hy, cy))

    hs_r, hy_r, cy_r = lstm_ref(xs, lengths, w_ih, w_hh, b_ih, b_hh)
    # bf16 gx stream + bf16 recurrent matmul (f32 accum/carries) -> looser tolerance.
    assert jnp.allclose(hs, hs_r, atol=5e-2, rtol=5e-2)
    assert jnp.allclose(hy[0], hy_r, atol=5e-2, rtol=5e-2)
    assert jnp.allclose(cy[0], cy_r, atol=5e-2, rtol=5e-2)

    print("KERNEL_OK")
</pallas_src>

<mosaic_0001>
module attributes {stable_mosaic.version = 11 : i64} {
  func.func @_lstm_block_kernel(%arg0: i32, %arg1: memref<8x1xi32, #tpu.memory_space<vmem>>, %arg2: memref<16x8x512xbf16, #tpu.memory_space<vmem>>, %arg3: memref<128x512xbf16, #tpu.memory_space<vmem>>, %arg4: memref<8x16x128xf32, #tpu.memory_space<vmem>>, %arg5: memref<8x128xf32, #tpu.memory_space<vmem>>, %arg6: memref<8x128xf32, #tpu.memory_space<vmem>>, %arg7: memref<8x128xf32, #tpu.memory_space<vmem>>, %arg8: memref<8x128xf32, #tpu.memory_space<vmem>>) attributes {dimension_semantics = [#tpu.dimension_semantics<arbitrary>], iteration_bounds = array<i64: 2>, scalar_prefetch = 0 : i64, scratch_operands = 2 : i64, tpu.core_type = #tpu.core_type<tc>, window_params = [{pipeline_mode = #tpu.pipeline_mode<synchronous>, transform_indices = @transform_0, window_bounds = array<i64: 8, 1>}, {transform_indices = @transform_1, window_bounds = array<i64: 16, 8, 512>}, {pipeline_mode = #tpu.pipeline_mode<synchronous>, transform_indices = @transform_2, window_bounds = array<i64: 128, 512>}, {transform_indices = @transform_3, window_bounds = array<i64: 8, 16, 128>}, {pipeline_mode = #tpu.pipeline_mode<synchronous>, transform_indices = @transform_4, window_bounds = array<i64: 8, 128>}, {pipeline_mode = #tpu.pipeline_mode<synchronous>, transform_indices = @transform_5, window_bounds = array<i64: 8, 128>}]} {
    %c0_i32 = arith.constant 0 : i32
    %0 = arith.cmpi eq, %arg0, %c0_i32 : i32
    %1 = arith.extui %0 : i1 to i32
    %c0_i32_0 = arith.constant 0 : i32
    %2 = arith.cmpi ne, %1, %c0_i32_0 : i32
    scf.if %2 {
      %cst_189 = arith.constant 0.000000e+00 : f32
      %652 = vector.broadcast %cst_189 : f32 to vector<8x128xf32>
      %c0_190 = arith.constant 0 : index
      %c0_191 = arith.constant 0 : index
      %653 = vector.load %arg7[%c0_190, %c0_191] : memref<8x128xf32, #tpu.memory_space<vmem>>, vector<8x128xf32>
      tpu.vector_store %arg7[%c0_190, %c0_191], %652 {strides = array<i32>} : memref<8x128xf32, #tpu.memory_space<vmem>>, vector<8x128xf32>,
      %cst_192 = arith.constant 0.000000e+00 : f32
      %654 = vector.broadcast %cst_192 : f32 to vector<8x128xf32>
      %c0_193 = arith.constant 0 : index
      %c0_194 = arith.constant 0 : index
      %655 = vector.load %arg8[%c0_193, %c0_194] : memref<8x128xf32, #tpu.memory_space<vmem>>, vector<8x128xf32>
      tpu.vector_store %arg8[%c0_193, %c0_194], %654 {strides = array<i32>} : memref<8x128xf32, #tpu.memory_space<vmem>>, vector<8x128xf32>,
    } else {
    }
    %c0 = arith.constant 0 : index
    %c0_1 = arith.constant 0 : index
    %3 = vector.load %arg1[%c0, %c0_1] : memref<8x1xi32, #tpu.memory_space<vmem>>, vector<8x1xi32>
    %c16_i32 = arith.constant 16 : i32
    %4 = arith.muli %arg0, %c16_i32 : i32
    %c0_2 = arith.constant 0 : index
    %c0_3 = arith.constant 0 : index
    %5 = vector.load %arg7[%c0_2, %c0_3] : memref<8x128xf32, #tpu.memory_space<vmem>>, vector<8x128xf32>
    %c0_4 = arith.constant 0 : index
    %c0_5 = arith.constant 0 : index
    %6 = vector.load %arg8[%c0_4, %c0_5] : memref<8x128xf32, #tpu.memory_space<vmem>>, vector<8x128xf32>
    %c0_6 = arith.constant 0 : index
    %c0_7 = arith.constant 0 : index
    %c0_8 = arith.constant 0 : index
    %7 = vector.load %arg2[%c0_6, %c0_7, %c0_8] : memref<16x8x512xbf16, #tpu.memory_space<vmem>>, vector<1x8x512xbf16>
    %8 = vector.shape_cast %7 : vector<1x8x512xbf16> to vector<8x512xbf16>
    %9 = arith.extf %8 : vector<8x512xbf16> to vector<8x512xf32>
    %10 = arith.truncf %5 : vector<8x128xf32> to vector<8x128xbf16>
    %c0_9 = arith.constant 0 : index
    %c0_10 = arith.constant 0 : index
    %11 = vector.load %arg3[%c0_9, %c0_10] : memref<128x512xbf16, #tpu.memory_space<vmem>>, vector<128x512xbf16>
    %cst = arith.constant dense<0.000000e+00> : vector<8x512xf32>
    %12 = tpu.matmul %10, %11, %cst {dimension_numbers = #tpu.dot_dimension_numbers<[1], [0], [0], [1], [0, 0, 1, 1], [], []>} : vector<8x128xbf16>, vector<128x512xbf16>, vector<8x512xf32> -> vector<8x512xf32>
    %13 = arith.addf %9, %12 : vector<8x512xf32>
    %14 = vector.extract_strided_slice %13 {offsets = [0, 0], sizes = [8, 384], strides = [1, 1]} : vector<8x512xf32> to vector<8x384xf32>
    %cst_11 = arith.constant 0.000000e+00 : f32
    %15 = vector.broadcast %cst_11 : f32 to vector<8x384xf32>
    %16 = arith.subf %15, %14 : vector<8x384xf32>
    %17 = math.exp %16 : vector<8x384xf32>
    %cst_12 = arith.constant 1.000000e+00 : f32
    %18 = vector.broadcast %cst_12 : f32 to vector<8x384xf32>
    %19 = arith.addf %18, %17 : vector<8x384xf32>
    %20 = tpu.reciprocal %19 {approx = true} : vector<8x384xf32> -> vector<8x384xf32>
    %21 = vector.extract_strided_slice %20 {offsets = [0, 0], sizes = [8, 128], strides = [1, 1]} : vector<8x384xf32> to vector<8x128xf32>
    %22 = vector.extract_strided_slice %20 {offsets = [0, 128], sizes = [8, 128], strides = [1, 1]} : vector<8x384xf32> to vector<8x128xf32>
    %23 = vector.extract_strided_slice %20 {offsets = [0, 256], sizes = [8, 128], strides = [1, 1]} : vector<8x384xf32> to vector<8x128xf32>
    %24 = vector.extract_strided_slice %13 {offsets = [0, 384], sizes = [8, 128], strides = [1, 1]} : vector<8x512xf32> to vector<8x128xf32>
    %25 = math.tanh %24 : vector<8x128xf32>
    %26 = arith.mulf %22, %6 : vector<8x128xf32>
    %27 = arith.mulf %21, %25 : vector<8x128xf32>
    %28 = arith.addf %26, %27 : vector<8x128xf32>
    %29 = math.tanh %28 : vector<8x128xf32>
    %30 = arith.mulf %23, %29 : vector<8x128xf32>
    %c0_i32_13 = arith.constant 0 : i32
    %31 = arith.addi %4, %c0_i32_13 : i32
    %32 = vector.broadcast %31 : i32 to vector<8x1xi32>
    %33 = arith.cmpi slt, %32, %3 : vector<8x1xi32>
    %cst_14 = arith.constant 0.000000e+00 : f32
    %34 = vector.shape_cast %33 : vector<8x1xi1> to vector<8x1xi1>
    %35 = vector.broadcast %34 : vector<8x1xi1> to vector<8x128xi1>
    %36 = vector.broadcast %cst_14 : f32 to vector<8x128xf32>
    %37 = arith.select %35, %30, %36 : vector<8x128xi1>, vector<8x128xf32>
    %c0_15 = arith.constant 0 : index
    %c0_16 = arith.constant 0 : index
    %c0_17 = arith.constant 0 : index
    %38 = vector.load %arg4[%c0_15, %c0_16, %c0_17] : memref<8x16x128xf32, #tpu.memory_space<vmem>>, vector<8x1x128xf32>
    %39 = vector.shape_cast %38 : vector<8x1x128xf32> to vector<8x128xf32>
    %40 = vector.shape_cast %37 : vector<8x128xf32> to vector<8x1x128xf32>
    tpu.vector_store %arg4[%c0_15, %c0_16, %c0_17], %40 {strides = array<i32>} : memref<8x16x128xf32, #tpu.memory_space<vmem>>, vector<8x1x128xf32>,
    %41 = vector.shape_cast %33 : vector<8x1xi1> to vector<8x1xi1>
    %42 = vector.broadcast %41 : vector<8x1xi1> to vector<8x128xi1>
    %43 = arith.select %42, %30, %5 : vector<8x128xi1>, vector<8x128xf32>
    %44 = vector.shape_cast %33 : vector<8x1xi1> to vector<8x1xi1>
    %45 = vector.broadcast %44 : vector<8x1xi1> to vector<8x128xi1>
    %46 = arith.select %45, %28, %6 : vector<8x128xi1>, vector<8x128xf32>
    %c1 = arith.constant 1 : index
    %c0_18 = arith.constant 0 : index
    %c0_19 = arith.constant 0 : index
    %47 = vector.load %arg2[%c1, %c0_18, %c0_19] : memref<16x8x512xbf16, #tpu.memory_space<vmem>>, vector<1x8x512xbf16>
    %48 = vector.shape_cast %47 : vector<1x8x512xbf16> to vector<8x512xbf16>
    %49 = arith.extf %48 : vector<8x512xbf16> to vector<8x512xf32>
    %50 = arith.truncf %43 : vector<8x128xf32> to vector<8x128xbf16>
    %c0_20 = arith.constant 0 : index
    %c0_21 = arith.constant 0 : index
    %51 = vector.load %arg3[%c0_20, %c0_21] : memref<128x512xbf16, #tpu.memory_space<vmem>>, vector<128x512xbf16>
    %cst_22 = arith.constant dense<0.000000e+00> : vector<8x512xf32>
    %52 = tpu.matmul %50, %51, %cst_22 {dimension_numbers = #tpu.dot_dimension_numbers<[1], [0], [0], [1], [0, 0, 1, 1], [], []>} : vector<8x128xbf16>, vector<128x512xbf16>, vector<8x512xf32> -> vector<8x512xf32>
    %53 = arith.addf %49, %52 : vector<8x512xf32>
    %54 = vector.extract_strided_slice %53 {offsets = [0, 0], sizes = [8, 384], strides = [1, 1]} : vector<8x512xf32> to vector<8x384xf32>
    %cst_23 = arith.constant 0.000000e+00 : f32
    %55 = vector.broadcast %cst_23 : f32 to vector<8x384xf32>
    %56 = arith.subf %55, %54 : vector<8x384xf32>
    %57 = math.exp %56 : vector<8x384xf32>
    %cst_24 = arith.constant 1.000000e+00 : f32
    %58 = vector.broadcast %cst_24 : f32 to vector<8x384xf32>
    %59 = arith.addf %58, %57 : vector<8x384xf32>
    %60 = tpu.reciprocal %59 {approx = true} : vector<8x384xf32> -> vector<8x384xf32>
    %61 = vector.extract_strided_slice %60 {offsets = [0, 0], sizes = [8, 128], strides = [1, 1]} : vector<8x384xf32> to vector<8x128xf32>
    %62 = vector.extract_strided_slice %60 {offsets = [0, 128], sizes = [8, 128], strides = [1, 1]} : vector<8x384xf32> to vector<8x128xf32>
    %63 = vector.extract_strided_slice %60 {offsets = [0, 256], sizes = [8, 128], strides = [1, 1]} : vector<8x384xf32> to vector<8x128xf32>
    %64 = vector.extract_strided_slice %53 {offsets = [0, 384], sizes = [8, 128], strides = [1, 1]} : vector<8x512xf32> to vector<8x128xf32>
    %65 = math.tanh %64 : vector<8x128xf32>
    %66 = arith.mulf %62, %46 : vector<8x128xf32>
    %67 = arith.mulf %61, %65 : vector<8x128xf32>
    %68 = arith.addf %66, %67 : vector<8x128xf32>
    %69 = math.tanh %68 : vector<8x128xf32>
    %70 = arith.mulf %63, %69 : vector<8x128xf32>
    %c1_i32 = arith.constant 1 : i32
    %71 = arith.addi %4, %c1_i32 : i32
    %72 = vector.broadcast %71 : i32 to vector<8x1xi32>
    %73 = arith.cmpi slt, %72, %3 : vector<8x1xi32>
    %cst_25 = arith.constant 0.000000e+00 : f32
    %74 = vector.shape_cast %73 : vector<8x1xi1> to vector<8x1xi1>
    %75 = vector.broadcast %74 : vector<8x1xi1> to vector<8x128xi1>
    %76 = vector.broadcast %cst_25 : f32 to vector<8x128xf32>
    %77 = arith.select %75, %70, %76 : vector<8x128xi1>, vector<8x128xf32>
    %c0_26 = arith.constant 0 : index
    %c1_27 = arith.constant 1 : index
    %c0_28 = arith.constant 0 : index
    %78 = vector.load %arg4[%c0_26, %c1_27, %c0_28] : memref<8x16x128xf32, #tpu.memory_space<vmem>>, vector<8x1x128xf32>
    %79 = vector.shape_cast %78 : vector<8x1x128xf32> to vector<8x128xf32>
    %80 = vector.shape_cast %77 : vector<8x128xf32> to vector<8x1x128xf32>
    tpu.vector_store %arg4[%c0_26, %c1_27, %c0_28], %80 {strides = array<i32>} : memref<8x16x128xf32, #tpu.memory_space<vmem>>, vector<8x1x128xf32>,
    %81 = vector.shape_cast %73 : vector<8x1xi1> to vector<8x1xi1>
    %82 = vector.broadcast %81 : vector<8x1xi1> to vector<8x128xi1>
    %83 = arith.select %82, %70, %43 : vector<8x128xi1>, vector<8x128xf32>
    %84 = vector.shape_cast %73 : vector<8x1xi1> to vector<8x1xi1>
    %85 = vector.broadcast %84 : vector<8x1xi1> to vector<8x128xi1>
    %86 = arith.select %85, %68, %46 : vector<8x128xi1>, vector<8x128xf32>
    %c2 = arith.constant 2 : index
    %c0_29 = arith.constant 0 : index
    %c0_30 = arith.constant 0 : index
    %87 = vector.load %arg2[%c2, %c0_29, %c0_30] : memref<16x8x512xbf16, #tpu.memory_space<vmem>>, vector<1x8x512xbf16>
    %88 = vector.shape_cast %87 : vector<1x8x512xbf16> to vector<8x512xbf16>
    %89 = arith.extf %88 : vector<8x512xbf16> to vector<8x512xf32>
    %90 = arith.truncf %83 : vector<8x128xf32> to vector<8x128xbf16>
    %c0_31 = arith.constant 0 : index
    %c0_32 = arith.constant 0 : index
    %91 = vector.load %arg3[%c0_31, %c0_32] : memref<128x512xbf16, #tpu.memory_space<vmem>>, vector<128x512xbf16>
    %cst_33 = arith.constant dense<0.000000e+00> : vector<8x512xf32>
    %92 = tpu.matmul %90, %91, %cst_33 {dimension_numbers = #tpu.dot_dimension_numbers<[1], [0], [0], [1], [0, 0, 1, 1], [], []>} : vector<8x128xbf16>, vector<128x512xbf16>, vector<8x512xf32> -> vector<8x512xf32>
    %93 = arith.addf %89, %92 : vector<8x512xf32>
    %94 = vector.extract_strided_slice %93 {offsets = [0, 0], sizes = [8, 384], strides = [1, 1]} : vector<8x512xf32> to vector<8x384xf32>
    %cst_34 = arith.constant 0.000000e+00 : f32
    %95 = vector.broadcast %cst_34 : f32 to vector<8x384xf32>
    %96 = arith.subf %95, %94 : vector<8x384xf32>
    %97 = math.exp %96 : vector<8x384xf32>
    %cst_35 = arith.constant 1.000000e+00 : f32
    %98 = vector.broadcast %cst_35 : f32 to vector<8x384xf32>
    %99 = arith.addf %98, %97 : vector<8x384xf32>
    %100 = tpu.reciprocal %99 {approx = true} : vector<8x384xf32> -> vector<8x384xf32>
    %101 = vector.extract_strided_slice %100 {offsets = [0, 0], sizes = [8, 128], strides = [1, 1]} : vector<8x384xf32> to vector<8x128xf32>
    %102 = vector.extract_strided_slice %100 {offsets = [0, 128], sizes = [8, 128], strides = [1, 1]} : vector<8x384xf32> to vector<8x128xf32>
    %103 = vector.extract_strided_slice %100 {offsets = [0, 256], sizes = [8, 128], strides = [1, 1]} : vector<8x384xf32> to vector<8x128xf32>
    %104 = vector.extract_strided_slice %93 {offsets = [0, 384], sizes = [8, 128], strides = [1, 1]} : vector<8x512xf32> to vector<8x128xf32>
    %105 = math.tanh %104 : vector<8x128xf32>
    %106 = arith.mulf %102, %86 : vector<8x128xf32>
    %107 = arith.mulf %101, %105 : vector<8x128xf32>
    %108 = arith.addf %106, %107 : vector<8x128xf32>
    %109 = math.tanh %108 : vector<8x128xf32>
    %110 = arith.mulf %103, %109 : vector<8x128xf32>
    %c2_i32 = arith.constant 2 : i32
    %111 = arith.addi %4, %c2_i32 : i32
    %112 = vector.broadcast %111 : i32 to vector<8x1xi32>
    %113 = arith.cmpi slt, %112, %3 : vector<8x1xi32>
    %cst_36 = arith.constant 0.000000e+00 : f32
    %114 = vector.shape_cast %113 : vector<8x1xi1> to vector<8x1xi1>
    %115 = vector.broadcast %114 : vector<8x1xi1> to vector<8x128xi1>
    %116 = vector.broadcast %cst_36 : f32 to vector<8x128xf32>
    %117 = arith.select %115, %110, %116 : vector<8x128xi1>, vector<8x128xf32>
    %c0_37 = arith.constant 0 : index
    %c2_38 = arith.constant 2 : index
    %c0_39 = arith.constant 0 : index
    %118 = vector.load %arg4[%c0_37, %c2_38, %c0_39] : memref<8x16x128xf32, #tpu.memory_space<vmem>>, vector<8x1x128xf32>
    %119 = vector.shape_cast %118 : vector<8x1x128xf32> to vector<8x128xf32>
    %120 = vector.shape_cast %117 : vector<8x128xf32> to vector<8x1x128xf32>
    tpu.vector_store %arg4[%c0_37, %c2_38, %c0_39], %120 {strides = array<i32>} : memref<8x16x128xf32, #tpu.memory_space<vmem>>, vector<8x1x128xf32>,
    %121 = vector.shape_cast %113 : vector<8x1xi1> to vector<8x1xi1>
    %122 = vector.broadcast %121 : vector<8x1xi1> to vector<8x128xi1>
    %123 = arith.select %122, %110, %83 : vector<8x128xi1>, vector<8x128xf32>
    %124 = vector.shape_cast %113 : vector<8x1xi1> to vector<8x1xi1>
    %125 = vector.broadcast %124 : vector<8x1xi1> to vector<8x128xi1>
    %126 = arith.select %125, %108, %86 : vector<8x128xi1>, vector<8x128xf32>
    %c3 = arith.constant 3 : index
    %c0_40 = arith.constant 0 : index
    %c0_41 = arith.constant 0 : index
    %127 = vector.load %arg2[%c3, %c0_40, %c0_41] : memref<16x8x512xbf16, #tpu.memory_space<vmem>>, vector<1x8x512xbf16>
    %128 = vector.shape_cast %127 : vector<1x8x512xbf16> to vector<8x512xbf16>
    %129 = arith.extf %128 : vector<8x512xbf16> to vector<8x512xf32>
    %130 = arith.truncf %123 : vector<8x128xf32> to vector<8x128xbf16>
    %c0_42 = arith.constant 0 : index
    %c0_43 = arith.constant 0 : index
    %131 = vector.load %arg3[%c0_42, %c0_43] : memref<128x512xbf16, #tpu.memory_space<vmem>>, vector<128x512xbf16>
    %cst_44 = arith.constant dense<0.000000e+00> : vector<8x512xf32>
    %132 = tpu.matmul %130, %131, %cst_44 {dimension_numbers = #tpu.dot_dimension_numbers<[1], [0], [0], [1], [0, 0, 1, 1], [], []>} : vector<8x128xbf16>, vector<128x512xbf16>, vector<8x512xf32> -> vector<8x512xf32>
    %133 = arith.addf %129, %132 : vector<8x512xf32>
    %134 = vector.extract_strided_slice %133 {offsets = [0, 0], sizes = [8, 384], strides = [1, 1]} : vector<8x512xf32> to vector<8x384xf32>
    %cst_45 = arith.constant 0.000000e+00 : f32
    %135 = vector.broadcast %cst_45 : f32 to vector<8x384xf32>
    %136 = arith.subf %135, %134 : vector<8x384xf32>
    %137 = math.exp %136 : vector<8x384xf32>
    %cst_46 = arith.constant 1.000000e+00 : f32
    %138 = vector.broadcast %cst_46 : f32 to vector<8x384xf32>
    %139 = arith.addf %138, %137 : vector<8x384xf32>
    %140 = tpu.reciprocal %139 {approx = true} : vector<8x384xf32> -> vector<8x384xf32>
    %141 = vector.extract_strided_slice %140 {offsets = [0, 0], sizes = [8, 128], strides = [1, 1]} : vector<8x384xf32> to vector<8x128xf32>
    %142 = vector.extract_strided_slice %140 {offsets = [0, 128], sizes = [8, 128], strides = [1, 1]} : vector<8x384xf32> to vector<8x128xf32>
    %143 = vector.extract_strided_slice %140 {offsets = [0, 256], sizes = [8, 128], strides = [1, 1]} : vector<8x384xf32> to vector<8x128xf32>
    %144 = vector.extract_strided_slice %133 {offsets = [0, 384], sizes = [8, 128], strides = [1, 1]} : vector<8x512xf32> to vector<8x128xf32>
    %145 = math.tanh %144 : vector<8x128xf32>
    %146 = arith.mulf %142, %126 : vector<8x128xf32>
    %147 = arith.mulf %141, %145 : vector<8x128xf32>
    %148 = arith.addf %146, %147 : vector<8x128xf32>
    %149 = math.tanh %148 : vector<8x128xf32>
    %150 = arith.mulf %143, %149 : vector<8x128xf32>
    %c3_i32 = arith.constant 3 : i32
    %151 = arith.addi %4, %c3_i32 : i32
    %152 = vector.broadcast %151 : i32 to vector<8x1xi32>
    %153 = arith.cmpi slt, %152, %3 : vector<8x1xi32>
    %cst_47 = arith.constant 0.000000e+00 : f32
    %154 = vector.shape_cast %153 : vector<8x1xi1> to vector<8x1xi1>
    %155 = vector.broadcast %154 : vector<8x1xi1> to vector<8x128xi1>
    %156 = vector.broadcast %cst_47 : f32 to vector<8x128xf32>
    %157 = arith.select %155, %150, %156 : vector<8x128xi1>, vector<8x128xf32>
    %c0_48 = arith.constant 0 : index
    %c3_49 = arith.constant 3 : index
    %c0_50 = arith.constant 0 : index
    %158 = vector.load %arg4[%c0_48, %c3_49, %c0_50] : memref<8x16x128xf32, #tpu.memory_space<vmem>>, vector<8x1x128xf32>
    %159 = vector.shape_cast %158 : vector<8x1x128xf32> to vector<8x128xf32>
    %160 = vector.shape_cast %157 : vector<8x128xf32> to vector<8x1x128xf32>
    tpu.vector_store %arg4[%c0_48, %c3_49, %c0_50], %160 {strides = array<i32>} : memref<8x16x128xf32, #tpu.memory_space<vmem>>, vector<8x1x128xf32>,
    %161 = vector.shape_cast %153 : vector<8x1xi1> to vector<8x1xi1>
    %162 = vector.broadcast %161 : vector<8x1xi1> to vector<8x128xi1>
    %163 = arith.select %162, %150, %123 : vector<8x128xi1>, vector<8x128xf32>
    %164 = vector.shape_cast %153 : vector<8x1xi1> to vector<8x1xi1>
    %165 = vector.broadcast %164 : vector<8x1xi1> to vector<8x128xi1>
    %166 = arith.select %165, %148, %126 : vector<8x128xi1>, vector<8x128xf32>
    %c4 = arith.constant 4 : index
    %c0_51 = arith.constant 0 : index
    %c0_52 = arith.constant 0 : index
    %167 = vector.load %arg2[%c4, %c0_51, %c0_52] : memref<16x8x512xbf16, #tpu.memory_space<vmem>>, vector<1x8x512xbf16>
    %168 = vector.shape_cast %167 : vector<1x8x512xbf16> to vector<8x512xbf16>
    %169 = arith.extf %168 : vector<8x512xbf16> to vector<8x512xf32>
    %170 = arith.truncf %163 : vector<8x128xf32> to vector<8x128xbf16>
    %c0_53 = arith.constant 0 : index
    %c0_54 = arith.constant 0 : index
    %171 = vector.load %arg3[%c0_53, %c0_54] : memref<128x512xbf16, #tpu.memory_space<vmem>>, vector<128x512xbf16>
    %cst_55 = arith.constant dense<0.000000e+00> : vector<8x512xf32>
    %172 = tpu.matmul %170, %171, %cst_55 {dimension_numbers = #tpu.dot_dimension_numbers<[1], [0], [0], [1], [0, 0, 1, 1], [], []>} : vector<8x128xbf16>, vector<128x512xbf16>, vector<8x512xf32> -> vector<8x512xf32>
    %173 = arith.addf %169, %172 : vector<8x512xf32>
    %174 = vector.extract_strided_slice %173 {offsets = [0, 0], sizes = [8, 384], strides = [1, 1]} : vector<8x512xf32> to vector<8x384xf32>
    %cst_56 = arith.constant 0.000000e+00 : f32
    %175 = vector.broadcast %cst_56 : f32 to vector<8x384xf32>
    %176 = arith.subf %175, %174 : vector<8x384xf32>
    %177 = math.exp %176 : vector<8x384xf32>
    %cst_57 = arith.constant 1.000000e+00 : f32
    %178 = vector.broadcast %cst_57 : f32 to vector<8x384xf32>
    %179 = arith.addf %178, %177 : vector<8x384xf32>
    %180 = tpu.reciprocal %179 {approx = true} : vector<8x384xf32> -> vector<8x384xf32>
    %181 = vector.extract_strided_slice %180 {offsets = [0, 0], sizes = [8, 128], strides = [1, 1]} : vector<8x384xf32> to vector<8x128xf32>
    %182 = vector.extract_strided_slice %180 {offsets = [0, 128], sizes = [8, 128], strides = [1, 1]} : vector<8x384xf32> to vector<8x128xf32>
    %183 = vector.extract_strided_slice %180 {offsets = [0, 256], sizes = [8, 128], strides = [1, 1]} : vector<8x384xf32> to vector<8x128xf32>
    %184 = vector.extract_strided_slice %173 {offsets = [0, 384], sizes = [8, 128], strides = [1, 1]} : vector<8x512xf32> to vector<8x128xf32>
    %185 = math.tanh %184 : vector<8x128xf32>
    %186 = arith.mulf %182, %166 : vector<8x128xf32>
    %187 = arith.mulf %181, %185 : vector<8x128xf32>
    %188 = arith.addf %186, %187 : vector<8x128xf32>
    %189 = math.tanh %188 : vector<8x128xf32>
    %190 = arith.mulf %183, %189 : vector<8x128xf32>
    %c4_i32 = arith.constant 4 : i32
    %191 = arith.addi %4, %c4_i32 : i32
    %192 = vector.broadcast %191 : i32 to vector<8x1xi32>
    %193 = arith.cmpi slt, %192, %3 : vector<8x1xi32>
    %cst_58 = arith.constant 0.000000e+00 : f32
    %194 = vector.shape_cast %193 : vector<8x1xi1> to vector<8x1xi1>
    %195 = vector.broadcast %194 : vector<8x1xi1> to vector<8x128xi1>
    %196 = vector.broadcast %cst_58 : f32 to vector<8x128xf32>
    %197 = arith.select %195, %190, %196 : vector<8x128xi1>, vector<8x128xf32>
    %c0_59 = arith.constant 0 : index
    %c4_60 = arith.constant 4 : index
    %c0_61 = arith.constant 0 : index
    %198 = vector.load %arg4[%c0_59, %c4_60, %c0_61] : memref<8x16x128xf32, #tpu.memory_space<vmem>>, vector<8x1x128xf32>
    %199 = vector.shape_cast %198 : vector<8x1x128xf32> to vector<8x128xf32>
    %200 = vector.shape_cast %197 : vector<8x128xf32> to vector<8x1x128xf32>
    tpu.vector_store %arg4[%c0_59, %c4_60, %c0_61], %200 {strides = array<i32>} : memref<8x16x128xf32, #tpu.memory_space<vmem>>, vector<8x1x128xf32>,
    %201 = vector.shape_cast %193 : vector<8x1xi1> to vector<8x1xi1>
    %202 = vector.broadcast %201 : vector<8x1xi1> to vector<8x128xi1>
    %203 = arith.select %202, %190, %163 : vector<8x128xi1>, vector<8x128xf32>
    %204 = vector.shape_cast %193 : vector<8x1xi1> to vector<8x1xi1>
    %205 = vector.broadcast %204 : vector<8x1xi1> to vector<8x128xi1>
    %206 = arith.select %205, %188, %166 : vector<8x128xi1>, vector<8x128xf32>
    %c5 = arith.constant 5 : index
    %c0_62 = arith.constant 0 : index
    %c0_63 = arith.constant 0 : index
    %207 = vector.load %arg2[%c5, %c0_62, %c0_63] : memref<16x8x512xbf16, #tpu.memory_space<vmem>>, vector<1x8x512xbf16>
    %208 = vector.shape_cast %207 : vector<1x8x512xbf16> to vector<8x512xbf16>
    %209 = arith.extf %208 : vector<8x512xbf16> to vector<8x512xf32>
    %210 = arith.truncf %203 : vector<8x128xf32> to vector<8x128xbf16>
    %c0_64 = arith.constant 0 : index
    %c0_65 = arith.constant 0 : index
    %211 = vector.load %arg3[%c0_64, %c0_65] : memref<128x512xbf16, #tpu.memory_space<vmem>>, vector<128x512xbf16>
    %cst_66 = arith.constant dense<0.000000e+00> : vector<8x512xf32>
    %212 = tpu.matmul %210, %211, %cst_66 {dimension_numbers = #tpu.dot_dimension_numbers<[1], [0], [0], [1], [0, 0, 1, 1], [], []>} : vector<8x128xbf16>, vector<128x512xbf16>, vector<8x512xf32> -> vector<8x512xf32>
    %213 = arith.addf %209, %212 : vector<8x512xf32>
    %214 = vector.extract_strided_slice %213 {offsets = [0, 0], sizes = [8, 384], strides = [1, 1]} : vector<8x512xf32> to vector<8x384xf32>
    %cst_67 = arith.constant 0.000000e+00 : f32
    %215 = vector.broadcast %cst_67 : f32 to vector<8x384xf32>
    %216 = arith.subf %215, %214 : vector<8x384xf32>
    %217 = math.exp %216 : vector<8x384xf32>
    %cst_68 = arith.constant 1.000000e+00 : f32
    %218 = vector.broadcast %cst_68 : f32 to vector<8x384xf32>
    %219 = arith.addf %218, %217 : vector<8x384xf32>
    %220 = tpu.reciprocal %219 {approx = true} : vector<8x384xf32> -> vector<8x384xf32>
    %221 = vector.extract_strided_slice %220 {offsets = [0, 0], sizes = [8, 128], strides = [1, 1]} : vector<8x384xf32> to vector<8x128xf32>
    %222 = vector.extract_strided_slice %220 {offsets = [0, 128], sizes = [8, 128], strides = [1, 1]} : vector<8x384xf32> to vector<8x128xf32>
    %223 = vector.extract_strided_slice %220 {offsets = [0, 256], sizes = [8, 128], strides = [1, 1]} : vector<8x384xf32> to vector<8x128xf32>
    %224 = vector.extract_strided_slice %213 {offsets = [0, 384], sizes = [8, 128], strides = [1, 1]} : vector<8x512xf32> to vector<8x128xf32>
    %225 = math.tanh %224 : vector<8x128xf32>
    %226 = arith.mulf %222, %206 : vector<8x128xf32>
    %227 = arith.mulf %221, %225 : vector<8x128xf32>
    %228 = arith.addf %226, %227 : vector<8x128xf32>
    %229 = math.tanh %228 : vector<8x128xf32>
    %230 = arith.mulf %223, %229 : vector<8x128xf32>
    %c5_i32 = arith.constant 5 : i32
    %231 = arith.addi %4, %c5_i32 : i32
    %232 = vector.broadcast %231 : i32 to vector<8x1xi32>
    %233 = arith.cmpi slt, %232, %3 : vector<8x1xi32>
    %cst_69 = arith.constant 0.000000e+00 : f32
    %234 = vector.shape_cast %233 : vector<8x1xi1> to vector<8x1xi1>
    %235 = vector.broadcast %234 : vector<8x1xi1> to vector<8x128xi1>
    %236 = vector.broadcast %cst_69 : f32 to vector<8x128xf32>
    %237 = arith.select %235, %230, %236 : vector<8x128xi1>, vector<8x128xf32>
    %c0_70 = arith.constant 0 : index
    %c5_71 = arith.constant 5 : index
    %c0_72 = arith.constant 0 : index
    %238 = vector.load %arg4[%c0_70, %c5_71, %c0_72] : memref<8x16x128xf32, #tpu.memory_space<vmem>>, vector<8x1x128xf32>
    %239 = vector.shape_cast %238 : vector<8x1x128xf32> to vector<8x128xf32>
    %240 = vector.shape_cast %237 : vector<8x128xf32> to vector<8x1x128xf32>
    tpu.vector_store %arg4[%c0_70, %c5_71, %c0_72], %240 {strides = array<i32>} : memref<8x16x128xf32, #tpu.memory_space<vmem>>, vector<8x1x128xf32>,
    %241 = vector.shape_cast %233 : vector<8x1xi1> to vector<8x1xi1>
    %242 = vector.broadcast %241 : vector<8x1xi1> to vector<8x128xi1>
    %243 = arith.select %242, %230, %203 : vector<8x128xi1>, vector<8x128xf32>
    %244 = vector.shape_cast %233 : vector<8x1xi1> to vector<8x1xi1>
    %245 = vector.broadcast %244 : vector<8x1xi1> to vector<8x128xi1>
    %246 = arith.select %245, %228, %206 : vector<8x128xi1>, vector<8x128xf32>
    %c6 = arith.constant 6 : index
    %c0_73 = arith.constant 0 : index
    %c0_74 = arith.constant 0 : index
    %247 = vector.load %arg2[%c6, %c0_73, %c0_74] : memref<16x8x512xbf16, #tpu.memory_space<vmem>>, vector<1x8x512xbf16>
    %248 = vector.shape_cast %247 : vector<1x8x512xbf16> to vector<8x512xbf16>
    %249 = arith.extf %248 : vector<8x512xbf16> to vector<8x512xf32>
    %250 = arith.truncf %243 : vector<8x128xf32> to vector<8x128xbf16>
    %c0_75 = arith.constant 0 : index
    %c0_76 = arith.constant 0 : index
    %251 = vector.load %arg3[%c0_75, %c0_76] : memref<128x512xbf16, #tpu.memory_space<vmem>>, vector<128x512xbf16>
    %cst_77 = arith.constant dense<0.000000e+00> : vector<8x512xf32>
    %252 = tpu.matmul %250, %251, %cst_77 {dimension_numbers = #tpu.dot_dimension_numbers<[1], [0], [0], [1], [0, 0, 1, 1], [], []>} : vector<8x128xbf16>, vector<128x512xbf16>, vector<8x512xf32> -> vector<8x512xf32>
    %253 = arith.addf %249, %252 : vector<8x512xf32>
    %254 = vector.extract_strided_slice %253 {offsets = [0, 0], sizes = [8, 384], strides = [1, 1]} : vector<8x512xf32> to vector<8x384xf32>
    %cst_78 = arith.constant 0.000000e+00 : f32
    %255 = vector.broadcast %cst_78 : f32 to vector<8x384xf32>
    %256 = arith.subf %255, %254 : vector<8x384xf32>
    %257 = math.exp %256 : vector<8x384xf32>
    %cst_79 = arith.constant 1.000000e+00 : f32
    %258 = vector.broadcast %cst_79 : f32 to vector<8x384xf32>
    %259 = arith.addf %258, %257 : vector<8x384xf32>
    %260 = tpu.reciprocal %259 {approx = true} : vector<8x384xf32> -> vector<8x384xf32>
    %261 = vector.extract_strided_slice %260 {offsets = [0, 0], sizes = [8, 128], strides = [1, 1]} : vector<8x384xf32> to vector<8x128xf32>
    %262 = vector.extract_strided_slice %260 {offsets = [0, 128], sizes = [8, 128], strides = [1, 1]} : vector<8x384xf32> to vector<8x128xf32>
    %263 = vector.extract_strided_slice %260 {offsets = [0, 256], sizes = [8, 128], strides = [1, 1]} : vector<8x384xf32> to vector<8x128xf32>
    %264 = vector.extract_strided_slice %253 {offsets = [0, 384], sizes = [8, 128], strides = [1, 1]} : vector<8x512xf32> to vector<8x128xf32>
    %265 = math.tanh %264 : vector<8x128xf32>
    %266 = arith.mulf %262, %246 : vector<8x128xf32>
    %267 = arith.mulf %261, %265 : vector<8x128xf32>
    %268 = arith.addf %266, %267 : vector<8x128xf32>
    %269 = math.tanh %268 : vector<8x128xf32>
    %270 = arith.mulf %263, %269 : vector<8x128xf32>
    %c6_i32 = arith.constant 6 : i32
    %271 = arith.addi %4, %c6_i32 : i32
    %272 = vector.broadcast %271 : i32 to vector<8x1xi32>
    %273 = arith.cmpi slt, %272, %3 : vector<8x1xi32>
    %cst_80 = arith.constant 0.000000e+00 : f32
    %274 = vector.shape_cast %273 : vector<8x1xi1> to vector<8x1xi1>
    %275 = vector.broadcast %274 : vector<8x1xi1> to vector<8x128xi1>
    %276 = vector.broadcast %cst_80 : f32 to vector<8x128xf32>
    %277 = arith.select %275, %270, %276 : vector<8x128xi1>, vector<8x128xf32>
    %c0_81 = arith.constant 0 : index
    %c6_82 = arith.constant 6 : index
    %c0_83 = arith.constant 0 : index
    %278 = vector.load %arg4[%c0_81, %c6_82, %c0_83] : memref<8x16x128xf32, #tpu.memory_space<vmem>>, vector<8x1x128xf32>
    %279 = vector.shape_cast %278 : vector<8x1x128xf32> to vector<8x128xf32>
    %280 = vector.shape_cast %277 : vector<8x128xf32> to vector<8x1x128xf32>
    tpu.vector_store %arg4[%c0_81, %c6_82, %c0_83], %280 {strides = array<i32>} : memref<8x16x128xf32, #tpu.memory_space<vmem>>, vector<8x1x128xf32>,
    %281 = vector.shape_cast %273 : vector<8x1xi1> to vector<8x1xi1>
    %282 = vector.broadcast %281 : vector<8x1xi1> to vector<8x128xi1>
    %283 = arith.select %282, %270, %243 : vector<8x128xi1>, vector<8x128xf32>
    %284 = vector.shape_cast %273 : vector<8x1xi1> to vector<8x1xi1>
    %285 = vector.broadcast %284 : vector<8x1xi1> to vector<8x128xi1>
    %286 = arith.select %285, %268, %246 : vector<8x128xi1>, vector<8x128xf32>
    %c7 = arith.constant 7 : index
    %c0_84 = arith.constant 0 : index
    %c0_85 = arith.constant 0 : index
    %287 = vector.load %arg2[%c7, %c0_84, %c0_85] : memref<16x8x512xbf16, #tpu.memory_space<vmem>>, vector<1x8x512xbf16>
    %288 = vector.shape_cast %287 : vector<1x8x512xbf16> to vector<8x512xbf16>
    %289 = arith.extf %288 : vector<8x512xbf16> to vector<8x512xf32>
    %290 = arith.truncf %283 : vector<8x128xf32> to vector<8x128xbf16>
    %c0_86 = arith.constant 0 : index
    %c0_87 = arith.constant 0 : index
    %291 = vector.load %arg3[%c0_86, %c0_87] : memref<128x512xbf16, #tpu.memory_space<vmem>>, vector<128x512xbf16>
    %cst_88 = arith.constant dense<0.000000e+00> : vector<8x512xf32>
    %292 = tpu.matmul %290, %291, %cst_88 {dimension_numbers = #tpu.dot_dimension_numbers<[1], [0], [0], [1], [0, 0, 1, 1], [], []>} : vector<8x128xbf16>, vector<128x512xbf16>, vector<8x512xf32> -> vector<8x512xf32>
    %293 = arith.addf %289, %292 : vector<8x512xf32>
    %294 = vector.extract_strided_slice %293 {offsets = [0, 0], sizes = [8, 384], strides = [1, 1]} : vector<8x512xf32> to vector<8x384xf32>
    %cst_89 = arith.constant 0.000000e+00 : f32
    %295 = vector.broadcast %cst_89 : f32 to vector<8x384xf32>
    %296 = arith.subf %295, %294 : vector<8x384xf32>
    %297 = math.exp %296 : vector<8x384xf32>
    %cst_90 = arith.constant 1.000000e+00 : f32
    %298 = vector.broadcast %cst_90 : f32 to vector<8x384xf32>
    %299 = arith.addf %298, %297 : vector<8x384xf32>
    %300 = tpu.reciprocal %299 {approx = true} : vector<8x384xf32> -> vector<8x384xf32>
    %301 = vector.extract_strided_slice %300 {offsets = [0, 0], sizes = [8, 128], strides = [1, 1]} : vector<8x384xf32> to vector<8x128xf32>
    %302 = vector.extract_strided_slice %300 {offsets = [0, 128], sizes = [8, 128], strides = [1, 1]} : vector<8x384xf32> to vector<8x128xf32>
    %303 = vector.extract_strided_slice %300 {offsets = [0, 256], sizes = [8, 128], strides = [1, 1]} : vector<8x384xf32> to vector<8x128xf32>
    %304 = vector.extract_strided_slice %293 {offsets = [0, 384], sizes = [8, 128], strides = [1, 1]} : vector<8x512xf32> to vector<8x128xf32>
    %305 = math.tanh %304 : vector<8x128xf32>
    %306 = arith.mulf %302, %286 : vector<8x128xf32>
    %307 = arith.mulf %301, %305 : vector<8x128xf32>
    %308 = arith.addf %306, %307 : vector<8x128xf32>
    %309 = math.tanh %308 : vector<8x128xf32>
    %310 = arith.mulf %303, %309 : vector<8x128xf32>
    %c7_i32 = arith.constant 7 : i32
    %311 = arith.addi %4, %c7_i32 : i32
    %312 = vector.broadcast %311 : i32 to vector<8x1xi32>
    %313 = arith.cmpi slt, %312, %3 : vector<8x1xi32>
    %cst_91 = arith.constant 0.000000e+00 : f32
    %314 = vector.shape_cast %313 : vector<8x1xi1> to vector<8x1xi1>
    %315 = vector.broadcast %314 : vector<8x1xi1> to vector<8x128xi1>
    %316 = vector.broadcast %cst_91 : f32 to vector<8x128xf32>
    %317 = arith.select %315, %310, %316 : vector<8x128xi1>, vector<8x128xf32>
    %c0_92 = arith.constant 0 : index
    %c7_93 = arith.constant 7 : index
    %c0_94 = arith.constant 0 : index
    %318 = vector.load %arg4[%c0_92, %c7_93, %c0_94] : memref<8x16x128xf32, #tpu.memory_space<vmem>>, vector<8x1x128xf32>
    %319 = vector.shape_cast %318 : vector<8x1x128xf32> to vector<8x128xf32>
    %320 = vector.shape_cast %317 : vector<8x128xf32> to vector<8x1x128xf32>
    tpu.vector_store %arg4[%c0_92, %c7_93, %c0_94], %320 {strides = array<i32>} : memref<8x16x128xf32, #tpu.memory_space<vmem>>, vector<8x1x128xf32>,
    %321 = vector.shape_cast %313 : vector<8x1xi1> to vector<8x1xi1>
    %322 = vector.broadcast %321 : vector<8x1xi1> to vector<8x128xi1>
    %323 = arith.select %322, %310, %283 : vector<8x128xi1>, vector<8x128xf32>
    %324 = vector.shape_cast %313 : vector<8x1xi1> to vector<8x1xi1>
    %325 = vector.broadcast %324 : vector<8x1xi1> to vector<8x128xi1>
    %326 = arith.select %325, %308, %286 : vector<8x128xi1>, vector<8x128xf32>
    %c8 = arith.constant 8 : index
    %c0_95 = arith.constant 0 : index
    %c0_96 = arith.constant 0 : index
    %327 = vector.load %arg2[%c8, %c0_95, %c0_96] : memref<16x8x512xbf16, #tpu.memory_space<vmem>>, vector<1x8x512xbf16>
    %328 = vector.shape_cast %327 : vector<1x8x512xbf16> to vector<8x512xbf16>
    %329 = arith.extf %328 : vector<8x512xbf16> to vector<8x512xf32>
    %330 = arith.truncf %323 : vector<8x128xf32> to vector<8x128xbf16>
    %c0_97 = arith.constant 0 : index
    %c0_98 = arith.constant 0 : index
    %331 = vector.load %arg3[%c0_97, %c0_98] : memref<128x512xbf16, #tpu.memory_space<vmem>>, vector<128x512xbf16>
    %cst_99 = arith.constant dense<0.000000e+00> : vector<8x512xf32>
    %332 = tpu.matmul %330, %331, %cst_99 {dimension_numbers = #tpu.dot_dimension_numbers<[1], [0], [0], [1], [0, 0, 1, 1], [], []>} : vector<8x128xbf16>, vector<128x512xbf16>, vector<8x512xf32> -> vector<8x512xf32>
    %333 = arith.addf %329, %332 : vector<8x512xf32>
    %334 = vector.extract_strided_slice %333 {offsets = [0, 0], sizes = [8, 384], strides = [1, 1]} : vector<8x512xf32> to vector<8x384xf32>
    %cst_100 = arith.constant 0.000000e+00 : f32
    %335 = vector.broadcast %cst_100 : f32 to vector<8x384xf32>
    %336 = arith.subf %335, %334 : vector<8x384xf32>
    %337 = math.exp %336 : vector<8x384xf32>
    %cst_101 = arith.constant 1.000000e+00 : f32
    %338 = vector.broadcast %cst_101 : f32 to vector<8x384xf32>
    %339 = arith.addf %338, %337 : vector<8x384xf32>
    %340 = tpu.reciprocal %339 {approx = true} : vector<8x384xf32> -> vector<8x384xf32>
    %341 = vector.extract_strided_slice %340 {offsets = [0, 0], sizes = [8, 128], strides = [1, 1]} : vector<8x384xf32> to vector<8x128xf32>
    %342 = vector.extract_strided_slice %340 {offsets = [0, 128], sizes = [8, 128], strides = [1, 1]} : vector<8x384xf32> to vector<8x128xf32>
    %343 = vector.extract_strided_slice %340 {offsets = [0, 256], sizes = [8, 128], strides = [1, 1]} : vector<8x384xf32> to vector<8x128xf32>
    %344 = vector.extract_strided_slice %333 {offsets = [0, 384], sizes = [8, 128], strides = [1, 1]} : vector<8x512xf32> to vector<8x128xf32>
    %345 = math.tanh %344 : vector<8x128xf32>
    %346 = arith.mulf %342, %326 : vector<8x128xf32>
    %347 = arith.mulf %341, %345 : vector<8x128xf32>
    %348 = arith.addf %346, %347 : vector<8x128xf32>
    %349 = math.tanh %348 : vector<8x128xf32>
    %350 = arith.mulf %343, %349 : vector<8x128xf32>
    %c8_i32 = arith.constant 8 : i32
    %351 = arith.addi %4, %c8_i32 : i32
    %352 = vector.broadcast %351 : i32 to vector<8x1xi32>
    %353 = arith.cmpi slt, %352, %3 : vector<8x1xi32>
    %cst_102 = arith.constant 0.000000e+00 : f32
    %354 = vector.shape_cast %353 : vector<8x1xi1> to vector<8x1xi1>
    %355 = vector.broadcast %354 : vector<8x1xi1> to vector<8x128xi1>
    %356 = vector.broadcast %cst_102 : f32 to vector<8x128xf32>
    %357 = arith.select %355, %350, %356 : vector<8x128xi1>, vector<8x128xf32>
    %c0_103 = arith.constant 0 : index
    %c8_104 = arith.constant 8 : index
    %c0_105 = arith.constant 0 : index
    %358 = vector.load %arg4[%c0_103, %c8_104, %c0_105] : memref<8x16x128xf32, #tpu.memory_space<vmem>>, vector<8x1x128xf32>
    %359 = vector.shape_cast %358 : vector<8x1x128xf32> to vector<8x128xf32>
    %360 = vector.shape_cast %357 : vector<8x128xf32> to vector<8x1x128xf32>
    tpu.vector_store %arg4[%c0_103, %c8_104, %c0_105], %360 {strides = array<i32>} : memref<8x16x128xf32, #tpu.memory_space<vmem>>, vector<8x1x128xf32>,
    %361 = vector.shape_cast %353 : vector<8x1xi1> to vector<8x1xi1>
    %362 = vector.broadcast %361 : vector<8x1xi1> to vector<8x128xi1>
    %363 = arith.select %362, %350, %323 : vector<8x128xi1>, vector<8x128xf32>
    %364 = vector.shape_cast %353 : vector<8x1xi1> to vector<8x1xi1>
    %365 = vector.broadcast %364 : vector<8x1xi1> to vector<8x128xi1>
    %366 = arith.select %365, %348, %326 : vector<8x128xi1>, vector<8x128xf32>
    %c9 = arith.constant 9 : index
    %c0_106 = arith.constant 0 : index
    %c0_107 = arith.constant 0 : index
    %367 = vector.load %arg2[%c9, %c0_106, %c0_107] : memref<16x8x512xbf16, #tpu.memory_space<vmem>>, vector<1x8x512xbf16>
    %368 = vector.shape_cast %367 : vector<1x8x512xbf16> to vector<8x512xbf16>
    %369 = arith.extf %368 : vector<8x512xbf16> to vector<8x512xf32>
    %370 = arith.truncf %363 : vector<8x128xf32> to vector<8x128xbf16>
    %c0_108 = arith.constant 0 : index
    %c0_109 = arith.constant 0 : index
    %371 = vector.load %arg3[%c0_108, %c0_109] : memref<128x512xbf16, #tpu.memory_space<vmem>>, vector<128x512xbf16>
    %cst_110 = arith.constant dense<0.000000e+00> : vector<8x512xf32>
    %372 = tpu.matmul %370, %371, %cst_110 {dimension_numbers = #tpu.dot_dimension_numbers<[1], [0], [0], [1], [0, 0, 1, 1], [], []>} : vector<8x128xbf16>, vector<128x512xbf16>, vector<8x512xf32> -> vector<8x512xf32>
    %373 = arith.addf %369, %372 : vector<8x512xf32>
    %374 = vector.extract_strided_slice %373 {offsets = [0, 0], sizes = [8, 384], strides = [1, 1]} : vector<8x512xf32> to vector<8x384xf32>
    %cst_111 = arith.constant 0.000000e+00 : f32
    %375 = vector.broadcast %cst_111 : f32 to vector<8x384xf32>
    %376 = arith.subf %375, %374 : vector<8x384xf32>
    %377 = math.exp %376 : vector<8x384xf32>
    %cst_112 = arith.constant 1.000000e+00 : f32
    %378 = vector.broadcast %cst_112 : f32 to vector<8x384xf32>
    %379 = arith.addf %378, %377 : vector<8x384xf32>
    %380 = tpu.reciprocal %379 {approx = true} : vector<8x384xf32> -> vector<8x384xf32>
    %381 = vector.extract_strided_slice %380 {offsets = [0, 0], sizes = [8, 128], strides = [1, 1]} : vector<8x384xf32> to vector<8x128xf32>
    %382 = vector.extract_strided_slice %380 {offsets = [0, 128], sizes = [8, 128], strides = [1, 1]} : vector<8x384xf32> to vector<8x128xf32>
    %383 = vector.extract_strided_slice %380 {offsets = [0, 256], sizes = [8, 128], strides = [1, 1]} : vector<8x384xf32> to vector<8x128xf32>
    %384 = vector.extract_strided_slice %373 {offsets = [0, 384], sizes = [8, 128], strides = [1, 1]} : vector<8x512xf32> to vector<8x128xf32>
    %385 = math.tanh %384 : vector<8x128xf32>
    %386 = arith.mulf %382, %366 : vector<8x128xf32>
    %387 = arith.mulf %381, %385 : vector<8x128xf32>
    %388 = arith.addf %386, %387 : vector<8x128xf32>
    %389 = math.tanh %388 : vector<8x128xf32>
    %390 = arith.mulf %383, %389 : vector<8x128xf32>
    %c9_i32 = arith.constant 9 : i32
    %391 = arith.addi %4, %c9_i32 : i32
    %392 = vector.broadcast %391 : i32 to vector<8x1xi32>
    %393 = arith.cmpi slt, %392, %3 : vector<8x1xi32>
    %cst_113 = arith.constant 0.000000e+00 : f32
    %394 = vector.shape_cast %393 : vector<8x1xi1> to vector<8x1xi1>
    %395 = vector.broadcast %394 : vector<8x1xi1> to vector<8x128xi1>
    %396 = vector.broadcast %cst_113 : f32 to vector<8x128xf32>
    %397 = arith.select %395, %390, %396 : vector<8x128xi1>, vector<8x128xf32>
    %c0_114 = arith.constant 0 : index
    %c9_115 = arith.constant 9 : index
    %c0_116 = arith.constant 0 : index
    %398 = vector.load %arg4[%c0_114, %c9_115, %c0_116] : memref<8x16x128xf32, #tpu.memory_space<vmem>>, vector<8x1x128xf32>
    %399 = vector.shape_cast %398 : vector<8x1x128xf32> to vector<8x128xf32>
    %400 = vector.shape_cast %397 : vector<8x128xf32> to vector<8x1x128xf32>
    tpu.vector_store %arg4[%c0_114, %c9_115, %c0_116], %400 {strides = array<i32>} : memref<8x16x128xf32, #tpu.memory_space<vmem>>, vector<8x1x128xf32>,
    %401 = vector.shape_cast %393 : vector<8x1xi1> to vector<8x1xi1>
    %402 = vector.broadcast %401 : vector<8x1xi1> to vector<8x128xi1>
    %403 = arith.select %402, %390, %363 : vector<8x128xi1>, vector<8x128xf32>
    %404 = vector.shape_cast %393 : vector<8x1xi1> to vector<8x1xi1>
    %405 = vector.broadcast %404 : vector<8x1xi1> to vector<8x128xi1>
    %406 = arith.select %405, %388, %366 : vector<8x128xi1>, vector<8x128xf32>
    %c10 = arith.constant 10 : index
    %c0_117 = arith.constant 0 : index
    %c0_118 = arith.constant 0 : index
    %407 = vector.load %arg2[%c10, %c0_117, %c0_118] : memref<16x8x512xbf16, #tpu.memory_space<vmem>>, vector<1x8x512xbf16>
    %408 = vector.shape_cast %407 : vector<1x8x512xbf16> to vector<8x512xbf16>
    %409 = arith.extf %408 : vector<8x512xbf16> to vector<8x512xf32>
    %410 = arith.truncf %403 : vector<8x128xf32> to vector<8x128xbf16>
    %c0_119 = arith.constant 0 : index
    %c0_120 = arith.constant 0 : index
    %411 = vector.load %arg3[%c0_119, %c0_120] : memref<128x512xbf16, #tpu.memory_space<vmem>>, vector<128x512xbf16>
    %cst_121 = arith.constant dense<0.000000e+00> : vector<8x512xf32>
    %412 = tpu.matmul %410, %411, %cst_121 {dimension_numbers = #tpu.dot_dimension_numbers<[1], [0], [0], [1], [0, 0, 1, 1], [], []>} : vector<8x128xbf16>, vector<128x512xbf16>, vector<8x512xf32> -> vector<8x512xf32>
    %413 = arith.addf %409, %412 : vector<8x512xf32>
    %414 = vector.extract_strided_slice %413 {offsets = [0, 0], sizes = [8, 384], strides = [1, 1]} : vector<8x512xf32> to vector<8x384xf32>
    %cst_122 = arith.constant 0.000000e+00 : f32
    %415 = vector.broadcast %cst_122 : f32 to vector<8x384xf32>
    %416 = arith.subf %415, %414 : vector<8x384xf32>
    %417 = math.exp %416 : vector<8x384xf32>
    %cst_123 = arith.constant 1.000000e+00 : f32
    %418 = vector.broadcast %cst_123 : f32 to vector<8x384xf32>
    %419 = arith.addf %418, %417 : vector<8x384xf32>
    %420 = tpu.reciprocal %419 {approx = true} : vector<8x384xf32> -> vector<8x384xf32>
    %421 = vector.extract_strided_slice %420 {offsets = [0, 0], sizes = [8, 128], strides = [1, 1]} : vector<8x384xf32> to vector<8x128xf32>
    %422 = vector.extract_strided_slice %420 {offsets = [0, 128], sizes = [8, 128], strides = [1, 1]} : vector<8x384xf32> to vector<8x128xf32>
    %423 = vector.extract_strided_slice %420 {offsets = [0, 256], sizes = [8, 128], strides = [1, 1]} : vector<8x384xf32> to vector<8x128xf32>
    %424 = vector.extract_strided_slice %413 {offsets = [0, 384], sizes = [8, 128], strides = [1, 1]} : vector<8x512xf32> to vector<8x128xf32>
    %425 = math.tanh %424 : vector<8x128xf32>
    %426 = arith.mulf %422, %406 : vector<8x128xf32>
    %427 = arith.mulf %421, %425 : vector<8x128xf32>
    %428 = arith.addf %426, %427 : vector<8x128xf32>
    %429 = math.tanh %428 : vector<8x128xf32>
    %430 = arith.mulf %423, %429 : vector<8x128xf32>
    %c10_i32 = arith.constant 10 : i32
    %431 = arith.addi %4, %c10_i32 : i32
    %432 = vector.broadcast %431 : i32 to vector<8x1xi32>
    %433 = arith.cmpi slt, %432, %3 : vector<8x1xi32>
    %cst_124 = arith.constant 0.000000e+00 : f32
    %434 = vector.shape_cast %433 : vector<8x1xi1> to vector<8x1xi1>
    %435 = vector.broadcast %434 : vector<8x1xi1> to vector<8x128xi1>
    %436 = vector.broadcast %cst_124 : f32 to vector<8x128xf32>
    %437 = arith.select %435, %430, %436 : vector<8x128xi1>, vector<8x128xf32>
    %c0_125 = arith.constant 0 : index
    %c10_126 = arith.constant 10 : index
    %c0_127 = arith.constant 0 : index
    %438 = vector.load %arg4[%c0_125, %c10_126, %c0_127] : memref<8x16x128xf32, #tpu.memory_space<vmem>>, vector<8x1x128xf32>
    %439 = vector.shape_cast %438 : vector<8x1x128xf32> to vector<8x128xf32>
    %440 = vector.shape_cast %437 : vector<8x128xf32> to vector<8x1x128xf32>
    tpu.vector_store %arg4[%c0_125, %c10_126, %c0_127], %440 {strides = array<i32>} : memref<8x16x128xf32, #tpu.memory_space<vmem>>, vector<8x1x128xf32>,
    %441 = vector.shape_cast %433 : vector<8x1xi1> to vector<8x1xi1>
    %442 = vector.broadcast %441 : vector<8x1xi1> to vector<8x128xi1>
    %443 = arith.select %442, %430, %403 : vector<8x128xi1>, vector<8x128xf32>
    %444 = vector.shape_cast %433 : vector<8x1xi1> to vector<8x1xi1>
    %445 = vector.broadcast %444 : vector<8x1xi1> to vector<8x128xi1>
    %446 = arith.select %445, %428, %406 : vector<8x128xi1>, vector<8x128xf32>
    %c11 = arith.constant 11 : index
    %c0_128 = arith.constant 0 : index
    %c0_129 = arith.constant 0 : index
    %447 = vector.load %arg2[%c11, %c0_128, %c0_129] : memref<16x8x512xbf16, #tpu.memory_space<vmem>>, vector<1x8x512xbf16>
    %448 = vector.shape_cast %447 : vector<1x8x512xbf16> to vector<8x512xbf16>
    %449 = arith.extf %448 : vector<8x512xbf16> to vector<8x512xf32>
    %450 = arith.truncf %443 : vector<8x128xf32> to vector<8x128xbf16>
    %c0_130 = arith.constant 0 : index
    %c0_131 = arith.constant 0 : index
    %451 = vector.load %arg3[%c0_130, %c0_131] : memref<128x512xbf16, #tpu.memory_space<vmem>>, vector<128x512xbf16>
    %cst_132 = arith.constant dense<0.000000e+00> : vector<8x512xf32>
    %452 = tpu.matmul %450, %451, %cst_132 {dimension_numbers = #tpu.dot_dimension_numbers<[1], [0], [0], [1], [0, 0, 1, 1], [], []>} : vector<8x128xbf16>, vector<128x512xbf16>, vector<8x512xf32> -> vector<8x512xf32>
    %453 = arith.addf %449, %452 : vector<8x512xf32>
    %454 = vector.extract_strided_slice %453 {offsets = [0, 0], sizes = [8, 384], strides = [1, 1]} : vector<8x512xf32> to vector<8x384xf32>
    %cst_133 = arith.constant 0.000000e+00 : f32
    %455 = vector.broadcast %cst_133 : f32 to vector<8x384xf32>
    %456 = arith.subf %455, %454 : vector<8x384xf32>
    %457 = math.exp %456 : vector<8x384xf32>
    %cst_134 = arith.constant 1.000000e+00 : f32
    %458 = vector.broadcast %cst_134 : f32 to vector<8x384xf32>
    %459 = arith.addf %458, %457 : vector<8x384xf32>
    %460 = tpu.reciprocal %459 {approx = true} : vector<8x384xf32> -> vector<8x384xf32>
    %461 = vector.extract_strided_slice %460 {offsets = [0, 0], sizes = [8, 128], strides = [1, 1]} : vector<8x384xf32> to vector<8x128xf32>
    %462 = vector.extract_strided_slice %460 {offsets = [0, 128], sizes = [8, 128], strides = [1, 1]} : vector<8x384xf32> to vector<8x128xf32>
    %463 = vector.extract_strided_slice %460 {offsets = [0, 256], sizes = [8, 128], strides = [1, 1]} : vector<8x384xf32> to vector<8x128xf32>
    %464 = vector.extract_strided_slice %453 {offsets = [0, 384], sizes = [8, 128], strides = [1, 1]} : vector<8x512xf32> to vector<8x128xf32>
    %465 = math.tanh %464 : vector<8x128xf32>
    %466 = arith.mulf %462, %446 : vector<8x128xf32>
    %467 = arith.mulf %461, %465 : vector<8x128xf32>
    %468 = arith.addf %466, %467 : vector<8x128xf32>
    %469 = math.tanh %468 : vector<8x128xf32>
    %470 = arith.mulf %463, %469 : vector<8x128xf32>
    %c11_i32 = arith.constant 11 : i32
    %471 = arith.addi %4, %c11_i32 : i32
    %472 = vector.broadcast %471 : i32 to vector<8x1xi32>
    %473 = arith.cmpi slt, %472, %3 : vector<8x1xi32>
    %cst_135 = arith.constant 0.000000e+00 : f32
    %474 = vector.shape_cast %473 : vector<8x1xi1> to vector<8x1xi1>
    %475 = vector.broadcast %474 : vector<8x1xi1> to vector<8x128xi1>
    %476 = vector.broadcast %cst_135 : f32 to vector<8x128xf32>
    %477 = arith.select %475, %470, %476 : vector<8x128xi1>, vector<8x128xf32>
    %c0_136 = arith.constant 0 : index
    %c11_137 = arith.constant 11 : index
    %c0_138 = arith.constant 0 : index
    %478 = vector.load %arg4[%c0_136, %c11_137, %c0_138] : memref<8x16x128xf32, #tpu.memory_space<vmem>>, vector<8x1x128xf32>
    %479 = vector.shape_cast %478 : vector<8x1x128xf32> to vector<8x128xf32>
    %480 = vector.shape_cast %477 : vector<8x128xf32> to vector<8x1x128xf32>
    tpu.vector_store %arg4[%c0_136, %c11_137, %c0_138], %480 {strides = array<i32>} : memref<8x16x128xf32, #tpu.memory_space<vmem>>, vector<8x1x128xf32>,
    %481 = vector.shape_cast %473 : vector<8x1xi1> to vector<8x1xi1>
    %482 = vector.broadcast %481 : vector<8x1xi1> to vector<8x128xi1>
    %483 = arith.select %482, %470, %443 : vector<8x128xi1>, vector<8x128xf32>
    %484 = vector.shape_cast %473 : vector<8x1xi1> to vector<8x1xi1>
    %485 = vector.broadcast %484 : vector<8x1xi1> to vector<8x128xi1>
    %486 = arith.select %485, %468, %446 : vector<8x128xi1>, vector<8x128xf32>
    %c12 = arith.constant 12 : index
    %c0_139 = arith.constant 0 : index
    %c0_140 = arith.constant 0 : index
    %487 = vector.load %arg2[%c12, %c0_139, %c0_140] : memref<16x8x512xbf16, #tpu.memory_space<vmem>>, vector<1x8x512xbf16>
    %488 = vector.shape_cast %487 : vector<1x8x512xbf16> to vector<8x512xbf16>
    %489 = arith.extf %488 : vector<8x512xbf16> to vector<8x512xf32>
    %490 = arith.truncf %483 : vector<8x128xf32> to vector<8x128xbf16>
    %c0_141 = arith.constant 0 : index
    %c0_142 = arith.constant 0 : index
    %491 = vector.load %arg3[%c0_141, %c0_142] : memref<128x512xbf16, #tpu.memory_space<vmem>>, vector<128x512xbf16>
    %cst_143 = arith.constant dense<0.000000e+00> : vector<8x512xf32>
    %492 = tpu.matmul %490, %491, %cst_143 {dimension_numbers = #tpu.dot_dimension_numbers<[1], [0], [0], [1], [0, 0, 1, 1], [], []>} : vector<8x128xbf16>, vector<128x512xbf16>, vector<8x512xf32> -> vector<8x512xf32>
    %493 = arith.addf %489, %492 : vector<8x512xf32>
    %494 = vector.extract_strided_slice %493 {offsets = [0, 0], sizes = [8, 384], strides = [1, 1]} : vector<8x512xf32> to vector<8x384xf32>
    %cst_144 = arith.constant 0.000000e+00 : f32
    %495 = vector.broadcast %cst_144 : f32 to vector<8x384xf32>
    %496 = arith.subf %495, %494 : vector<8x384xf32>
    %497 = math.exp %496 : vector<8x384xf32>
    %cst_145 = arith.constant 1.000000e+00 : f32
    %498 = vector.broadcast %cst_145 : f32 to vector<8x384xf32>
    %499 = arith.addf %498, %497 : vector<8x384xf32>
    %500 = tpu.reciprocal %499 {approx = true} : vector<8x384xf32> -> vector<8x384xf32>
    %501 = vector.extract_strided_slice %500 {offsets = [0, 0], sizes = [8, 128], strides = [1, 1]} : vector<8x384xf32> to vector<8x128xf32>
    %502 = vector.extract_strided_slice %500 {offsets = [0, 128], sizes = [8, 128], strides = [1, 1]} : vector<8x384xf32> to vector<8x128xf32>
    %503 = vector.extract_strided_slice %500 {offsets = [0, 256], sizes = [8, 128], strides = [1, 1]} : vector<8x384xf32> to vector<8x128xf32>
    %504 = vector.extract_strided_slice %493 {offsets = [0, 384], sizes = [8, 128], strides = [1, 1]} : vector<8x512xf32> to vector<8x128xf32>
    %505 = math.tanh %504 : vector<8x128xf32>
    %506 = arith.mulf %502, %486 : vector<8x128xf32>
    %507 = arith.mulf %501, %505 : vector<8x128xf32>
    %508 = arith.addf %506, %507 : vector<8x128xf32>
    %509 = math.tanh %508 : vector<8x128xf32>
    %510 = arith.mulf %503, %509 : vector<8x128xf32>
    %c12_i32 = arith.constant 12 : i32
    %511 = arith.addi %4, %c12_i32 : i32
    %512 = vector.broadcast %511 : i32 to vector<8x1xi32>
    %513 = arith.cmpi slt, %512, %3 : vector<8x1xi32>
    %cst_146 = arith.constant 0.000000e+00 : f32
    %514 = vector.shape_cast %513 : vector<8x1xi1> to vector<8x1xi1>
    %515 = vector.broadcast %514 : vector<8x1xi1> to vector<8x128xi1>
    %516 = vector.broadcast %cst_146 : f32 to vector<8x128xf32>
    %517 = arith.select %515, %510, %516 : vector<8x128xi1>, vector<8x128xf32>
    %c0_147 = arith.constant 0 : index
    %c12_148 = arith.constant 12 : index
    %c0_149 = arith.constant 0 : index
    %518 = vector.load %arg4[%c0_147, %c12_148, %c0_149] : memref<8x16x128xf32, #tpu.memory_space<vmem>>, vector<8x1x128xf32>
    %519 = vector.shape_cast %518 : vector<8x1x128xf32> to vector<8x128xf32>
    %520 = vector.shape_cast %517 : vector<8x128xf32> to vector<8x1x128xf32>
    tpu.vector_store %arg4[%c0_147, %c12_148, %c0_149], %520 {strides = array<i32>} : memref<8x16x128xf32, #tpu.memory_space<vmem>>, vector<8x1x128xf32>,
    %521 = vector.shape_cast %513 : vector<8x1xi1> to vector<8x1xi1>
    %522 = vector.broadcast %521 : vector<8x1xi1> to vector<8x128xi1>
    %523 = arith.select %522, %510, %483 : vector<8x128xi1>, vector<8x128xf32>
    %524 = vector.shape_cast %513 : vector<8x1xi1> to vector<8x1xi1>
    %525 = vector.broadcast %524 : vector<8x1xi1> to vector<8x128xi1>
    %526 = arith.select %525, %508, %486 : vector<8x128xi1>, vector<8x128xf32>
    %c13 = arith.constant 13 : index
    %c0_150 = arith.constant 0 : index
    %c0_151 = arith.constant 0 : index
    %527 = vector.load %arg2[%c13, %c0_150, %c0_151] : memref<16x8x512xbf16, #tpu.memory_space<vmem>>, vector<1x8x512xbf16>
    %528 = vector.shape_cast %527 : vector<1x8x512xbf16> to vector<8x512xbf16>
    %529 = arith.extf %528 : vector<8x512xbf16> to vector<8x512xf32>
    %530 = arith.truncf %523 : vector<8x128xf32> to vector<8x128xbf16>
    %c0_152 = arith.constant 0 : index
    %c0_153 = arith.constant 0 : index
    %531 = vector.load %arg3[%c0_152, %c0_153] : memref<128x512xbf16, #tpu.memory_space<vmem>>, vector<128x512xbf16>
    %cst_154 = arith.constant dense<0.000000e+00> : vector<8x512xf32>
    %532 = tpu.matmul %530, %531, %cst_154 {dimension_numbers = #tpu.dot_dimension_numbers<[1], [0], [0], [1], [0, 0, 1, 1], [], []>} : vector<8x128xbf16>, vector<128x512xbf16>, vector<8x512xf32> -> vector<8x512xf32>
    %533 = arith.addf %529, %532 : vector<8x512xf32>
    %534 = vector.extract_strided_slice %533 {offsets = [0, 0], sizes = [8, 384], strides = [1, 1]} : vector<8x512xf32> to vector<8x384xf32>
    %cst_155 = arith.constant 0.000000e+00 : f32
    %535 = vector.broadcast %cst_155 : f32 to vector<8x384xf32>
    %536 = arith.subf %535, %534 : vector<8x384xf32>
    %537 = math.exp %536 : vector<8x384xf32>
    %cst_156 = arith.constant 1.000000e+00 : f32
    %538 = vector.broadcast %cst_156 : f32 to vector<8x384xf32>
    %539 = arith.addf %538, %537 : vector<8x384xf32>
    %540 = tpu.reciprocal %539 {approx = true} : vector<8x384xf32> -> vector<8x384xf32>
    %541 = vector.extract_strided_slice %540 {offsets = [0, 0], sizes = [8, 128], strides = [1, 1]} : vector<8x384xf32> to vector<8x128xf32>
    %542 = vector.extract_strided_slice %540 {offsets = [0, 128], sizes = [8, 128], strides = [1, 1]} : vector<8x384xf32> to vector<8x128xf32>
    %543 = vector.extract_strided_slice %540 {offsets = [0, 256], sizes = [8, 128], strides = [1, 1]} : vector<8x384xf32> to vector<8x128xf32>
    %544 = vector.extract_strided_slice %533 {offsets = [0, 384], sizes = [8, 128], strides = [1, 1]} : vector<8x512xf32> to vector<8x128xf32>
    %545 = math.tanh %544 : vector<8x128xf32>
    %546 = arith.mulf %542, %526 : vector<8x128xf32>
    %547 = arith.mulf %541, %545 : vector<8x128xf32>
    %548 = arith.addf %546, %547 : vector<8x128xf32>
    %549 = math.tanh %548 : vector<8x128xf32>
    %550 = arith.mulf %543, %549 : vector<8x128xf32>
    %c13_i32 = arith.constant 13 : i32
    %551 = arith.addi %4, %c13_i32 : i32
    %552 = vector.broadcast %551 : i32 to vector<8x1xi32>
    %553 = arith.cmpi slt, %552, %3 : vector<8x1xi32>
    %cst_157 = arith.constant 0.000000e+00 : f32
    %554 = vector.shape_cast %553 : vector<8x1xi1> to vector<8x1xi1>
    %555 = vector.broadcast %554 : vector<8x1xi1> to vector<8x128xi1>
    %556 = vector.broadcast %cst_157 : f32 to vector<8x128xf32>
    %557 = arith.select %555, %550, %556 : vector<8x128xi1>, vector<8x128xf32>
    %c0_158 = arith.constant 0 : index
    %c13_159 = arith.constant 13 : index
    %c0_160 = arith.constant 0 : index
    %558 = vector.load %arg4[%c0_158, %c13_159, %c0_160] : memref<8x16x128xf32, #tpu.memory_space<vmem>>, vector<8x1x128xf32>
    %559 = vector.shape_cast %558 : vector<8x1x128xf32> to vector<8x128xf32>
    %560 = vector.shape_cast %557 : vector<8x128xf32> to vector<8x1x128xf32>
    tpu.vector_store %arg4[%c0_158, %c13_159, %c0_160], %560 {strides = array<i32>} : memref<8x16x128xf32, #tpu.memory_space<vmem>>, vector<8x1x128xf32>,
    %561 = vector.shape_cast %553 : vector<8x1xi1> to vector<8x1xi1>
    %562 = vector.broadcast %561 : vector<8x1xi1> to vector<8x128xi1>
    %563 = arith.select %562, %550, %523 : vector<8x128xi1>, vector<8x128xf32>
    %564 = vector.shape_cast %553 : vector<8x1xi1> to vector<8x1xi1>
    %565 = vector.broadcast %564 : vector<8x1xi1> to vector<8x128xi1>
    %566 = arith.select %565, %548, %526 : vector<8x128xi1>, vector<8x128xf32>
    %c14 = arith.constant 14 : index
    %c0_161 = arith.constant 0 : index
    %c0_162 = arith.constant 0 : index
    %567 = vector.load %arg2[%c14, %c0_161, %c0_162] : memref<16x8x512xbf16, #tpu.memory_space<vmem>>, vector<1x8x512xbf16>
    %568 = vector.shape_cast %567 : vector<1x8x512xbf16> to vector<8x512xbf16>
    %569 = arith.extf %568 : vector<8x512xbf16> to vector<8x512xf32>
    %570 = arith.truncf %563 : vector<8x128xf32> to vector<8x128xbf16>
    %c0_163 = arith.constant 0 : index
    %c0_164 = arith.constant 0 : index
    %571 = vector.load %arg3[%c0_163, %c0_164] : memref<128x512xbf16, #tpu.memory_space<vmem>>, vector<128x512xbf16>
    %cst_165 = arith.constant dense<0.000000e+00> : vector<8x512xf32>
    %572 = tpu.matmul %570, %571, %cst_165 {dimension_numbers = #tpu.dot_dimension_numbers<[1], [0], [0], [1], [0, 0, 1, 1], [], []>} : vector<8x128xbf16>, vector<128x512xbf16>, vector<8x512xf32> -> vector<8x512xf32>
    %573 = arith.addf %569, %572 : vector<8x512xf32>
    %574 = vector.extract_strided_slice %573 {offsets = [0, 0], sizes = [8, 384], strides = [1, 1]} : vector<8x512xf32> to vector<8x384xf32>
    %cst_166 = arith.constant 0.000000e+00 : f32
    %575 = vector.broadcast %cst_166 : f32 to vector<8x384xf32>
    %576 = arith.subf %575, %574 : vector<8x384xf32>
    %577 = math.exp %576 : vector<8x384xf32>
    %cst_167 = arith.constant 1.000000e+00 : f32
    %578 = vector.broadcast %cst_167 : f32 to vector<8x384xf32>
    %579 = arith.addf %578, %577 : vector<8x384xf32>
    %580 = tpu.reciprocal %579 {approx = true} : vector<8x384xf32> -> vector<8x384xf32>
    %581 = vector.extract_strided_slice %580 {offsets = [0, 0], sizes = [8, 128], strides = [1, 1]} : vector<8x384xf32> to vector<8x128xf32>
    %582 = vector.extract_strided_slice %580 {offsets = [0, 128], sizes = [8, 128], strides = [1, 1]} : vector<8x384xf32> to vector<8x128xf32>
    %583 = vector.extract_strided_slice %580 {offsets = [0, 256], sizes = [8, 128], strides = [1, 1]} : vector<8x384xf32> to vector<8x128xf32>
    %584 = vector.extract_strided_slice %573 {offsets = [0, 384], sizes = [8, 128], strides = [1, 1]} : vector<8x512xf32> to vector<8x128xf32>
    %585 = math.tanh %584 : vector<8x128xf32>
    %586 = arith.mulf %582, %566 : vector<8x128xf32>
    %587 = arith.mulf %581, %585 : vector<8x128xf32>
    %588 = arith.addf %586, %587 : vector<8x128xf32>
    %589 = math.tanh %588 : vector<8x128xf32>
    %590 = arith.mulf %583, %589 : vector<8x128xf32>
    %c14_i32 = arith.constant 14 : i32
    %591 = arith.addi %4, %c14_i32 : i32
    %592 = vector.broadcast %591 : i32 to vector<8x1xi32>
    %593 = arith.cmpi slt, %592, %3 : vector<8x1xi32>
    %cst_168 = arith.constant 0.000000e+00 : f32
    %594 = vector.shape_cast %593 : vector<8x1xi1> to vector<8x1xi1>
    %595 = vector.broadcast %594 : vector<8x1xi1> to vector<8x128xi1>
    %596 = vector.broadcast %cst_168 : f32 to vector<8x128xf32>
    %597 = arith.select %595, %590, %596 : vector<8x128xi1>, vector<8x128xf32>
    %c0_169 = arith.constant 0 : index
    %c14_170 = arith.constant 14 : index
    %c0_171 = arith.constant 0 : index
    %598 = vector.load %arg4[%c0_169, %c14_170, %c0_171] : memref<8x16x128xf32, #tpu.memory_space<vmem>>, vector<8x1x128xf32>
    %599 = vector.shape_cast %598 : vector<8x1x128xf32> to vector<8x128xf32>
    %600 = vector.shape_cast %597 : vector<8x128xf32> to vector<8x1x128xf32>
    tpu.vector_store %arg4[%c0_169, %c14_170, %c0_171], %600 {strides = array<i32>} : memref<8x16x128xf32, #tpu.memory_space<vmem>>, vector<8x1x128xf32>,
    %601 = vector.shape_cast %593 : vector<8x1xi1> to vector<8x1xi1>
    %602 = vector.broadcast %601 : vector<8x1xi1> to vector<8x128xi1>
    %603 = arith.select %602, %590, %563 : vector<8x128xi1>, vector<8x128xf32>
    %604 = vector.shape_cast %593 : vector<8x1xi1> to vector<8x1xi1>
    %605 = vector.broadcast %604 : vector<8x1xi1> to vector<8x128xi1>
    %606 = arith.select %605, %588, %566 : vector<8x128xi1>, vector<8x128xf32>
    %c15 = arith.constant 15 : index
    %c0_172 = arith.constant 0 : index
    %c0_173 = arith.constant 0 : index
    %607 = vector.load %arg2[%c15, %c0_172, %c0_173] : memref<16x8x512xbf16, #tpu.memory_space<vmem>>, vector<1x8x512xbf16>
    %608 = vector.shape_cast %607 : vector<1x8x512xbf16> to vector<8x512xbf16>
    %609 = arith.extf %608 : vector<8x512xbf16> to vector<8x512xf32>
    %610 = arith.truncf %603 : vector<8x128xf32> to vector<8x128xbf16>
    %c0_174 = arith.constant 0 : index
    %c0_175 = arith.constant 0 : index
    %611 = vector.load %arg3[%c0_174, %c0_175] : memref<128x512xbf16, #tpu.memory_space<vmem>>, vector<128x512xbf16>
    %cst_176 = arith.constant dense<0.000000e+00> : vector<8x512xf32>
    %612 = tpu.matmul %610, %611, %cst_176 {dimension_numbers = #tpu.dot_dimension_numbers<[1], [0], [0], [1], [0, 0, 1, 1], [], []>} : vector<8x128xbf16>, vector<128x512xbf16>, vector<8x512xf32> -> vector<8x512xf32>
    %613 = arith.addf %609, %612 : vector<8x512xf32>
    %614 = vector.extract_strided_slice %613 {offsets = [0, 0], sizes = [8, 384], strides = [1, 1]} : vector<8x512xf32> to vector<8x384xf32>
    %cst_177 = arith.constant 0.000000e+00 : f32
    %615 = vector.broadcast %cst_177 : f32 to vector<8x384xf32>
    %616 = arith.subf %615, %614 : vector<8x384xf32>
    %617 = math.exp %616 : vector<8x384xf32>
    %cst_178 = arith.constant 1.000000e+00 : f32
    %618 = vector.broadcast %cst_178 : f32 to vector<8x384xf32>
    %619 = arith.addf %618, %617 : vector<8x384xf32>
    %620 = tpu.reciprocal %619 {approx = true} : vector<8x384xf32> -> vector<8x384xf32>
    %621 = vector.extract_strided_slice %620 {offsets = [0, 0], sizes = [8, 128], strides = [1, 1]} : vector<8x384xf32> to vector<8x128xf32>
    %622 = vector.extract_strided_slice %620 {offsets = [0, 128], sizes = [8, 128], strides = [1, 1]} : vector<8x384xf32> to vector<8x128xf32>
    %623 = vector.extract_strided_slice %620 {offsets = [0, 256], sizes = [8, 128], strides = [1, 1]} : vector<8x384xf32> to vector<8x128xf32>
    %624 = vector.extract_strided_slice %613 {offsets = [0, 384], sizes = [8, 128], strides = [1, 1]} : vector<8x512xf32> to vector<8x128xf32>
    %625 = math.tanh %624 : vector<8x128xf32>
    %626 = arith.mulf %622, %606 : vector<8x128xf32>
    %627 = arith.mulf %621, %625 : vector<8x128xf32>
    %628 = arith.addf %626, %627 : vector<8x128xf32>
    %629 = math.tanh %628 : vector<8x128xf32>
    %630 = arith.mulf %623, %629 : vector<8x128xf32>
    %c15_i32 = arith.constant 15 : i32
    %631 = arith.addi %4, %c15_i32 : i32
    %632 = vector.broadcast %631 : i32 to vector<8x1xi32>
    %633 = arith.cmpi slt, %632, %3 : vector<8x1xi32>
    %cst_179 = arith.constant 0.000000e+00 : f32
    %634 = vector.shape_cast %633 : vector<8x1xi1> to vector<8x1xi1>
    %635 = vector.broadcast %634 : vector<8x1xi1> to vector<8x128xi1>
    %636 = vector.broadcast %cst_179 : f32 to vector<8x128xf32>
    %637 = arith.select %635, %630, %636 : vector<8x128xi1>, vector<8x128xf32>
    %c0_180 = arith.constant 0 : index
    %c15_181 = arith.constant 15 : index
    %c0_182 = arith.constant 0 : index
    %638 = vector.load %arg4[%c0_180, %c15_181, %c0_182] : memref<8x16x128xf32, #tpu.memory_space<vmem>>, vector<8x1x128xf32>
    %639 = vector.shape_cast %638 : vector<8x1x128xf32> to vector<8x128xf32>
    %640 = vector.shape_cast %637 : vector<8x128xf32> to vector<8x1x128xf32>
    tpu.vector_store %arg4[%c0_180, %c15_181, %c0_182], %640 {strides = array<i32>} : memref<8x16x128xf32, #tpu.memory_space<vmem>>, vector<8x1x128xf32>,
    %641 = vector.shape_cast %633 : vector<8x1xi1> to vector<8x1xi1>
    %642 = vector.broadcast %641 : vector<8x1xi1> to vector<8x128xi1>
    %643 = arith.select %642, %630, %603 : vector<8x128xi1>, vector<8x128xf32>
    %644 = vector.shape_cast %633 : vector<8x1xi1> to vector<8x1xi1>
    %645 = vector.broadcast %644 : vector<8x1xi1> to vector<8x128xi1>
    %646 = arith.select %645, %628, %606 : vector<8x128xi1>, vector<8x128xf32>
    %c0_183 = arith.constant 0 : index
    %c0_184 = arith.constant 0 : index
    %647 = vector.load %arg7[%c0_183, %c0_184] : memref<8x128xf32, #tpu.memory_space<vmem>>, vector<8x128xf32>
    tpu.vector_store %arg7[%c0_183, %c0_184], %643 {strides = array<i32>} : memref<8x128xf32, #tpu.memory_space<vmem>>, vector<8x128xf32>,
    %c0_185 = arith.constant 0 : index
    %c0_186 = arith.constant 0 : index
    %648 = vector.load %arg8[%c0_185, %c0_186] : memref<8x128xf32, #tpu.memory_space<vmem>>, vector<8x128xf32>
    tpu.vector_store %arg8[%c0_185, %c0_186], %646 {strides = array<i32>} : memref<8x128xf32, #tpu.memory_space<vmem>>, vector<8x128xf32>,
    %c1_i32_187 = arith.constant 1 : i32
    %649 = arith.cmpi eq, %arg0, %c1_i32_187 : i32
    %650 = arith.extui %649 : i1 to i32
    %c0_i32_188 = arith.constant 0 : i32
    %651 = arith.cmpi ne, %650, %c0_i32_188 : i32
    scf.if %651 {
      %c0_189 = arith.constant 0 : index
      %c0_190 = arith.constant 0 : index
      %652 = vector.load %arg5[%c0_189, %c0_190] : memref<8x128xf32, #tpu.memory_space<vmem>>, vector<8x128xf32>
      tpu.vector_store %arg5[%c0_189, %c0_190], %643 {strides = array<i32>} : memref<8x128xf32, #tpu.memory_space<vmem>>, vector<8x128xf32>,
      %c0_191 = arith.constant 0 : index
      %c0_192 = arith.constant 0 : index
      %653 = vector.load %arg6[%c0_191, %c0_192] : memref<8x128xf32, #tpu.memory_space<vmem>>, vector<8x128xf32>
      tpu.vector_store %arg6[%c0_191, %c0_192], %646 {strides = array<i32>} : memref<8x128xf32, #tpu.memory_space<vmem>>, vector<8x128xf32>,
    } else {
    }
    return
  }
  func.func @transform_0(%arg0: i32) -> (i32, i32) {
    %c0_i32 = arith.constant 0 : i32
    %c0_i32_0 = arith.constant 0 : i32
    %c0_i32_1 = arith.constant 0 : i32
    return %c0_i32, %c0_i32_0 : i32, i32
  }
  func.func @transform_1(%arg0: i32) -> (i32, i32, i32) {
    %c0_i32 = arith.constant 0 : i32
    %c0_i32_0 = arith.constant 0 : i32
    %c0_i32_1 = arith.constant 0 : i32
    return %arg0, %c0_i32, %c0_i32_0 : i32, i32, i32
  }
  func.func @transform_2(%arg0: i32) -> (i32, i32) {
    %c0_i32 = arith.constant 0 : i32
    %c0_i32_0 = arith.constant 0 : i32
    %c0_i32_1 = arith.constant 0 : i32
    return %c0_i32, %c0_i32_0 : i32, i32
  }
  func.func @transform_3(%arg0: i32) -> (i32, i32, i32) {
    %c0_i32 = arith.constant 0 : i32
    %c0_i32_0 = arith.constant 0 : i32
    %c0_i32_1 = arith.constant 0 : i32
    return %c0_i32, %arg0, %c0_i32_0 : i32, i32, i32
  }
  func.func @transform_4(%arg0: i32) -> (i32, i32) {
    %c0_i32 = arith.constant 0 : i32
    %c0_i32_0 = arith.constant 0 : i32
    %c0_i32_1 = arith.constant 0 : i32
    return %c0_i32, %c0_i32_0 : i32, i32
  }
  func.func @transform_5(%arg0: i32) -> (i32, i32) {
    %c0_i32 = arith.constant 0 : i32
    %c0_i32_0 = arith.constant 0 : i32
    %c0_i32_1 = arith.constant 0 : i32
    return %c0_i32, %c0_i32_0 : i32, i32
  }
}

</mosaic_0001>

<llo_original>
// kernel: tpu_custom_call.1
$region0: #{tpu_custom_call.1}
  #allocation0 [shape = 'u32[]', space=smem, size = 0x4, offset = 0x4, fixed_abs, tag = 'smem constant byte address 0x4 - core index']
  #allocation1 [shape = 'u32[144,128]{1,0:T(1,128)}', space=vmem, size = 0x12000, scoped, tag = 'internal scratch']
  #allocation2 [shape = 'f32[8,128]{1,0:T(8,128)}', space=vmem, size = 0x1000, scoped, tag = 'scratch operand']
  #allocation3 [shape = 'f32[8,128]{1,0:T(8,128)}', space=vmem, size = 0x1000, scoped, tag = 'scratch operand']
  #allocation13 [shape = 's32[]', space=sflag, size = 0x4, offset = 0, fixed_abs, tag = 'sflag constant byte address 0x0 - dummy sync flag']
  %s0 = inlined_call_operand.vmem [shape: s32[8,1], index: 0, kind: input, shape index: {}]
  %s1 = inlined_call_operand.hbm [shape: bf16[32,8,512], index: 1, kind: input, shape index: {}]
  %s2 = inlined_call_operand.hbm [shape: bf16[128,512], index: 2, kind: input, shape index: {}]
  %s3 = inlined_call_operand.hbm [shape: f32[8,32,128], index: 3, kind: output, shape index: {0}]
  %s4 = inlined_call_operand.hbm [shape: f32[8,128], index: 4, kind: output, shape index: {1}]
  %s5 = inlined_call_operand.hbm [shape: f32[8,128], index: 5, kind: output, shape index: {2}]
  %6 = xla_tuple %s3, %s4, %s5
  %s7 = sld [smem:[#allocation0]]
  $region77: #{tpu_custom_call.1} parent=0
    _
  %s9 = ssub.s32 1, %s7
  %s10 = scalar_select 0, %s9, %s7
  $region1: #{tpu_custom_call.1} parent=0
    #allocation4 [shape = 'u8[262144]{0}', space=vmem, size = 0x40000, scoped, tag = 'input window, operand 1']
    #allocation5 [shape = 's32[2]{0}', space=sflag, size = 0x8, scoped, tag = 'scoped memory for tpu_custom_call.1']
    #allocation6 [shape = 's32[2]{0}', space=sflag, size = 0x8, scoped, tag = 'scoped memory for tpu_custom_call.1']
    #allocation7 [shape = 'u8[131072]{0}', space=vmem, size = 0x20000, scoped, tag = 'input window, operand 2, single buffered']
    #allocation8 [shape = 's32[1]{0}', space=sflag, size = 0x4, scoped, tag = 'scoped memory for tpu_custom_call.1']
    #allocation9 [shape = 'u8[131072]{0}', space=vmem, size = 0x20000, scoped, tag = 'output window, operand 0']
    #allocation10 [shape = 'u8[4096]{0}', space=vmem, size = 0x1000, scoped, tag = 'output window, operand 1, single buffered']
    #allocation11 [shape = 's32[1]{0}', space=sflag, size = 0x4, scoped, tag = 'scoped memory for tpu_custom_call.1']
    #allocation12 [shape = 'u8[4096]{0}', space=vmem, size = 0x1000, scoped, tag = 'output window, operand 2, single buffered']
    %11 = vsyncpa [#allocation5], 0
    %s12 = scalar_lea.sflag [#allocation5], 1
    %13 = vsyncpa %s12, 0
    %14 = vsyncpa [#allocation8], 0
    %15 = vsyncpa [#allocation6], 0
    %s16 = scalar_lea.sflag [#allocation6], 1
    %17 = vsyncpa %s16, 0
    %18 = vsyncpa [#allocation11], 0
    loop: start=0, step=1, limit=4
    $region2: #{tpu_custom_call.1} parent=1 // loop_pre_header
      _
    $region3: #{tpu_custom_call.1} parent=1 // loop_header
      %s20 = sphi 0, %s24
      %p21 = scmp.ge.s32.totalorder %s20, 4
      %s28 = sphi 0, %s28
      %s30 = sphi 0, %s28
      %s31 = sphi 0, %s30
      %s45 = sphi 0, %s31
      %s51 = sphi 0, %s53
      %s54 = sphi 0, %s51
      %s55 = sphi 0, %s54
      %s71 = sphi 0, %s55
      %s75 = sphi 0, %s75
      %s77 = sphi 0, %s75
      %s78 = sphi 0, %s77
      %s92 = sphi 0, %s78
      %s98 = sphi 0, %s100
      %s101 = sphi 0, %s98
      %s102 = sphi 0, %s101
      %s118 = sphi 0, %s102
      %s122 = sphi 0, %s122
      %s124 = sphi 0, %s122
      %s125 = sphi 0, %s124
      %s139 = sphi 0, %s125
      %s143 = sphi 0, %s143
      %s145 = sphi 0, %s143
      %s146 = sphi 0, %s145
      %s160 = sphi 0, %s146
    $region4: #{tpu_custom_call.1} parent=1 // loop_header_branch
      %23 = sbr.rel (%p21) target = $region8
    $region5: #{tpu_custom_call.1} parent=1 // loop_body
      %s25 = ssub.s32 %s20, 1
      %s26 = ssub.s32 %s20, 2
      %s27 = sadd.s32 %s20, 1
      %s29 = sadd.s32 %s28, 1
      %p32 = scmp.eq.s32.totalorder %s20, 1
      %p33 = scmp.ne.s32.totalorder %s28, %s30
      %p34 = scmp.eq.s32.totalorder %s20, 0
      %p35 = por %p33, %p34
      %p36 = scmp.ne.s32.totalorder %s28, %s30
      %p37 = scmp.eq.s32.totalorder %s25, 1
      %p38 = por %p36, %p37
      %p39 = scmp.ne.s32.totalorder %s30, %s31
      %p40 = scmp.eq.s32.totalorder %s25, 0
      %p41 = por %p39, %p40
      %p42 = scmp.ne.s32.totalorder %s30, %s31
      %p43 = scmp.eq.s32.totalorder %s26, 1
      %p44 = por %p42, %p43
      %p46 = scmp.ne.s32.totalorder %s31, %s45
      %p47 = scmp.eq.s32.totalorder %s26, 0
      %p48 = por %p46, %p47
      %s49 = ssub.s32 %s20, %s27
      %p50 = scmp.eq.s32.totalorder %s49, 0
      %s52 = sadd.s32 %s51, 1
      %s53 = scalar_select %p50, %s51, %s52
      %p56 = pneg %p50
      %p57 = scmp.eq.s32.totalorder %s20, 1
      %p58 = por %p56, %p57
      %p59 = scmp.ne.s32.totalorder %s51, %s54
      %p60 = scmp.eq.s32.totalorder %s20, 0
      %p61 = por %p59, %p60
      %p62 = scmp.ne.s32.totalorder %s51, %s54
      %p63 = scmp.eq.s32.totalorder %s25, 1
      %p64 = por %p62, %p63
      %p65 = scmp.ne.s32.totalorder %s54, %s55
      %p66 = scmp.eq.s32.totalorder %s25, 0
      %p67 = por %p65, %p66
      %p68 = scmp.ne.s32.totalorder %s54, %s55
      %p69 = scmp.eq.s32.totalorder %s26, 1
      %p70 = por %p68, %p69
      %p72 = scmp.ne.s32.totalorder %s55, %s71
      %p73 = scmp.eq.s32.totalorder %s26, 0
      %p74 = por %p72, %p73
      %s76 = sadd.s32 %s75, 1
      %p79 = scmp.eq.s32.totalorder %s20, 1
      %p80 = scmp.ne.s32.totalorder %s75, %s77
      %p81 = scmp.eq.s32.totalorder %s20, 0
      %p82 = por %p80, %p81
      %p83 = scmp.ne.s32.totalorder %s75, %s77
      %p84 = scmp.eq.s32.totalorder %s25, 1
      %p85 = por %p83, %p84
      %p86 = scmp.ne.s32.totalorder %s77, %s78
      %p87 = scmp.eq.s32.totalorder %s25, 0
      %p88 = por %p86, %p87
      %p89 = scmp.ne.s32.totalorder %s77, %s78
      %p90 = scmp.eq.s32.totalorder %s26, 1
      %p91 = por %p89, %p90
      %p93 = scmp.ne.s32.totalorder %s78, %s92
      %p94 = scmp.eq.s32.totalorder %s26, 0
      %p95 = por %p93, %p94
      %s96 = ssub.s32 %s20, %s27
      %p97 = scmp.eq.s32.totalorder %s96, 0
      %s99 = sadd.s32 %s98, 1
      %s100 = scalar_select %p97, %s98, %s99
      %p103 = pneg %p97
      %p104 = scmp.eq.s32.totalorder %s20, 1
      %p105 = por %p103, %p104
      %p106 = scmp.ne.s32.totalorder %s98, %s101
      %p107 = scmp.eq.s32.totalorder %s20, 0
      %p108 = por %p106, %p107
      %p109 = scmp.ne.s32.totalorder %s98, %s101
      %p110 = scmp.eq.s32.totalorder %s25, 1
      %p111 = por %p109, %p110
      %p112 = scmp.ne.s32.totalorder %s101, %s102
      %p113 = scmp.eq.s32.totalorder %s25, 0
      %p114 = por %p112, %p113
      %p115 = scmp.ne.s32.totalorder %s101, %s102
      %p116 = scmp.eq.s32.totalorder %s26, 1
      %p117 = por %p115, %p116
      %p119 = scmp.ne.s32.totalorder %s102, %s118
      %p120 = scmp.eq.s32.totalorder %s26, 0
      %p121 = por %p119, %p120
      %s123 = sadd.s32 %s122, 1
      %p126 = scmp.eq.s32.totalorder %s20, 1
      %p127 = scmp.ne.s32.totalorder %s122, %s124
      %p128 = scmp.eq.s32.totalorder %s20, 0
      %p129 = por %p127, %p128
      %p130 = scmp.ne.s32.totalorder %s122, %s124
      %p131 = scmp.eq.s32.totalorder %s25, 1
      %p132 = por %p130, %p131
      %p133 = scmp.ne.s32.totalorder %s124, %s125
      %p134 = scmp.eq.s32.totalorder %s25, 0
      %p135 = por %p133, %p134
      %p136 = scmp.ne.s32.totalorder %s124, %s125
      %p137 = scmp.eq.s32.totalorder %s26, 1
      %p138 = por %p136, %p137
      %p140 = scmp.ne.s32.totalorder %s125, %s139
      %p141 = scmp.eq.s32.totalorder %s26, 0
      %p142 = por %p140, %p141
      %s144 = sadd.s32 %s143, 1
      %p147 = scmp.eq.s32.totalorder %s20, 1
      %p148 = scmp.ne.s32.totalorder %s143, %s145
      %p149 = scmp.eq.s32.totalorder %s20, 0
      %p150 = por %p148, %p149
      %p151 = scmp.ne.s32.totalorder %s143, %s145
      %p152 = scmp.eq.s32.totalorder %s25, 1
      %p153 = por %p151, %p152
      %p154 = scmp.ne.s32.totalorder %s145, %s146
      %p155 = scmp.eq.s32.totalorder %s25, 0
      %p156 = por %p154, %p155
      %p157 = scmp.ne.s32.totalorder %s145, %s146
      %p158 = scmp.eq.s32.totalorder %s26, 1
      %p159 = por %p157, %p158
      %p161 = scmp.ne.s32.totalorder %s146, %s160
      %p162 = scmp.eq.s32.totalorder %s26, 0
      %p163 = por %p161, %p162
      %p164 = scmp.le.s32.totalorder 1, %s20
      %p165 = scmp.lt.s32.totalorder %s20, 3
      %p166 = pnand %p164, %p165
      %p167 = pneg %p166
      // Predicated region
      $region9: #{tpu_custom_call.1} parent=5 // pred_check
        _
      $region10: #{tpu_custom_call.1} parent=5 // pred_check_branch
        %169 = sbr.rel (%p166) target = $region12
      $region11: #{tpu_custom_call.1} parent=5 // pred_region
        %s170 = ssub.s32 %s20, 1
        // Predicated region
        $region13: #{tpu_custom_call.1} parent=11 // pred_check
          %p171 = pneg %p41
        $region14: #{tpu_custom_call.1} parent=11 // pred_check_branch
          %173 = sbr.rel (%p171) target = $region16
        $region15: #{tpu_custom_call.1} parent=11 // pred_region
          _
        $region16: #{tpu_custom_call.1} parent=11 // pred_fallthru
          _
        // Predicated region
        $region17: #{tpu_custom_call.1} parent=11 // pred_check
          %p174 = pneg %p88
        $region18: #{tpu_custom_call.1} parent=11 // pred_check_branch
          %176 = sbr.rel (%p174) target = $region20
        $region19: #{tpu_custom_call.1} parent=11 // pred_region
          %s178 = ssub.s32 4096, 4096
          %179 = vsyncadd [#allocation8], %s178
          %s180 = sshll.u32 [#allocation7], 4
          %s181 = int_to_ptr.vmem [resolvable:$true] %s180
          %186 = dma.hbm_to_vmem [thread:$0]  %s2, 4096, %s181, [#allocation8], 256, 256, 16
        $region20: #{tpu_custom_call.1} parent=11 // pred_fallthru
          _
      $region12: #{tpu_custom_call.1} parent=5 // pred_fallthru
        _
      %p187 = scmp.lt.s32.totalorder %s20, 2
      // Predicated region
      $region21: #{tpu_custom_call.1} parent=5 // pred_check
        %p188 = pneg %p187
      $region22: #{tpu_custom_call.1} parent=5 // pred_check_branch
        %190 = sbr.rel (%p188) target = $region24
      $region23: #{tpu_custom_call.1} parent=5 // pred_region
        // Predicated region
        $region25: #{tpu_custom_call.1} parent=23 // pred_check
          %p191 = pneg %p61
        $region26: #{tpu_custom_call.1} parent=23 // pred_check_branch
          %193 = sbr.rel (%p191) target = $region28
        $region27: #{tpu_custom_call.1} parent=23 // pred_region
          %s194 = sand.u32 %s51, 1
          %s195 = scalar_lea.sflag [#allocation5], %s194
          %s196 = sand.u32 %s51, 1
          %s197 = smul.addr %s196, 256
          %s198 = scalar_lea.vmem [#allocation4], %s197
          %s199 = smul.u32 16, %s20
          %s201 = ssub.s32 4096, 4096
          %202 = vsyncadd %s195, %s201
          %s203 = smul.addr %s199, 4
          %s204 = smul.addr %s203, 64
          %s205 = scalar_lea.hbm %s1, %s204
          %s206 = sshll.u32 %s198, 4
          %s207 = int_to_ptr.vmem [resolvable:$true] %s206
          %212 = dma.hbm_to_vmem [thread:$0]  %s205, 4096, %s207, %s195, 256, 256, 16
        $region28: #{tpu_custom_call.1} parent=23 // pred_fallthru
          _
      $region24: #{tpu_custom_call.1} parent=5 // pred_fallthru
        _
      %p213 = scmp.le.s32.totalorder 1, %s20
      %p214 = scmp.lt.s32.totalorder %s20, 3
      %p215 = pnand %p213, %p214
      %p216 = pneg %p215
      // Predicated region
      $region29: #{tpu_custom_call.1} parent=5 // pred_check
        _
      $region30: #{tpu_custom_call.1} parent=5 // pred_check_branch
        %218 = sbr.rel (%p215) target = $region32
      $region31: #{tpu_custom_call.1} parent=5 // pred_region
        %s219 = ssub.s32 %s20, 1
        %s220 = sand.u32 %s54, 1
        %s221 = scalar_lea.sflag [#allocation5], %s220
        %s222 = sand.u32 %s54, 1
        %s223 = smul.addr %s222, 256
        %s224 = scalar_lea.vmem [#allocation4], %s223
        // Predicated region
        $region33: #{tpu_custom_call.1} parent=31 // pred_check
          %p225 = pneg %p67
        $region34: #{tpu_custom_call.1} parent=31 // pred_check_branch
          %227 = sbr.rel (%p225) target = $region36
        $region35: #{tpu_custom_call.1} parent=31 // pred_region
          %228 = dma.done %s221, 4096
        $region36: #{tpu_custom_call.1} parent=31 // pred_fallthru
          _
        // Predicated region
        $region37: #{tpu_custom_call.1} parent=31 // pred_check
          %p229 = pneg %p88
        $region38: #{tpu_custom_call.1} parent=31 // pred_check_branch
          %231 = sbr.rel (%p229) target = $region40
        $region39: #{tpu_custom_call.1} parent=31 // pred_region
          %232 = dma.done [#allocation8], 4096
        $region40: #{tpu_custom_call.1} parent=31 // pred_fallthru
          _
        %p233 = pneg %p41
        %p234 = pneg %p38
        %s235 = sand.u32 %s54, 1
        %s236 = scalar_lea.sflag [#allocation5], %s235
        %s237 = sand.u32 %s54, 1
        %s238 = smul.addr %s237, 256
        %s239 = scalar_lea.vmem [#allocation4], %s238
        %p240 = pneg %p67
        %p241 = pneg %p64
        %p242 = pneg %p88
        %p243 = pneg %p85
        %p244 = pneg %p114
        %p245 = pneg %p111
        %s246 = sand.u32 %s101, 1
        %s247 = scalar_lea.sflag [#allocation6], %s246
        %s248 = sand.u32 %s101, 1
        %s249 = smul.addr %s248, 128
        %s250 = scalar_lea.vmem [#allocation9], %s249
        %p251 = pneg %p135
        %p252 = pneg %p132
        %p253 = pneg %p156
        %p254 = pneg %p153
        %s255 = smul.u32 16, %s25
        %s256 = smul.u32 2, %s25
        %p258 = scmp.eq.s32.totalorder %s25, 0
        // Predicated region
        $region41: #{tpu_custom_call.1} parent=31 // pred_check
          %p259 = pneg %p258
        $region42: #{tpu_custom_call.1} parent=31 // pred_check_branch
          %261 = sbr.rel (%p259) target = $region44
        $region43: #{tpu_custom_call.1} parent=31 // pred_region
          %262 = vst [vmem:[#allocation2] sm:$0xff] 0.0
          %263 = vst [vmem:[#allocation3] sm:$0xff] 0.0
        $region44: #{tpu_custom_call.1} parent=31 // pred_fallthru
          _
        %v264 = vld [vmem:[%s0] sm:$0xff]
        %s265 = smul.u32 %s25, 16
        %v266 = vld [vmem:[#allocation2] sm:$0xff]
        %v267 = vld [vmem:[#allocation3] sm:$0xff]
        %v268 = vld [vmem:[%s224] sm:$0xff]
        %v269 = vld [vmem:[%s224 + $0x8] sm:$0xff]
        %v270 = vunpack.c.l.bf16 %v268
        %v271 = vunpack.c.h.bf16 %v268
        %v272 = vunpack.c.l.bf16 %v269
        %v273 = vunpack.c.h.bf16 %v269
        %v274 = vpack.c.bf16 %v266, %v266
        %v275 = vld [vmem:[#allocation7] sm:$0xff]
        %v276 = vld [vmem:[#allocation7 + $0x8] sm:$0xff]
        %v277 = vld [vmem:[#allocation7 + $0x10] sm:$0xff]
        %v278 = vld [vmem:[#allocation7 + $0x18] sm:$0xff]
        %v279 = vld [vmem:[#allocation7 + $0x20] sm:$0xff]
        %v280 = vld [vmem:[#allocation7 + $0x28] sm:$0xff]
        %v281 = vld [vmem:[#allocation7 + $0x30] sm:$0xff]
        %v282 = vld [vmem:[#allocation7 + $0x38] sm:$0xff]
        %v283 = vld [vmem:[#allocation7 + $0x40] sm:$0xff]
        %v284 = vld [vmem:[#allocation7 + $0x48] sm:$0xff]
        %v285 = vld [vmem:[#allocation7 + $0x50] sm:$0xff]
        %v286 = vld [vmem:[#allocation7 + $0x58] sm:$0xff]
        %v287 = vld [vmem:[#allocation7 + $0x60] sm:$0xff]
        %v288 = vld [vmem:[#allocation7 + $0x68] sm:$0xff]
        %v289 = vld [vmem:[#allocation7 + $0x70] sm:$0xff]
        %v290 = vld [vmem:[#allocation7 + $0x78] sm:$0xff]
        %v291 = vld [vmem:[#allocation7 + $0x80] sm:$0xff]
        %v292 = vld [vmem:[#allocation7 + $0x88] sm:$0xff]
        %v293 = vld [vmem:[#allocation7 + $0x90] sm:$0xff]
        %v294 = vld [vmem:[#allocation7 + $0x98] sm:$0xff]
        %v295 = vld [vmem:[#allocation7 + $0xa0] sm:$0xff]
        %v296 = vld [vmem:[#allocation7 + $0xa8] sm:$0xff]
        %v297 = vld [vmem:[#allocation7 + $0xb0] sm:$0xff]
        %v298 = vld [vmem:[#allocation7 + $0xb8] sm:$0xff]
        %v299 = vld [vmem:[#allocation7 + $0xc0] sm:$0xff]
        %v300 = vld [vmem:[#allocation7 + $0xc8] sm:$0xff]
        %v301 = vld [vmem:[#allocation7 + $0xd0] sm:$0xff]
        %v302 = vld [vmem:[#allocation7 + $0xd8] sm:$0xff]
        %v303 = vld [vmem:[#allocation7 + $0xe0] sm:$0xff]
        %v304 = vld [vmem:[#allocation7 + $0xe8] sm:$0xff]
        %v305 = vld [vmem:[#allocation7 + $0xf0] sm:$0xff]
        %v306 = vld [vmem:[#allocation7 + $0xf8] sm:$0xff]
        %v339 = vunpack.c.l.b16 %v275
        %v340 = vunpack.c.h.b16 %v275
        %v341 = vunpack.c.l.b16 %v276
        %v342 = vunpack.c.h.b16 %v276
        %v343 = vunpack.c.l.b16 %v277
        %v344 = vunpack.c.h.b16 %v277
        %v345 = vunpack.c.l.b16 %v278
        %v346 = vunpack.c.h.b16 %v278
        %v347 = vunpack.c.l.b16 %v279
        %v348 = vunpack.c.h.b16 %v279
        %v349 = vunpack.c.l.b16 %v280
        %v350 = vunpack.c.h.b16 %v280
        %v351 = vunpack.c.l.b16 %v281
        %v352 = vunpack.c.h.b16 %v281
        %v353 = vunpack.c.l.b16 %v282
        %v354 = vunpack.c.h.b16 %v282
        %v355 = vunpack.c.l.b16 %v283
        %v356 = vunpack.c.h.b16 %v283
        %v357 = vunpack.c.l.b16 %v284
        %v358 = vunpack.c.h.b16 %v284
        %v359 = vunpack.c.l.b16 %v285
        %v360 = vunpack.c.h.b16 %v285
        %v361 = vunpack.c.l.b16 %v286
        %v362 = vunpack.c.h.b16 %v286
        %v363 = vunpack.c.l.b16 %v287
        %v364 = vunpack.c.h.b16 %v287
        %v365 = vunpack.c.l.b16 %v288
        %v366 = vunpack.c.h.b16 %v288
        %v367 = vunpack.c.l.b16 %v289
        %v368 = vunpack.c.h.b16 %v289
        %v369 = vunpack.c.l.b16 %v290
        %v370 = vunpack.c.h.b16 %v290
        %v371 = vunpack.c.l.b16 %v291
        %v372 = vunpack.c.h.b16 %v291
        %v373 = vunpack.c.l.b16 %v292
        %v374 = vunpack.c.h.b16 %v292
        %v375 = vunpack.c.l.b16 %v293
        %v376 = vunpack.c.h.b16 %v293
        %v377 = vunpack.c.l.b16 %v294
        %v378 = vunpack.c.h.b16 %v294
        %v379 = vunpack.c.l.b16 %v295
        %v380 = vunpack.c.h.b16 %v295
        %v381 = vunpack.c.l.b16 %v296
        %v382 = vunpack.c.h.b16 %v296
        %v383 = vunpack.c.l.b16 %v297
        %v384 = vunpack.c.h.b16 %v297
        %v385 = vunpack.c.l.b16 %v298
        %v386 = vunpack.c.h.b16 %v298
        %v387 = vunpack.c.l.b16 %v299
        %v388 = vunpack.c.h.b16 %v299
        %v389 = vunpack.c.l.b16 %v300
        %v390 = vunpack.c.h.b16 %v300
        %v391 = vunpack.c.l.b16 %v301
        %v392 = vunpack.c.h.b16 %v301
        %v393 = vunpack.c.l.b16 %v302
        %v394 = vunpack.c.h.b16 %v302
        %v395 = vunpack.c.l.b16 %v303
        %v396 = vunpack.c.h.b16 %v303
        %v397 = vunpack.c.l.b16 %v304
        %v398 = vunpack.c.h.b16 %v304
        %v399 = vunpack.c.l.b16 %v305
        %v400 = vunpack.c.h.b16 %v305
        %v401 = vunpack.c.l.b16 %v306
        %v402 = vunpack.c.h.b16 %v306
        %v403 = vpack.c.b16 %v343, %v339
        %v404 = vpack.c.b16 %v344, %v340
        %v405 = vpack.c.b16 %v345, %v341
        %v406 = vpack.c.b16 %v346, %v342
        %v407 = vpack.c.b16 %v351, %v347
        %v408 = vpack.c.b16 %v352, %v348
        %v409 = vpack.c.b16 %v353, %v349
        %v410 = vpack.c.b16 %v354, %v350
        %v411 = vpack.c.b16 %v359, %v355
        %v412 = vpack.c.b16 %v360, %v356
        %v413 = vpack.c.b16 %v361, %v357
        %v414 = vpack.c.b16 %v362, %v358
        %v415 = vpack.c.b16 %v367, %v363
        %v416 = vpack.c.b16 %v368, %v364
        %v417 = vpack.c.b16 %v369, %v365
        %v418 = vpack.c.b16 %v370, %v366
        %v419 = vpack.c.b16 %v375, %v371
        %v420 = vpack.c.b16 %v376, %v372
        %v421 = vpack.c.b16 %v377, %v373
        %v422 = vpack.c.b16 %v378, %v374
        %v423 = vpack.c.b16 %v383, %v379
        %v424 = vpack.c.b16 %v384, %v380
        %v425 = vpack.c.b16 %v385, %v381
        %v426 = vpack.c.b16 %v386, %v382
        %v427 = vpack.c.b16 %v391, %v387
        %v428 = vpack.c.b16 %v392, %v388
        %v429 = vpack.c.b16 %v393, %v389
        %v430 = vpack.c.b16 %v394, %v390
        %v431 = vpack.c.b16 %v399, %v395
        %v432 = vpack.c.b16 %v400, %v396
        %v433 = vpack.c.b16 %v401, %v397
        %v434 = vpack.c.b16 %v402, %v398
        %467 = vmatprep.subr.bf16.mxu0 %v432
        %468 = vmatpush1.bf16.msra.mxu0 %v431
        %469 = vmatprep.subr.bf16.mxu0 %v428
        %470 = vmatpush1.bf16.msra.mxu0 %v427
        %471 = vmatprep.subr.bf16.mxu0 %v424
        %472 = vmatpush1.bf16.msra.mxu0 %v423
        %473 = vmatprep.subr.bf16.mxu0 %v420
        %474 = vmatpush1.bf16.msra.mxu0 %v419
        %475 = vmatprep.subr.bf16.mxu0 %v416
        %476 = vmatpush1.bf16.msra.mxu0 %v415
        %477 = vmatprep.subr.bf16.mxu0 %v412
        %478 = vmatpush1.bf16.msra.mxu0 %v411
        %479 = vmatprep.subr.bf16.mxu0 %v408
        %480 = vmatpush1.bf16.msra.mxu0 %v407
        %481 = vmatprep.subr.bf16.mxu0 %v404
        %482 = vmatpush1.bf16.msra.mxu0 %v403
        %483 = vmatprep.subr.bf16.mxu0 0
        %484 = vmatpush2.bf16.msra.mxu0 0
        %485 = vmatprep.subr.bf16.mxu0 0
        %486 = vmatpush2.bf16.msra.mxu0 0
        %487 = vmatprep.subr.bf16.mxu0 0
        %488 = vmatpush2.bf16.msra.mxu0 0
        %489 = vmatprep.subr.bf16.mxu0 0
        %490 = vmatpush2.bf16.msra.mxu0 0
        %491 = vmatprep.subr.bf16.mxu0 0
        %492 = vmatpush2.bf16.msra.mxu0 0
        %493 = vmatprep.subr.bf16.mxu0 0
        %494 = vmatpush2.bf16.msra.mxu0 0
        %495 = vmatprep.subr.bf16.mxu0 0
        %496 = vmatpush2.bf16.msra.mxu0 0
        %497 = vmatprep.subr.bf16.mxu0 0
        %498 = vmatpush2.bf16.msra.mxu0 0
        %499 = vmatprep.mubr.bf16.mxu0 0
        %500 = vmatmul.mubr.bf16.gmra.mxu0 %v274
        %v501 = vpop.f32.mrf.mxu0
        %v502 = vadd.f32 0.0, %v501
        %v503 = vpop.f32.mrf.mxu0
        %v504 = vadd.f32 0.0, %v503
        %v505 = vpop.f32.mrf.mxu0
        %v506 = vpop.f32.mrf.mxu0
        %507 = vdwg.mxu0
        %508 = vmatprep.subr.bf16.mxu0 %v434
        %509 = vmatpush1.bf16.msra.mxu0 %v433
        %510 = vmatprep.subr.bf16.mxu0 %v430
        %511 = vmatpush1.bf16.msra.mxu0 %v429
        %512 = vmatprep.subr.bf16.mxu0 %v426
        %513 = vmatpush1.bf16.msra.mxu0 %v425
        %514 = vmatprep.subr.bf16.mxu0 %v422
        %515 = vmatpush1.bf16.msra.mxu0 %v421
        %516 = vmatprep.subr.bf16.mxu0 %v418
        %517 = vmatpush1.bf16.msra.mxu0 %v417
        %518 = vmatprep.subr.bf16.mxu0 %v414
        %519 = vmatpush1.bf16.msra.mxu0 %v413
        %520 = vmatprep.subr.bf16.mxu0 %v410
        %521 = vmatpush1.bf16.msra.mxu0 %v409
        %522 = vmatprep.subr.bf16.mxu0 %v406
        %523 = vmatpush1.bf16.msra.mxu0 %v405
        %524 = vmatprep.subr.bf16.mxu0 0
        %525 = vmatpush2.bf16.msra.mxu0 0
        %526 = vmatprep.subr.bf16.mxu0 0
        %527 = vmatpush2.bf16.msra.mxu0 0
        %528 = vmatprep.subr.bf16.mxu0 0
        %529 = vmatpush2.bf16.msra.mxu0 0
        %530 = vmatprep.subr.bf16.mxu0 0
        %531 = vmatpush2.bf16.msra.mxu0 0
        %532 = vmatprep.subr.bf16.mxu0 0
        %533 = vmatpush2.bf16.msra.mxu0 0
        %534 = vmatprep.subr.bf16.mxu0 0
        %535 = vmatpush2.bf16.msra.mxu0 0
        %536 = vmatprep.subr.bf16.mxu0 0
        %537 = vmatpush2.bf16.msra.mxu0 0
        %538 = vmatprep.subr.bf16.mxu0 0
        %539 = vmatpush2.bf16.msra.mxu0 0
        %540 = vmatprep.mubr.bf16.mxu0 0
        %541 = vmatmul.mubr.bf16.gmra.mxu0 %v274
        %v542 = vpop.f32.mrf.mxu0
        %v543 = vadd.f32 0.0, %v542
        %v544 = vpop.f32.mrf.mxu0
        %v545 = vadd.f32 0.0, %v544
        %v546 = vpop.f32.mrf.mxu0
        %v547 = vpop.f32.mrf.mxu0
        %548 = vdwg.mxu0
        %v549 = vadd.f32 %v270, %v502
        %v550 = vadd.f32 %v271, %v504
        %v551 = vadd.f32 %v272, %v543
        %v552 = vadd.f32 %v273, %v545
        %v553 = vsub.f32 0.0, %v549
        %v554 = vsub.f32 0.0, %v550
        %v555 = vsub.f32 0.0, %v551
        %v556 = vmul.f32 %v553, 1.442695
        %v557 = vpow.pop %v556
        %v558 = vmul.f32 %v554, 1.442695
        %v559 = vpow.pop %v558
        %v560 = vmul.f32 %v555, 1.442695
        %v561 = vpow.pop %v560
        %v562 = vadd.f32 %v557, 1.0
        %v563 = vadd.f32 %v559, 1.0
        %v564 = vadd.f32 %v561, 1.0
        %v565 = vrcp.pop %v562
        %v566 = vrcp.pop %v563
        %v567 = vrcp.pop %v564
        %v568 = vtanh.pop %v552
        %v569 = vmul.f32 %v566, %v267
        %v570 = vmul.f32 %v565, %v568
        %v571 = vadd.f32 %v569, %v570
        %v572 = vtanh.pop %v571
        %v573 = vmul.f32 %v567, %v572
        %v574 = vstv %s265
        %vm575 = vcmp.lt.s32.totalorder %v574, %v264
        %v576 = vsel %vm575, 1, 0
        %577 = vset.pattern.permute.xlu0 0
        %578 = vperm.xlu0 %577, %v576
        %v579 = vpop.permute.xlu0 %578
        %vm580 = vcmp.eq.s32.totalorder %v579, 1
        %v581 = vsel %vm580, %v573, 0.0
        %v583 = vcombine.high %v581, %v581
        %v585 = vunpack.c.l.s4 1966171168
        %v586 = vunpack.c.0.s8 %v585
        %v587 = vlaneseq
        %v588 = vshrl.u32 %v587, 7
        %v589 = vsub.s32 %v586, %v588
        %v590 = vrot.slane %v581, %v589
        %v592 = vunpack.c.l.s4 1966171168
        %v593 = vunpack.c.0.s8 %v592
        %v594 = vlaneseq
        %v595 = vshrl.u32 %v594, 7
        %v596 = vsub.s32 %v593, %v595
        %v597 = vrot.slane %v583, %v596
        %v598 = vcombine.high %v590, %v590
        %v599 = vcombine.high %v597, %v597
        %v601 = vunpack.c.l.s4 1966171168
        %v602 = vunpack.c.0.s8 %v601
        %v603 = vlaneseq
        %v604 = vshrl.u32 %v603, 7
        %v605 = vsub.s32 %v602, %v604
        %v606 = vrot.slane %v590, %v605
        %v608 = vunpack.c.l.s4 1966171168
        %v609 = vunpack.c.0.s8 %v608
        %v610 = vlaneseq
        %v611 = vshrl.u32 %v610, 7
        %v612 = vsub.s32 %v609, %v611
        %v613 = vrot.slane %v597, %v612
        %v615 = vunpack.c.l.s4 1966171168
        %v616 = vunpack.c.0.s8 %v615
        %v617 = vlaneseq
        %v618 = vshrl.u32 %v617, 7
        %v619 = vsub.s32 %v616, %v618
        %v620 = vrot.slane %v598, %v619
        %v622 = vunpack.c.l.s4 1966171168
        %v623 = vunpack.c.0.s8 %v622
        %v624 = vlaneseq
        %v625 = vshrl.u32 %v624, 7
        %v626 = vsub.s32 %v623, %v625
        %v627 = vrot.slane %v599, %v626
        %v628 = vcombine.high %v606, %v606
        %v629 = vcombine.high %v613, %v613
        %v630 = vcombine.high %v620, %v620
        %v631 = vcombine.high %v627, %v627
        %640 = vst [vmem:[%s250] sm:$0x1] %v606
        %641 = vst [vmem:[%s250 + $0x10] sm:$0x1] %v620
        %642 = vst [vmem:[%s250 + $0x20] sm:$0x1] %v628
        %643 = vst [vmem:[%s250 + $0x30] sm:$0x1] %v630
        %644 = vst [vmem:[%s250 + $0x40] sm:$0x1] %v613
        %645 = vst [vmem:[%s250 + $0x50] sm:$0x1] %v627
        %646 = vst [vmem:[%s250 + $0x60] sm:$0x1] %v629
        %647 = vst [vmem:[%s250 + $0x70] sm:$0x1] %v631
        %v648 = vsel %vm580, %v573, %v266
        %v649 = vsel %vm580, %v571, %v267
        %s650 = scalar_lea.vmem %s224, 16 [#allocation4]
        %v651 = vld [vmem:[%s650] sm:$0xff]
        %v652 = vld [vmem:[%s650 + $0x8] sm:$0xff]
        %v653 = vunpack.c.l.bf16 %v651
        %v654 = vunpack.c.h.bf16 %v651
        %v655 = vunpack.c.l.bf16 %v652
        %v656 = vunpack.c.h.bf16 %v652
        %v657 = vpack.c.bf16 %v648, %v648
        %v658 = vld [vmem:[#allocation7] sm:$0xff]
        %v659 = vld [vmem:[#allocation7 + $0x8] sm:$0xff]
        %v660 = vld [vmem:[#allocation7 + $0x10] sm:$0xff]
        %v661 = vld [vmem:[#allocation7 + $0x18] sm:$0xff]
        %v662 = vld [vmem:[#allocation7 + $0x20] sm:$0xff]
        %v663 = vld [vmem:[#allocation7 + $0x28] sm:$0xff]
        %v664 = vld [vmem:[#allocation7 + $0x30] sm:$0xff]
        %v665 = vld [vmem:[#allocation7 + $0x38] sm:$0xff]
        %v666 = vld [vmem:[#allocation7 + $0x40] sm:$0xff]
        %v667 = vld [vmem:[#allocation7 + $0x48] sm:$0xff]
        %v668 = vld [vmem:[#allocation7 + $0x50] sm:$0xff]
        %v669 = vld [vmem:[#allocation7 + $0x58] sm:$0xff]
        %v670 = vld [vmem:[#allocation7 + $0x60] sm:$0xff]
        %v671 = vld [vmem:[#allocation7 + $0x68] sm:$0xff]
        %v672 = vld [vmem:[#allocation7 + $0x70] sm:$0xff]
        %v673 = vld [vmem:[#allocation7 + $0x78] sm:$0xff]
        %v674 = vld [vmem:[#allocation7 + $0x80] sm:$0xff]
        %v675 = vld [vmem:[#allocation7 + $0x88] sm:$0xff]
        %v676 = vld [vmem:[#allocation7 + $0x90] sm:$0xff]
        %v677 = vld [vmem:[#allocation7 + $0x98] sm:$0xff]
        %v678 = vld [vmem:[#allocation7 + $0xa0] sm:$0xff]
        %v679 = vld [vmem:[#allocation7 + $0xa8] sm:$0xff]
        %v680 = vld [vmem:[#allocation7 + $0xb0] sm:$0xff]
        %v681 = vld [vmem:[#allocation7 + $0xb8] sm:$0xff]
        %v682 = vld [vmem:[#allocation7 + $0xc0] sm:$0xff]
        %v683 = vld [vmem:[#allocation7 + $0xc8] sm:$0xff]
        %v684 = vld [vmem:[#allocation7 + $0xd0] sm:$0xff]
        %v685 = vld [vmem:[#allocation7 + $0xd8] sm:$0xff]
        %v686 = vld [vmem:[#allocation7 + $0xe0] sm:$0xff]
        %v687 = vld [vmem:[#allocation7 + $0xe8] sm:$0xff]
        %v688 = vld [vmem:[#allocation7 + $0xf0] sm:$0xff]
        %v689 = vld [vmem:[#allocation7 + $0xf8] sm:$0xff]
        %v722 = vunpack.c.l.b16 %v658
        %v723 = vunpack.c.h.b16 %v658
        %v724 = vunpack.c.l.b16 %v659
        %v725 = vunpack.c.h.b16 %v659
        %v726 = vunpack.c.l.b16 %v660
        %v727 = vunpack.c.h.b16 %v660
        %v728 = vunpack.c.l.b16 %v661
        %v729 = vunpack.c.h.b16 %v661
        %v730 = vunpack.c.l.b16 %v662
        %v731 = vunpack.c.h.b16 %v662
        %v732 = vunpack.c.l.b16 %v663
        %v733 = vunpack.c.h.b16 %v663
        %v734 = vunpack.c.l.b16 %v664
        %v735 = vunpack.c.h.b16 %v664
        %v736 = vunpack.c.l.b16 %v665
        %v737 = vunpack.c.h.b16 %v665
        %v738 = vunpack.c.l.b16 %v666
        %v739 = vunpack.c.h.b16 %v666
        %v740 = vunpack.c.l.b16 %v667
        %v741 = vunpack.c.h.b16 %v667
        %v742 = vunpack.c.l.b16 %v668
        %v743 = vunpack.c.h.b16 %v668
        %v744 = vunpack.c.l.b16 %v669
        %v745 = vunpack.c.h.b16 %v669
        %v746 = vunpack.c.l.b16 %v670
        %v747 = vunpack.c.h.b16 %v670
        %v748 = vunpack.c.l.b16 %v671
        %v749 = vunpack.c.h.b16 %v671
        %v750 = vunpack.c.l.b16 %v672
        %v751 = vunpack.c.h.b16 %v672
        %v752 = vunpack.c.l.b16 %v673
        %v753 = vunpack.c.h.b16 %v673
        %v754 = vunpack.c.l.b16 %v674
        %v755 = vunpack.c.h.b16 %v674
        %v756 = vunpack.c.l.b16 %v675
        %v757 = vunpack.c.h.b16 %v675
        %v758 = vunpack.c.l.b16 %v676
        %v759 = vunpack.c.h.b16 %v676
        %v760 = vunpack.c.l.b16 %v677
        %v761 = vunpack.c.h.b16 %v677
        %v762 = vunpack.c.l.b16 %v678
        %v763 = vunpack.c.h.b16 %v678
        %v764 = vunpack.c.l.b16 %v679
        %v765 = vunpack.c.h.b16 %v679
        %v766 = vunpack.c.l.b16 %v680
        %v767 = vunpack.c.h.b16 %v680
        %v768 = vunpack.c.l.b16 %v681
        %v769 = vunpack.c.h.b16 %v681
        %v770 = vunpack.c.l.b16 %v682
        %v771 = vunpack.c.h.b16 %v682
        %v772 = vunpack.c.l.b16 %v683
        %v773 = vunpack.c.h.b16 %v683
        %v774 = vunpack.c.l.b16 %v684
        %v775 = vunpack.c.h.b16 %v684
        %v776 = vunpack.c.l.b16 %v685
        %v777 = vunpack.c.h.b16 %v685
        %v778 = vunpack.c.l.b16 %v686
        %v779 = vunpack.c.h.b16 %v686
        %v780 = vunpack.c.l.b16 %v687
        %v781 = vunpack.c.h.b16 %v687
        %v782 = vunpack.c.l.b16 %v688
        %v783 = vunpack.c.h.b16 %v688
        %v784 = vunpack.c.l.b16 %v689
        %v785 = vunpack.c.h.b16 %v689
        %v786 = vpack.c.b16 %v726, %v722
        %v787 = vpack.c.b16 %v727, %v723
        %v788 = vpack.c.b16 %v728, %v724
        %v789 = vpack.c.b16 %v729, %v725
        %v790 = vpack.c.b16 %v734, %v730
        %v791 = vpack.c.b16 %v735, %v731
        %v792 = vpack.c.b16 %v736, %v732
        %v793 = vpack.c.b16 %v737, %v733
        %v794 = vpack.c.b16 %v742, %v738
        %v795 = vpack.c.b16 %v743, %v739
        %v796 = vpack.c.b16 %v744, %v740
        %v797 = vpack.c.b16 %v745, %v741
        %v798 = vpack.c.b16 %v750, %v746
        %v799 = vpack.c.b16 %v751, %v747
        %v800 = vpack.c.b16 %v752, %v748
        %v801 = vpack.c.b16 %v753, %v749
        %v802 = vpack.c.b16 %v758, %v754
        %v803 = vpack.c.b16 %v759, %v755
        %v804 = vpack.c.b16 %v760, %v756
        %v805 = vpack.c.b16 %v761, %v757
        %v806 = vpack.c.b16 %v766, %v762
        %v807 = vpack.c.b16 %v767, %v763
        %v808 = vpack.c.b16 %v768, %v764
        %v809 = vpack.c.b16 %v769, %v765
        %v810 = vpack.c.b16 %v774, %v770
        %v811 = vpack.c.b16 %v775, %v771
        %v812 = vpack.c.b16 %v776, %v772
        %v813 = vpack.c.b16 %v777, %v773
        %v814 = vpack.c.b16 %v782, %v778
        %v815 = vpack.c.b16 %v783, %v779
        %v816 = vpack.c.b16 %v784, %v780
        %v817 = vpack.c.b16 %v785, %v781
        %850 = vmatprep.subr.bf16.mxu0 %v815
        %851 = vmatpush1.bf16.msra.mxu0 %v814
        %852 = vmatprep.subr.bf16.mxu0 %v811
        %853 = vmatpush1.bf16.msra.mxu0 %v810
        %854 = vmatprep.subr.bf16.mxu0 %v807
        %855 = vmatpush1.bf16.msra.mxu0 %v806
        %856 = vmatprep.subr.bf16.mxu0 %v803
        %857 = vmatpush1.bf16.msra.mxu0 %v802
        %858 = vmatprep.subr.bf16.mxu0 %v799
        %859 = vmatpush1.bf16.msra.mxu0 %v798
        %860 = vmatprep.subr.bf16.mxu0 %v795
        %861 = vmatpush1.bf16.msra.mxu0 %v794
        %862 = vmatprep.subr.bf16.mxu0 %v791
        %863 = vmatpush1.bf16.msra.mxu0 %v790
        %864 = vmatprep.subr.bf16.mxu0 %v787
        %865 = vmatpush1.bf16.msra.mxu0 %v786
        %866 = vmatprep.subr.bf16.mxu0 0
        %867 = vmatpush2.bf16.msra.mxu0 0
        %868 = vmatprep.subr.bf16.mxu0 0
        %869 = vmatpush2.bf16.msra.mxu0 0
        %870 = vmatprep.subr.bf16.mxu0 0
        %871 = vmatpush2.bf16.msra.mxu0 0
        %872 = vmatprep.subr.bf16.mxu0 0
        %873 = vmatpush2.bf16.msra.mxu0 0
        %874 = vmatprep.subr.bf16.mxu0 0
        %875 = vmatpush2.bf16.msra.mxu0 0
        %876 = vmatprep.subr.bf16.mxu0 0
        %877 = vmatpush2.bf16.msra.mxu0 0
        %878 = vmatprep.subr.bf16.mxu0 0
        %879 = vmatpush2.bf16.msra.mxu0 0
        %880 = vmatprep.subr.bf16.mxu0 0
        %881 = vmatpush2.bf16.msra.mxu0 0
        %882 = vmatprep.mubr.bf16.mxu0 0
        %883 = vmatmul.mubr.bf16.gmra.mxu0 %v657
        %v884 = vpop.f32.mrf.mxu0
        %v885 = vadd.f32 0.0, %v884
        %v886 = vpop.f32.mrf.mxu0
        %v887 = vadd.f32 0.0, %v886
        %v888 = vpop.f32.mrf.mxu0
        %v889 = vpop.f32.mrf.mxu0
        %890 = vdwg.mxu0
        %891 = vmatprep.subr.bf16.mxu0 %v817
        %892 = vmatpush1.bf16.msra.mxu0 %v816
        %893 = vmatprep.subr.bf16.mxu0 %v813
        %894 = vmatpush1.bf16.msra.mxu0 %v812
        %895 = vmatprep.subr.bf16.mxu0 %v809
        %896 = vmatpush1.bf16.msra.mxu0 %v808
        %897 = vmatprep.subr.bf16.mxu0 %v805
        %898 = vmatpush1.bf16.msra.mxu0 %v804
        %899 = vmatprep.subr.bf16.mxu0 %v801
        %900 = vmatpush1.bf16.msra.mxu0 %v800
        %901 = vmatprep.subr.bf16.mxu0 %v797
        %902 = vmatpush1.bf16.msra.mxu0 %v796
        %903 = vmatprep.subr.bf16.mxu0 %v793
        %904 = vmatpush1.bf16.msra.mxu0 %v792
        %905 = vmatprep.subr.bf16.mxu0 %v789
        %906 = vmatpush1.bf16.msra.mxu0 %v788
        %907 = vmatprep.subr.bf16.mxu0 0
        %908 = vmatpush2.bf16.msra.mxu0 0
        %909 = vmatprep.subr.bf16.mxu0 0
        %910 = vmatpush2.bf16.msra.mxu0 0
        %911 = vmatprep.subr.bf16.mxu0 0
        %912 = vmatpush2.bf16.msra.mxu0 0
        %913 = vmatprep.subr.bf16.mxu0 0
        %914 = vmatpush2.bf16.msra.mxu0 0
        %915 = vmatprep.subr.bf16.mxu0 0
        %916 = vmatpush2.bf16.msra.mxu0 0
        %917 = vmatprep.subr.bf16.mxu0 0
        %918 = vmatpush2.bf16.msra.mxu0 0
        %919 = vmatprep.subr.bf16.mxu0 0
        %920 = vmatpush2.bf16.msra.mxu0 0
        %921 = vmatprep.subr.bf16.mxu0 0
        %922 = vmatpush2.bf16.msra.mxu0 0
        %923 = vmatprep.mubr.bf16.mxu0 0
        %924 = vmatmul.mubr.bf16.gmra.mxu0 %v657
        %v925 = vpop.f32.mrf.mxu0
        %v926 = vadd.f32 0.0, %v925
        %v927 = vpop.f32.mrf.mxu0
        %v928 = vadd.f32 0.0, %v927
        %v929 = vpop.f32.mrf.mxu0
        %v930 = vpop.f32.mrf.mxu0
        %931 = vdwg.mxu0
        %v932 = vadd.f32 %v653, %v885
        %v933 = vadd.f32 %v654, %v887
        %v934 = vadd.f32 %v655, %v926
        %v935 = vadd.f32 %v656, %v928
        %v936 = vsub.f32 0.0, %v932
        %v937 = vsub.f32 0.0, %v933
        %v938 = vsub.f32 0.0, %v934
        %v939 = vmul.f32 %v936, 1.442695
        %v940 = vpow.pop %v939
        %v941 = vmul.f32 %v937, 1.442695
        %v942 = vpow.pop %v941
        %v943 = vmul.f32 %v938, 1.442695
        %v944 = vpow.pop %v943
        %v945 = vadd.f32 %v940, 1.0
        %v946 = vadd.f32 %v942, 1.0
        %v947 = vadd.f32 %v944, 1.0
        %v948 = vrcp.pop %v945
        %v949 = vrcp.pop %v946
        %v950 = vrcp.pop %v947
        %v951 = vtanh.pop %v935
        %v952 = vmul.f32 %v949, %v649
        %v953 = vmul.f32 %v948, %v951
        %v954 = vadd.f32 %v952, %v953
        %v955 = vtanh.pop %v954
        %v956 = vmul.f32 %v950, %v955
        %s957 = sadd.s32 %s265, 1
        %v958 = vstv %s957
        %vm959 = vcmp.lt.s32.totalorder %v958, %v264
        %v960 = vsel %vm959, 1, 0
        %961 = vset.pattern.permute.xlu0 0
        %962 = vperm.xlu0 %961, %v960
        %v963 = vpop.permute.xlu0 %962
        %vm964 = vcmp.eq.s32.totalorder %v963, 1
        %v965 = vsel %vm964, %v956, 0.0
        %v967 = vcombine.high %v965, %v965
        %v969 = vunpack.c.l.s4 1966171168
        %v970 = vunpack.c.0.s8 %v969
        %v971 = vlaneseq
        %v972 = vshrl.u32 %v971, 7
        %v973 = vsub.s32 %v970, %v972
        %v974 = vrot.slane %v965, %v973
        %v976 = vunpack.c.l.s4 1966171168
        %v977 = vunpack.c.0.s8 %v976
        %v978 = vlaneseq
        %v979 = vshrl.u32 %v978, 7
        %v980 = vsub.s32 %v977, %v979
        %v981 = vrot.slane %v967, %v980
        %v982 = vcombine.high %v974, %v974
        %v983 = vcombine.high %v981, %v981
        %v985 = vunpack.c.l.s4 1966171168
        %v986 = vunpack.c.0.s8 %v985
        %v987 = vlaneseq
        %v988 = vshrl.u32 %v987, 7
        %v989 = vsub.s32 %v986, %v988
        %v990 = vrot.slane %v974, %v989
        %v992 = vunpack.c.l.s4 1966171168
        %v993 = vunpack.c.0.s8 %v992
        %v994 = vlaneseq
        %v995 = vshrl.u32 %v994, 7
        %v996 = vsub.s32 %v993, %v995
        %v997 = vrot.slane %v981, %v996
        %v999 = vunpack.c.l.s4 1966171168
        %v1000 = vunpack.c.0.s8 %v999
        %v1001 = vlaneseq
        %v1002 = vshrl.u32 %v1001, 7
        %v1003 = vsub.s32 %v1000, %v1002
        %v1004 = vrot.slane %v982, %v1003
        %v1006 = vunpack.c.l.s4 1966171168
        %v1007 = vunpack.c.0.s8 %v1006
        %v1008 = vlaneseq
        %v1009 = vshrl.u32 %v1008, 7
        %v1010 = vsub.s32 %v1007, %v1009
        %v1011 = vrot.slane %v983, %v1010
        %v1012 = vcombine.high %v990, %v990
        %v1013 = vcombine.high %v997, %v997
        %v1014 = vcombine.high %v1004, %v1004
        %v1015 = vcombine.high %v1011, %v1011
        %1024 = vst [vmem:[%s250 + $0x1] sm:$0x1] %v990
        %1025 = vst [vmem:[%s250 + $0x11] sm:$0x1] %v1004
        %1026 = vst [vmem:[%s250 + $0x21] sm:$0x1] %v1012
        %1027 = vst [vmem:[%s250 + $0x31] sm:$0x1] %v1014
        %1028 = vst [vmem:[%s250 + $0x41] sm:$0x1] %v997
        %1029 = vst [vmem:[%s250 + $0x51] sm:$0x1] %v1011
        %1030 = vst [vmem:[%s250 + $0x61] sm:$0x1] %v1013
        %1031 = vst [vmem:[%s250 + $0x71] sm:$0x1] %v1015
        %v1032 = vsel %vm964, %v956, %v648
        %v1033 = vsel %vm964, %v954, %v649
        %s1034 = scalar_lea.vmem %s224, 32 [#allocation4]
        %v1035 = vld [vmem:[%s1034] sm:$0xff]
        %v1036 = vld [vmem:[%s1034 + $0x8] sm:$0xff]
        %v1037 = vunpack.c.l.bf16 %v1035
        %v1038 = vunpack.c.h.bf16 %v1035
        %v1039 = vunpack.c.l.bf16 %v1036
        %v1040 = vunpack.c.h.bf16 %v1036
        %v1041 = vpack.c.bf16 %v1032, %v1032
        %v1042 = vld [vmem:[#allocation7] sm:$0xff]
        %v1043 = vld [vmem:[#allocation7 + $0x8] sm:$0xff]
        %v1044 = vld [vmem:[#allocation7 + $0x10] sm:$0xff]
        %v1045 = vld [vmem:[#allocation7 + $0x18] sm:$0xff]
        %v1046 = vld [vmem:[#allocation7 + $0x20] sm:$0xff]
        %v1047 = vld [vmem:[#allocation7 + $0x28] sm:$0xff]
        %v1048 = vld [vmem:[#allocation7 + $0x30] sm:$0xff]
        %v1049 = vld [vmem:[#allocation7 + $0x38] sm:$0xff]
        %v1050 = vld [vmem:[#allocation7 + $0x40] sm:$0xff]
        %v1051 = vld [vmem:[#allocation7 + $0x48] sm:$0xff]
        %v1052 = vld [vmem:[#allocation7 + $0x50] sm:$0xff]
        %v1053 = vld [vmem:[#allocation7 + $0x58] sm:$0xff]
        %v1054 = vld [vmem:[#allocation7 + $0x60] sm:$0xff]
        %v1055 = vld [vmem:[#allocation7 + $0x68] sm:$0xff]
        %v1056 = vld [vmem:[#allocation7 + $0x70] sm:$0xff]
        %v1057 = vld [vmem:[#allocation7 + $0x78] sm:$0xff]
        %v1058 = vld [vmem:[#allocation7 + $0x80] sm:$0xff]
        %v1059 = vld [vmem:[#allocation7 + $0x88] sm:$0xff]
        %v1060 = vld [vmem:[#allocation7 + $0x90] sm:$0xff]
        %v1061 = vld [vmem:[#allocation7 + $0x98] sm:$0xff]
        %v1062 = vld [vmem:[#allocation7 + $0xa0] sm:$0xff]
        %v1063 = vld [vmem:[#allocation7 + $0xa8] sm:$0xff]
        %v1064 = vld [vmem:[#allocation7 + $0xb0] sm:$0xff]
        %v1065 = vld [vmem:[#allocation7 + $0xb8] sm:$0xff]
        %v1066 = vld [vmem:[#allocation7 + $0xc0] sm:$0xff]
        %v1067 = vld [vmem:[#allocation7 + $0xc8] sm:$0xff]
        %v1068 = vld [vmem:[#allocation7 + $0xd0] sm:$0xff]
        %v1069 = vld [vmem:[#allocation7 + $0xd8] sm:$0xff]
        %v1070 = vld [vmem:[#allocation7 + $0xe0] sm:$0xff]
        %v1071 = vld [vmem:[#allocation7 + $0xe8] sm:$0xff]
        %v1072 = vld [vmem:[#allocation7 + $0xf0] sm:$0xff]
        %v1073 = vld [vmem:[#allocation7 + $0xf8] sm:$0xff]
        %v1106 = vunpack.c.l.b16 %v1042
        %v1107 = vunpack.c.h.b16 %v1042
        %v1108 = vunpack.c.l.b16 %v1043
        %v1109 = vunpack.c.h.b16 %v1043
        %v1110 = vunpack.c.l.b16 %v1044
        %v1111 = vunpack.c.h.b16 %v1044
        %v1112 = vunpack.c.l.b16 %v1045
        %v1113 = vunpack.c.h.b16 %v1045
        %v1114 = vunpack.c.l.b16 %v1046
        %v1115 = vunpack.c.h.b16 %v1046
        %v1116 = vunpack.c.l.b16 %v1047
        %v1117 = vunpack.c.h.b16 %v1047
        %v1118 = vunpack.c.l.b16 %v1048
        %v1119 = vunpack.c.h.b16 %v1048
        %v1120 = vunpack.c.l.b16 %v1049
        %v1121 = vunpack.c.h.b16 %v1049
        %v1122 = vunpack.c.l.b16 %v1050
        %v1123 = vunpack.c.h.b16 %v1050
        %v1124 = vunpack.c.l.b16 %v1051
        %v1125 = vunpack.c.h.b16 %v1051
        %v1126 = vunpack.c.l.b16 %v1052
        %v1127 = vunpack.c.h.b16 %v1052
        %v1128 = vunpack.c.l.b16 %v1053
        %v1129 = vunpack.c.h.b16 %v1053
        %v1130 = vunpack.c.l.b16 %v1054
        %v1131 = vunpack.c.h.b16 %v1054
        %v1132 = vunpack.c.l.b16 %v1055
        %v1133 = vunpack.c.h.b16 %v1055
        %v1134 = vunpack.c.l.b16 %v1056
        %v1135 = vunpack.c.h.b16 %v1056
        %v1136 = vunpack.c.l.b16 %v1057
        %v1137 = vunpack.c.h.b16 %v1057
        %v1138 = vunpack.c.l.b16 %v1058
        %v1139 = vunpack.c.h.b16 %v1058
        %v1140 = vunpack.c.l.b16 %v1059
        %v1141 = vunpack.c.h.b16 %v1059
        %v1142 = vunpack.c.l.b16 %v1060
        %v1143 = vunpack.c.h.b16 %v1060
        %v1144 = vunpack.c.l.b16 %v1061
        %v1145 = vunpack.c.h.b16 %v1061
        %v1146 = vunpack.c.l.b16 %v1062
        %v1147 = vunpack.c.h.b16 %v1062
        %v1148 = vunpack.c.l.b16 %v1063
        %v1149 = vunpack.c.h.b16 %v1063
        %v1150 = vunpack.c.l.b16 %v1064
        %v1151 = vunpack.c.h.b16 %v1064
        %v1152 = vunpack.c.l.b16 %v1065
        %v1153 = vunpack.c.h.b16 %v1065
        %v1154 = vunpack.c.l.b16 %v1066
        %v1155 = vunpack.c.h.b16 %v1066
        %v1156 = vunpack.c.l.b16 %v1067
        %v1157 = vunpack.c.h.b16 %v1067
        %v1158 = vunpack.c.l.b16 %v1068
        %v1159 = vunpack.c.h.b16 %v1068
        %v1160 = vunpack.c.l.b16 %v1069
        %v1161 = vunpack.c.h.b16 %v1069
        %v1162 = vunpack.c.l.b16 %v1070
        %v1163 = vunpack.c.h.b16 %v1070
        %v1164 = vunpack.c.l.b16 %v1071
        %v1165 = vunpack.c.h.b16 %v1071
        %v1166 = vunpack.c.l.b16 %v1072
        %v1167 = vunpack.c.h.b16 %v1072
        %v1168 = vunpack.c.l.b16 %v1073
        %v1169 = vunpack.c.h.b16 %v1073
        %v1170 = vpack.c.b16 %v1110, %v1106
        %v1171 = vpack.c.b16 %v1111, %v1107
        %v1172 = vpack.c.b16 %v1112, %v1108
        %v1173 = vpack.c.b16 %v1113, %v1109
        %v1174 = vpack.c.b16 %v1118, %v1114
        %v1175 = vpack.c.b16 %v1119, %v1115
        %v1176 = vpack.c.b16 %v1120, %v1116
        %v1177 = vpack.c.b16 %v1121, %v1117
        %v1178 = vpack.c.b16 %v1126, %v1122
        %v1179 = vpack.c.b16 %v1127, %v1123
        %v1180 = vpack.c.b16 %v1128, %v1124
        %v1181 = vpack.c.b16 %v1129, %v1125
        %v1182 = vpack.c.b16 %v1134, %v1130
        %v1183 = vpack.c.b16 %v1135, %v1131
        %v1184 = vpack.c.b16 %v1136, %v1132
        %v1185 = vpack.c.b16 %v1137, %v1133
        %v1186 = vpack.c.b16 %v1142, %v1138
        %v1187 = vpack.c.b16 %v1143, %v1139
        %v1188 = vpack.c.b16 %v1144, %v1140
        %v1189 = vpack.c.b16 %v1145, %v1141
        %v1190 = vpack.c.b16 %v1150, %v1146
        %v1191 = vpack.c.b16 %v1151, %v1147
        %v1192 = vpack.c.b16 %v1152, %v1148
        %v1193 = vpack.c.b16 %v1153, %v1149
        %v1194 = vpack.c.b16 %v1158, %v1154
        %v1195 = vpack.c.b16 %v1159, %v1155
        %v1196 = vpack.c.b16 %v1160, %v1156
        %v1197 = vpack.c.b16 %v1161, %v1157
        %v1198 = vpack.c.b16 %v1166, %v1162
        %v1199 = vpack.c.b16 %v1167, %v1163
        %v1200 = vpack.c.b16 %v1168, %v1164
        %v1201 = vpack.c.b16 %v1169, %v1165
        %1234 = vmatprep.subr.bf16.mxu0 %v1199
        %1235 = vmatpush1.bf16.msra.mxu0 %v1198
        %1236 = vmatprep.subr.bf16.mxu0 %v1195
        %1237 = vmatpush1.bf16.msra.mxu0 %v1194
        %1238 = vmatprep.subr.bf16.mxu0 %v1191
        %1239 = vmatpush1.bf16.msra.mxu0 %v1190
        %1240 = vmatprep.subr.bf16.mxu0 %v1187
        %1241 = vmatpush1.bf16.msra.mxu0 %v1186
        %1242 = vmatprep.subr.bf16.mxu0 %v1183
        %1243 = vmatpush1.bf16.msra.mxu0 %v1182
        %1244 = vmatprep.subr.bf16.mxu0 %v1179
        %1245 = vmatpush1.bf16.msra.mxu0 %v1178
        %1246 = vmatprep.subr.bf16.mxu0 %v1175
        %1247 = vmatpush1.bf16.msra.mxu0 %v1174
        %1248 = vmatprep.subr.bf16.mxu0 %v1171
        %1249 = vmatpush1.bf16.msra.mxu0 %v1170
        %1250 = vmatprep.subr.bf16.mxu0 0
        %1251 = vmatpush2.bf16.msra.mxu0 0
        %1252 = vmatprep.subr.bf16.mxu0 0
        %1253 = vmatpush2.bf16.msra.mxu0 0
        %1254 = vmatprep.subr.bf16.mxu0 0
        %1255 = vmatpush2.bf16.msra.mxu0 0
        %1256 = vmatprep.subr.bf16.mxu0 0
        %1257 = vmatpush2.bf16.msra.mxu0 0
        %1258 = vmatprep.subr.bf16.mxu0 0
        %1259 = vmatpush2.bf16.msra.mxu0 0
        %1260 = vmatprep.subr.bf16.mxu0 0
        %1261 = vmatpush2.bf16.msra.mxu0 0
        %1262 = vmatprep.subr.bf16.mxu0 0
        %1263 = vmatpush2.bf16.msra.mxu0 0
        %1264 = vmatprep.subr.bf16.mxu0 0
        %1265 = vmatpush2.bf16.msra.mxu0 0
        %1266 = vmatprep.mubr.bf16.mxu0 0
        %1267 = vmatmul.mubr.bf16.gmra.mxu0 %v1041
        %v1268 = vpop.f32.mrf.mxu0
        %v1269 = vadd.f32 0.0, %v1268
        %v1270 = vpop.f32.mrf.mxu0
        %v1271 = vadd.f32 0.0, %v1270
        %v1272 = vpop.f32.mrf.mxu0
        %v1273 = vpop.f32.mrf.mxu0
        %1274 = vdwg.mxu0
        %1275 = vmatprep.subr.bf16.mxu0 %v1201
        %1276 = vmatpush1.bf16.msra.mxu0 %v1200
        %1277 = vmatprep.subr.bf16.mxu0 %v1197
        %1278 = vmatpush1.bf16.msra.mxu0 %v1196
        %1279 = vmatprep.subr.bf16.mxu0 %v1193
        %1280 = vmatpush1.bf16.msra.mxu0 %v1192
        %1281 = vmatprep.subr.bf16.mxu0 %v1189
        %1282 = vmatpush1.bf16.msra.mxu0 %v1188
        %1283 = vmatprep.subr.bf16.mxu0 %v1185
        %1284 = vmatpush1.bf16.msra.mxu0 %v1184
        %1285 = vmatprep.subr.bf16.mxu0 %v1181
        %1286 = vmatpush1.bf16.msra.mxu0 %v1180
        %1287 = vmatprep.subr.bf16.mxu0 %v1177
        %1288 = vmatpush1.bf16.msra.mxu0 %v1176
        %1289 = vmatprep.subr.bf16.mxu0 %v1173
        %1290 = vmatpush1.bf16.msra.mxu0 %v1172
        %1291 = vmatprep.subr.bf16.mxu0 0
        %1292 = vmatpush2.bf16.msra.mxu0 0
        %1293 = vmatprep.subr.bf16.mxu0 0
        %1294 = vmatpush2.bf16.msra.mxu0 0
        %1295 = vmatprep.subr.bf16.mxu0 0
        %1296 = vmatpush2.bf16.msra.mxu0 0
        %1297 = vmatprep.subr.bf16.mxu0 0
        %1298 = vmatpush2.bf16.msra.mxu0 0
        %1299 = vmatprep.subr.bf16.mxu0 0
        %1300 = vmatpush2.bf16.msra.mxu0 0
        %1301 = vmatprep.subr.bf16.mxu0 0
        %1302 = vmatpush2.bf16.msra.mxu0 0
        %1303 = vmatprep.subr.bf16.mxu0 0
        %1304 = vmatpush2.bf16.msra.mxu0 0
        %1305 = vmatprep.subr.bf16.mxu0 0
        %1306 = vmatpush2.bf16.msra.mxu0 0
        %1307 = vmatprep.mubr.bf16.mxu0 0
        %1308 = vmatmul.mubr.bf16.gmra.mxu0 %v1041
        %v1309 = vpop.f32.mrf.mxu0
        %v1310 = vadd.f32 0.0, %v1309
        %v1311 = vpop.f32.mrf.mxu0
        %v1312 = vadd.f32 0.0, %v1311
        %v1313 = vpop.f32.mrf.mxu0
        %v1314 = vpop.f32.mrf.mxu0
        %1315 = vdwg.mxu0
        %v1316 = vadd.f32 %v1037, %v1269
        %v1317 = vadd.f32 %v1038, %v1271
        %v1318 = vadd.f32 %v1039, %v1310
        %v1319 = vadd.f32 %v1040, %v1312
        %v1320 = vsub.f32 0.0, %v1316
        %v1321 = vsub.f32 0.0, %v1317
        %v1322 = vsub.f32 0.0, %v1318
        %v1323 = vmul.f32 %v1320, 1.442695
        %v1324 = vpow.pop %v1323
        %v1325 = vmul.f32 %v1321, 1.442695
        %v1326 = vpow.pop %v1325
        %v1327 = vmul.f32 %v1322, 1.442695
        %v1328 = vpow.pop %v1327
        %v1329 = vadd.f32 %v1324, 1.0
        %v1330 = vadd.f32 %v1326, 1.0
        %v1331 = vadd.f32 %v1328, 1.0
        %v1332 = vrcp.pop %v1329
        %v1333 = vrcp.pop %v1330
        %v1334 = vrcp.pop %v1331
        %v1335 = vtanh.pop %v1319
        %v1336 = vmul.f32 %v1333, %v1033
        %v1337 = vmul.f32 %v1332, %v1335
        %v1338 = vadd.f32 %v1336, %v1337
        %v1339 = vtanh.pop %v1338
        %v1340 = vmul.f32 %v1334, %v1339
        %s1341 = sadd.s32 %s265, 2
        %v1342 = vstv %s1341
        %vm1343 = vcmp.lt.s32.totalorder %v1342, %v264
        %v1344 = vsel %vm1343, 1, 0
        %1345 = vset.pattern.permute.xlu0 0
        %1346 = vperm.xlu0 %1345, %v1344
        %v1347 = vpop.permute.xlu0 %1346
        %vm1348 = vcmp.eq.s32.totalorder %v1347, 1
        %v1349 = vsel %vm1348, %v1340, 0.0
        %v1351 = vcombine.high %v1349, %v1349
        %v1353 = vunpack.c.l.s4 1966171168
        %v1354 = vunpack.c.0.s8 %v1353
        %v1355 = vlaneseq
        %v1356 = vshrl.u32 %v1355, 7
        %v1357 = vsub.s32 %v1354, %v1356
        %v1358 = vrot.slane %v1349, %v1357
        %v1360 = vunpack.c.l.s4 1966171168
        %v1361 = vunpack.c.0.s8 %v1360
        %v1362 = vlaneseq
        %v1363 = vshrl.u32 %v1362, 7
        %v1364 = vsub.s32 %v1361, %v1363
        %v1365 = vrot.slane %v1351, %v1364
        %v1366 = vcombine.high %v1358, %v1358
        %v1367 = vcombine.high %v1365, %v1365
        %v1369 = vunpack.c.l.s4 1966171168
        %v1370 = vunpack.c.0.s8 %v1369
        %v1371 = vlaneseq
        %v1372 = vshrl.u32 %v1371, 7
        %v1373 = vsub.s32 %v1370, %v1372
        %v1374 = vrot.slane %v1358, %v1373
        %v1376 = vunpack.c.l.s4 1966171168
        %v1377 = vunpack.c.0.s8 %v1376
        %v1378 = vlaneseq
        %v1379 = vshrl.u32 %v1378, 7
        %v1380 = vsub.s32 %v1377, %v1379
        %v1381 = vrot.slane %v1365, %v1380
        %v1383 = vunpack.c.l.s4 1966171168
        %v1384 = vunpack.c.0.s8 %v1383
        %v1385 = vlaneseq
        %v1386 = vshrl.u32 %v1385, 7
        %v1387 = vsub.s32 %v1384, %v1386
        %v1388 = vrot.slane %v1366, %v1387
        %v1390 = vunpack.c.l.s4 1966171168
        %v1391 = vunpack.c.0.s8 %v1390
        %v1392 = vlaneseq
        %v1393 = vshrl.u32 %v1392, 7
        %v1394 = vsub.s32 %v1391, %v1393
        %v1395 = vrot.slane %v1367, %v1394
        %v1396 = vcombine.high %v1374, %v1374
        %v1397 = vcombine.high %v1381, %v1381
        %v1398 = vcombine.high %v1388, %v1388
        %v1399 = vcombine.high %v1395, %v1395
        %1408 = vst [vmem:[%s250 + $0x2] sm:$0x1] %v1374
        %1409 = vst [vmem:[%s250 + $0x12] sm:$0x1] %v1388
        %1410 = vst [vmem:[%s250 + $0x22] sm:$0x1] %v1396
        %1411 = vst [vmem:[%s250 + $0x32] sm:$0x1] %v1398
        %1412 = vst [vmem:[%s250 + $0x42] sm:$0x1] %v1381
        %1413 = vst [vmem:[%s250 + $0x52] sm:$0x1] %v1395
        %1414 = vst [vmem:[%s250 + $0x62] sm:$0x1] %v1397
        %1415 = vst [vmem:[%s250 + $0x72] sm:$0x1] %v1399
        %v1416 = vsel %vm1348, %v1340, %v1032
        %v1417 = vsel %vm1348, %v1338, %v1033
        %s1418 = scalar_lea.vmem %s224, 48 [#allocation4]
        %v1419 = vld [vmem:[%s1418] sm:$0xff]
        %v1420 = vld [vmem:[%s1418 + $0x8] sm:$0xff]
        %v1421 = vunpack.c.l.bf16 %v1419
        %v1422 = vunpack.c.h.bf16 %v1419
        %v1423 = vunpack.c.l.bf16 %v1420
        %v1424 = vunpack.c.h.bf16 %v1420
        %v1425 = vpack.c.bf16 %v1416, %v1416
        %v1426 = vld [vmem:[#allocation7] sm:$0xff]
        %v1427 = vld [vmem:[#allocation7 + $0x8] sm:$0xff]
        %v1428 = vld [vmem:[#allocation7 + $0x10] sm:$0xff]
        %v1429 = vld [vmem:[#allocation7 + $0x18] sm:$0xff]
        %v1430 = vld [vmem:[#allocation7 + $0x20] sm:$0xff]
        %v1431 = vld [vmem:[#allocation7 + $0x28] sm:$0xff]
        %v1432 = vld [vmem:[#allocation7 + $0x30] sm:$0xff]
        %v1433 = vld [vmem:[#allocation7 + $0x38] sm:$0xff]
        %v1434 = vld [vmem:[#allocation7 + $0x40] sm:$0xff]
        %v1435 = vld [vmem:[#allocation7 + $0x48] sm:$0xff]
        %v1436 = vld [vmem:[#allocation7 + $0x50] sm:$0xff]
        %v1437 = vld [vmem:[#allocation7 + $0x58] sm:$0xff]
        %v1438 = vld [vmem:[#allocation7 + $0x60] sm:$0xff]
        %v1439 = vld [vmem:[#allocation7 + $0x68] sm:$0xff]
        %v1440 = vld [vmem:[#allocation7 + $0x70] sm:$0xff]
        %v1441 = vld [vmem:[#allocation7 + $0x78] sm:$0xff]
        %v1442 = vld [vmem:[#allocation7 + $0x80] sm:$0xff]
        %v1443 = vld [vmem:[#allocation7 + $0x88] sm:$0xff]
        %v1444 = vld [vmem:[#allocation7 + $0x90] sm:$0xff]
        %v1445 = vld [vmem:[#allocation7 + $0x98] sm:$0xff]
        %v1446 = vld [vmem:[#allocation7 + $0xa0] sm:$0xff]
        %v1447 = vld [vmem:[#allocation7 + $0xa8] sm:$0xff]
        %v1448 = vld [vmem:[#allocation7 + $0xb0] sm:$0xff]
        %v1449 = vld [vmem:[#allocation7 + $0xb8] sm:$0xff]
        %v1450 = vld [vmem:[#allocation7 + $0xc0] sm:$0xff]
        %v1451 = vld [vmem:[#allocation7 + $0xc8] sm:$0xff]
        %v1452 = vld [vmem:[#allocation7 + $0xd0] sm:$0xff]
        %v1453 = vld [vmem:[#allocation7 + $0xd8] sm:$0xff]
        %v1454 = vld [vmem:[#allocation7 + $0xe0] sm:$0xff]
        %v1455 = vld [vmem:[#allocation7 + $0xe8] sm:$0xff]
        %v1456 = vld [vmem:[#allocation7 + $0xf0] sm:$0xff]
        %v1457 = vld [vmem:[#allocation7 + $0xf8] sm:$0xff]
        %v1490 = vunpack.c.l.b16 %v1426
        %v1491 = vunpack.c.h.b16 %v1426
        %v1492 = vunpack.c.l.b16 %v1427
        %v1493 = vunpack.c.h.b16 %v1427
        %v1494 = vunpack.c.l.b16 %v1428
        %v1495 = vunpack.c.h.b16 %v1428
        %v1496 = vunpack.c.l.b16 %v1429
        %v1497 = vunpack.c.h.b16 %v1429
        %v1498 = vunpack.c.l.b16 %v1430
        %v1499 = vunpack.c.h.b16 %v1430
        %v1500 = vunpack.c.l.b16 %v1431
        %v1501 = vunpack.c.h.b16 %v1431
        %v1502 = vunpack.c.l.b16 %v1432
        %v1503 = vunpack.c.h.b16 %v1432
        %v1504 = vunpack.c.l.b16 %v1433
        %v1505 = vunpack.c.h.b16 %v1433
        %v1506 = vunpack.c.l.b16 %v1434
        %v1507 = vunpack.c.h.b16 %v1434
        %v1508 = vunpack.c.l.b16 %v1435
        %v1509 = vunpack.c.h.b16 %v1435
        %v1510 = vunpack.c.l.b16 %v1436
        %v1511 = vunpack.c.h.b16 %v1436
        %v1512 = vunpack.c.l.b16 %v1437
        %v1513 = vunpack.c.h.b16 %v1437
        %v1514 = vunpack.c.l.b16 %v1438
        %v1515 = vunpack.c.h.b16 %v1438
        %v1516 = vunpack.c.l.b16 %v1439
        %v1517 = vunpack.c.h.b16 %v1439
        %v1518 = vunpack.c.l.b16 %v1440
        %v1519 = vunpack.c.h.b16 %v1440
        %v1520 = vunpack.c.l.b16 %v1441
        %v1521 = vunpack.c.h.b16 %v1441
        %v1522 = vunpack.c.l.b16 %v1442
        %v1523 = vunpack.c.h.b16 %v1442
        %v1524 = vunpack.c.l.b16 %v1443
        %v1525 = vunpack.c.h.b16 %v1443
        %v1526 = vunpack.c.l.b16 %v1444
        %v1527 = vunpack.c.h.b16 %v1444
        %v1528 = vunpack.c.l.b16 %v1445
        %v1529 = vunpack.c.h.b16 %v1445
        %v1530 = vunpack.c.l.b16 %v1446
        %v1531 = vunpack.c.h.b16 %v1446
        %v1532 = vunpack.c.l.b16 %v1447
        %v1533 = vunpack.c.h.b16 %v1447
        %v1534 = vunpack.c.l.b16 %v1448
        %v1535 = vunpack.c.h.b16 %v1448
        %v1536 = vunpack.c.l.b16 %v1449
        %v1537 = vunpack.c.h.b16 %v1449
        %v1538 = vunpack.c.l.b16 %v1450
        %v1539 = vunpack.c.h.b16 %v1450
        %v1540 = vunpack.c.l.b16 %v1451
        %v1541 = vunpack.c.h.b16 %v1451
        %v1542 = vunpack.c.l.b16 %v1452
        %v1543 = vunpack.c.h.b16 %v1452
        %v1544 = vunpack.c.l.b16 %v1453
        %v1545 = vunpack.c.h.b16 %v1453
        %v1546 = vunpack.c.l.b16 %v1454
        %v1547 = vunpack.c.h.b16 %v1454
        %v1548 = vunpack.c.l.b16 %v1455
        %v1549 = vunpack.c.h.b16 %v1455
        %v1550 = vunpack.c.l.b16 %v1456
        %v1551 = vunpack.c.h.b16 %v1456
        %v1552 = vunpack.c.l.b16 %v1457
        %v1553 = vunpack.c.h.b16 %v1457
        %v1554 = vpack.c.b16 %v1494, %v1490
        %v1555 = vpack.c.b16 %v1495, %v1491
        %v1556 = vpack.c.b16 %v1496, %v1492
        %v1557 = vpack.c.b16 %v1497, %v1493
        %v1558 = vpack.c.b16 %v1502, %v1498
        %v1559 = vpack.c.b16 %v1503, %v1499
        %v1560 = vpack.c.b16 %v1504, %v1500
        %v1561 = vpack.c.b16 %v1505, %v1501
        %v1562 = vpack.c.b16 %v1510, %v1506
        %v1563 = vpack.c.b16 %v1511, %v1507
        %v1564 = vpack.c.b16 %v1512, %v1508
        %v1565 = vpack.c.b16 %v1513, %v1509
        %v1566 = vpack.c.b16 %v1518, %v1514
        %v1567 = vpack.c.b16 %v1519, %v1515
        %v1568 = vpack.c.b16 %v1520, %v1516
        %v1569 = vpack.c.b16 %v1521, %v1517
        %v1570 = vpack.c.b16 %v1526, %v1522
        %v1571 = vpack.c.b16 %v1527, %v1523
        %v1572 = vpack.c.b16 %v1528, %v1524
        %v1573 = vpack.c.b16 %v1529, %v1525
        %v1574 = vpack.c.b16 %v1534, %v1530
        %v1575 = vpack.c.b16 %v1535, %v1531
        %v1576 = vpack.c.b16 %v1536, %v1532
        %v1577 = vpack.c.b16 %v1537, %v1533
        %v1578 = vpack.c.b16 %v1542, %v1538
        %v1579 = vpack.c.b16 %v1543, %v1539
        %v1580 = vpack.c.b16 %v1544, %v1540
        %v1581 = vpack.c.b16 %v1545, %v1541
        %v1582 = vpack.c.b16 %v1550, %v1546
        %v1583 = vpack.c.b16 %v1551, %v1547
        %v1584 = vpack.c.b16 %v1552, %v1548
        %v1585 = vpack.c.b16 %v1553, %v1549
        %1618 = vmatprep.subr.bf16.mxu0 %v1583
        %1619 = vmatpush1.bf16.msra.mxu0 %v1582
        %1620 = vmatprep.subr.bf16.mxu0 %v1579
        %1621 = vmatpush1.bf16.msra.mxu0 %v1578
        %1622 = vmatprep.subr.bf16.mxu0 %v1575
        %1623 = vmatpush1.bf16.msra.mxu0 %v1574
        %1624 = vmatprep.subr.bf16.mxu0 %v1571
        %1625 = vmatpush1.bf16.msra.mxu0 %v1570
        %1626 = vmatprep.subr.bf16.mxu0 %v1567
        %1627 = vmatpush1.bf16.msra.mxu0 %v1566
        %1628 = vmatprep.subr.bf16.mxu0 %v1563
        %1629 = vmatpush1.bf16.msra.mxu0 %v1562
        %1630 = vmatprep.subr.bf16.mxu0 %v1559
        %1631 = vmatpush1.bf16.msra.mxu0 %v1558
        %1632 = vmatprep.subr.bf16.mxu0 %v1555
        %1633 = vmatpush1.bf16.msra.mxu0 %v1554
        %1634 = vmatprep.subr.bf16.mxu0 0
        %1635 = vmatpush2.bf16.msra.mxu0 0
        %1636 = vmatprep.subr.bf16.mxu0 0
        %1637 = vmatpush2.bf16.msra.mxu0 0
        %1638 = vmatprep.subr.bf16.mxu0 0
        %1639 = vmatpush2.bf16.msra.mxu0 0
        %1640 = vmatprep.subr.bf16.mxu0 0
        %1641 = vmatpush2.bf16.msra.mxu0 0
        %1642 = vmatprep.subr.bf16.mxu0 0
        %1643 = vmatpush2.bf16.msra.mxu0 0
        %1644 = vmatprep.subr.bf16.mxu0 0
        %1645 = vmatpush2.bf16.msra.mxu0 0
        %1646 = vmatprep.subr.bf16.mxu0 0
        %1647 = vmatpush2.bf16.msra.mxu0 0
        %1648 = vmatprep.subr.bf16.mxu0 0
        %1649 = vmatpush2.bf16.msra.mxu0 0
        %1650 = vmatprep.mubr.bf16.mxu0 0
        %1651 = vmatmul.mubr.bf16.gmra.mxu0 %v1425
        %v1652 = vpop.f32.mrf.mxu0
        %v1653 = vadd.f32 0.0, %v1652
        %v1654 = vpop.f32.mrf.mxu0
        %v1655 = vadd.f32 0.0, %v1654
        %v1656 = vpop.f32.mrf.mxu0
        %v1657 = vpop.f32.mrf.mxu0
        %1658 = vdwg.mxu0
        %1659 = vmatprep.subr.bf16.mxu0 %v1585
        %1660 = vmatpush1.bf16.msra.mxu0 %v1584
        %1661 = vmatprep.subr.bf16.mxu0 %v1581
        %1662 = vmatpush1.bf16.msra.mxu0 %v1580
        %1663 = vmatprep.subr.bf16.mxu0 %v1577
        %1664 = vmatpush1.bf16.msra.mxu0 %v1576
        %1665 = vmatprep.subr.bf16.mxu0 %v1573
        %1666 = vmatpush1.bf16.msra.mxu0 %v1572
        %1667 = vmatprep.subr.bf16.mxu0 %v1569
        %1668 = vmatpush1.bf16.msra.mxu0 %v1568
        %1669 = vmatprep.subr.bf16.mxu0 %v1565
        %1670 = vmatpush1.bf16.msra.mxu0 %v1564
        %1671 = vmatprep.subr.bf16.mxu0 %v1561
        %1672 = vmatpush1.bf16.msra.mxu0 %v1560
        %1673 = vmatprep.subr.bf16.mxu0 %v1557
        %1674 = vmatpush1.bf16.msra.mxu0 %v1556
        %1675 = vmatprep.subr.bf16.mxu0 0
        %1676 = vmatpush2.bf16.msra.mxu0 0
        %1677 = vmatprep.subr.bf16.mxu0 0
        %1678 = vmatpush2.bf16.msra.mxu0 0
        %1679 = vmatprep.subr.bf16.mxu0 0
        %1680 = vmatpush2.bf16.msra.mxu0 0
        %1681 = vmatprep.subr.bf16.mxu0 0
        %1682 = vmatpush2.bf16.msra.mxu0 0
        %1683 = vmatprep.subr.bf16.mxu0 0
        %1684 = vmatpush2.bf16.msra.mxu0 0
        %1685 = vmatprep.subr.bf16.mxu0 0
        %1686 = vmatpush2.bf16.msra.mxu0 0
        %1687 = vmatprep.subr.bf16.mxu0 0
        %1688 = vmatpush2.bf16.msra.mxu0 0
        %1689 = vmatprep.subr.bf16.mxu0 0
        %1690 = vmatpush2.bf16.msra.mxu0 0
        %1691 = vmatprep.mubr.bf16.mxu0 0
        %1692 = vmatmul.mubr.bf16.gmra.mxu0 %v1425
        %v1693 = vpop.f32.mrf.mxu0
        %v1694 = vadd.f32 0.0, %v1693
        %v1695 = vpop.f32.mrf.mxu0
        %v1696 = vadd.f32 0.0, %v1695
        %v1697 = vpop.f32.mrf.mxu0
        %v1698 = vpop.f32.mrf.mxu0
        %1699 = vdwg.mxu0
        %v1700 = vadd.f32 %v1421, %v1653
        %v1701 = vadd.f32 %v1422, %v1655
        %v1702 = vadd.f32 %v1423, %v1694
        %v1703 = vadd.f32 %v1424, %v1696
        %v1704 = vsub.f32 0.0, %v1700
        %v1705 = vsub.f32 0.0, %v1701
        %v1706 = vsub.f32 0.0, %v1702
        %v1707 = vmul.f32 %v1704, 1.442695
        %v1708 = vpow.pop %v1707
        %v1709 = vmul.f32 %v1705, 1.442695
        %v1710 = vpow.pop %v1709
        %v1711 = vmul.f32 %v1706, 1.442695
        %v1712 = vpow.pop %v1711
        %v1713 = vadd.f32 %v1708, 1.0
        %v1714 = vadd.f32 %v1710, 1.0
        %v1715 = vadd.f32 %v1712, 1.0
        %v1716 = vrcp.pop %v1713
        %v1717 = vrcp.pop %v1714
        %v1718 = vrcp.pop %v1715
        %v1719 = vtanh.pop %v1703
        %v1720 = vmul.f32 %v1717, %v1417
        %v1721 = vmul.f32 %v1716, %v1719
        %v1722 = vadd.f32 %v1720, %v1721
        %v1723 = vtanh.pop %v1722
        %v1724 = vmul.f32 %v1718, %v1723
        %s1725 = sadd.s32 %s265, 3
        %v1726 = vstv %s1725
        %vm1727 = vcmp.lt.s32.totalorder %v1726, %v264
        %v1728 = vsel %vm1727, 1, 0
        %1729 = vset.pattern.permute.xlu0 0
        %1730 = vperm.xlu0 %1729, %v1728
        %v1731 = vpop.permute.xlu0 %1730
        %vm1732 = vcmp.eq.s32.totalorder %v1731, 1
        %v1733 = vsel %vm1732, %v1724, 0.0
        %v1735 = vcombine.high %v1733, %v1733
        %v1737 = vunpack.c.l.s4 1966171168
        %v1738 = vunpack.c.0.s8 %v1737
        %v1739 = vlaneseq
        %v1740 = vshrl.u32 %v1739, 7
        %v1741 = vsub.s32 %v1738, %v1740
        %v1742 = vrot.slane %v1733, %v1741
        %v1744 = vunpack.c.l.s4 1966171168
        %v1745 = vunpack.c.0.s8 %v1744
        %v1746 = vlaneseq
        %v1747 = vshrl.u32 %v1746, 7
        %v1748 = vsub.s32 %v1745, %v1747
        %v1749 = vrot.slane %v1735, %v1748
        %v1750 = vcombine.high %v1742, %v1742
        %v1751 = vcombine.high %v1749, %v1749
        %v1753 = vunpack.c.l.s4 1966171168
        %v1754 = vunpack.c.0.s8 %v1753
        %v1755 = vlaneseq
        %v1756 = vshrl.u32 %v1755, 7
        %v1757 = vsub.s32 %v1754, %v1756
        %v1758 = vrot.slane %v1742, %v1757
        %v1760 = vunpack.c.l.s4 1966171168
        %v1761 = vunpack.c.0.s8 %v1760
        %v1762 = vlaneseq
        %v1763 = vshrl.u32 %v1762, 7
        %v1764 = vsub.s32 %v1761, %v1763
        %v1765 = vrot.slane %v1749, %v1764
        %v1767 = vunpack.c.l.s4 1966171168
        %v1768 = vunpack.c.0.s8 %v1767
        %v1769 = vlaneseq
        %v1770 = vshrl.u32 %v1769, 7
        %v1771 = vsub.s32 %v1768, %v1770
        %v1772 = vrot.slane %v1750, %v1771
        %v1774 = vunpack.c.l.s4 1966171168
        %v1775 = vunpack.c.0.s8 %v1774
        %v1776 = vlaneseq
        %v1777 = vshrl.u32 %v1776, 7
        %v1778 = vsub.s32 %v1775, %v1777
        %v1779 = vrot.slane %v1751, %v1778
        %v1780 = vcombine.high %v1758, %v1758
        %v1781 = vcombine.high %v1765, %v1765
        %v1782 = vcombine.high %v1772, %v1772
        %v1783 = vcombine.high %v1779, %v1779
        %1792 = vst [vmem:[%s250 + $0x3] sm:$0x1] %v1758
        %1793 = vst [vmem:[%s250 + $0x13] sm:$0x1] %v1772
        %1794 = vst [vmem:[%s250 + $0x23] sm:$0x1] %v1780
        %1795 = vst [vmem:[%s250 + $0x33] sm:$0x1] %v1782
        %1796 = vst [vmem:[%s250 + $0x43] sm:$0x1] %v1765
        %1797 = vst [vmem:[%s250 + $0x53] sm:$0x1] %v1779
        %1798 = vst [vmem:[%s250 + $0x63] sm:$0x1] %v1781
        %1799 = vst [vmem:[%s250 + $0x73] sm:$0x1] %v1783
        %v1800 = vsel %vm1732, %v1724, %v1416
        %v1801 = vsel %vm1732, %v1722, %v1417
        %s1802 = scalar_lea.vmem %s224, 64 [#allocation4]
        %v1803 = vld [vmem:[%s1802] sm:$0xff]
        %v1804 = vld [vmem:[%s1802 + $0x8] sm:$0xff]
        %v1805 = vunpack.c.l.bf16 %v1803
        %v1806 = vunpack.c.h.bf16 %v1803
        %v1807 = vunpack.c.l.bf16 %v1804
        %v1808 = vunpack.c.h.bf16 %v1804
        %v1809 = vpack.c.bf16 %v1800, %v1800
        %v1810 = vld [vmem:[#allocation7] sm:$0xff]
        %v1811 = vld [vmem:[#allocation7 + $0x8] sm:$0xff]
        %v1812 = vld [vmem:[#allocation7 + $0x10] sm:$0xff]
        %v1813 = vld [vmem:[#allocation7 + $0x18] sm:$0xff]
        %v1814 = vld [vmem:[#allocation7 + $0x20] sm:$0xff]
        %v1815 = vld [vmem:[#allocation7 + $0x28] sm:$0xff]
        %v1816 = vld [vmem:[#allocation7 + $0x30] sm:$0xff]
        %v1817 = vld [vmem:[#allocation7 + $0x38] sm:$0xff]
        %v1818 = vld [vmem:[#allocation7 + $0x40] sm:$0xff]
        %v1819 = vld [vmem:[#allocation7 + $0x48] sm:$0xff]
        %v1820 = vld [vmem:[#allocation7 + $0x50] sm:$0xff]
        %v1821 = vld [vmem:[#allocation7 + $0x58] sm:$0xff]
        %v1822 = vld [vmem:[#allocation7 + $0x60] sm:$0xff]
        %v1823 = vld [vmem:[#allocation7 + $0x68] sm:$0xff]
        %v1824 = vld [vmem:[#allocation7 + $0x70] sm:$0xff]
        %v1825 = vld [vmem:[#allocation7 + $0x78] sm:$0xff]
        %v1826 = vld [vmem:[#allocation7 + $0x80] sm:$0xff]
        %v1827 = vld [vmem:[#allocation7 + $0x88] sm:$0xff]
        %v1828 = vld [vmem:[#allocation7 + $0x90] sm:$0xff]
        %v1829 = vld [vmem:[#allocation7 + $0x98] sm:$0xff]
        %v1830 = vld [vmem:[#allocation7 + $0xa0] sm:$0xff]
        %v1831 = vld [vmem:[#allocation7 + $0xa8] sm:$0xff]
        %v1832 = vld [vmem:[#allocation7 + $0xb0] sm:$0xff]
        %v1833 = vld [vmem:[#allocation7 + $0xb8] sm:$0xff]
        %v1834 = vld [vmem:[#allocation7 + $0xc0] sm:$0xff]
        %v1835 = vld [vmem:[#allocation7 + $0xc8] sm:$0xff]
        %v1836 = vld [vmem:[#allocation7 + $0xd0] sm:$0xff]
        %v1837 = vld [vmem:[#allocation7 + $0xd8] sm:$0xff]
        %v1838 = vld [vmem:[#allocation7 + $0xe0] sm:$0xff]
        %v1839 = vld [vmem:[#allocation7 + $0xe8] sm:$0xff]
        %v1840 = vld [vmem:[#allocation7 + $0xf0] sm:$0xff]
        %v1841 = vld [vmem:[#allocation7 + $0xf8] sm:$0xff]
        %v1874 = vunpack.c.l.b16 %v1810
        %v1875 = vunpack.c.h.b16 %v1810
        %v1876 = vunpack.c.l.b16 %v1811
        %v1877 = vunpack.c.h.b16 %v1811
        %v1878 = vunpack.c.l.b16 %v1812
        %v1879 = vunpack.c.h.b16 %v1812
        %v1880 = vunpack.c.l.b16 %v1813
        %v1881 = vunpack.c.h.b16 %v1813
        %v1882 = vunpack.c.l.b16 %v1814
        %v1883 = vunpack.c.h.b16 %v1814
        %v1884 = vunpack.c.l.b16 %v1815
        %v1885 = vunpack.c.h.b16 %v1815
        %v1886 = vunpack.c.l.b16 %v1816
        %v1887 = vunpack.c.h.b16 %v1816
        %v1888 = vunpack.c.l.b16 %v1817
        %v1889 = vunpack.c.h.b16 %v1817
        %v1890 = vunpack.c.l.b16 %v1818
        %v1891 = vunpack.c.h.b16 %v1818
        %v1892 = vunpack.c.l.b16 %v1819
        %v1893 = vunpack.c.h.b16 %v1819
        %v1894 = vunpack.c.l.b16 %v1820
        %v1895 = vunpack.c.h.b16 %v1820
        %v1896 = vunpack.c.l.b16 %v1821
        %v1897 = vunpack.c.h.b16 %v1821
        %v1898 = vunpack.c.l.b16 %v1822
        %v1899 = vunpack.c.h.b16 %v1822
        %v1900 = vunpack.c.l.b16 %v1823
        %v1901 = vunpack.c.h.b16 %v1823
        %v1902 = vunpack.c.l.b16 %v1824
        %v1903 = vunpack.c.h.b16 %v1824
        %v1904 = vunpack.c.l.b16 %v1825
        %v1905 = vunpack.c.h.b16 %v1825
        %v1906 = vunpack.c.l.b16 %v1826
        %v1907 = vunpack.c.h.b16 %v1826
        %v1908 = vunpack.c.l.b16 %v1827
        %v1909 = vunpack.c.h.b16 %v1827
        %v1910 = vunpack.c.l.b16 %v1828
        %v1911 = vunpack.c.h.b16 %v1828
        %v1912 = vunpack.c.l.b16 %v1829
        %v1913 = vunpack.c.h.b16 %v1829
        %v1914 = vunpack.c.l.b16 %v1830
        %v1915 = vunpack.c.h.b16 %v1830
        %v1916 = vunpack.c.l.b16 %v1831
        %v1917 = vunpack.c.h.b16 %v1831
        %v1918 = vunpack.c.l.b16 %v1832
        %v1919 = vunpack.c.h.b16 %v1832
        %v1920 = vunpack.c.l.b16 %v1833
        %v1921 = vunpack.c.h.b16 %v1833
        %v1922 = vunpack.c.l.b16 %v1834
        %v1923 = vunpack.c.h.b16 %v1834
        %v1924 = vunpack.c.l.b16 %v1835
        %v1925 = vunpack.c.h.b16 %v1835
        %v1926 = vunpack.c.l.b16 %v1836
        %v1927 = vunpack.c.h.b16 %v1836
        %v1928 = vunpack.c.l.b16 %v1837
        %v1929 = vunpack.c.h.b16 %v1837
        %v1930 = vunpack.c.l.b16 %v1838
        %v1931 = vunpack.c.h.b16 %v1838
        %v1932 = vunpack.c.l.b16 %v1839
        %v1933 = vunpack.c.h.b16 %v1839
        %v1934 = vunpack.c.l.b16 %v1840
        %v1935 = vunpack.c.h.b16 %v1840
        %v1936 = vunpack.c.l.b16 %v1841
        %v1937 = vunpack.c.h.b16 %v1841
        %v1938 = vpack.c.b16 %v1878, %v1874
        %v1939 = vpack.c.b16 %v1879, %v1875
        %v1940 = vpack.c.b16 %v1880, %v1876
        %v1941 = vpack.c.b16 %v1881, %v1877
        %v1942 = vpack.c.b16 %v1886, %v1882
        %v1943 = vpack.c.b16 %v1887, %v1883
        %v1944 = vpack.c.b16 %v1888, %v1884
        %v1945 = vpack.c.b16 %v1889, %v1885
        %v1946 = vpack.c.b16 %v1894, %v1890
        %v1947 = vpack.c.b16 %v1895, %v1891
        %v1948 = vpack.c.b16 %v1896, %v1892
        %v1949 = vpack.c.b16 %v1897, %v1893
        %v1950 = vpack.c.b16 %v1902, %v1898
        %v1951 = vpack.c.b16 %v1903, %v1899
        %v1952 = vpack.c.b16 %v1904, %v1900
        %v1953 = vpack.c.b16 %v1905, %v1901
        %v1954 = vpack.c.b16 %v1910, %v1906
        %v1955 = vpack.c.b16 %v1911, %v1907
        %v1956 = vpack.c.b16 %v1912, %v1908
        %v1957 = vpack.c.b16 %v1913, %v1909
        %v1958 = vpack.c.b16 %v1918, %v1914
        %v1959 = vpack.c.b16 %v1919, %v1915
        %v1960 = vpack.c.b16 %v1920, %v1916
        %v1961 = vpack.c.b16 %v1921, %v1917
        %v1962 = vpack.c.b16 %v1926, %v1922
        %v1963 = vpack.c.b16 %v1927, %v1923
        %v1964 = vpack.c.b16 %v1928, %v1924
        %v1965 = vpack.c.b16 %v1929, %v1925
        %v1966 = vpack.c.b16 %v1934, %v1930
        %v1967 = vpack.c.b16 %v1935, %v1931
        %v1968 = vpack.c.b16 %v1936, %v1932
        %v1969 = vpack.c.b16 %v1937, %v1933
        %2002 = vmatprep.subr.bf16.mxu0 %v1967
        %2003 = vmatpush1.bf16.msra.mxu0 %v1966
        %2004 = vmatprep.subr.bf16.mxu0 %v1963
        %2005 = vmatpush1.bf16.msra.mxu0 %v1962
        %2006 = vmatprep.subr.bf16.mxu0 %v1959
        %2007 = vmatpush1.bf16.msra.mxu0 %v1958
        %2008 = vmatprep.subr.bf16.mxu0 %v1955
        %2009 = vmatpush1.bf16.msra.mxu0 %v1954
        %2010 = vmatprep.subr.bf16.mxu0 %v1951
        %2011 = vmatpush1.bf16.msra.mxu0 %v1950
        %2012 = vmatprep.subr.bf16.mxu0 %v1947
        %2013 = vmatpush1.bf16.msra.mxu0 %v1946
        %2014 = vmatprep.subr.bf16.mxu0 %v1943
        %2015 = vmatpush1.bf16.msra.mxu0 %v1942
        %2016 = vmatprep.subr.bf16.mxu0 %v1939
        %2017 = vmatpush1.bf16.msra.mxu0 %v1938
        %2018 = vmatprep.subr.bf16.mxu0 0
        %2019 = vmatpush2.bf16.msra.mxu0 0
        %2020 = vmatprep.subr.bf16.mxu0 0
        %2021 = vmatpush2.bf16.msra.mxu0 0
        %2022 = vmatprep.subr.bf16.mxu0 0
        %2023 = vmatpush2.bf16.msra.mxu0 0
        %2024 = vmatprep.subr.bf16.mxu0 0
        %2025 = vmatpush2.bf16.msra.mxu0 0
        %2026 = vmatprep.subr.bf16.mxu0 0
        %2027 = vmatpush2.bf16.msra.mxu0 0
        %2028 = vmatprep.subr.bf16.mxu0 0
        %2029 = vmatpush2.bf16.msra.mxu0 0
        %2030 = vmatprep.subr.bf16.mxu0 0
        %2031 = vmatpush2.bf16.msra.mxu0 0
        %2032 = vmatprep.subr.bf16.mxu0 0
        %2033 = vmatpush2.bf16.msra.mxu0 0
        %2034 = vmatprep.mubr.bf16.mxu0 0
        %2035 = vmatmul.mubr.bf16.gmra.mxu0 %v1809
        %v2036 = vpop.f32.mrf.mxu0
        %v2037 = vadd.f32 0.0, %v2036
        %v2038 = vpop.f32.mrf.mxu0
        %v2039 = vadd.f32 0.0, %v2038
        %v2040 = vpop.f32.mrf.mxu0
        %v2041 = vpop.f32.mrf.mxu0
        %2042 = vdwg.mxu0
        %2043 = vmatprep.subr.bf16.mxu0 %v1969
        %2044 = vmatpush1.bf16.msra.mxu0 %v1968
        %2045 = vmatprep.subr.bf16.mxu0 %v1965
        %2046 = vmatpush1.bf16.msra.mxu0 %v1964
        %2047 = vmatprep.subr.bf16.mxu0 %v1961
        %2048 = vmatpush1.bf16.msra.mxu0 %v1960
        %2049 = vmatprep.subr.bf16.mxu0 %v1957
        %2050 = vmatpush1.bf16.msra.mxu0 %v1956
        %2051 = vmatprep.subr.bf16.mxu0 %v1953
        %2052 = vmatpush1.bf16.msra.mxu0 %v1952
        %2053 = vmatprep.subr.bf16.mxu0 %v1949
        %2054 = vmatpush1.bf16.msra.mxu0 %v1948
        %2055 = vmatprep.subr.bf16.mxu0 %v1945
        %2056 = vmatpush1.bf16.msra.mxu0 %v1944
        %2057 = vmatprep.subr.bf16.mxu0 %v1941
        %2058 = vmatpush1.bf16.msra.mxu0 %v1940
        %2059 = vmatprep.subr.bf16.mxu0 0
        %2060 = vmatpush2.bf16.msra.mxu0 0
        %2061 = vmatprep.subr.bf16.mxu0 0
        %2062 = vmatpush2.bf16.msra.mxu0 0
        %2063 = vmatprep.subr.bf16.mxu0 0
        %2064 = vmatpush2.bf16.msra.mxu0 0
        %2065 = vmatprep.subr.bf16.mxu0 0
        %2066 = vmatpush2.bf16.msra.mxu0 0
        %2067 = vmatprep.subr.bf16.mxu0 0
        %2068 = vmatpush2.bf16.msra.mxu0 0
        %2069 = vmatprep.subr.bf16.mxu0 0
        %2070 = vmatpush2.bf16.msra.mxu0 0
        %2071 = vmatprep.subr.bf16.mxu0 0
        %2072 = vmatpush2.bf16.msra.mxu0 0
        %2073 = vmatprep.subr.bf16.mxu0 0
        %2074 = vmatpush2.bf16.msra.mxu0 0
        %2075 = vmatprep.mubr.bf16.mxu0 0
        %2076 = vmatmul.mubr.bf16.gmra.mxu0 %v1809
        %v2077 = vpop.f32.mrf.mxu0
        %v2078 = vadd.f32 0.0, %v2077
        %v2079 = vpop.f32.mrf.mxu0
        %v2080 = vadd.f32 0.0, %v2079
        %v2081 = vpop.f32.mrf.mxu0
        %v2082 = vpop.f32.mrf.mxu0
        %2083 = vdwg.mxu0
        %v2084 = vadd.f32 %v1805, %v2037
        %v2085 = vadd.f32 %v1806, %v2039
        %v2086 = vadd.f32 %v1807, %v2078
        %v2087 = vadd.f32 %v1808, %v2080
        %v2088 = vsub.f32 0.0, %v2084
        %v2089 = vsub.f32 0.0, %v2085
        %v2090 = vsub.f32 0.0, %v2086
        %v2091 = vmul.f32 %v2088, 1.442695
        %v2092 = vpow.pop %v2091
        %v2093 = vmul.f32 %v2089, 1.442695
        %v2094 = vpow.pop %v2093
        %v2095 = vmul.f32 %v2090, 1.442695
        %v2096 = vpow.pop %v2095
        %v2097 = vadd.f32 %v2092, 1.0
        %v2098 = vadd.f32 %v2094, 1.0
        %v2099 = vadd.f32 %v2096, 1.0
        %v2100 = vrcp.pop %v2097
        %v2101 = vrcp.pop %v2098
        %v2102 = vrcp.pop %v2099
        %v2103 = vtanh.pop %v2087
        %v2104 = vmul.f32 %v2101, %v1801
        %v2105 = vmul.f32 %v2100, %v2103
        %v2106 = vadd.f32 %v2104, %v2105
        %v2107 = vtanh.pop %v2106
        %v2108 = vmul.f32 %v2102, %v2107
        %s2109 = sadd.s32 %s265, 4
        %v2110 = vstv %s2109
        %vm2111 = vcmp.lt.s32.totalorder %v2110, %v264
        %v2112 = vsel %vm2111, 1, 0
        %2113 = vset.pattern.permute.xlu0 0
        %2114 = vperm.xlu0 %2113, %v2112
        %v2115 = vpop.permute.xlu0 %2114
        %vm2116 = vcmp.eq.s32.totalorder %v2115, 1
        %v2117 = vsel %vm2116, %v2108, 0.0
        %v2119 = vcombine.high %v2117, %v2117
        %v2121 = vunpack.c.l.s4 1966171168
        %v2122 = vunpack.c.0.s8 %v2121
        %v2123 = vlaneseq
        %v2124 = vshrl.u32 %v2123, 7
        %v2125 = vsub.s32 %v2122, %v2124
        %v2126 = vrot.slane %v2117, %v2125
        %v2128 = vunpack.c.l.s4 1966171168
        %v2129 = vunpack.c.0.s8 %v2128
        %v2130 = vlaneseq
        %v2131 = vshrl.u32 %v2130, 7
        %v2132 = vsub.s32 %v2129, %v2131
        %v2133 = vrot.slane %v2119, %v2132
        %v2134 = vcombine.high %v2126, %v2126
        %v2135 = vcombine.high %v2133, %v2133
        %v2137 = vunpack.c.l.s4 1966171168
        %v2138 = vunpack.c.0.s8 %v2137
        %v2139 = vlaneseq
        %v2140 = vshrl.u32 %v2139, 7
        %v2141 = vsub.s32 %v2138, %v2140
        %v2142 = vrot.slane %v2126, %v2141
        %v2144 = vunpack.c.l.s4 1966171168
        %v2145 = vunpack.c.0.s8 %v2144
        %v2146 = vlaneseq
        %v2147 = vshrl.u32 %v2146, 7
        %v2148 = vsub.s32 %v2145, %v2147
        %v2149 = vrot.slane %v2133, %v2148
        %v2151 = vunpack.c.l.s4 1966171168
        %v2152 = vunpack.c.0.s8 %v2151
        %v2153 = vlaneseq
        %v2154 = vshrl.u32 %v2153, 7
        %v2155 = vsub.s32 %v2152, %v2154
        %v2156 = vrot.slane %v2134, %v2155
        %v2158 = vunpack.c.l.s4 1966171168
        %v2159 = vunpack.c.0.s8 %v2158
        %v2160 = vlaneseq
        %v2161 = vshrl.u32 %v2160, 7
        %v2162 = vsub.s32 %v2159, %v2161
        %v2163 = vrot.slane %v2135, %v2162
        %v2164 = vcombine.high %v2142, %v2142
        %v2165 = vcombine.high %v2149, %v2149
        %v2166 = vcombine.high %v2156, %v2156
        %v2167 = vcombine.high %v2163, %v2163
        %2176 = vst [vmem:[%s250 + $0x4] sm:$0x1] %v2142
        %2177 = vst [vmem:[%s250 + $0x14] sm:$0x1] %v2156
        %2178 = vst [vmem:[%s250 + $0x24] sm:$0x1] %v2164
        %2179 = vst [vmem:[%s250 + $0x34] sm:$0x1] %v2166
        %2180 = vst [vmem:[%s250 + $0x44] sm:$0x1] %v2149
        %2181 = vst [vmem:[%s250 + $0x54] sm:$0x1] %v2163
        %2182 = vst [vmem:[%s250 + $0x64] sm:$0x1] %v2165
        %2183 = vst [vmem:[%s250 + $0x74] sm:$0x1] %v2167
        %v2184 = vsel %vm2116, %v2108, %v1800
        %v2185 = vsel %vm2116, %v2106, %v1801
        %s2186 = scalar_lea.vmem %s224, 80 [#allocation4]
        %v2187 = vld [vmem:[%s2186] sm:$0xff]
        %v2188 = vld [vmem:[%s2186 + $0x8] sm:$0xff]
        %v2189 = vunpack.c.l.bf16 %v2187
        %v2190 = vunpack.c.h.bf16 %v2187
        %v2191 = vunpack.c.l.bf16 %v2188
        %v2192 = vunpack.c.h.bf16 %v2188
        %v2193 = vpack.c.bf16 %v2184, %v2184
        %v2194 = vld [vmem:[#allocation7] sm:$0xff]
        %v2195 = vld [vmem:[#allocation7 + $0x8] sm:$0xff]
        %v2196 = vld [vmem:[#allocation7 + $0x10] sm:$0xff]
        %v2197 = vld [vmem:[#allocation7 + $0x18] sm:$0xff]
        %v2198 = vld [vmem:[#allocation7 + $0x20] sm:$0xff]
        %v2199 = vld [vmem:[#allocation7 + $0x28] sm:$0xff]
        %v2200 = vld [vmem:[#allocation7 + $0x30] sm:$0xff]
        %v2201 = vld [vmem:[#allocation7 + $0x38] sm:$0xff]
        %v2202 = vld [vmem:[#allocation7 + $0x40] sm:$0xff]
        %v2203 = vld [vmem:[#allocation7 + $0x48] sm:$0xff]
        %v2204 = vld [vmem:[#allocation7 + $0x50] sm:$0xff]
        %v2205 = vld [vmem:[#allocation7 + $0x58] sm:$0xff]
        %v2206 = vld [vmem:[#allocation7 + $0x60] sm:$0xff]
        %v2207 = vld [vmem:[#allocation7 + $0x68] sm:$0xff]
        %v2208 = vld [vmem:[#allocation7 + $0x70] sm:$0xff]
        %v2209 = vld [vmem:[#allocation7 + $0x78] sm:$0xff]
        %v2210 = vld [vmem:[#allocation7 + $0x80] sm:$0xff]
        %v2211 = vld [vmem:[#allocation7 + $0x88] sm:$0xff]
        %v2212 = vld [vmem:[#allocation7 + $0x90] sm:$0xff]
        %v2213 = vld [vmem:[#allocation7 + $0x98] sm:$0xff]
        %v2214 = vld [vmem:[#allocation7 + $0xa0] sm:$0xff]
        %v2215 = vld [vmem:[#allocation7 + $0xa8] sm:$0xff]
        %v2216 = vld [vmem:[#allocation7 + $0xb0] sm:$0xff]
        %v2217 = vld [vmem:[#allocation7 + $0xb8] sm:$0xff]
        %v2218 = vld [vmem:[#allocation7 + $0xc0] sm:$0xff]
        %v2219 = vld [vmem:[#allocation7 + $0xc8] sm:$0xff]
        %v2220 = vld [vmem:[#allocation7 + $0xd0] sm:$0xff]
        %v2221 = vld [vmem:[#allocation7 + $0xd8] sm:$0xff]
        %v2222 = vld [vmem:[#allocation7 + $0xe0] sm:$0xff]
        %v2223 = vld [vmem:[#allocation7 + $0xe8] sm:$0xff]
        %v2224 = vld [vmem:[#allocation7 + $0xf0] sm:$0xff]
        %v2225 = vld [vmem:[#allocation7 + $0xf8] sm:$0xff]
        %v2258 = vunpack.c.l.b16 %v2194
        %v2259 = vunpack.c.h.b16 %v2194
        %v2260 = vunpack.c.l.b16 %v2195
        %v2261 = vunpack.c.h.b16 %v2195
        %v2262 = vunpack.c.l.b16 %v2196
        %v2263 = vunpack.c.h.b16 %v2196
        %v2264 = vunpack.c.l.b16 %v2197
        %v2265 = vunpack.c.h.b16 %v2197
        %v2266 = vunpack.c.l.b16 %v2198
        %v2267 = vunpack.c.h.b16 %v2198
        %v2268 = vunpack.c.l.b16 %v2199
        %v2269 = vunpack.c.h.b16 %v2199
        %v2270 = vunpack.c.l.b16 %v2200
        %v2271 = vunpack.c.h.b16 %v2200
        %v2272 = vunpack.c.l.b16 %v2201
        %v2273 = vunpack.c.h.b16 %v2201
        %v2274 = vunpack.c.l.b16 %v2202
        %v2275 = vunpack.c.h.b16 %v2202
        %v2276 = vunpack.c.l.b16 %v2203
        %v2277 = vunpack.c.h.b16 %v2203
        %v2278 = vunpack.c.l.b16 %v2204
        %v2279 = vunpack.c.h.b16 %v2204
        %v2280 = vunpack.c.l.b16 %v2205
        %v2281 = vunpack.c.h.b16 %v2205
        %v2282 = vunpack.c.l.b16 %v2206
        %v2283 = vunpack.c.h.b16 %v2206
        %v2284 = vunpack.c.l.b16 %v2207
        %v2285 = vunpack.c.h.b16 %v2207
        %v2286 = vunpack.c.l.b16 %v2208
        %v2287 = vunpack.c.h.b16 %v2208
        %v2288 = vunpack.c.l.b16 %v2209
        %v2289 = vunpack.c.h.b16 %v2209
        %v2290 = vunpack.c.l.b16 %v2210
        %v2291 = vunpack.c.h.b16 %v2210
        %v2292 = vunpack.c.l.b16 %v2211
        %v2293 = vunpack.c.h.b16 %v2211
        %v2294 = vunpack.c.l.b16 %v2212
        %v2295 = vunpack.c.h.b16 %v2212
        %v2296 = vunpack.c.l.b16 %v2213
        %v2297 = vunpack.c.h.b16 %v2213
        %v2298 = vunpack.c.l.b16 %v2214
        %v2299 = vunpack.c.h.b16 %v2214
        %v2300 = vunpack.c.l.b16 %v2215
        %v2301 = vunpack.c.h.b16 %v2215
        %v2302 = vunpack.c.l.b16 %v2216
        %v2303 = vunpack.c.h.b16 %v2216
        %v2304 = vunpack.c.l.b16 %v2217
        %v2305 = vunpack.c.h.b16 %v2217
        %v2306 = vunpack.c.l.b16 %v2218
        %v2307 = vunpack.c.h.b16 %v2218
        %v2308 = vunpack.c.l.b16 %v2219
        %v2309 = vunpack.c.h.b16 %v2219
        %v2310 = vunpack.c.l.b16 %v2220
        %v2311 = vunpack.c.h.b16 %v2220
        %v2312 = vunpack.c.l.b16 %v2221
        %v2313 = vunpack.c.h.b16 %v2221
        %v2314 = vunpack.c.l.b16 %v2222
        %v2315 = vunpack.c.h.b16 %v2222
        %v2316 = vunpack.c.l.b16 %v2223
        %v2317 = vunpack.c.h.b16 %v2223
        %v2318 = vunpack.c.l.b16 %v2224
        %v2319 = vunpack.c.h.b16 %v2224
        %v2320 = vunpack.c.l.b16 %v2225
        %v2321 = vunpack.c.h.b16 %v2225
        %v2322 = vpack.c.b16 %v2262, %v2258
        %v2323 = vpack.c.b16 %v2263, %v2259
        %v2324 = vpack.c.b16 %v2264, %v2260
        %v2325 = vpack.c.b16 %v2265, %v2261
        %v2326 = vpack.c.b16 %v2270, %v2266
        %v2327 = vpack.c.b16 %v2271, %v2267
        %v2328 = vpack.c.b16 %v2272, %v2268
        %v2329 = vpack.c.b16 %v2273, %v2269
        %v2330 = vpack.c.b16 %v2278, %v2274
        %v2331 = vpack.c.b16 %v2279, %v2275
        %v2332 = vpack.c.b16 %v2280, %v2276
        %v2333 = vpack.c.b16 %v2281, %v2277
        %v2334 = vpack.c.b16 %v2286, %v2282
        %v2335 = vpack.c.b16 %v2287, %v2283
        %v2336 = vpack.c.b16 %v2288, %v2284
        %v2337 = vpack.c.b16 %v2289, %v2285
        %v2338 = vpack.c.b16 %v2294, %v2290
        %v2339 = vpack.c.b16 %v2295, %v2291
        %v2340 = vpack.c.b16 %v2296, %v2292
        %v2341 = vpack.c.b16 %v2297, %v2293
        %v2342 = vpack.c.b16 %v2302, %v2298
        %v2343 = vpack.c.b16 %v2303, %v2299
        %v2344 = vpack.c.b16 %v2304, %v2300
        %v2345 = vpack.c.b16 %v2305, %v2301
        %v2346 = vpack.c.b16 %v2310, %v2306
        %v2347 = vpack.c.b16 %v2311, %v2307
        %v2348 = vpack.c.b16 %v2312, %v2308
        %v2349 = vpack.c.b16 %v2313, %v2309
        %v2350 = vpack.c.b16 %v2318, %v2314
        %v2351 = vpack.c.b16 %v2319, %v2315
        %v2352 = vpack.c.b16 %v2320, %v2316
        %v2353 = vpack.c.b16 %v2321, %v2317
        %2386 = vmatprep.subr.bf16.mxu0 %v2351
        %2387 = vmatpush1.bf16.msra.mxu0 %v2350
        %2388 = vmatprep.subr.bf16.mxu0 %v2347
        %2389 = vmatpush1.bf16.msra.mxu0 %v2346
        %2390 = vmatprep.subr.bf16.mxu0 %v2343
        %2391 = vmatpush1.bf16.msra.mxu0 %v2342
        %2392 = vmatprep.subr.bf16.mxu0 %v2339
        %2393 = vmatpush1.bf16.msra.mxu0 %v2338
        %2394 = vmatprep.subr.bf16.mxu0 %v2335
        %2395 = vmatpush1.bf16.msra.mxu0 %v2334
        %2396 = vmatprep.subr.bf16.mxu0 %v2331
        %2397 = vmatpush1.bf16.msra.mxu0 %v2330
        %2398 = vmatprep.subr.bf16.mxu0 %v2327
        %2399 = vmatpush1.bf16.msra.mxu0 %v2326
        %2400 = vmatprep.subr.bf16.mxu0 %v2323
        %2401 = vmatpush1.bf16.msra.mxu0 %v2322
        %2402 = vmatprep.subr.bf16.mxu0 0
        %2403 = vmatpush2.bf16.msra.mxu0 0
        %2404 = vmatprep.subr.bf16.mxu0 0
        %2405 = vmatpush2.bf16.msra.mxu0 0
        %2406 = vmatprep.subr.bf16.mxu0 0
        %2407 = vmatpush2.bf16.msra.mxu0 0
        %2408 = vmatprep.subr.bf16.mxu0 0
        %2409 = vmatpush2.bf16.msra.mxu0 0
        %2410 = vmatprep.subr.bf16.mxu0 0
        %2411 = vmatpush2.bf16.msra.mxu0 0
        %2412 = vmatprep.subr.bf16.mxu0 0
        %2413 = vmatpush2.bf16.msra.mxu0 0
        %2414 = vmatprep.subr.bf16.mxu0 0
        %2415 = vmatpush2.bf16.msra.mxu0 0
        %2416 = vmatprep.subr.bf16.mxu0 0
        %2417 = vmatpush2.bf16.msra.mxu0 0
        %2418 = vmatprep.mubr.bf16.mxu0 0
        %2419 = vmatmul.mubr.bf16.gmra.mxu0 %v2193
        %v2420 = vpop.f32.mrf.mxu0
        %v2421 = vadd.f32 0.0, %v2420
        %v2422 = vpop.f32.mrf.mxu0
        %v2423 = vadd.f32 0.0, %v2422
        %v2424 = vpop.f32.mrf.mxu0
        %v2425 = vpop.f32.mrf.mxu0
        %2426 = vdwg.mxu0
        %2427 = vmatprep.subr.bf16.mxu0 %v2353
        %2428 = vmatpush1.bf16.msra.mxu0 %v2352
        %2429 = vmatprep.subr.bf16.mxu0 %v2349
        %2430 = vmatpush1.bf16.msra.mxu0 %v2348
        %2431 = vmatprep.subr.bf16.mxu0 %v2345
        %2432 = vmatpush1.bf16.msra.mxu0 %v2344
        %2433 = vmatprep.subr.bf16.mxu0 %v2341
        %2434 = vmatpush1.bf16.msra.mxu0 %v2340
        %2435 = vmatprep.subr.bf16.mxu0 %v2337
        %2436 = vmatpush1.bf16.msra.mxu0 %v2336
        %2437 = vmatprep.subr.bf16.mxu0 %v2333
        %2438 = vmatpush1.bf16.msra.mxu0 %v2332
        %2439 = vmatprep.subr.bf16.mxu0 %v2329
        %2440 = vmatpush1.bf16.msra.mxu0 %v2328
        %2441 = vmatprep.subr.bf16.mxu0 %v2325
        %2442 = vmatpush1.bf16.msra.mxu0 %v2324
        %2443 = vmatprep.subr.bf16.mxu0 0
        %2444 = vmatpush2.bf16.msra.mxu0 0
        %2445 = vmatprep.subr.bf16.mxu0 0
        %2446 = vmatpush2.bf16.msra.mxu0 0
        %2447 = vmatprep.subr.bf16.mxu0 0
        %2448 = vmatpush2.bf16.msra.mxu0 0
        %2449 = vmatprep.subr.bf16.mxu0 0
        %2450 = vmatpush2.bf16.msra.mxu0 0
        %2451 = vmatprep.subr.bf16.mxu0 0
        %2452 = vmatpush2.bf16.msra.mxu0 0
        %2453 = vmatprep.subr.bf16.mxu0 0
        %2454 = vmatpush2.bf16.msra.mxu0 0
        %2455 = vmatprep.subr.bf16.mxu0 0
        %2456 = vmatpush2.bf16.msra.mxu0 0
        %2457 = vmatprep.subr.bf16.mxu0 0
        %2458 = vmatpush2.bf16.msra.mxu0 0
        %2459 = vmatprep.mubr.bf16.mxu0 0
        %2460 = vmatmul.mubr.bf16.gmra.mxu0 %v2193
        %v2461 = vpop.f32.mrf.mxu0
        %v2462 = vadd.f32 0.0, %v2461
        %v2463 = vpop.f32.mrf.mxu0
        %v2464 = vadd.f32 0.0, %v2463
        %v2465 = vpop.f32.mrf.mxu0
        %v2466 = vpop.f32.mrf.mxu0
        %2467 = vdwg.mxu0
        %v2468 = vadd.f32 %v2189, %v2421
        %v2469 = vadd.f32 %v2190, %v2423
        %v2470 = vadd.f32 %v2191, %v2462
        %v2471 = vadd.f32 %v2192, %v2464
        %v2472 = vsub.f32 0.0, %v2468
        %v2473 = vsub.f32 0.0, %v2469
        %v2474 = vsub.f32 0.0, %v2470
        %v2475 = vmul.f32 %v2472, 1.442695
        %v2476 = vpow.pop %v2475
        %v2477 = vmul.f32 %v2473, 1.442695
        %v2478 = vpow.pop %v2477
        %v2479 = vmul.f32 %v2474, 1.442695
        %v2480 = vpow.pop %v2479
        %v2481 = vadd.f32 %v2476, 1.0
        %v2482 = vadd.f32 %v2478, 1.0
        %v2483 = vadd.f32 %v2480, 1.0
        %v2484 = vrcp.pop %v2481
        %v2485 = vrcp.pop %v2482
        %v2486 = vrcp.pop %v2483
        %v2487 = vtanh.pop %v2471
        %v2488 = vmul.f32 %v2485, %v2185
        %v2489 = vmul.f32 %v2484, %v2487
        %v2490 = vadd.f32 %v2488, %v2489
        %v2491 = vtanh.pop %v2490
        %v2492 = vmul.f32 %v2486, %v2491
        %s2493 = sadd.s32 %s265, 5
        %v2494 = vstv %s2493
        %vm2495 = vcmp.lt.s32.totalorder %v2494, %v264
        %v2496 = vsel %vm2495, 1, 0
        %2497 = vset.pattern.permute.xlu0 0
        %2498 = vperm.xlu0 %2497, %v2496
        %v2499 = vpop.permute.xlu0 %2498
        %vm2500 = vcmp.eq.s32.totalorder %v2499, 1
        %v2501 = vsel %vm2500, %v2492, 0.0
        %v2503 = vcombine.high %v2501, %v2501
        %v2505 = vunpack.c.l.s4 1966171168
        %v2506 = vunpack.c.0.s8 %v2505
        %v2507 = vlaneseq
        %v2508 = vshrl.u32 %v2507, 7
        %v2509 = vsub.s32 %v2506, %v2508
        %v2510 = vrot.slane %v2501, %v2509
        %v2512 = vunpack.c.l.s4 1966171168
        %v2513 = vunpack.c.0.s8 %v2512
        %v2514 = vlaneseq
        %v2515 = vshrl.u32 %v2514, 7
        %v2516 = vsub.s32 %v2513, %v2515
        %v2517 = vrot.slane %v2503, %v2516
        %v2518 = vcombine.high %v2510, %v2510
        %v2519 = vcombine.high %v2517, %v2517
        %v2521 = vunpack.c.l.s4 1966171168
        %v2522 = vunpack.c.0.s8 %v2521
        %v2523 = vlaneseq
        %v2524 = vshrl.u32 %v2523, 7
        %v2525 = vsub.s32 %v2522, %v2524
        %v2526 = vrot.slane %v2510, %v2525
        %v2528 = vunpack.c.l.s4 1966171168
        %v2529 = vunpack.c.0.s8 %v2528
        %v2530 = vlaneseq
        %v2531 = vshrl.u32 %v2530, 7
        %v2532 = vsub.s32 %v2529, %v2531
        %v2533 = vrot.slane %v2517, %v2532
        %v2535 = vunpack.c.l.s4 1966171168
        %v2536 = vunpack.c.0.s8 %v2535
        %v2537 = vlaneseq
        %v2538 = vshrl.u32 %v2537, 7
        %v2539 = vsub.s32 %v2536, %v2538
        %v2540 = vrot.slane %v2518, %v2539
        %v2542 = vunpack.c.l.s4 1966171168
        %v2543 = vunpack.c.0.s8 %v2542
        %v2544 = vlaneseq
        %v2545 = vshrl.u32 %v2544, 7
        %v2546 = vsub.s32 %v2543, %v2545
        %v2547 = vrot.slane %v2519, %v2546
        %v2548 = vcombine.high %v2526, %v2526
        %v2549 = vcombine.high %v2533, %v2533
        %v2550 = vcombine.high %v2540, %v2540
        %v2551 = vcombine.high %v2547, %v2547
        %2560 = vst [vmem:[%s250 + $0x5] sm:$0x1] %v2526
        %2561 = vst [vmem:[%s250 + $0x15] sm:$0x1] %v2540
        %2562 = vst [vmem:[%s250 + $0x25] sm:$0x1] %v2548
        %2563 = vst [vmem:[%s250 + $0x35] sm:$0x1] %v2550
        %2564 = vst [vmem:[%s250 + $0x45] sm:$0x1] %v2533
        %2565 = vst [vmem:[%s250 + $0x55] sm:$0x1] %v2547
        %2566 = vst [vmem:[%s250 + $0x65] sm:$0x1] %v2549
        %2567 = vst [vmem:[%s250 + $0x75] sm:$0x1] %v2551
        %v2568 = vsel %vm2500, %v2492, %v2184
        %v2569 = vsel %vm2500, %v2490, %v2185
        %s2570 = scalar_lea.vmem %s224, 96 [#allocation4]
        %v2571 = vld [vmem:[%s2570] sm:$0xff]
        %v2572 = vld [vmem:[%s2570 + $0x8] sm:$0xff]
        %v2573 = vunpack.c.l.bf16 %v2571
        %v2574 = vunpack.c.h.bf16 %v2571
        %v2575 = vunpack.c.l.bf16 %v2572
        %v2576 = vunpack.c.h.bf16 %v2572
        %v2577 = vpack.c.bf16 %v2568, %v2568
        %v2578 = vld [vmem:[#allocation7] sm:$0xff]
        %v2579 = vld [vmem:[#allocation7 + $0x8] sm:$0xff]
        %v2580 = vld [vmem:[#allocation7 + $0x10] sm:$0xff]
        %v2581 = vld [vmem:[#allocation7 + $0x18] sm:$0xff]
        %v2582 = vld [vmem:[#allocation7 + $0x20] sm:$0xff]
        %v2583 = vld [vmem:[#allocation7 + $0x28] sm:$0xff]
        %v2584 = vld [vmem:[#allocation7 + $0x30] sm:$0xff]
        %v2585 = vld [vmem:[#allocation7 + $0x38] sm:$0xff]
        %v2586 = vld [vmem:[#allocation7 + $0x40] sm:$0xff]
        %v2587 = vld [vmem:[#allocation7 + $0x48] sm:$0xff]
        %v2588 = vld [vmem:[#allocation7 + $0x50] sm:$0xff]
        %v2589 = vld [vmem:[#allocation7 + $0x58] sm:$0xff]
        %v2590 = vld [vmem:[#allocation7 + $0x60] sm:$0xff]
        %v2591 = vld [vmem:[#allocation7 + $0x68] sm:$0xff]
        %v2592 = vld [vmem:[#allocation7 + $0x70] sm:$0xff]
        %v2593 = vld [vmem:[#allocation7 + $0x78] sm:$0xff]
        %v2594 = vld [vmem:[#allocation7 + $0x80] sm:$0xff]
        %v2595 = vld [vmem:[#allocation7 + $0x88] sm:$0xff]
        %v2596 = vld [vmem:[#allocation7 + $0x90] sm:$0xff]
        %v2597 = vld [vmem:[#allocation7 + $0x98] sm:$0xff]
        %v2598 = vld [vmem:[#allocation7 + $0xa0] sm:$0xff]
        %v2599 = vld [vmem:[#allocation7 + $0xa8] sm:$0xff]
        %v2600 = vld [vmem:[#allocation7 + $0xb0] sm:$0xff]
        %v2601 = vld [vmem:[#allocation7 + $0xb8] sm:$0xff]
        %v2602 = vld [vmem:[#allocation7 + $0xc0] sm:$0xff]
        %v2603 = vld [vmem:[#allocation7 + $0xc8] sm:$0xff]
        %v2604 = vld [vmem:[#allocation7 + $0xd0] sm:$0xff]
        %v2605 = vld [vmem:[#allocation7 + $0xd8] sm:$0xff]
        %v2606 = vld [vmem:[#allocation7 + $0xe0] sm:$0xff]
        %v2607 = vld [vmem:[#allocation7 + $0xe8] sm:$0xff]
        %v2608 = vld [vmem:[#allocation7 + $0xf0] sm:$0xff]
        %v2609 = vld [vmem:[#allocation7 + $0xf8] sm:$0xff]
        %v2642 = vunpack.c.l.b16 %v2578
        %v2643 = vunpack.c.h.b16 %v2578
        %v2644 = vunpack.c.l.b16 %v2579
        %v2645 = vunpack.c.h.b16 %v2579
        %v2646 = vunpack.c.l.b16 %v2580
        %v2647 = vunpack.c.h.b16 %v2580
        %v2648 = vunpack.c.l.b16 %v2581
        %v2649 = vunpack.c.h.b16 %v2581
        %v2650 = vunpack.c.l.b16 %v2582
        %v2651 = vunpack.c.h.b16 %v2582
        %v2652 = vunpack.c.l.b16 %v2583
        %v2653 = vunpack.c.h.b16 %v2583
        %v2654 = vunpack.c.l.b16 %v2584
        %v2655 = vunpack.c.h.b16 %v2584
        %v2656 = vunpack.c.l.b16 %v2585
        %v2657 = vunpack.c.h.b16 %v2585
        %v2658 = vunpack.c.l.b16 %v2586
        %v2659 = vunpack.c.h.b16 %v2586
        %v2660 = vunpack.c.l.b16 %v2587
        %v2661 = vunpack.c.h.b16 %v2587
        %v2662 = vunpack.c.l.b16 %v2588
        %v2663 = vunpack.c.h.b16 %v2588
        %v2664 = vunpack.c.l.b16 %v2589
        %v2665 = vunpack.c.h.b16 %v2589
        %v2666 = vunpack.c.l.b16 %v2590
        %v2667 = vunpack.c.h.b16 %v2590
        %v2668 = vunpack.c.l.b16 %v2591
        %v2669 = vunpack.c.h.b16 %v2591
        %v2670 = vunpack.c.l.b16 %v2592
        %v2671 = vunpack.c.h.b16 %v2592
        %v2672 = vunpack.c.l.b16 %v2593
        %v2673 = vunpack.c.h.b16 %v2593
        %v2674 = vunpack.c.l.b16 %v2594
        %v2675 = vunpack.c.h.b16 %v2594
        %v2676 = vunpack.c.l.b16 %v2595
        %v2677 = vunpack.c.h.b16 %v2595
        %v2678 = vunpack.c.l.b16 %v2596
        %v2679 = vunpack.c.h.b16 %v2596
        %v2680 = vunpack.c.l.b16 %v2597
        %v2681 = vunpack.c.h.b16 %v2597
        %v2682 = vunpack.c.l.b16 %v2598
        %v2683 = vunpack.c.h.b16 %v2598
        %v2684 = vunpack.c.l.b16 %v2599
        %v2685 = vunpack.c.h.b16 %v2599
        %v2686 = vunpack.c.l.b16 %v2600
        %v2687 = vunpack.c.h.b16 %v2600
        %v2688 = vunpack.c.l.b16 %v2601
        %v2689 = vunpack.c.h.b16 %v2601
        %v2690 = vunpack.c.l.b16 %v2602
        %v2691 = vunpack.c.h.b16 %v2602
        %v2692 = vunpack.c.l.b16 %v2603
        %v2693 = vunpack.c.h.b16 %v2603
        %v2694 = vunpack.c.l.b16 %v2604
        %v2695 = vunpack.c.h.b16 %v2604
        %v2696 = vunpack.c.l.b16 %v2605
        %v2697 = vunpack.c.h.b16 %v2605
        %v2698 = vunpack.c.l.b16 %v2606
        %v2699 = vunpack.c.h.b16 %v2606
        %v2700 = vunpack.c.l.b16 %v2607
        %v2701 = vunpack.c.h.b16 %v2607
        %v2702 = vunpack.c.l.b16 %v2608
        %v2703 = vunpack.c.h.b16 %v2608
        %v2704 = vunpack.c.l.b16 %v2609
        %v2705 = vunpack.c.h.b16 %v2609
        %v2706 = vpack.c.b16 %v2646, %v2642
        %v2707 = vpack.c.b16 %v2647, %v2643
        %v2708 = vpack.c.b16 %v2648, %v2644
        %v2709 = vpack.c.b16 %v2649, %v2645
        %v2710 = vpack.c.b16 %v2654, %v2650
        %v2711 = vpack.c.b16 %v2655, %v2651
        %v2712 = vpack.c.b16 %v2656, %v2652
        %v2713 = vpack.c.b16 %v2657, %v2653
        %v2714 = vpack.c.b16 %v2662, %v2658
        %v2715 = vpack.c.b16 %v2663, %v2659
        %v2716 = vpack.c.b16 %v2664, %v2660
        %v2717 = vpack.c.b16 %v2665, %v2661
        %v2718 = vpack.c.b16 %v2670, %v2666
        %v2719 = vpack.c.b16 %v2671, %v2667
        %v2720 = vpack.c.b16 %v2672, %v2668
        %v2721 = vpack.c.b16 %v2673, %v2669
        %v2722 = vpack.c.b16 %v2678, %v2674
        %v2723 = vpack.c.b16 %v2679, %v2675
        %v2724 = vpack.c.b16 %v2680, %v2676
        %v2725 = vpack.c.b16 %v2681, %v2677
        %v2726 = vpack.c.b16 %v2686, %v2682
        %v2727 = vpack.c.b16 %v2687, %v2683
        %v2728 = vpack.c.b16 %v2688, %v2684
        %v2729 = vpack.c.b16 %v2689, %v2685
        %v2730 = vpack.c.b16 %v2694, %v2690
        %v2731 = vpack.c.b16 %v2695, %v2691
        %v2732 = vpack.c.b16 %v2696, %v2692
        %v2733 = vpack.c.b16 %v2697, %v2693
        %v2734 = vpack.c.b16 %v2702, %v2698
        %v2735 = vpack.c.b16 %v2703, %v2699
        %v2736 = vpack.c.b16 %v2704, %v2700
        %v2737 = vpack.c.b16 %v2705, %v2701
        %2770 = vmatprep.subr.bf16.mxu0 %v2735
        %2771 = vmatpush1.bf16.msra.mxu0 %v2734
        %2772 = vmatprep.subr.bf16.mxu0 %v2731
        %2773 = vmatpush1.bf16.msra.mxu0 %v2730
        %2774 = vmatprep.subr.bf16.mxu0 %v2727
        %2775 = vmatpush1.bf16.msra.mxu0 %v2726
        %2776 = vmatprep.subr.bf16.mxu0 %v2723
        %2777 = vmatpush1.bf16.msra.mxu0 %v2722
        %2778 = vmatprep.subr.bf16.mxu0 %v2719
        %2779 = vmatpush1.bf16.msra.mxu0 %v2718
        %2780 = vmatprep.subr.bf16.mxu0 %v2715
        %2781 = vmatpush1.bf16.msra.mxu0 %v2714
        %2782 = vmatprep.subr.bf16.mxu0 %v2711
        %2783 = vmatpush1.bf16.msra.mxu0 %v2710
        %2784 = vmatprep.subr.bf16.mxu0 %v2707
        %2785 = vmatpush1.bf16.msra.mxu0 %v2706
        %2786 = vmatprep.subr.bf16.mxu0 0
        %2787 = vmatpush2.bf16.msra.mxu0 0
        %2788 = vmatprep.subr.bf16.mxu0 0
        %2789 = vmatpush2.bf16.msra.mxu0 0
        %2790 = vmatprep.subr.bf16.mxu0 0
        %2791 = vmatpush2.bf16.msra.mxu0 0
        %2792 = vmatprep.subr.bf16.mxu0 0
        %2793 = vmatpush2.bf16.msra.mxu0 0
        %2794 = vmatprep.subr.bf16.mxu0 0
        %2795 = vmatpush2.bf16.msra.mxu0 0
        %2796 = vmatprep.subr.bf16.mxu0 0
        %2797 = vmatpush2.bf16.msra.mxu0 0
        %2798 = vmatprep.subr.bf16.mxu0 0
        %2799 = vmatpush2.bf16.msra.mxu0 0
        %2800 = vmatprep.subr.bf16.mxu0 0
        %2801 = vmatpush2.bf16.msra.mxu0 0
        %2802 = vmatprep.mubr.bf16.mxu0 0
        %2803 = vmatmul.mubr.bf16.gmra.mxu0 %v2577
        %v2804 = vpop.f32.mrf.mxu0
        %v2805 = vadd.f32 0.0, %v2804
        %v2806 = vpop.f32.mrf.mxu0
        %v2807 = vadd.f32 0.0, %v2806
        %v2808 = vpop.f32.mrf.mxu0
        %v2809 = vpop.f32.mrf.mxu0
        %2810 = vdwg.mxu0
        %2811 = vmatprep.subr.bf16.mxu0 %v2737
        %2812 = vmatpush1.bf16.msra.mxu0 %v2736
        %2813 = vmatprep.subr.bf16.mxu0 %v2733
        %2814 = vmatpush1.bf16.msra.mxu0 %v2732
        %2815 = vmatprep.subr.bf16.mxu0 %v2729
        %2816 = vmatpush1.bf16.msra.mxu0 %v2728
        %2817 = vmatprep.subr.bf16.mxu0 %v2725
        %2818 = vmatpush1.bf16.msra.mxu0 %v2724
        %2819 = vmatprep.subr.bf16.mxu0 %v2721
        %2820 = vmatpush1.bf16.msra.mxu0 %v2720
        %2821 = vmatprep.subr.bf16.mxu0 %v2717
        %2822 = vmatpush1.bf16.msra.mxu0 %v2716
        %2823 = vmatprep.subr.bf16.mxu0 %v2713
        %2824 = vmatpush1.bf16.msra.mxu0 %v2712
        %2825 = vmatprep.subr.bf16.mxu0 %v2709
        %2826 = vmatpush1.bf16.msra.mxu0 %v2708
        %2827 = vmatprep.subr.bf16.mxu0 0
        %2828 = vmatpush2.bf16.msra.mxu0 0
        %2829 = vmatprep.subr.bf16.mxu0 0
        %2830 = vmatpush2.bf16.msra.mxu0 0
        %2831 = vmatprep.subr.bf16.mxu0 0
        %2832 = vmatpush2.bf16.msra.mxu0 0
        %2833 = vmatprep.subr.bf16.mxu0 0
        %2834 = vmatpush2.bf16.msra.mxu0 0
        %2835 = vmatprep.subr.bf16.mxu0 0
        %2836 = vmatpush2.bf16.msra.mxu0 0
        %2837 = vmatprep.subr.bf16.mxu0 0
        %2838 = vmatpush2.bf16.msra.mxu0 0
        %2839 = vmatprep.subr.bf16.mxu0 0
        %2840 = vmatpush2.bf16.msra.mxu0 0
        %2841 = vmatprep.subr.bf16.mxu0 0
        %2842 = vmatpush2.bf16.msra.mxu0 0
        %2843 = vmatprep.mubr.bf16.mxu0 0
        %2844 = vmatmul.mubr.bf16.gmra.mxu0 %v2577
        %v2845 = vpop.f32.mrf.mxu0
        %v2846 = vadd.f32 0.0, %v2845
        %v2847 = vpop.f32.mrf.mxu0
        %v2848 = vadd.f32 0.0, %v2847
        %v2849 = vpop.f32.mrf.mxu0
        %v2850 = vpop.f32.mrf.mxu0
        %2851 = vdwg.mxu0
        %v2852 = vadd.f32 %v2573, %v2805
        %v2853 = vadd.f32 %v2574, %v2807
        %v2854 = vadd.f32 %v2575, %v2846
        %v2855 = vadd.f32 %v2576, %v2848
        %v2856 = vsub.f32 0.0, %v2852
        %v2857 = vsub.f32 0.0, %v2853
        %v2858 = vsub.f32 0.0, %v2854
        %v2859 = vmul.f32 %v2856, 1.442695
        %v2860 = vpow.pop %v2859
        %v2861 = vmul.f32 %v2857, 1.442695
        %v2862 = vpow.pop %v2861
        %v2863 = vmul.f32 %v2858, 1.442695
        %v2864 = vpow.pop %v2863
        %v2865 = vadd.f32 %v2860, 1.0
        %v2866 = vadd.f32 %v2862, 1.0
        %v2867 = vadd.f32 %v2864, 1.0
        %v2868 = vrcp.pop %v2865
        %v2869 = vrcp.pop %v2866
        %v2870 = vrcp.pop %v2867
        %v2871 = vtanh.pop %v2855
        %v2872 = vmul.f32 %v2869, %v2569
        %v2873 = vmul.f32 %v2868, %v2871
        %v2874 = vadd.f32 %v2872, %v2873
        %v2875 = vtanh.pop %v2874
        %v2876 = vmul.f32 %v2870, %v2875
        %s2877 = sadd.s32 %s265, 6
        %v2878 = vstv %s2877
        %vm2879 = vcmp.lt.s32.totalorder %v2878, %v264
        %v2880 = vsel %vm2879, 1, 0
        %2881 = vset.pattern.permute.xlu0 0
        %2882 = vperm.xlu0 %2881, %v2880
        %v2883 = vpop.permute.xlu0 %2882
        %vm2884 = vcmp.eq.s32.totalorder %v2883, 1
        %v2885 = vsel %vm2884, %v2876, 0.0
        %v2887 = vcombine.high %v2885, %v2885
        %v2889 = vunpack.c.l.s4 1966171168
        %v2890 = vunpack.c.0.s8 %v2889
        %v2891 = vlaneseq
        %v2892 = vshrl.u32 %v2891, 7
        %v2893 = vsub.s32 %v2890, %v2892
        %v2894 = vrot.slane %v2885, %v2893
        %v2896 = vunpack.c.l.s4 1966171168
        %v2897 = vunpack.c.0.s8 %v2896
        %v2898 = vlaneseq
        %v2899 = vshrl.u32 %v2898, 7
        %v2900 = vsub.s32 %v2897, %v2899
        %v2901 = vrot.slane %v2887, %v2900
        %v2902 = vcombine.high %v2894, %v2894
        %v2903 = vcombine.high %v2901, %v2901
        %v2905 = vunpack.c.l.s4 1966171168
        %v2906 = vunpack.c.0.s8 %v2905
        %v2907 = vlaneseq
        %v2908 = vshrl.u32 %v2907, 7
        %v2909 = vsub.s32 %v2906, %v2908
        %v2910 = vrot.slane %v2894, %v2909
        %v2912 = vunpack.c.l.s4 1966171168
        %v2913 = vunpack.c.0.s8 %v2912
        %v2914 = vlaneseq
        %v2915 = vshrl.u32 %v2914, 7
        %v2916 = vsub.s32 %v2913, %v2915
        %v2917 = vrot.slane %v2901, %v2916
        %v2919 = vunpack.c.l.s4 1966171168
        %v2920 = vunpack.c.0.s8 %v2919
        %v2921 = vlaneseq
        %v2922 = vshrl.u32 %v2921, 7
        %v2923 = vsub.s32 %v2920, %v2922
        %v2924 = vrot.slane %v2902, %v2923
        %v2926 = vunpack.c.l.s4 1966171168
        %v2927 = vunpack.c.0.s8 %v2926
        %v2928 = vlaneseq
        %v2929 = vshrl.u32 %v2928, 7
        %v2930 = vsub.s32 %v2927, %v2929
        %v2931 = vrot.slane %v2903, %v2930
        %v2932 = vcombine.high %v2910, %v2910
        %v2933 = vcombine.high %v2917, %v2917
        %v2934 = vcombine.high %v2924, %v2924
        %v2935 = vcombine.high %v2931, %v2931
        %2944 = vst [vmem:[%s250 + $0x6] sm:$0x1] %v2910
        %2945 = vst [vmem:[%s250 + $0x16] sm:$0x1] %v2924
        %2946 = vst [vmem:[%s250 + $0x26] sm:$0x1] %v2932
        %2947 = vst [vmem:[%s250 + $0x36] sm:$0x1] %v2934
        %2948 = vst [vmem:[%s250 + $0x46] sm:$0x1] %v2917
        %2949 = vst [vmem:[%s250 + $0x56] sm:$0x1] %v2931
        %2950 = vst [vmem:[%s250 + $0x66] sm:$0x1] %v2933
        %2951 = vst [vmem:[%s250 + $0x76] sm:$0x1] %v2935
        %v2952 = vsel %vm2884, %v2876, %v2568
        %v2953 = vsel %vm2884, %v2874, %v2569
        %s2954 = scalar_lea.vmem %s224, 112 [#allocation4]
        %v2955 = vld [vmem:[%s2954] sm:$0xff]
        %v2956 = vld [vmem:[%s2954 + $0x8] sm:$0xff]
        %v2957 = vunpack.c.l.bf16 %v2955
        %v2958 = vunpack.c.h.bf16 %v2955
        %v2959 = vunpack.c.l.bf16 %v2956
        %v2960 = vunpack.c.h.bf16 %v2956
        %v2961 = vpack.c.bf16 %v2952, %v2952
        %v2962 = vld [vmem:[#allocation7] sm:$0xff]
        %v2963 = vld [vmem:[#allocation7 + $0x8] sm:$0xff]
        %v2964 = vld [vmem:[#allocation7 + $0x10] sm:$0xff]
        %v2965 = vld [vmem:[#allocation7 + $0x18] sm:$0xff]
        %v2966 = vld [vmem:[#allocation7 + $0x20] sm:$0xff]
        %v2967 = vld [vmem:[#allocation7 + $0x28] sm:$0xff]
        %v2968 = vld [vmem:[#allocation7 + $0x30] sm:$0xff]
        %v2969 = vld [vmem:[#allocation7 + $0x38] sm:$0xff]
        %v2970 = vld [vmem:[#allocation7 + $0x40] sm:$0xff]
        %v2971 = vld [vmem:[#allocation7 + $0x48] sm:$0xff]
        %v2972 = vld [vmem:[#allocation7 + $0x50] sm:$0xff]
        %v2973 = vld [vmem:[#allocation7 + $0x58] sm:$0xff]
        %v2974 = vld [vmem:[#allocation7 + $0x60] sm:$0xff]
        %v2975 = vld [vmem:[#allocation7 + $0x68] sm:$0xff]
        %v2976 = vld [vmem:[#allocation7 + $0x70] sm:$0xff]
        %v2977 = vld [vmem:[#allocation7 + $0x78] sm:$0xff]
        %v2978 = vld [vmem:[#allocation7 + $0x80] sm:$0xff]
        %v2979 = vld [vmem:[#allocation7 + $0x88] sm:$0xff]
        %v2980 = vld [vmem:[#allocation7 + $0x90] sm:$0xff]
        %v2981 = vld [vmem:[#allocation7 + $0x98] sm:$0xff]
        %v2982 = vld [vmem:[#allocation7 + $0xa0] sm:$0xff]
        %v2983 = vld [vmem:[#allocation7 + $0xa8] sm:$0xff]
        %v2984 = vld [vmem:[#allocation7 + $0xb0] sm:$0xff]
        %v2985 = vld [vmem:[#allocation7 + $0xb8] sm:$0xff]
        %v2986 = vld [vmem:[#allocation7 + $0xc0] sm:$0xff]
        %v2987 = vld [vmem:[#allocation7 + $0xc8] sm:$0xff]
        %v2988 = vld [vmem:[#allocation7 + $0xd0] sm:$0xff]
        %v2989 = vld [vmem:[#allocation7 + $0xd8] sm:$0xff]
        %v2990 = vld [vmem:[#allocation7 + $0xe0] sm:$0xff]
        %v2991 = vld [vmem:[#allocation7 + $0xe8] sm:$0xff]
        %v2992 = vld [vmem:[#allocation7 + $0xf0] sm:$0xff]
        %v2993 = vld [vmem:[#allocation7 + $0xf8] sm:$0xff]
        %v3026 = vunpack.c.l.b16 %v2962
        %v3027 = vunpack.c.h.b16 %v2962
        %v3028 = vunpack.c.l.b16 %v2963
        %v3029 = vunpack.c.h.b16 %v2963
        %v3030 = vunpack.c.l.b16 %v2964
        %v3031 = vunpack.c.h.b16 %v2964
        %v3032 = vunpack.c.l.b16 %v2965
        %v3033 = vunpack.c.h.b16 %v2965
        %v3034 = vunpack.c.l.b16 %v2966
        %v3035 = vunpack.c.h.b16 %v2966
        %v3036 = vunpack.c.l.b16 %v2967
        %v3037 = vunpack.c.h.b16 %v2967
        %v3038 = vunpack.c.l.b16 %v2968
        %v3039 = vunpack.c.h.b16 %v2968
        %v3040 = vunpack.c.l.b16 %v2969
        %v3041 = vunpack.c.h.b16 %v2969
        %v3042 = vunpack.c.l.b16 %v2970
        %v3043 = vunpack.c.h.b16 %v2970
        %v3044 = vunpack.c.l.b16 %v2971
        %v3045 = vunpack.c.h.b16 %v2971
        %v3046 = vunpack.c.l.b16 %v2972
        %v3047 = vunpack.c.h.b16 %v2972
        %v3048 = vunpack.c.l.b16 %v2973
        %v3049 = vunpack.c.h.b16 %v2973
        %v3050 = vunpack.c.l.b16 %v2974
        %v3051 = vunpack.c.h.b16 %v2974
        %v3052 = vunpack.c.l.b16 %v2975
        %v3053 = vunpack.c.h.b16 %v2975
        %v3054 = vunpack.c.l.b16 %v2976
        %v3055 = vunpack.c.h.b16 %v2976
        %v3056 = vunpack.c.l.b16 %v2977
        %v3057 = vunpack.c.h.b16 %v2977
        %v3058 = vunpack.c.l.b16 %v2978
        %v3059 = vunpack.c.h.b16 %v2978
        %v3060 = vunpack.c.l.b16 %v2979
        %v3061 = vunpack.c.h.b16 %v2979
        %v3062 = vunpack.c.l.b16 %v2980
        %v3063 = vunpack.c.h.b16 %v2980
        %v3064 = vunpack.c.l.b16 %v2981
        %v3065 = vunpack.c.h.b16 %v2981
        %v3066 = vunpack.c.l.b16 %v2982
        %v3067 = vunpack.c.h.b16 %v2982
        %v3068 = vunpack.c.l.b16 %v2983
        %v3069 = vunpack.c.h.b16 %v2983
        %v3070 = vunpack.c.l.b16 %v2984
        %v3071 = vunpack.c.h.b16 %v2984
        %v3072 = vunpack.c.l.b16 %v2985
        %v3073 = vunpack.c.h.b16 %v2985
        %v3074 = vunpack.c.l.b16 %v2986
        %v3075 = vunpack.c.h.b16 %v2986
        %v3076 = vunpack.c.l.b16 %v2987
        %v3077 = vunpack.c.h.b16 %v2987
        %v3078 = vunpack.c.l.b16 %v2988
        %v3079 = vunpack.c.h.b16 %v2988
        %v3080 = vunpack.c.l.b16 %v2989
        %v3081 = vunpack.c.h.b16 %v2989
        %v3082 = vunpack.c.l.b16 %v2990
        %v3083 = vunpack.c.h.b16 %v2990
        %v3084 = vunpack.c.l.b16 %v2991
        %v3085 = vunpack.c.h.b16 %v2991
        %v3086 = vunpack.c.l.b16 %v2992
        %v3087 = vunpack.c.h.b16 %v2992
        %v3088 = vunpack.c.l.b16 %v2993
        %v3089 = vunpack.c.h.b16 %v2993
        %v3090 = vpack.c.b16 %v3030, %v3026
        %v3091 = vpack.c.b16 %v3031, %v3027
        %v3092 = vpack.c.b16 %v3032, %v3028
        %v3093 = vpack.c.b16 %v3033, %v3029
        %v3094 = vpack.c.b16 %v3038, %v3034
        %v3095 = vpack.c.b16 %v3039, %v3035
        %v3096 = vpack.c.b16 %v3040, %v3036
        %v3097 = vpack.c.b16 %v3041, %v3037
        %v3098 = vpack.c.b16 %v3046, %v3042
        %v3099 = vpack.c.b16 %v3047, %v3043
        %v3100 = vpack.c.b16 %v3048, %v3044
        %v3101 = vpack.c.b16 %v3049, %v3045
        %v3102 = vpack.c.b16 %v3054, %v3050
        %v3103 = vpack.c.b16 %v3055, %v3051
        %v3104 = vpack.c.b16 %v3056, %v3052
        %v3105 = vpack.c.b16 %v3057, %v3053
        %v3106 = vpack.c.b16 %v3062, %v3058
        %v3107 = vpack.c.b16 %v3063, %v3059
        %v3108 = vpack.c.b16 %v3064, %v3060
        %v3109 = vpack.c.b16 %v3065, %v3061
        %v3110 = vpack.c.b16 %v3070, %v3066
        %v3111 = vpack.c.b16 %v3071, %v3067
        %v3112 = vpack.c.b16 %v3072, %v3068
        %v3113 = vpack.c.b16 %v3073, %v3069
        %v3114 = vpack.c.b16 %v3078, %v3074
        %v3115 = vpack.c.b16 %v3079, %v3075
        %v3116 = vpack.c.b16 %v3080, %v3076
        %v3117 = vpack.c.b16 %v3081, %v3077
        %v3118 = vpack.c.b16 %v3086, %v3082
        %v3119 = vpack.c.b16 %v3087, %v3083
        %v3120 = vpack.c.b16 %v3088, %v3084
        %v3121 = vpack.c.b16 %v3089, %v3085
        %3154 = vmatprep.subr.bf16.mxu0 %v3119
        %3155 = vmatpush1.bf16.msra.mxu0 %v3118
        %3156 = vmatprep.subr.bf16.mxu0 %v3115
        %3157 = vmatpush1.bf16.msra.mxu0 %v3114
        %3158 = vmatprep.subr.bf16.mxu0 %v3111
        %3159 = vmatpush1.bf16.msra.mxu0 %v3110
        %3160 = vmatprep.subr.bf16.mxu0 %v3107
        %3161 = vmatpush1.bf16.msra.mxu0 %v3106
        %3162 = vmatprep.subr.bf16.mxu0 %v3103
        %3163 = vmatpush1.bf16.msra.mxu0 %v3102
        %3164 = vmatprep.subr.bf16.mxu0 %v3099
        %3165 = vmatpush1.bf16.msra.mxu0 %v3098
        %3166 = vmatprep.subr.bf16.mxu0 %v3095
        %3167 = vmatpush1.bf16.msra.mxu0 %v3094
        %3168 = vmatprep.subr.bf16.mxu0 %v3091
        %3169 = vmatpush1.bf16.msra.mxu0 %v3090
        %3170 = vmatprep.subr.bf16.mxu0 0
        %3171 = vmatpush2.bf16.msra.mxu0 0
        %3172 = vmatprep.subr.bf16.mxu0 0
        %3173 = vmatpush2.bf16.msra.mxu0 0
        %3174 = vmatprep.subr.bf16.mxu0 0
        %3175 = vmatpush2.bf16.msra.mxu0 0
        %3176 = vmatprep.subr.bf16.mxu0 0
        %3177 = vmatpush2.bf16.msra.mxu0 0
        %3178 = vmatprep.subr.bf16.mxu0 0
        %3179 = vmatpush2.bf16.msra.mxu0 0
        %3180 = vmatprep.subr.bf16.mxu0 0
        %3181 = vmatpush2.bf16.msra.mxu0 0
        %3182 = vmatprep.subr.bf16.mxu0 0
        %3183 = vmatpush2.bf16.msra.mxu0 0
        %3184 = vmatprep.subr.bf16.mxu0 0
        %3185 = vmatpush2.bf16.msra.mxu0 0
        %3186 = vmatprep.mubr.bf16.mxu0 0
        %3187 = vmatmul.mubr.bf16.gmra.mxu0 %v2961
        %v3188 = vpop.f32.mrf.mxu0
        %v3189 = vadd.f32 0.0, %v3188
        %v3190 = vpop.f32.mrf.mxu0
        %v3191 = vadd.f32 0.0, %v3190
        %v3192 = vpop.f32.mrf.mxu0
        %v3193 = vpop.f32.mrf.mxu0
        %3194 = vdwg.mxu0
        %3195 = vmatprep.subr.bf16.mxu0 %v3121
        %3196 = vmatpush1.bf16.msra.mxu0 %v3120
        %3197 = vmatprep.subr.bf16.mxu0 %v3117
        %3198 = vmatpush1.bf16.msra.mxu0 %v3116
        %3199 = vmatprep.subr.bf16.mxu0 %v3113
        %3200 = vmatpush1.bf16.msra.mxu0 %v3112
        %3201 = vmatprep.subr.bf16.mxu0 %v3109
        %3202 = vmatpush1.bf16.msra.mxu0 %v3108
        %3203 = vmatprep.subr.bf16.mxu0 %v3105
        %3204 = vmatpush1.bf16.msra.mxu0 %v3104
        %3205 = vmatprep.subr.bf16.mxu0 %v3101
        %3206 = vmatpush1.bf16.msra.mxu0 %v3100
        %3207 = vmatprep.subr.bf16.mxu0 %v3097
        %3208 = vmatpush1.bf16.msra.mxu0 %v3096
        %3209 = vmatprep.subr.bf16.mxu0 %v3093
        %3210 = vmatpush1.bf16.msra.mxu0 %v3092
        %3211 = vmatprep.subr.bf16.mxu0 0
        %3212 = vmatpush2.bf16.msra.mxu0 0
        %3213 = vmatprep.subr.bf16.mxu0 0
        %3214 = vmatpush2.bf16.msra.mxu0 0
        %3215 = vmatprep.subr.bf16.mxu0 0
        %3216 = vmatpush2.bf16.msra.mxu0 0
        %3217 = vmatprep.subr.bf16.mxu0 0
        %3218 = vmatpush2.bf16.msra.mxu0 0
        %3219 = vmatprep.subr.bf16.mxu0 0
        %3220 = vmatpush2.bf16.msra.mxu0 0
        %3221 = vmatprep.subr.bf16.mxu0 0
        %3222 = vmatpush2.bf16.msra.mxu0 0
        %3223 = vmatprep.subr.bf16.mxu0 0
        %3224 = vmatpush2.bf16.msra.mxu0 0
        %3225 = vmatprep.subr.bf16.mxu0 0
        %3226 = vmatpush2.bf16.msra.mxu0 0
        %3227 = vmatprep.mubr.bf16.mxu0 0
        %3228 = vmatmul.mubr.bf16.gmra.mxu0 %v2961
        %v3229 = vpop.f32.mrf.mxu0
        %v3230 = vadd.f32 0.0, %v3229
        %v3231 = vpop.f32.mrf.mxu0
        %v3232 = vadd.f32 0.0, %v3231
        %v3233 = vpop.f32.mrf.mxu0
        %v3234 = vpop.f32.mrf.mxu0
        %3235 = vdwg.mxu0
        %v3236 = vadd.f32 %v2957, %v3189
        %v3237 = vadd.f32 %v2958, %v3191
        %v3238 = vadd.f32 %v2959, %v3230
        %v3239 = vadd.f32 %v2960, %v3232
        %v3240 = vsub.f32 0.0, %v3236
        %v3241 = vsub.f32 0.0, %v3237
        %v3242 = vsub.f32 0.0, %v3238
        %v3243 = vmul.f32 %v3240, 1.442695
        %v3244 = vpow.pop %v3243
        %v3245 = vmul.f32 %v3241, 1.442695
        %v3246 = vpow.pop %v3245
        %v3247 = vmul.f32 %v3242, 1.442695
        %v3248 = vpow.pop %v3247
        %v3249 = vadd.f32 %v3244, 1.0
        %v3250 = vadd.f32 %v3246, 1.0
        %v3251 = vadd.f32 %v3248, 1.0
        %v3252 = vrcp.pop %v3249
        %v3253 = vrcp.pop %v3250
        %v3254 = vrcp.pop %v3251
        %v3255 = vtanh.pop %v3239
        %v3256 = vmul.f32 %v3253, %v2953
        %v3257 = vmul.f32 %v3252, %v3255
        %v3258 = vadd.f32 %v3256, %v3257
        %v3259 = vtanh.pop %v3258
        %v3260 = vmul.f32 %v3254, %v3259
        %s3261 = sadd.s32 %s265, 7
        %v3262 = vstv %s3261
        %vm3263 = vcmp.lt.s32.totalorder %v3262, %v264
        %v3264 = vsel %vm3263, 1, 0
        %3265 = vset.pattern.permute.xlu0 0
        %3266 = vperm.xlu0 %3265, %v3264
        %v3267 = vpop.permute.xlu0 %3266
        %vm3268 = vcmp.eq.s32.totalorder %v3267, 1
        %v3269 = vsel %vm3268, %v3260, 0.0
        %v3271 = vcombine.high %v3269, %v3269
        %v3273 = vunpack.c.l.s4 1966171168
        %v3274 = vunpack.c.0.s8 %v3273
        %v3275 = vlaneseq
        %v3276 = vshrl.u32 %v3275, 7
        %v3277 = vsub.s32 %v3274, %v3276
        %v3278 = vrot.slane %v3269, %v3277
        %v3280 = vunpack.c.l.s4 1966171168
        %v3281 = vunpack.c.0.s8 %v3280
        %v3282 = vlaneseq
        %v3283 = vshrl.u32 %v3282, 7
        %v3284 = vsub.s32 %v3281, %v3283
        %v3285 = vrot.slane %v3271, %v3284
        %v3286 = vcombine.high %v3278, %v3278
        %v3287 = vcombine.high %v3285, %v3285
        %v3289 = vunpack.c.l.s4 1966171168
        %v3290 = vunpack.c.0.s8 %v3289
        %v3291 = vlaneseq
        %v3292 = vshrl.u32 %v3291, 7
        %v3293 = vsub.s32 %v3290, %v3292
        %v3294 = vrot.slane %v3278, %v3293
        %v3296 = vunpack.c.l.s4 1966171168
        %v3297 = vunpack.c.0.s8 %v3296
        %v3298 = vlaneseq
        %v3299 = vshrl.u32 %v3298, 7
        %v3300 = vsub.s32 %v3297, %v3299
        %v3301 = vrot.slane %v3285, %v3300
        %v3303 = vunpack.c.l.s4 1966171168
        %v3304 = vunpack.c.0.s8 %v3303
        %v3305 = vlaneseq
        %v3306 = vshrl.u32 %v3305, 7
        %v3307 = vsub.s32 %v3304, %v3306
        %v3308 = vrot.slane %v3286, %v3307
        %v3310 = vunpack.c.l.s4 1966171168
        %v3311 = vunpack.c.0.s8 %v3310
        %v3312 = vlaneseq
        %v3313 = vshrl.u32 %v3312, 7
        %v3314 = vsub.s32 %v3311, %v3313
        %v3315 = vrot.slane %v3287, %v3314
        %v3316 = vcombine.high %v3294, %v3294
        %v3317 = vcombine.high %v3301, %v3301
        %v3318 = vcombine.high %v3308, %v3308
        %v3319 = vcombine.high %v3315, %v3315
        %3328 = vst [vmem:[%s250 + $0x7] sm:$0x1] %v3294
        %3329 = vst [vmem:[%s250 + $0x17] sm:$0x1] %v3308
        %3330 = vst [vmem:[%s250 + $0x27] sm:$0x1] %v3316
        %3331 = vst [vmem:[%s250 + $0x37] sm:$0x1] %v3318
        %3332 = vst [vmem:[%s250 + $0x47] sm:$0x1] %v3301
        %3333 = vst [vmem:[%s250 + $0x57] sm:$0x1] %v3315
        %3334 = vst [vmem:[%s250 + $0x67] sm:$0x1] %v3317
        %3335 = vst [vmem:[%s250 + $0x77] sm:$0x1] %v3319
        %v3336 = vsel %vm3268, %v3260, %v2952
        %v3337 = vsel %vm3268, %v3258, %v2953
        %s3338 = scalar_lea.vmem %s224, 128 [#allocation4]
        %v3339 = vld [vmem:[%s3338] sm:$0xff]
        %v3340 = vld [vmem:[%s3338 + $0x8] sm:$0xff]
        %v3341 = vunpack.c.l.bf16 %v3339
        %v3342 = vunpack.c.h.bf16 %v3339
        %v3343 = vunpack.c.l.bf16 %v3340
        %v3344 = vunpack.c.h.bf16 %v3340
        %v3345 = vpack.c.bf16 %v3336, %v3336
        %v3346 = vld [vmem:[#allocation7] sm:$0xff]
        %v3347 = vld [vmem:[#allocation7 + $0x8] sm:$0xff]
        %v3348 = vld [vmem:[#allocation7 + $0x10] sm:$0xff]
        %v3349 = vld [vmem:[#allocation7 + $0x18] sm:$0xff]
        %v3350 = vld [vmem:[#allocation7 + $0x20] sm:$0xff]
        %v3351 = vld [vmem:[#allocation7 + $0x28] sm:$0xff]
        %v3352 = vld [vmem:[#allocation7 + $0x30] sm:$0xff]
        %v3353 = vld [vmem:[#allocation7 + $0x38] sm:$0xff]
        %v3354 = vld [vmem:[#allocation7 + $0x40] sm:$0xff]
        %v3355 = vld [vmem:[#allocation7 + $0x48] sm:$0xff]
        %v3356 = vld [vmem:[#allocation7 + $0x50] sm:$0xff]
        %v3357 = vld [vmem:[#allocation7 + $0x58] sm:$0xff]
        %v3358 = vld [vmem:[#allocation7 + $0x60] sm:$0xff]
        %v3359 = vld [vmem:[#allocation7 + $0x68] sm:$0xff]
        %v3360 = vld [vmem:[#allocation7 + $0x70] sm:$0xff]
        %v3361 = vld [vmem:[#allocation7 + $0x78] sm:$0xff]
        %v3362 = vld [vmem:[#allocation7 + $0x80] sm:$0xff]
        %v3363 = vld [vmem:[#allocation7 + $0x88] sm:$0xff]
        %v3364 = vld [vmem:[#allocation7 + $0x90] sm:$0xff]
        %v3365 = vld [vmem:[#allocation7 + $0x98] sm:$0xff]
        %v3366 = vld [vmem:[#allocation7 + $0xa0] sm:$0xff]
        %v3367 = vld [vmem:[#allocation7 + $0xa8] sm:$0xff]
        %v3368 = vld [vmem:[#allocation7 + $0xb0] sm:$0xff]
        %v3369 = vld [vmem:[#allocation7 + $0xb8] sm:$0xff]
        %v3370 = vld [vmem:[#allocation7 + $0xc0] sm:$0xff]
        %v3371 = vld [vmem:[#allocation7 + $0xc8] sm:$0xff]
        %v3372 = vld [vmem:[#allocation7 + $0xd0] sm:$0xff]
        %v3373 = vld [vmem:[#allocation7 + $0xd8] sm:$0xff]
        %v3374 = vld [vmem:[#allocation7 + $0xe0] sm:$0xff]
        %v3375 = vld [vmem:[#allocation7 + $0xe8] sm:$0xff]
        %v3376 = vld [vmem:[#allocation7 + $0xf0] sm:$0xff]
        %v3377 = vld [vmem:[#allocation7 + $0xf8] sm:$0xff]
        %v3410 = vunpack.c.l.b16 %v3346
        %v3411 = vunpack.c.h.b16 %v3346
        %v3412 = vunpack.c.l.b16 %v3347
        %v3413 = vunpack.c.h.b16 %v3347
        %v3414 = vunpack.c.l.b16 %v3348
        %v3415 = vunpack.c.h.b16 %v3348
        %v3416 = vunpack.c.l.b16 %v3349
        %v3417 = vunpack.c.h.b16 %v3349
        %v3418 = vunpack.c.l.b16 %v3350
        %v3419 = vunpack.c.h.b16 %v3350
        %v3420 = vunpack.c.l.b16 %v3351
        %v3421 = vunpack.c.h.b16 %v3351
        %v3422 = vunpack.c.l.b16 %v3352
        %v3423 = vunpack.c.h.b16 %v3352
        %v3424 = vunpack.c.l.b16 %v3353
        %v3425 = vunpack.c.h.b16 %v3353
        %v3426 = vunpack.c.l.b16 %v3354
        %v3427 = vunpack.c.h.b16 %v3354
        %v3428 = vunpack.c.l.b16 %v3355
        %v3429 = vunpack.c.h.b16 %v3355
        %v3430 = vunpack.c.l.b16 %v3356
        %v3431 = vunpack.c.h.b16 %v3356
        %v3432 = vunpack.c.l.b16 %v3357
        %v3433 = vunpack.c.h.b16 %v3357
        %v3434 = vunpack.c.l.b16 %v3358
        %v3435 = vunpack.c.h.b16 %v3358
        %v3436 = vunpack.c.l.b16 %v3359
        %v3437 = vunpack.c.h.b16 %v3359
        %v3438 = vunpack.c.l.b16 %v3360
        %v3439 = vunpack.c.h.b16 %v3360
        %v3440 = vunpack.c.l.b16 %v3361
        %v3441 = vunpack.c.h.b16 %v3361
        %v3442 = vunpack.c.l.b16 %v3362
        %v3443 = vunpack.c.h.b16 %v3362
        %v3444 = vunpack.c.l.b16 %v3363
        %v3445 = vunpack.c.h.b16 %v3363
        %v3446 = vunpack.c.l.b16 %v3364
        %v3447 = vunpack.c.h.b16 %v3364
        %v3448 = vunpack.c.l.b16 %v3365
        %v3449 = vunpack.c.h.b16 %v3365
        %v3450 = vunpack.c.l.b16 %v3366
        %v3451 = vunpack.c.h.b16 %v3366
        %v3452 = vunpack.c.l.b16 %v3367
        %v3453 = vunpack.c.h.b16 %v3367
        %v3454 = vunpack.c.l.b16 %v3368
        %v3455 = vunpack.c.h.b16 %v3368
        %v3456 = vunpack.c.l.b16 %v3369
        %v3457 = vunpack.c.h.b16 %v3369
        %v3458 = vunpack.c.l.b16 %v3370
        %v3459 = vunpack.c.h.b16 %v3370
        %v3460 = vunpack.c.l.b16 %v3371
        %v3461 = vunpack.c.h.b16 %v3371
        %v3462 = vunpack.c.l.b16 %v3372
        %v3463 = vunpack.c.h.b16 %v3372
        %v3464 = vunpack.c.l.b16 %v3373
        %v3465 = vunpack.c.h.b16 %v3373
        %v3466 = vunpack.c.l.b16 %v3374
        %v3467 = vunpack.c.h.b16 %v3374
        %v3468 = vunpack.c.l.b16 %v3375
        %v3469 = vunpack.c.h.b16 %v3375
        %v3470 = vunpack.c.l.b16 %v3376
        %v3471 = vunpack.c.h.b16 %v3376
        %v3472 = vunpack.c.l.b16 %v3377
        %v3473 = vunpack.c.h.b16 %v3377
        %v3474 = vpack.c.b16 %v3414, %v3410
        %v3475 = vpack.c.b16 %v3415, %v3411
        %v3476 = vpack.c.b16 %v3416, %v3412
        %v3477 = vpack.c.b16 %v3417, %v3413
        %v3478 = vpack.c.b16 %v3422, %v3418
        %v3479 = vpack.c.b16 %v3423, %v3419
        %v3480 = vpack.c.b16 %v3424, %v3420
        %v3481 = vpack.c.b16 %v3425, %v3421
        %v3482 = vpack.c.b16 %v3430, %v3426
        %v3483 = vpack.c.b16 %v3431, %v3427
        %v3484 = vpack.c.b16 %v3432, %v3428
        %v3485 = vpack.c.b16 %v3433, %v3429
        %v3486 = vpack.c.b16 %v3438, %v3434
        %v3487 = vpack.c.b16 %v3439, %v3435
        %v3488 = vpack.c.b16 %v3440, %v3436
        %v3489 = vpack.c.b16 %v3441, %v3437
        %v3490 = vpack.c.b16 %v3446, %v3442
        %v3491 = vpack.c.b16 %v3447, %v3443
        %v3492 = vpack.c.b16 %v3448, %v3444
        %v3493 = vpack.c.b16 %v3449, %v3445
        %v3494 = vpack.c.b16 %v3454, %v3450
        %v3495 = vpack.c.b16 %v3455, %v3451
        %v3496 = vpack.c.b16 %v3456, %v3452
        %v3497 = vpack.c.b16 %v3457, %v3453
        %v3498 = vpack.c.b16 %v3462, %v3458
        %v3499 = vpack.c.b16 %v3463, %v3459
        %v3500 = vpack.c.b16 %v3464, %v3460
        %v3501 = vpack.c.b16 %v3465, %v3461
        %v3502 = vpack.c.b16 %v3470, %v3466
        %v3503 = vpack.c.b16 %v3471, %v3467
        %v3504 = vpack.c.b16 %v3472, %v3468
        %v3505 = vpack.c.b16 %v3473, %v3469
        %3538 = vmatprep.subr.bf16.mxu0 %v3503
        %3539 = vmatpush1.bf16.msra.mxu0 %v3502
        %3540 = vmatprep.subr.bf16.mxu0 %v3499
        %3541 = vmatpush1.bf16.msra.mxu0 %v3498
        %3542 = vmatprep.subr.bf16.mxu0 %v3495
        %3543 = vmatpush1.bf16.msra.mxu0 %v3494
        %3544 = vmatprep.subr.bf16.mxu0 %v3491
        %3545 = vmatpush1.bf16.msra.mxu0 %v3490
        %3546 = vmatprep.subr.bf16.mxu0 %v3487
        %3547 = vmatpush1.bf16.msra.mxu0 %v3486
        %3548 = vmatprep.subr.bf16.mxu0 %v3483
        %3549 = vmatpush1.bf16.msra.mxu0 %v3482
        %3550 = vmatprep.subr.bf16.mxu0 %v3479
        %3551 = vmatpush1.bf16.msra.mxu0 %v3478
        %3552 = vmatprep.subr.bf16.mxu0 %v3475
        %3553 = vmatpush1.bf16.msra.mxu0 %v3474
        %3554 = vmatprep.subr.bf16.mxu0 0
        %3555 = vmatpush2.bf16.msra.mxu0 0
        %3556 = vmatprep.subr.bf16.mxu0 0
        %3557 = vmatpush2.bf16.msra.mxu0 0
        %3558 = vmatprep.subr.bf16.mxu0 0
        %3559 = vmatpush2.bf16.msra.mxu0 0
        %3560 = vmatprep.subr.bf16.mxu0 0
        %3561 = vmatpush2.bf16.msra.mxu0 0
        %3562 = vmatprep.subr.bf16.mxu0 0
        %3563 = vmatpush2.bf16.msra.mxu0 0
        %3564 = vmatprep.subr.bf16.mxu0 0
        %3565 = vmatpush2.bf16.msra.mxu0 0
        %3566 = vmatprep.subr.bf16.mxu0 0
        %3567 = vmatpush2.bf16.msra.mxu0 0
        %3568 = vmatprep.subr.bf16.mxu0 0
        %3569 = vmatpush2.bf16.msra.mxu0 0
        %3570 = vmatprep.mubr.bf16.mxu0 0
        %3571 = vmatmul.mubr.bf16.gmra.mxu0 %v3345
        %v3572 = vpop.f32.mrf.mxu0
        %v3573 = vadd.f32 0.0, %v3572
        %v3574 = vpop.f32.mrf.mxu0
        %v3575 = vadd.f32 0.0, %v3574
        %v3576 = vpop.f32.mrf.mxu0
        %v3577 = vpop.f32.mrf.mxu0
        %3578 = vdwg.mxu0
        %3579 = vmatprep.subr.bf16.mxu0 %v3505
        %3580 = vmatpush1.bf16.msra.mxu0 %v3504
        %3581 = vmatprep.subr.bf16.mxu0 %v3501
        %3582 = vmatpush1.bf16.msra.mxu0 %v3500
        %3583 = vmatprep.subr.bf16.mxu0 %v3497
        %3584 = vmatpush1.bf16.msra.mxu0 %v3496
        %3585 = vmatprep.subr.bf16.mxu0 %v3493
        %3586 = vmatpush1.bf16.msra.mxu0 %v3492
        %3587 = vmatprep.subr.bf16.mxu0 %v3489
        %3588 = vmatpush1.bf16.msra.mxu0 %v3488
        %3589 = vmatprep.subr.bf16.mxu0 %v3485
        %3590 = vmatpush1.bf16.msra.mxu0 %v3484
        %3591 = vmatprep.subr.bf16.mxu0 %v3481
        %3592 = vmatpush1.bf16.msra.mxu0 %v3480
        %3593 = vmatprep.subr.bf16.mxu0 %v3477
        %3594 = vmatpush1.bf16.msra.mxu0 %v3476
        %3595 = vmatprep.subr.bf16.mxu0 0
        %3596 = vmatpush2.bf16.msra.mxu0 0
        %3597 = vmatprep.subr.bf16.mxu0 0
        %3598 = vmatpush2.bf16.msra.mxu0 0
        %3599 = vmatprep.subr.bf16.mxu0 0
        %3600 = vmatpush2.bf16.msra.mxu0 0
        %3601 = vmatprep.subr.bf16.mxu0 0
        %3602 = vmatpush2.bf16.msra.mxu0 0
        %3603 = vmatprep.subr.bf16.mxu0 0
        %3604 = vmatpush2.bf16.msra.mxu0 0
        %3605 = vmatprep.subr.bf16.mxu0 0
        %3606 = vmatpush2.bf16.msra.mxu0 0
        %3607 = vmatprep.subr.bf16.mxu0 0
        %3608 = vmatpush2.bf16.msra.mxu0 0
        %3609 = vmatprep.subr.bf16.mxu0 0
        %3610 = vmatpush2.bf16.msra.mxu0 0
        %3611 = vmatprep.mubr.bf16.mxu0 0
        %3612 = vmatmul.mubr.bf16.gmra.mxu0 %v3345
        %v3613 = vpop.f32.mrf.mxu0
        %v3614 = vadd.f32 0.0, %v3613
        %v3615 = vpop.f32.mrf.mxu0
        %v3616 = vadd.f32 0.0, %v3615
        %v3617 = vpop.f32.mrf.mxu0
        %v3618 = vpop.f32.mrf.mxu0
        %3619 = vdwg.mxu0
        %v3620 = vadd.f32 %v3341, %v3573
        %v3621 = vadd.f32 %v3342, %v3575
        %v3622 = vadd.f32 %v3343, %v3614
        %v3623 = vadd.f32 %v3344, %v3616
        %v3624 = vsub.f32 0.0, %v3620
        %v3625 = vsub.f32 0.0, %v3621
        %v3626 = vsub.f32 0.0, %v3622
        %v3627 = vmul.f32 %v3624, 1.442695
        %v3628 = vpow.pop %v3627
        %v3629 = vmul.f32 %v3625, 1.442695
        %v3630 = vpow.pop %v3629
        %v3631 = vmul.f32 %v3626, 1.442695
        %v3632 = vpow.pop %v3631
        %v3633 = vadd.f32 %v3628, 1.0
        %v3634 = vadd.f32 %v3630, 1.0
        %v3635 = vadd.f32 %v3632, 1.0
        %v3636 = vrcp.pop %v3633
        %v3637 = vrcp.pop %v3634
        %v3638 = vrcp.pop %v3635
        %v3639 = vtanh.pop %v3623
        %v3640 = vmul.f32 %v3637, %v3337
        %v3641 = vmul.f32 %v3636, %v3639
        %v3642 = vadd.f32 %v3640, %v3641
        %v3643 = vtanh.pop %v3642
        %v3644 = vmul.f32 %v3638, %v3643
        %s3645 = sadd.s32 %s265, 8
        %v3646 = vstv %s3645
        %vm3647 = vcmp.lt.s32.totalorder %v3646, %v264
        %v3648 = vsel %vm3647, 1, 0
        %3649 = vset.pattern.permute.xlu0 0
        %3650 = vperm.xlu0 %3649, %v3648
        %v3651 = vpop.permute.xlu0 %3650
        %vm3652 = vcmp.eq.s32.totalorder %v3651, 1
        %v3653 = vsel %vm3652, %v3644, 0.0
        %v3655 = vcombine.high %v3653, %v3653
        %v3657 = vunpack.c.l.s4 1966171168
        %v3658 = vunpack.c.0.s8 %v3657
        %v3659 = vlaneseq
        %v3660 = vshrl.u32 %v3659, 7
        %v3661 = vsub.s32 %v3658, %v3660
        %v3662 = vrot.slane %v3653, %v3661
        %v3664 = vunpack.c.l.s4 1966171168
        %v3665 = vunpack.c.0.s8 %v3664
        %v3666 = vlaneseq
        %v3667 = vshrl.u32 %v3666, 7
        %v3668 = vsub.s32 %v3665, %v3667
        %v3669 = vrot.slane %v3655, %v3668
        %v3670 = vcombine.high %v3662, %v3662
        %v3671 = vcombine.high %v3669, %v3669
        %v3673 = vunpack.c.l.s4 1966171168
        %v3674 = vunpack.c.0.s8 %v3673
        %v3675 = vlaneseq
        %v3676 = vshrl.u32 %v3675, 7
        %v3677 = vsub.s32 %v3674, %v3676
        %v3678 = vrot.slane %v3662, %v3677
        %v3680 = vunpack.c.l.s4 1966171168
        %v3681 = vunpack.c.0.s8 %v3680
        %v3682 = vlaneseq
        %v3683 = vshrl.u32 %v3682, 7
        %v3684 = vsub.s32 %v3681, %v3683
        %v3685 = vrot.slane %v3669, %v3684
        %v3687 = vunpack.c.l.s4 1966171168
        %v3688 = vunpack.c.0.s8 %v3687
        %v3689 = vlaneseq
        %v3690 = vshrl.u32 %v3689, 7
        %v3691 = vsub.s32 %v3688, %v3690
        %v3692 = vrot.slane %v3670, %v3691
        %v3694 = vunpack.c.l.s4 1966171168
        %v3695 = vunpack.c.0.s8 %v3694
        %v3696 = vlaneseq
        %v3697 = vshrl.u32 %v3696, 7
        %v3698 = vsub.s32 %v3695, %v3697
        %v3699 = vrot.slane %v3671, %v3698
        %v3700 = vcombine.high %v3678, %v3678
        %v3701 = vcombine.high %v3685, %v3685
        %v3702 = vcombine.high %v3692, %v3692
        %v3703 = vcombine.high %v3699, %v3699
        %3712 = vst [vmem:[%s250 + $0x8] sm:$0x1] %v3678
        %3713 = vst [vmem:[%s250 + $0x18] sm:$0x1] %v3692
        %3714 = vst [vmem:[%s250 + $0x28] sm:$0x1] %v3700
        %3715 = vst [vmem:[%s250 + $0x38] sm:$0x1] %v3702
        %3716 = vst [vmem:[%s250 + $0x48] sm:$0x1] %v3685
        %3717 = vst [vmem:[%s250 + $0x58] sm:$0x1] %v3699
        %3718 = vst [vmem:[%s250 + $0x68] sm:$0x1] %v3701
        %3719 = vst [vmem:[%s250 + $0x78] sm:$0x1] %v3703
        %v3720 = vsel %vm3652, %v3644, %v3336
        %v3721 = vsel %vm3652, %v3642, %v3337
        %s3722 = scalar_lea.vmem %s224, 144 [#allocation4]
        %v3723 = vld [vmem:[%s3722] sm:$0xff]
        %v3724 = vld [vmem:[%s3722 + $0x8] sm:$0xff]
        %v3725 = vunpack.c.l.bf16 %v3723
        %v3726 = vunpack.c.h.bf16 %v3723
        %v3727 = vunpack.c.l.bf16 %v3724
        %v3728 = vunpack.c.h.bf16 %v3724
        %v3729 = vpack.c.bf16 %v3720, %v3720
        %v3730 = vld [vmem:[#allocation7] sm:$0xff]
        %v3731 = vld [vmem:[#allocation7 + $0x8] sm:$0xff]
        %v3732 = vld [vmem:[#allocation7 + $0x10] sm:$0xff]
        %v3733 = vld [vmem:[#allocation7 + $0x18] sm:$0xff]
        %v3734 = vld [vmem:[#allocation7 + $0x20] sm:$0xff]
        %v3735 = vld [vmem:[#allocation7 + $0x28] sm:$0xff]
        %v3736 = vld [vmem:[#allocation7 + $0x30] sm:$0xff]
        %v3737 = vld [vmem:[#allocation7 + $0x38] sm:$0xff]
        %v3738 = vld [vmem:[#allocation7 + $0x40] sm:$0xff]
        %v3739 = vld [vmem:[#allocation7 + $0x48] sm:$0xff]
        %v3740 = vld [vmem:[#allocation7 + $0x50] sm:$0xff]
        %v3741 = vld [vmem:[#allocation7 + $0x58] sm:$0xff]
        %v3742 = vld [vmem:[#allocation7 + $0x60] sm:$0xff]
        %v3743 = vld [vmem:[#allocation7 + $0x68] sm:$0xff]
        %v3744 = vld [vmem:[#allocation7 + $0x70] sm:$0xff]
        %v3745 = vld [vmem:[#allocation7 + $0x78] sm:$0xff]
        %v3746 = vld [vmem:[#allocation7 + $0x80] sm:$0xff]
        %v3747 = vld [vmem:[#allocation7 + $0x88] sm:$0xff]
        %v3748 = vld [vmem:[#allocation7 + $0x90] sm:$0xff]
        %v3749 = vld [vmem:[#allocation7 + $0x98] sm:$0xff]
        %v3750 = vld [vmem:[#allocation7 + $0xa0] sm:$0xff]
        %v3751 = vld [vmem:[#allocation7 + $0xa8] sm:$0xff]
        %v3752 = vld [vmem:[#allocation7 + $0xb0] sm:$0xff]
        %v3753 = vld [vmem:[#allocation7 + $0xb8] sm:$0xff]
        %v3754 = vld [vmem:[#allocation7 + $0xc0] sm:$0xff]
        %v3755 = vld [vmem:[#allocation7 + $0xc8] sm:$0xff]
        %v3756 = vld [vmem:[#allocation7 + $0xd0] sm:$0xff]
        %v3757 = vld [vmem:[#allocation7 + $0xd8] sm:$0xff]
        %v3758 = vld [vmem:[#allocation7 + $0xe0] sm:$0xff]
        %v3759 = vld [vmem:[#allocation7 + $0xe8] sm:$0xff]
        %v3760 = vld [vmem:[#allocation7 + $0xf0] sm:$0xff]
        %v3761 = vld [vmem:[#allocation7 + $0xf8] sm:$0xff]
        %v3794 = vunpack.c.l.b16 %v3730
        %v3795 = vunpack.c.h.b16 %v3730
        %v3796 = vunpack.c.l.b16 %v3731
        %v3797 = vunpack.c.h.b16 %v3731
        %v3798 = vunpack.c.l.b16 %v3732
        %v3799 = vunpack.c.h.b16 %v3732
        %v3800 = vunpack.c.l.b16 %v3733
        %v3801 = vunpack.c.h.b16 %v3733
        %v3802 = vunpack.c.l.b16 %v3734
        %v3803 = vunpack.c.h.b16 %v3734
        %v3804 = vunpack.c.l.b16 %v3735
        %v3805 = vunpack.c.h.b16 %v3735
        %v3806 = vunpack.c.l.b16 %v3736
        %v3807 = vunpack.c.h.b16 %v3736
        %v3808 = vunpack.c.l.b16 %v3737
        %v3809 = vunpack.c.h.b16 %v3737
        %v3810 = vunpack.c.l.b16 %v3738
        %v3811 = vunpack.c.h.b16 %v3738
        %v3812 = vunpack.c.l.b16 %v3739
        %v3813 = vunpack.c.h.b16 %v3739
        %v3814 = vunpack.c.l.b16 %v3740
        %v3815 = vunpack.c.h.b16 %v3740
        %v3816 = vunpack.c.l.b16 %v3741
        %v3817 = vunpack.c.h.b16 %v3741
        %v3818 = vunpack.c.l.b16 %v3742
        %v3819 = vunpack.c.h.b16 %v3742
        %v3820 = vunpack.c.l.b16 %v3743
        %v3821 = vunpack.c.h.b16 %v3743
        %v3822 = vunpack.c.l.b16 %v3744
        %v3823 = vunpack.c.h.b16 %v3744
        %v3824 = vunpack.c.l.b16 %v3745
        %v3825 = vunpack.c.h.b16 %v3745
        %v3826 = vunpack.c.l.b16 %v3746
        %v3827 = vunpack.c.h.b16 %v3746
        %v3828 = vunpack.c.l.b16 %v3747
        %v3829 = vunpack.c.h.b16 %v3747
        %v3830 = vunpack.c.l.b16 %v3748
        %v3831 = vunpack.c.h.b16 %v3748
        %v3832 = vunpack.c.l.b16 %v3749
        %v3833 = vunpack.c.h.b16 %v3749
        %v3834 = vunpack.c.l.b16 %v3750
        %v3835 = vunpack.c.h.b16 %v3750
        %v3836 = vunpack.c.l.b16 %v3751
        %v3837 = vunpack.c.h.b16 %v3751
        %v3838 = vunpack.c.l.b16 %v3752
        %v3839 = vunpack.c.h.b16 %v3752
        %v3840 = vunpack.c.l.b16 %v3753
        %v3841 = vunpack.c.h.b16 %v3753
        %v3842 = vunpack.c.l.b16 %v3754
        %v3843 = vunpack.c.h.b16 %v3754
        %v3844 = vunpack.c.l.b16 %v3755
        %v3845 = vunpack.c.h.b16 %v3755
        %v3846 = vunpack.c.l.b16 %v3756
        %v3847 = vunpack.c.h.b16 %v3756
        %v3848 = vunpack.c.l.b16 %v3757
        %v3849 = vunpack.c.h.b16 %v3757
        %v3850 = vunpack.c.l.b16 %v3758
        %v3851 = vunpack.c.h.b16 %v3758
        %v3852 = vunpack.c.l.b16 %v3759
        %v3853 = vunpack.c.h.b16 %v3759
        %v3854 = vunpack.c.l.b16 %v3760
        %v3855 = vunpack.c.h.b16 %v3760
        %v3856 = vunpack.c.l.b16 %v3761
        %v3857 = vunpack.c.h.b16 %v3761
        %v3858 = vpack.c.b16 %v3798, %v3794
        %v3859 = vpack.c.b16 %v3799, %v3795
        %v3860 = vpack.c.b16 %v3800, %v3796
        %v3861 = vpack.c.b16 %v3801, %v3797
        %v3862 = vpack.c.b16 %v3806, %v3802
        %v3863 = vpack.c.b16 %v3807, %v3803
        %v3864 = vpack.c.b16 %v3808, %v3804
        %v3865 = vpack.c.b16 %v3809, %v3805
        %v3866 = vpack.c.b16 %v3814, %v3810
        %v3867 = vpack.c.b16 %v3815, %v3811
        %v3868 = vpack.c.b16 %v3816, %v3812
        %v3869 = vpack.c.b16 %v3817, %v3813
        %v3870 = vpack.c.b16 %v3822, %v3818
        %v3871 = vpack.c.b16 %v3823, %v3819
        %v3872 = vpack.c.b16 %v3824, %v3820
        %v3873 = vpack.c.b16 %v3825, %v3821
        %v3874 = vpack.c.b16 %v3830, %v3826
        %v3875 = vpack.c.b16 %v3831, %v3827
        %v3876 = vpack.c.b16 %v3832, %v3828
        %v3877 = vpack.c.b16 %v3833, %v3829
        %v3878 = vpack.c.b16 %v3838, %v3834
        %v3879 = vpack.c.b16 %v3839, %v3835
        %v3880 = vpack.c.b16 %v3840, %v3836
        %v3881 = vpack.c.b16 %v3841, %v3837
        %v3882 = vpack.c.b16 %v3846, %v3842
        %v3883 = vpack.c.b16 %v3847, %v3843
        %v3884 = vpack.c.b16 %v3848, %v3844
        %v3885 = vpack.c.b16 %v3849, %v3845
        %v3886 = vpack.c.b16 %v3854, %v3850
        %v3887 = vpack.c.b16 %v3855, %v3851
        %v3888 = vpack.c.b16 %v3856, %v3852
        %v3889 = vpack.c.b16 %v3857, %v3853
        %3922 = vmatprep.subr.bf16.mxu0 %v3887
        %3923 = vmatpush1.bf16.msra.mxu0 %v3886
        %3924 = vmatprep.subr.bf16.mxu0 %v3883
        %3925 = vmatpush1.bf16.msra.mxu0 %v3882
        %3926 = vmatprep.subr.bf16.mxu0 %v3879
        %3927 = vmatpush1.bf16.msra.mxu0 %v3878
        %3928 = vmatprep.subr.bf16.mxu0 %v3875
        %3929 = vmatpush1.bf16.msra.mxu0 %v3874
        %3930 = vmatprep.subr.bf16.mxu0 %v3871
        %3931 = vmatpush1.bf16.msra.mxu0 %v3870
        %3932 = vmatprep.subr.bf16.mxu0 %v3867
        %3933 = vmatpush1.bf16.msra.mxu0 %v3866
        %3934 = vmatprep.subr.bf16.mxu0 %v3863
        %3935 = vmatpush1.bf16.msra.mxu0 %v3862
        %3936 = vmatprep.subr.bf16.mxu0 %v3859
        %3937 = vmatpush1.bf16.msra.mxu0 %v3858
        %3938 = vmatprep.subr.bf16.mxu0 0
        %3939 = vmatpush2.bf16.msra.mxu0 0
        %3940 = vmatprep.subr.bf16.mxu0 0
        %3941 = vmatpush2.bf16.msra.mxu0 0
        %3942 = vmatprep.subr.bf16.mxu0 0
        %3943 = vmatpush2.bf16.msra.mxu0 0
        %3944 = vmatprep.subr.bf16.mxu0 0
        %3945 = vmatpush2.bf16.msra.mxu0 0
        %3946 = vmatprep.subr.bf16.mxu0 0
        %3947 = vmatpush2.bf16.msra.mxu0 0
        %3948 = vmatprep.subr.bf16.mxu0 0
        %3949 = vmatpush2.bf16.msra.mxu0 0
        %3950 = vmatprep.subr.bf16.mxu0 0
        %3951 = vmatpush2.bf16.msra.mxu0 0
        %3952 = vmatprep.subr.bf16.mxu0 0
        %3953 = vmatpush2.bf16.msra.mxu0 0
        %3954 = vmatprep.mubr.bf16.mxu0 0
        %3955 = vmatmul.mubr.bf16.gmra.mxu0 %v3729
        %v3956 = vpop.f32.mrf.mxu0
        %v3957 = vadd.f32 0.0, %v3956
        %v3958 = vpop.f32.mrf.mxu0
        %v3959 = vadd.f32 0.0, %v3958
        %v3960 = vpop.f32.mrf.mxu0
        %v3961 = vpop.f32.mrf.mxu0
        %3962 = vdwg.mxu0
        %3963 = vmatprep.subr.bf16.mxu0 %v3889
        %3964 = vmatpush1.bf16.msra.mxu0 %v3888
        %3965 = vmatprep.subr.bf16.mxu0 %v3885
        %3966 = vmatpush1.bf16.msra.mxu0 %v3884
        %3967 = vmatprep.subr.bf16.mxu0 %v3881
        %3968 = vmatpush1.bf16.msra.mxu0 %v3880
        %3969 = vmatprep.subr.bf16.mxu0 %v3877
        %3970 = vmatpush1.bf16.msra.mxu0 %v3876
        %3971 = vmatprep.subr.bf16.mxu0 %v3873
        %3972 = vmatpush1.bf16.msra.mxu0 %v3872
        %3973 = vmatprep.subr.bf16.mxu0 %v3869
        %3974 = vmatpush1.bf16.msra.mxu0 %v3868
        %3975 = vmatprep.subr.bf16.mxu0 %v3865
        %3976 = vmatpush1.bf16.msra.mxu0 %v3864
        %3977 = vmatprep.subr.bf16.mxu0 %v3861
        %3978 = vmatpush1.bf16.msra.mxu0 %v3860
        %3979 = vmatprep.subr.bf16.mxu0 0
        %3980 = vmatpush2.bf16.msra.mxu0 0
        %3981 = vmatprep.subr.bf16.mxu0 0
        %3982 = vmatpush2.bf16.msra.mxu0 0
        %3983 = vmatprep.subr.bf16.mxu0 0
        %3984 = vmatpush2.bf16.msra.mxu0 0
        %3985 = vmatprep.subr.bf16.mxu0 0
        %3986 = vmatpush2.bf16.msra.mxu0 0
        %3987 = vmatprep.subr.bf16.mxu0 0
        %3988 = vmatpush2.bf16.msra.mxu0 0
        %3989 = vmatprep.subr.bf16.mxu0 0
        %3990 = vmatpush2.bf16.msra.mxu0 0
        %3991 = vmatprep.subr.bf16.mxu0 0
        %3992 = vmatpush2.bf16.msra.mxu0 0
        %3993 = vmatprep.subr.bf16.mxu0 0
        %3994 = vmatpush2.bf16.msra.mxu0 0
        %3995 = vmatprep.mubr.bf16.mxu0 0
        %3996 = vmatmul.mubr.bf16.gmra.mxu0 %v3729
        %v3997 = vpop.f32.mrf.mxu0
        %v3998 = vadd.f32 0.0, %v3997
        %v3999 = vpop.f32.mrf.mxu0
        %v4000 = vadd.f32 0.0, %v3999
        %v4001 = vpop.f32.mrf.mxu0
        %v4002 = vpop.f32.mrf.mxu0
        %4003 = vdwg.mxu0
        %v4004 = vadd.f32 %v3725, %v3957
        %v4005 = vadd.f32 %v3726, %v3959
        %v4006 = vadd.f32 %v3727, %v3998
        %v4007 = vadd.f32 %v3728, %v4000
        %v4008 = vsub.f32 0.0, %v4004
        %v4009 = vsub.f32 0.0, %v4005
        %v4010 = vsub.f32 0.0, %v4006
        %v4011 = vmul.f32 %v4008, 1.442695
        %v4012 = vpow.pop %v4011
        %v4013 = vmul.f32 %v4009, 1.442695
        %v4014 = vpow.pop %v4013
        %v4015 = vmul.f32 %v4010, 1.442695
        %v4016 = vpow.pop %v4015
        %v4017 = vadd.f32 %v4012, 1.0
        %v4018 = vadd.f32 %v4014, 1.0
        %v4019 = vadd.f32 %v4016, 1.0
        %v4020 = vrcp.pop %v4017
        %v4021 = vrcp.pop %v4018
        %v4022 = vrcp.pop %v4019
        %v4023 = vtanh.pop %v4007
        %v4024 = vmul.f32 %v4021, %v3721
        %v4025 = vmul.f32 %v4020, %v4023
        %v4026 = vadd.f32 %v4024, %v4025
        %v4027 = vtanh.pop %v4026
        %v4028 = vmul.f32 %v4022, %v4027
        %s4029 = sadd.s32 %s265, 9
        %v4030 = vstv %s4029
        %vm4031 = vcmp.lt.s32.totalorder %v4030, %v264
        %v4032 = vsel %vm4031, 1, 0
        %4033 = vset.pattern.permute.xlu0 0
        %4034 = vperm.xlu0 %4033, %v4032
        %v4035 = vpop.permute.xlu0 %4034
        %vm4036 = vcmp.eq.s32.totalorder %v4035, 1
        %v4037 = vsel %vm4036, %v4028, 0.0
        %v4039 = vcombine.high %v4037, %v4037
        %v4041 = vunpack.c.l.s4 1966171168
        %v4042 = vunpack.c.0.s8 %v4041
        %v4043 = vlaneseq
        %v4044 = vshrl.u32 %v4043, 7
        %v4045 = vsub.s32 %v4042, %v4044
        %v4046 = vrot.slane %v4037, %v4045
        %v4048 = vunpack.c.l.s4 1966171168
        %v4049 = vunpack.c.0.s8 %v4048
        %v4050 = vlaneseq
        %v4051 = vshrl.u32 %v4050, 7
        %v4052 = vsub.s32 %v4049, %v4051
        %v4053 = vrot.slane %v4039, %v4052
        %v4054 = vcombine.high %v4046, %v4046
        %v4055 = vcombine.high %v4053, %v4053
        %v4057 = vunpack.c.l.s4 1966171168
        %v4058 = vunpack.c.0.s8 %v4057
        %v4059 = vlaneseq
        %v4060 = vshrl.u32 %v4059, 7
        %v4061 = vsub.s32 %v4058, %v4060
        %v4062 = vrot.slane %v4046, %v4061
        %v4064 = vunpack.c.l.s4 1966171168
        %v4065 = vunpack.c.0.s8 %v4064
        %v4066 = vlaneseq
        %v4067 = vshrl.u32 %v4066, 7
        %v4068 = vsub.s32 %v4065, %v4067
        %v4069 = vrot.slane %v4053, %v4068
        %v4071 = vunpack.c.l.s4 1966171168
        %v4072 = vunpack.c.0.s8 %v4071
        %v4073 = vlaneseq
        %v4074 = vshrl.u32 %v4073, 7
        %v4075 = vsub.s32 %v4072, %v4074
        %v4076 = vrot.slane %v4054, %v4075
        %v4078 = vunpack.c.l.s4 1966171168
        %v4079 = vunpack.c.0.s8 %v4078
        %v4080 = vlaneseq
        %v4081 = vshrl.u32 %v4080, 7
        %v4082 = vsub.s32 %v4079, %v4081
        %v4083 = vrot.slane %v4055, %v4082
        %v4084 = vcombine.high %v4062, %v4062
        %v4085 = vcombine.high %v4069, %v4069
        %v4086 = vcombine.high %v4076, %v4076
        %v4087 = vcombine.high %v4083, %v4083
        %4096 = vst [vmem:[%s250 + $0x9] sm:$0x1] %v4062
        %4097 = vst [vmem:[%s250 + $0x19] sm:$0x1] %v4076
        %4098 = vst [vmem:[%s250 + $0x29] sm:$0x1] %v4084
        %4099 = vst [vmem:[%s250 + $0x39] sm:$0x1] %v4086
        %4100 = vst [vmem:[%s250 + $0x49] sm:$0x1] %v4069
        %4101 = vst [vmem:[%s250 + $0x59] sm:$0x1] %v4083
        %4102 = vst [vmem:[%s250 + $0x69] sm:$0x1] %v4085
        %4103 = vst [vmem:[%s250 + $0x79] sm:$0x1] %v4087
        %v4104 = vsel %vm4036, %v4028, %v3720
        %v4105 = vsel %vm4036, %v4026, %v3721
        %s4106 = scalar_lea.vmem %s224, 160 [#allocation4]
        %v4107 = vld [vmem:[%s4106] sm:$0xff]
        %v4108 = vld [vmem:[%s4106 + $0x8] sm:$0xff]
        %v4109 = vunpack.c.l.bf16 %v4107
        %v4110 = vunpack.c.h.bf16 %v4107
        %v4111 = vunpack.c.l.bf16 %v4108
        %v4112 = vunpack.c.h.bf16 %v4108
        %v4113 = vpack.c.bf16 %v4104, %v4104
        %v4114 = vld [vmem:[#allocation7] sm:$0xff]
        %v4115 = vld [vmem:[#allocation7 + $0x8] sm:$0xff]
        %v4116 = vld [vmem:[#allocation7 + $0x10] sm:$0xff]
        %v4117 = vld [vmem:[#allocation7 + $0x18] sm:$0xff]
        %v4118 = vld [vmem:[#allocation7 + $0x20] sm:$0xff]
        %v4119 = vld [vmem:[#allocation7 + $0x28] sm:$0xff]
        %v4120 = vld [vmem:[#allocation7 + $0x30] sm:$0xff]
        %v4121 = vld [vmem:[#allocation7 + $0x38] sm:$0xff]
        %v4122 = vld [vmem:[#allocation7 + $0x40] sm:$0xff]
        %v4123 = vld [vmem:[#allocation7 + $0x48] sm:$0xff]
        %v4124 = vld [vmem:[#allocation7 + $0x50] sm:$0xff]
        %v4125 = vld [vmem:[#allocation7 + $0x58] sm:$0xff]
        %v4126 = vld [vmem:[#allocation7 + $0x60] sm:$0xff]
        %v4127 = vld [vmem:[#allocation7 + $0x68] sm:$0xff]
        %v4128 = vld [vmem:[#allocation7 + $0x70] sm:$0xff]
        %v4129 = vld [vmem:[#allocation7 + $0x78] sm:$0xff]
        %v4130 = vld [vmem:[#allocation7 + $0x80] sm:$0xff]
        %v4131 = vld [vmem:[#allocation7 + $0x88] sm:$0xff]
        %v4132 = vld [vmem:[#allocation7 + $0x90] sm:$0xff]
        %v4133 = vld [vmem:[#allocation7 + $0x98] sm:$0xff]
        %v4134 = vld [vmem:[#allocation7 + $0xa0] sm:$0xff]
        %v4135 = vld [vmem:[#allocation7 + $0xa8] sm:$0xff]
        %v4136 = vld [vmem:[#allocation7 + $0xb0] sm:$0xff]
        %v4137 = vld [vmem:[#allocation7 + $0xb8] sm:$0xff]
        %v4138 = vld [vmem:[#allocation7 + $0xc0] sm:$0xff]
        %v4139 = vld [vmem:[#allocation7 + $0xc8] sm:$0xff]
        %v4140 = vld [vmem:[#allocation7 + $0xd0] sm:$0xff]
        %v4141 = vld [vmem:[#allocation7 + $0xd8] sm:$0xff]
        %v4142 = vld [vmem:[#allocation7 + $0xe0] sm:$0xff]
        %v4143 = vld [vmem:[#allocation7 + $0xe8] sm:$0xff]
        %v4144 = vld [vmem:[#allocation7 + $0xf0] sm:$0xff]
        %v4145 = vld [vmem:[#allocation7 + $0xf8] sm:$0xff]
        %v4178 = vunpack.c.l.b16 %v4114
        %v4179 = vunpack.c.h.b16 %v4114
        %v4180 = vunpack.c.l.b16 %v4115
        %v4181 = vunpack.c.h.b16 %v4115
        %v4182 = vunpack.c.l.b16 %v4116
        %v4183 = vunpack.c.h.b16 %v4116
        %v4184 = vunpack.c.l.b16 %v4117
        %v4185 = vunpack.c.h.b16 %v4117
        %v4186 = vunpack.c.l.b16 %v4118
        %v4187 = vunpack.c.h.b16 %v4118
        %v4188 = vunpack.c.l.b16 %v4119
        %v4189 = vunpack.c.h.b16 %v4119
        %v4190 = vunpack.c.l.b16 %v4120
        %v4191 = vunpack.c.h.b16 %v4120
        %v4192 = vunpack.c.l.b16 %v4121
        %v4193 = vunpack.c.h.b16 %v4121
        %v4194 = vunpack.c.l.b16 %v4122
        %v4195 = vunpack.c.h.b16 %v4122
        %v4196 = vunpack.c.l.b16 %v4123
        %v4197 = vunpack.c.h.b16 %v4123
        %v4198 = vunpack.c.l.b16 %v4124
        %v4199 = vunpack.c.h.b16 %v4124
        %v4200 = vunpack.c.l.b16 %v4125
        %v4201 = vunpack.c.h.b16 %v4125
        %v4202 = vunpack.c.l.b16 %v4126
        %v4203 = vunpack.c.h.b16 %v4126
        %v4204 = vunpack.c.l.b16 %v4127
        %v4205 = vunpack.c.h.b16 %v4127
        %v4206 = vunpack.c.l.b16 %v4128
        %v4207 = vunpack.c.h.b16 %v4128
        %v4208 = vunpack.c.l.b16 %v4129
        %v4209 = vunpack.c.h.b16 %v4129
        %v4210 = vunpack.c.l.b16 %v4130
        %v4211 = vunpack.c.h.b16 %v4130
        %v4212 = vunpack.c.l.b16 %v4131
        %v4213 = vunpack.c.h.b16 %v4131
        %v4214 = vunpack.c.l.b16 %v4132
        %v4215 = vunpack.c.h.b16 %v4132
        %v4216 = vunpack.c.l.b16 %v4133
        %v4217 = vunpack.c.h.b16 %v4133
        %v4218 = vunpack.c.l.b16 %v4134
        %v4219 = vunpack.c.h.b16 %v4134
        %v4220 = vunpack.c.l.b16 %v4135
        %v4221 = vunpack.c.h.b16 %v4135
        %v4222 = vunpack.c.l.b16 %v4136
        %v4223 = vunpack.c.h.b16 %v4136
        %v4224 = vunpack.c.l.b16 %v4137
        %v4225 = vunpack.c.h.b16 %v4137
        %v4226 = vunpack.c.l.b16 %v4138
        %v4227 = vunpack.c.h.b16 %v4138
        %v4228 = vunpack.c.l.b16 %v4139
        %v4229 = vunpack.c.h.b16 %v4139
        %v4230 = vunpack.c.l.b16 %v4140
        %v4231 = vunpack.c.h.b16 %v4140
        %v4232 = vunpack.c.l.b16 %v4141
        %v4233 = vunpack.c.h.b16 %v4141
        %v4234 = vunpack.c.l.b16 %v4142
        %v4235 = vunpack.c.h.b16 %v4142
        %v4236 = vunpack.c.l.b16 %v4143
        %v4237 = vunpack.c.h.b16 %v4143
        %v4238 = vunpack.c.l.b16 %v4144
        %v4239 = vunpack.c.h.b16 %v4144
        %v4240 = vunpack.c.l.b16 %v4145
        %v4241 = vunpack.c.h.b16 %v4145
        %v4242 = vpack.c.b16 %v4182, %v4178
        %v4243 = vpack.c.b16 %v4183, %v4179
        %v4244 = vpack.c.b16 %v4184, %v4180
        %v4245 = vpack.c.b16 %v4185, %v4181
        %v4246 = vpack.c.b16 %v4190, %v4186
        %v4247 = vpack.c.b16 %v4191, %v4187
        %v4248 = vpack.c.b16 %v4192, %v4188
        %v4249 = vpack.c.b16 %v4193, %v4189
        %v4250 = vpack.c.b16 %v4198, %v4194
        %v4251 = vpack.c.b16 %v4199, %v4195
        %v4252 = vpack.c.b16 %v4200, %v4196
        %v4253 = vpack.c.b16 %v4201, %v4197
        %v4254 = vpack.c.b16 %v4206, %v4202
        %v4255 = vpack.c.b16 %v4207, %v4203
        %v4256 = vpack.c.b16 %v4208, %v4204
        %v4257 = vpack.c.b16 %v4209, %v4205
        %v4258 = vpack.c.b16 %v4214, %v4210
        %v4259 = vpack.c.b16 %v4215, %v4211
        %v4260 = vpack.c.b16 %v4216, %v4212
        %v4261 = vpack.c.b16 %v4217, %v4213
        %v4262 = vpack.c.b16 %v4222, %v4218
        %v4263 = vpack.c.b16 %v4223, %v4219
        %v4264 = vpack.c.b16 %v4224, %v4220
        %v4265 = vpack.c.b16 %v4225, %v4221
        %v4266 = vpack.c.b16 %v4230, %v4226
        %v4267 = vpack.c.b16 %v4231, %v4227
        %v4268 = vpack.c.b16 %v4232, %v4228
        %v4269 = vpack.c.b16 %v4233, %v4229
        %v4270 = vpack.c.b16 %v4238, %v4234
        %v4271 = vpack.c.b16 %v4239, %v4235
        %v4272 = vpack.c.b16 %v4240, %v4236
        %v4273 = vpack.c.b16 %v4241, %v4237
        %4306 = vmatprep.subr.bf16.mxu0 %v4271
        %4307 = vmatpush1.bf16.msra.mxu0 %v4270
        %4308 = vmatprep.subr.bf16.mxu0 %v4267
        %4309 = vmatpush1.bf16.msra.mxu0 %v4266
        %4310 = vmatprep.subr.bf16.mxu0 %v4263
        %4311 = vmatpush1.bf16.msra.mxu0 %v4262
        %4312 = vmatprep.subr.bf16.mxu0 %v4259
        %4313 = vmatpush1.bf16.msra.mxu0 %v4258
        %4314 = vmatprep.subr.bf16.mxu0 %v4255
        %4315 = vmatpush1.bf16.msra.mxu0 %v4254
        %4316 = vmatprep.subr.bf16.mxu0 %v4251
        %4317 = vmatpush1.bf16.msra.mxu0 %v4250
        %4318 = vmatprep.subr.bf16.mxu0 %v4247
        %4319 = vmatpush1.bf16.msra.mxu0 %v4246
        %4320 = vmatprep.subr.bf16.mxu0 %v4243
        %4321 = vmatpush1.bf16.msra.mxu0 %v4242
        %4322 = vmatprep.subr.bf16.mxu0 0
        %4323 = vmatpush2.bf16.msra.mxu0 0
        %4324 = vmatprep.subr.bf16.mxu0 0
        %4325 = vmatpush2.bf16.msra.mxu0 0
        %4326 = vmatprep.subr.bf16.mxu0 0
        %4327 = vmatpush2.bf16.msra.mxu0 0
        %4328 = vmatprep.subr.bf16.mxu0 0
        %4329 = vmatpush2.bf16.msra.mxu0 0
        %4330 = vmatprep.subr.bf16.mxu0 0
        %4331 = vmatpush2.bf16.msra.mxu0 0
        %4332 = vmatprep.subr.bf16.mxu0 0
        %4333 = vmatpush2.bf16.msra.mxu0 0
        %4334 = vmatprep.subr.bf16.mxu0 0
        %4335 = vmatpush2.bf16.msra.mxu0 0
        %4336 = vmatprep.subr.bf16.mxu0 0
        %4337 = vmatpush2.bf16.msra.mxu0 0
        %4338 = vmatprep.mubr.bf16.mxu0 0
        %4339 = vmatmul.mubr.bf16.gmra.mxu0 %v4113
        %v4340 = vpop.f32.mrf.mxu0
        %v4341 = vadd.f32 0.0, %v4340
        %v4342 = vpop.f32.mrf.mxu0
        %v4343 = vadd.f32 0.0, %v4342
        %v4344 = vpop.f32.mrf.mxu0
        %v4345 = vpop.f32.mrf.mxu0
        %4346 = vdwg.mxu0
        %4347 = vmatprep.subr.bf16.mxu0 %v4273
        %4348 = vmatpush1.bf16.msra.mxu0 %v4272
        %4349 = vmatprep.subr.bf16.mxu0 %v4269
        %4350 = vmatpush1.bf16.msra.mxu0 %v4268
        %4351 = vmatprep.subr.bf16.mxu0 %v4265
        %4352 = vmatpush1.bf16.msra.mxu0 %v4264
        %4353 = vmatprep.subr.bf16.mxu0 %v4261
        %4354 = vmatpush1.bf16.msra.mxu0 %v4260
        %4355 = vmatprep.subr.bf16.mxu0 %v4257
        %4356 = vmatpush1.bf16.msra.mxu0 %v4256
        %4357 = vmatprep.subr.bf16.mxu0 %v4253
        %4358 = vmatpush1.bf16.msra.mxu0 %v4252
        %4359 = vmatprep.subr.bf16.mxu0 %v4249
        %4360 = vmatpush1.bf16.msra.mxu0 %v4248
        %4361 = vmatprep.subr.bf16.mxu0 %v4245
        %4362 = vmatpush1.bf16.msra.mxu0 %v4244
        %4363 = vmatprep.subr.bf16.mxu0 0
        %4364 = vmatpush2.bf16.msra.mxu0 0
        %4365 = vmatprep.subr.bf16.mxu0 0
        %4366 = vmatpush2.bf16.msra.mxu0 0
        %4367 = vmatprep.subr.bf16.mxu0 0
        %4368 = vmatpush2.bf16.msra.mxu0 0
        %4369 = vmatprep.subr.bf16.mxu0 0
        %4370 = vmatpush2.bf16.msra.mxu0 0
        %4371 = vmatprep.subr.bf16.mxu0 0
        %4372 = vmatpush2.bf16.msra.mxu0 0
        %4373 = vmatprep.subr.bf16.mxu0 0
        %4374 = vmatpush2.bf16.msra.mxu0 0
        %4375 = vmatprep.subr.bf16.mxu0 0
        %4376 = vmatpush2.bf16.msra.mxu0 0
        %4377 = vmatprep.subr.bf16.mxu0 0
        %4378 = vmatpush2.bf16.msra.mxu0 0
        %4379 = vmatprep.mubr.bf16.mxu0 0
        %4380 = vmatmul.mubr.bf16.gmra.mxu0 %v4113
        %v4381 = vpop.f32.mrf.mxu0
        %v4382 = vadd.f32 0.0, %v4381
        %v4383 = vpop.f32.mrf.mxu0
        %v4384 = vadd.f32 0.0, %v4383
        %v4385 = vpop.f32.mrf.mxu0
        %v4386 = vpop.f32.mrf.mxu0
        %4387 = vdwg.mxu0
        %v4388 = vadd.f32 %v4109, %v4341
        %v4389 = vadd.f32 %v4110, %v4343
        %v4390 = vadd.f32 %v4111, %v4382
        %v4391 = vadd.f32 %v4112, %v4384
        %v4392 = vsub.f32 0.0, %v4388
        %v4393 = vsub.f32 0.0, %v4389
        %v4394 = vsub.f32 0.0, %v4390
        %v4395 = vmul.f32 %v4392, 1.442695
        %v4396 = vpow.pop %v4395
        %v4397 = vmul.f32 %v4393, 1.442695
        %v4398 = vpow.pop %v4397
        %v4399 = vmul.f32 %v4394, 1.442695
        %v4400 = vpow.pop %v4399
        %v4401 = vadd.f32 %v4396, 1.0
        %v4402 = vadd.f32 %v4398, 1.0
        %v4403 = vadd.f32 %v4400, 1.0
        %v4404 = vrcp.pop %v4401
        %v4405 = vrcp.pop %v4402
        %v4406 = vrcp.pop %v4403
        %v4407 = vtanh.pop %v4391
        %v4408 = vmul.f32 %v4405, %v4105
        %v4409 = vmul.f32 %v4404, %v4407
        %v4410 = vadd.f32 %v4408, %v4409
        %v4411 = vtanh.pop %v4410
        %v4412 = vmul.f32 %v4406, %v4411
        %s4413 = sadd.s32 %s265, 10
        %v4414 = vstv %s4413
        %vm4415 = vcmp.lt.s32.totalorder %v4414, %v264
        %v4416 = vsel %vm4415, 1, 0
        %4417 = vset.pattern.permute.xlu0 0
        %4418 = vperm.xlu0 %4417, %v4416
        %v4419 = vpop.permute.xlu0 %4418
        %vm4420 = vcmp.eq.s32.totalorder %v4419, 1
        %v4421 = vsel %vm4420, %v4412, 0.0
        %v4423 = vcombine.high %v4421, %v4421
        %v4425 = vunpack.c.l.s4 1966171168
        %v4426 = vunpack.c.0.s8 %v4425
        %v4427 = vlaneseq
        %v4428 = vshrl.u32 %v4427, 7
        %v4429 = vsub.s32 %v4426, %v4428
        %v4430 = vrot.slane %v4421, %v4429
        %v4432 = vunpack.c.l.s4 1966171168
        %v4433 = vunpack.c.0.s8 %v4432
        %v4434 = vlaneseq
        %v4435 = vshrl.u32 %v4434, 7
        %v4436 = vsub.s32 %v4433, %v4435
        %v4437 = vrot.slane %v4423, %v4436
        %v4438 = vcombine.high %v4430, %v4430
        %v4439 = vcombine.high %v4437, %v4437
        %v4441 = vunpack.c.l.s4 1966171168
        %v4442 = vunpack.c.0.s8 %v4441
        %v4443 = vlaneseq
        %v4444 = vshrl.u32 %v4443, 7
        %v4445 = vsub.s32 %v4442, %v4444
        %v4446 = vrot.slane %v4430, %v4445
        %v4448 = vunpack.c.l.s4 1966171168
        %v4449 = vunpack.c.0.s8 %v4448
        %v4450 = vlaneseq
        %v4451 = vshrl.u32 %v4450, 7
        %v4452 = vsub.s32 %v4449, %v4451
        %v4453 = vrot.slane %v4437, %v4452
        %v4455 = vunpack.c.l.s4 1966171168
        %v4456 = vunpack.c.0.s8 %v4455
        %v4457 = vlaneseq
        %v4458 = vshrl.u32 %v4457, 7
        %v4459 = vsub.s32 %v4456, %v4458
        %v4460 = vrot.slane %v4438, %v4459
        %v4462 = vunpack.c.l.s4 1966171168
        %v4463 = vunpack.c.0.s8 %v4462
        %v4464 = vlaneseq
        %v4465 = vshrl.u32 %v4464, 7
        %v4466 = vsub.s32 %v4463, %v4465
        %v4467 = vrot.slane %v4439, %v4466
        %v4468 = vcombine.high %v4446, %v4446
        %v4469 = vcombine.high %v4453, %v4453
        %v4470 = vcombine.high %v4460, %v4460
        %v4471 = vcombine.high %v4467, %v4467
        %4480 = vst [vmem:[%s250 + $0xa] sm:$0x1] %v4446
        %4481 = vst [vmem:[%s250 + $0x1a] sm:$0x1] %v4460
        %4482 = vst [vmem:[%s250 + $0x2a] sm:$0x1] %v4468
        %4483 = vst [vmem:[%s250 + $0x3a] sm:$0x1] %v4470
        %4484 = vst [vmem:[%s250 + $0x4a] sm:$0x1] %v4453
        %4485 = vst [vmem:[%s250 + $0x5a] sm:$0x1] %v4467
        %4486 = vst [vmem:[%s250 + $0x6a] sm:$0x1] %v4469
        %4487 = vst [vmem:[%s250 + $0x7a] sm:$0x1] %v4471
        %v4488 = vsel %vm4420, %v4412, %v4104
        %v4489 = vsel %vm4420, %v4410, %v4105
        %s4490 = scalar_lea.vmem %s224, 176 [#allocation4]
        %v4491 = vld [vmem:[%s4490] sm:$0xff]
        %v4492 = vld [vmem:[%s4490 + $0x8] sm:$0xff]
        %v4493 = vunpack.c.l.bf16 %v4491
        %v4494 = vunpack.c.h.bf16 %v4491
        %v4495 = vunpack.c.l.bf16 %v4492
        %v4496 = vunpack.c.h.bf16 %v4492
        %v4497 = vpack.c.bf16 %v4488, %v4488
        %v4498 = vld [vmem:[#allocation7] sm:$0xff]
        %v4499 = vld [vmem:[#allocation7 + $0x8] sm:$0xff]
        %v4500 = vld [vmem:[#allocation7 + $0x10] sm:$0xff]
        %v4501 = vld [vmem:[#allocation7 + $0x18] sm:$0xff]
        %v4502 = vld [vmem:[#allocation7 + $0x20] sm:$0xff]
        %v4503 = vld [vmem:[#allocation7 + $0x28] sm:$0xff]
        %v4504 = vld [vmem:[#allocation7 + $0x30] sm:$0xff]
        %v4505 = vld [vmem:[#allocation7 + $0x38] sm:$0xff]
        %v4506 = vld [vmem:[#allocation7 + $0x40] sm:$0xff]
        %v4507 = vld [vmem:[#allocation7 + $0x48] sm:$0xff]
        %v4508 = vld [vmem:[#allocation7 + $0x50] sm:$0xff]
        %v4509 = vld [vmem:[#allocation7 + $0x58] sm:$0xff]
        %v4510 = vld [vmem:[#allocation7 + $0x60] sm:$0xff]
        %v4511 = vld [vmem:[#allocation7 + $0x68] sm:$0xff]
        %v4512 = vld [vmem:[#allocation7 + $0x70] sm:$0xff]
        %v4513 = vld [vmem:[#allocation7 + $0x78] sm:$0xff]
        %v4514 = vld [vmem:[#allocation7 + $0x80] sm:$0xff]
        %v4515 = vld [vmem:[#allocation7 + $0x88] sm:$0xff]
        %v4516 = vld [vmem:[#allocation7 + $0x90] sm:$0xff]
        %v4517 = vld [vmem:[#allocation7 + $0x98] sm:$0xff]
        %v4518 = vld [vmem:[#allocation7 + $0xa0] sm:$0xff]
        %v4519 = vld [vmem:[#allocation7 + $0xa8] sm:$0xff]
        %v4520 = vld [vmem:[#allocation7 + $0xb0] sm:$0xff]
        %v4521 = vld [vmem:[#allocation7 + $0xb8] sm:$0xff]
        %v4522 = vld [vmem:[#allocation7 + $0xc0] sm:$0xff]
        %v4523 = vld [vmem:[#allocation7 + $0xc8] sm:$0xff]
        %v4524 = vld [vmem:[#allocation7 + $0xd0] sm:$0xff]
        %v4525 = vld [vmem:[#allocation7 + $0xd8] sm:$0xff]
        %v4526 = vld [vmem:[#allocation7 + $0xe0] sm:$0xff]
        %v4527 = vld [vmem:[#allocation7 + $0xe8] sm:$0xff]
        %v4528 = vld [vmem:[#allocation7 + $0xf0] sm:$0xff]
        %v4529 = vld [vmem:[#allocation7 + $0xf8] sm:$0xff]
        %v4562 = vunpack.c.l.b16 %v4498
        %v4563 = vunpack.c.h.b16 %v4498
        %v4564 = vunpack.c.l.b16 %v4499
        %v4565 = vunpack.c.h.b16 %v4499
        %v4566 = vunpack.c.l.b16 %v4500
        %v4567 = vunpack.c.h.b16 %v4500
        %v4568 = vunpack.c.l.b16 %v4501
        %v4569 = vunpack.c.h.b16 %v4501
        %v4570 = vunpack.c.l.b16 %v4502
        %v4571 = vunpack.c.h.b16 %v4502
        %v4572 = vunpack.c.l.b16 %v4503
        %v4573 = vunpack.c.h.b16 %v4503
        %v4574 = vunpack.c.l.b16 %v4504
        %v4575 = vunpack.c.h.b16 %v4504
        %v4576 = vunpack.c.l.b16 %v4505
        %v4577 = vunpack.c.h.b16 %v4505
        %v4578 = vunpack.c.l.b16 %v4506
        %v4579 = vunpack.c.h.b16 %v4506
        %v4580 = vunpack.c.l.b16 %v4507
        %v4581 = vunpack.c.h.b16 %v4507
        %v4582 = vunpack.c.l.b16 %v4508
        %v4583 = vunpack.c.h.b16 %v4508
        %v4584 = vunpack.c.l.b16 %v4509
        %v4585 = vunpack.c.h.b16 %v4509
        %v4586 = vunpack.c.l.b16 %v4510
        %v4587 = vunpack.c.h.b16 %v4510
        %v4588 = vunpack.c.l.b16 %v4511
        %v4589 = vunpack.c.h.b16 %v4511
        %v4590 = vunpack.c.l.b16 %v4512
        %v4591 = vunpack.c.h.b16 %v4512
        %v4592 = vunpack.c.l.b16 %v4513
        %v4593 = vunpack.c.h.b16 %v4513
        %v4594 = vunpack.c.l.b16 %v4514
        %v4595 = vunpack.c.h.b16 %v4514
        %v4596 = vunpack.c.l.b16 %v4515
        %v4597 = vunpack.c.h.b16 %v4515
        %v4598 = vunpack.c.l.b16 %v4516
        %v4599 = vunpack.c.h.b16 %v4516
        %v4600 = vunpack.c.l.b16 %v4517
        %v4601 = vunpack.c.h.b16 %v4517
        %v4602 = vunpack.c.l.b16 %v4518
        %v4603 = vunpack.c.h.b16 %v4518
        %v4604 = vunpack.c.l.b16 %v4519
        %v4605 = vunpack.c.h.b16 %v4519
        %v4606 = vunpack.c.l.b16 %v4520
        %v4607 = vunpack.c.h.b16 %v4520
        %v4608 = vunpack.c.l.b16 %v4521
        %v4609 = vunpack.c.h.b16 %v4521
        %v4610 = vunpack.c.l.b16 %v4522
        %v4611 = vunpack.c.h.b16 %v4522
        %v4612 = vunpack.c.l.b16 %v4523
        %v4613 = vunpack.c.h.b16 %v4523
        %v4614 = vunpack.c.l.b16 %v4524
        %v4615 = vunpack.c.h.b16 %v4524
        %v4616 = vunpack.c.l.b16 %v4525
        %v4617 = vunpack.c.h.b16 %v4525
        %v4618 = vunpack.c.l.b16 %v4526
        %v4619 = vunpack.c.h.b16 %v4526
        %v4620 = vunpack.c.l.b16 %v4527
        %v4621 = vunpack.c.h.b16 %v4527
        %v4622 = vunpack.c.l.b16 %v4528
        %v4623 = vunpack.c.h.b16 %v4528
        %v4624 = vunpack.c.l.b16 %v4529
        %v4625 = vunpack.c.h.b16 %v4529
        %v4626 = vpack.c.b16 %v4566, %v4562
        %v4627 = vpack.c.b16 %v4567, %v4563
        %v4628 = vpack.c.b16 %v4568, %v4564
        %v4629 = vpack.c.b16 %v4569, %v4565
        %v4630 = vpack.c.b16 %v4574, %v4570
        %v4631 = vpack.c.b16 %v4575, %v4571
        %v4632 = vpack.c.b16 %v4576, %v4572
        %v4633 = vpack.c.b16 %v4577, %v4573
        %v4634 = vpack.c.b16 %v4582, %v4578
        %v4635 = vpack.c.b16 %v4583, %v4579
        %v4636 = vpack.c.b16 %v4584, %v4580
        %v4637 = vpack.c.b16 %v4585, %v4581
        %v4638 = vpack.c.b16 %v4590, %v4586
        %v4639 = vpack.c.b16 %v4591, %v4587
        %v4640 = vpack.c.b16 %v4592, %v4588
        %v4641 = vpack.c.b16 %v4593, %v4589
        %v4642 = vpack.c.b16 %v4598, %v4594
        %v4643 = vpack.c.b16 %v4599, %v4595
        %v4644 = vpack.c.b16 %v4600, %v4596
        %v4645 = vpack.c.b16 %v4601, %v4597
        %v4646 = vpack.c.b16 %v4606, %v4602
        %v4647 = vpack.c.b16 %v4607, %v4603
        %v4648 = vpack.c.b16 %v4608, %v4604
        %v4649 = vpack.c.b16 %v4609, %v4605
        %v4650 = vpack.c.b16 %v4614, %v4610
        %v4651 = vpack.c.b16 %v4615, %v4611
        %v4652 = vpack.c.b16 %v4616, %v4612
        %v4653 = vpack.c.b16 %v4617, %v4613
        %v4654 = vpack.c.b16 %v4622, %v4618
        %v4655 = vpack.c.b16 %v4623, %v4619
        %v4656 = vpack.c.b16 %v4624, %v4620
        %v4657 = vpack.c.b16 %v4625, %v4621
        %4690 = vmatprep.subr.bf16.mxu0 %v4655
        %4691 = vmatpush1.bf16.msra.mxu0 %v4654
        %4692 = vmatprep.subr.bf16.mxu0 %v4651
        %4693 = vmatpush1.bf16.msra.mxu0 %v4650
        %4694 = vmatprep.subr.bf16.mxu0 %v4647
        %4695 = vmatpush1.bf16.msra.mxu0 %v4646
        %4696 = vmatprep.subr.bf16.mxu0 %v4643
        %4697 = vmatpush1.bf16.msra.mxu0 %v4642
        %4698 = vmatprep.subr.bf16.mxu0 %v4639
        %4699 = vmatpush1.bf16.msra.mxu0 %v4638
        %4700 = vmatprep.subr.bf16.mxu0 %v4635
        %4701 = vmatpush1.bf16.msra.mxu0 %v4634
        %4702 = vmatprep.subr.bf16.mxu0 %v4631
        %4703 = vmatpush1.bf16.msra.mxu0 %v4630
        %4704 = vmatprep.subr.bf16.mxu0 %v4627
        %4705 = vmatpush1.bf16.msra.mxu0 %v4626
        %4706 = vmatprep.subr.bf16.mxu0 0
        %4707 = vmatpush2.bf16.msra.mxu0 0
        %4708 = vmatprep.subr.bf16.mxu0 0
        %4709 = vmatpush2.bf16.msra.mxu0 0
        %4710 = vmatprep.subr.bf16.mxu0 0
        %4711 = vmatpush2.bf16.msra.mxu0 0
        %4712 = vmatprep.subr.bf16.mxu0 0
        %4713 = vmatpush2.bf16.msra.mxu0 0
        %4714 = vmatprep.subr.bf16.mxu0 0
        %4715 = vmatpush2.bf16.msra.mxu0 0
        %4716 = vmatprep.subr.bf16.mxu0 0
        %4717 = vmatpush2.bf16.msra.mxu0 0
        %4718 = vmatprep.subr.bf16.mxu0 0
        %4719 = vmatpush2.bf16.msra.mxu0 0
        %4720 = vmatprep.subr.bf16.mxu0 0
        %4721 = vmatpush2.bf16.msra.mxu0 0
        %4722 = vmatprep.mubr.bf16.mxu0 0
        %4723 = vmatmul.mubr.bf16.gmra.mxu0 %v4497
        %v4724 = vpop.f32.mrf.mxu0
        %v4725 = vadd.f32 0.0, %v4724
        %v4726 = vpop.f32.mrf.mxu0
        %v4727 = vadd.f32 0.0, %v4726
        %v4728 = vpop.f32.mrf.mxu0
        %v4729 = vpop.f32.mrf.mxu0
        %4730 = vdwg.mxu0
        %4731 = vmatprep.subr.bf16.mxu0 %v4657
        %4732 = vmatpush1.bf16.msra.mxu0 %v4656
        %4733 = vmatprep.subr.bf16.mxu0 %v4653
        %4734 = vmatpush1.bf16.msra.mxu0 %v4652
        %4735 = vmatprep.subr.bf16.mxu0 %v4649
        %4736 = vmatpush1.bf16.msra.mxu0 %v4648
        %4737 = vmatprep.subr.bf16.mxu0 %v4645
        %4738 = vmatpush1.bf16.msra.mxu0 %v4644
        %4739 = vmatprep.subr.bf16.mxu0 %v4641
        %4740 = vmatpush1.bf16.msra.mxu0 %v4640
        %4741 = vmatprep.subr.bf16.mxu0 %v4637
        %4742 = vmatpush1.bf16.msra.mxu0 %v4636
        %4743 = vmatprep.subr.bf16.mxu0 %v4633
        %4744 = vmatpush1.bf16.msra.mxu0 %v4632
        %4745 = vmatprep.subr.bf16.mxu0 %v4629
        %4746 = vmatpush1.bf16.msra.mxu0 %v4628
        %4747 = vmatprep.subr.bf16.mxu0 0
        %4748 = vmatpush2.bf16.msra.mxu0 0
        %4749 = vmatprep.subr.bf16.mxu0 0
        %4750 = vmatpush2.bf16.msra.mxu0 0
        %4751 = vmatprep.subr.bf16.mxu0 0
        %4752 = vmatpush2.bf16.msra.mxu0 0
        %4753 = vmatprep.subr.bf16.mxu0 0
        %4754 = vmatpush2.bf16.msra.mxu0 0
        %4755 = vmatprep.subr.bf16.mxu0 0
        %4756 = vmatpush2.bf16.msra.mxu0 0
        %4757 = vmatprep.subr.bf16.mxu0 0
        %4758 = vmatpush2.bf16.msra.mxu0 0
        %4759 = vmatprep.subr.bf16.mxu0 0
        %4760 = vmatpush2.bf16.msra.mxu0 0
        %4761 = vmatprep.subr.bf16.mxu0 0
        %4762 = vmatpush2.bf16.msra.mxu0 0
        %4763 = vmatprep.mubr.bf16.mxu0 0
        %4764 = vmatmul.mubr.bf16.gmra.mxu0 %v4497
        %v4765 = vpop.f32.mrf.mxu0
        %v4766 = vadd.f32 0.0, %v4765
        %v4767 = vpop.f32.mrf.mxu0
        %v4768 = vadd.f32 0.0, %v4767
        %v4769 = vpop.f32.mrf.mxu0
        %v4770 = vpop.f32.mrf.mxu0
        %4771 = vdwg.mxu0
        %v4772 = vadd.f32 %v4493, %v4725
        %v4773 = vadd.f32 %v4494, %v4727
        %v4774 = vadd.f32 %v4495, %v4766
        %v4775 = vadd.f32 %v4496, %v4768
        %v4776 = vsub.f32 0.0, %v4772
        %v4777 = vsub.f32 0.0, %v4773
        %v4778 = vsub.f32 0.0, %v4774
        %v4779 = vmul.f32 %v4776, 1.442695
        %v4780 = vpow.pop %v4779
        %v4781 = vmul.f32 %v4777, 1.442695
        %v4782 = vpow.pop %v4781
        %v4783 = vmul.f32 %v4778, 1.442695
        %v4784 = vpow.pop %v4783
        %v4785 = vadd.f32 %v4780, 1.0
        %v4786 = vadd.f32 %v4782, 1.0
        %v4787 = vadd.f32 %v4784, 1.0
        %v4788 = vrcp.pop %v4785
        %v4789 = vrcp.pop %v4786
        %v4790 = vrcp.pop %v4787
        %v4791 = vtanh.pop %v4775
        %v4792 = vmul.f32 %v4789, %v4489
        %v4793 = vmul.f32 %v4788, %v4791
        %v4794 = vadd.f32 %v4792, %v4793
        %v4795 = vtanh.pop %v4794
        %v4796 = vmul.f32 %v4790, %v4795
        %s4797 = sadd.s32 %s265, 11
        %v4798 = vstv %s4797
        %vm4799 = vcmp.lt.s32.totalorder %v4798, %v264
        %v4800 = vsel %vm4799, 1, 0
        %4801 = vset.pattern.permute.xlu0 0
        %4802 = vperm.xlu0 %4801, %v4800
        %v4803 = vpop.permute.xlu0 %4802
        %vm4804 = vcmp.eq.s32.totalorder %v4803, 1
        %v4805 = vsel %vm4804, %v4796, 0.0
        %v4807 = vcombine.high %v4805, %v4805
        %v4809 = vunpack.c.l.s4 1966171168
        %v4810 = vunpack.c.0.s8 %v4809
        %v4811 = vlaneseq
        %v4812 = vshrl.u32 %v4811, 7
        %v4813 = vsub.s32 %v4810, %v4812
        %v4814 = vrot.slane %v4805, %v4813
        %v4816 = vunpack.c.l.s4 1966171168
        %v4817 = vunpack.c.0.s8 %v4816
        %v4818 = vlaneseq
        %v4819 = vshrl.u32 %v4818, 7
        %v4820 = vsub.s32 %v4817, %v4819
        %v4821 = vrot.slane %v4807, %v4820
        %v4822 = vcombine.high %v4814, %v4814
        %v4823 = vcombine.high %v4821, %v4821
        %v4825 = vunpack.c.l.s4 1966171168
        %v4826 = vunpack.c.0.s8 %v4825
        %v4827 = vlaneseq
        %v4828 = vshrl.u32 %v4827, 7
        %v4829 = vsub.s32 %v4826, %v4828
        %v4830 = vrot.slane %v4814, %v4829
        %v4832 = vunpack.c.l.s4 1966171168
        %v4833 = vunpack.c.0.s8 %v4832
        %v4834 = vlaneseq
        %v4835 = vshrl.u32 %v4834, 7
        %v4836 = vsub.s32 %v4833, %v4835
        %v4837 = vrot.slane %v4821, %v4836
        %v4839 = vunpack.c.l.s4 1966171168
        %v4840 = vunpack.c.0.s8 %v4839
        %v4841 = vlaneseq
        %v4842 = vshrl.u32 %v4841, 7
        %v4843 = vsub.s32 %v4840, %v4842
        %v4844 = vrot.slane %v4822, %v4843
        %v4846 = vunpack.c.l.s4 1966171168
        %v4847 = vunpack.c.0.s8 %v4846
        %v4848 = vlaneseq
        %v4849 = vshrl.u32 %v4848, 7
        %v4850 = vsub.s32 %v4847, %v4849
        %v4851 = vrot.slane %v4823, %v4850
        %v4852 = vcombine.high %v4830, %v4830
        %v4853 = vcombine.high %v4837, %v4837
        %v4854 = vcombine.high %v4844, %v4844
        %v4855 = vcombine.high %v4851, %v4851
        %4864 = vst [vmem:[%s250 + $0xb] sm:$0x1] %v4830
        %4865 = vst [vmem:[%s250 + $0x1b] sm:$0x1] %v4844
        %4866 = vst [vmem:[%s250 + $0x2b] sm:$0x1] %v4852
        %4867 = vst [vmem:[%s250 + $0x3b] sm:$0x1] %v4854
        %4868 = vst [vmem:[%s250 + $0x4b] sm:$0x1] %v4837
        %4869 = vst [vmem:[%s250 + $0x5b] sm:$0x1] %v4851
        %4870 = vst [vmem:[%s250 + $0x6b] sm:$0x1] %v4853
        %4871 = vst [vmem:[%s250 + $0x7b] sm:$0x1] %v4855
        %v4872 = vsel %vm4804, %v4796, %v4488
        %v4873 = vsel %vm4804, %v4794, %v4489
        %s4874 = scalar_lea.vmem %s224, 192 [#allocation4]
        %v4875 = vld [vmem:[%s4874] sm:$0xff]
        %v4876 = vld [vmem:[%s4874 + $0x8] sm:$0xff]
        %v4877 = vunpack.c.l.bf16 %v4875
        %v4878 = vunpack.c.h.bf16 %v4875
        %v4879 = vunpack.c.l.bf16 %v4876
        %v4880 = vunpack.c.h.bf16 %v4876
        %v4881 = vpack.c.bf16 %v4872, %v4872
        %v4882 = vld [vmem:[#allocation7] sm:$0xff]
        %v4883 = vld [vmem:[#allocation7 + $0x8] sm:$0xff]
        %v4884 = vld [vmem:[#allocation7 + $0x10] sm:$0xff]
        %v4885 = vld [vmem:[#allocation7 + $0x18] sm:$0xff]
        %v4886 = vld [vmem:[#allocation7 + $0x20] sm:$0xff]
        %v4887 = vld [vmem:[#allocation7 + $0x28] sm:$0xff]
        %v4888 = vld [vmem:[#allocation7 + $0x30] sm:$0xff]
        %v4889 = vld [vmem:[#allocation7 + $0x38] sm:$0xff]
        %v4890 = vld [vmem:[#allocation7 + $0x40] sm:$0xff]
        %v4891 = vld [vmem:[#allocation7 + $0x48] sm:$0xff]
        %v4892 = vld [vmem:[#allocation7 + $0x50] sm:$0xff]
        %v4893 = vld [vmem:[#allocation7 + $0x58] sm:$0xff]
        %v4894 = vld [vmem:[#allocation7 + $0x60] sm:$0xff]
        %v4895 = vld [vmem:[#allocation7 + $0x68] sm:$0xff]
        %v4896 = vld [vmem:[#allocation7 + $0x70] sm:$0xff]
        %v4897 = vld [vmem:[#allocation7 + $0x78] sm:$0xff]
        %v4898 = vld [vmem:[#allocation7 + $0x80] sm:$0xff]
        %v4899 = vld [vmem:[#allocation7 + $0x88] sm:$0xff]
        %v4900 = vld [vmem:[#allocation7 + $0x90] sm:$0xff]
        %v4901 = vld [vmem:[#allocation7 + $0x98] sm:$0xff]
        %v4902 = vld [vmem:[#allocation7 + $0xa0] sm:$0xff]
        %v4903 = vld [vmem:[#allocation7 + $0xa8] sm:$0xff]
        %v4904 = vld [vmem:[#allocation7 + $0xb0] sm:$0xff]
        %v4905 = vld [vmem:[#allocation7 + $0xb8] sm:$0xff]
        %v4906 = vld [vmem:[#allocation7 + $0xc0] sm:$0xff]
        %v4907 = vld [vmem:[#allocation7 + $0xc8] sm:$0xff]
        %v4908 = vld [vmem:[#allocation7 + $0xd0] sm:$0xff]
        %v4909 = vld [vmem:[#allocation7 + $0xd8] sm:$0xff]
        %v4910 = vld [vmem:[#allocation7 + $0xe0] sm:$0xff]
        %v4911 = vld [vmem:[#allocation7 + $0xe8] sm:$0xff]
        %v4912 = vld [vmem:[#allocation7 + $0xf0] sm:$0xff]
        %v4913 = vld [vmem:[#allocation7 + $0xf8] sm:$0xff]
        %v4946 = vunpack.c.l.b16 %v4882
        %v4947 = vunpack.c.h.b16 %v4882
        %v4948 = vunpack.c.l.b16 %v4883
        %v4949 = vunpack.c.h.b16 %v4883
        %v4950 = vunpack.c.l.b16 %v4884
        %v4951 = vunpack.c.h.b16 %v4884
        %v4952 = vunpack.c.l.b16 %v4885
        %v4953 = vunpack.c.h.b16 %v4885
        %v4954 = vunpack.c.l.b16 %v4886
        %v4955 = vunpack.c.h.b16 %v4886
        %v4956 = vunpack.c.l.b16 %v4887
        %v4957 = vunpack.c.h.b16 %v4887
        %v4958 = vunpack.c.l.b16 %v4888
        %v4959 = vunpack.c.h.b16 %v4888
        %v4960 = vunpack.c.l.b16 %v4889
        %v4961 = vunpack.c.h.b16 %v4889
        %v4962 = vunpack.c.l.b16 %v4890
        %v4963 = vunpack.c.h.b16 %v4890
        %v4964 = vunpack.c.l.b16 %v4891
        %v4965 = vunpack.c.h.b16 %v4891
        %v4966 = vunpack.c.l.b16 %v4892
        %v4967 = vunpack.c.h.b16 %v4892
        %v4968 = vunpack.c.l.b16 %v4893
        %v4969 = vunpack.c.h.b16 %v4893
        %v4970 = vunpack.c.l.b16 %v4894
        %v4971 = vunpack.c.h.b16 %v4894
        %v4972 = vunpack.c.l.b16 %v4895
        %v4973 = vunpack.c.h.b16 %v4895
        %v4974 = vunpack.c.l.b16 %v4896
        %v4975 = vunpack.c.h.b16 %v4896
        %v4976 = vunpack.c.l.b16 %v4897
        %v4977 = vunpack.c.h.b16 %v4897
        %v4978 = vunpack.c.l.b16 %v4898
        %v4979 = vunpack.c.h.b16 %v4898
        %v4980 = vunpack.c.l.b16 %v4899
        %v4981 = vunpack.c.h.b16 %v4899
        %v4982 = vunpack.c.l.b16 %v4900
        %v4983 = vunpack.c.h.b16 %v4900
        %v4984 = vunpack.c.l.b16 %v4901
        %v4985 = vunpack.c.h.b16 %v4901
        %v4986 = vunpack.c.l.b16 %v4902
        %v4987 = vunpack.c.h.b16 %v4902
        %v4988 = vunpack.c.l.b16 %v4903
        %v4989 = vunpack.c.h.b16 %v4903
        %v4990 = vunpack.c.l.b16 %v4904
        %v4991 = vunpack.c.h.b16 %v4904
        %v4992 = vunpack.c.l.b16 %v4905
        %v4993 = vunpack.c.h.b16 %v4905
        %v4994 = vunpack.c.l.b16 %v4906
        %v4995 = vunpack.c.h.b16 %v4906
        %v4996 = vunpack.c.l.b16 %v4907
        %v4997 = vunpack.c.h.b16 %v4907
        %v4998 = vunpack.c.l.b16 %v4908
        %v4999 = vunpack.c.h.b16 %v4908
        %v5000 = vunpack.c.l.b16 %v4909
        %v5001 = vunpack.c.h.b16 %v4909
        %v5002 = vunpack.c.l.b16 %v4910
        %v5003 = vunpack.c.h.b16 %v4910
        %v5004 = vunpack.c.l.b16 %v4911
        %v5005 = vunpack.c.h.b16 %v4911
        %v5006 = vunpack.c.l.b16 %v4912
        %v5007 = vunpack.c.h.b16 %v4912
        %v5008 = vunpack.c.l.b16 %v4913
        %v5009 = vunpack.c.h.b16 %v4913
        %v5010 = vpack.c.b16 %v4950, %v4946
        %v5011 = vpack.c.b16 %v4951, %v4947
        %v5012 = vpack.c.b16 %v4952, %v4948
        %v5013 = vpack.c.b16 %v4953, %v4949
        %v5014 = vpack.c.b16 %v4958, %v4954
        %v5015 = vpack.c.b16 %v4959, %v4955
        %v5016 = vpack.c.b16 %v4960, %v4956
        %v5017 = vpack.c.b16 %v4961, %v4957
        %v5018 = vpack.c.b16 %v4966, %v4962
        %v5019 = vpack.c.b16 %v4967, %v4963
        %v5020 = vpack.c.b16 %v4968, %v4964
        %v5021 = vpack.c.b16 %v4969, %v4965
        %v5022 = vpack.c.b16 %v4974, %v4970
        %v5023 = vpack.c.b16 %v4975, %v4971
        %v5024 = vpack.c.b16 %v4976, %v4972
        %v5025 = vpack.c.b16 %v4977, %v4973
        %v5026 = vpack.c.b16 %v4982, %v4978
        %v5027 = vpack.c.b16 %v4983, %v4979
        %v5028 = vpack.c.b16 %v4984, %v4980
        %v5029 = vpack.c.b16 %v4985, %v4981
        %v5030 = vpack.c.b16 %v4990, %v4986
        %v5031 = vpack.c.b16 %v4991, %v4987
        %v5032 = vpack.c.b16 %v4992, %v4988
        %v5033 = vpack.c.b16 %v4993, %v4989
        %v5034 = vpack.c.b16 %v4998, %v4994
        %v5035 = vpack.c.b16 %v4999, %v4995
        %v5036 = vpack.c.b16 %v5000, %v4996
        %v5037 = vpack.c.b16 %v5001, %v4997
        %v5038 = vpack.c.b16 %v5006, %v5002
        %v5039 = vpack.c.b16 %v5007, %v5003
        %v5040 = vpack.c.b16 %v5008, %v5004
        %v5041 = vpack.c.b16 %v5009, %v5005
        %5074 = vmatprep.subr.bf16.mxu0 %v5039
        %5075 = vmatpush1.bf16.msra.mxu0 %v5038
        %5076 = vmatprep.subr.bf16.mxu0 %v5035
        %5077 = vmatpush1.bf16.msra.mxu0 %v5034
        %5078 = vmatprep.subr.bf16.mxu0 %v5031
        %5079 = vmatpush1.bf16.msra.mxu0 %v5030
        %5080 = vmatprep.subr.bf16.mxu0 %v5027
        %5081 = vmatpush1.bf16.msra.mxu0 %v5026
        %5082 = vmatprep.subr.bf16.mxu0 %v5023
        %5083 = vmatpush1.bf16.msra.mxu0 %v5022
        %5084 = vmatprep.subr.bf16.mxu0 %v5019
        %5085 = vmatpush1.bf16.msra.mxu0 %v5018
        %5086 = vmatprep.subr.bf16.mxu0 %v5015
        %5087 = vmatpush1.bf16.msra.mxu0 %v5014
        %5088 = vmatprep.subr.bf16.mxu0 %v5011
        %5089 = vmatpush1.bf16.msra.mxu0 %v5010
        %5090 = vmatprep.subr.bf16.mxu0 0
        %5091 = vmatpush2.bf16.msra.mxu0 0
        %5092 = vmatprep.subr.bf16.mxu0 0
        %5093 = vmatpush2.bf16.msra.mxu0 0
        %5094 = vmatprep.subr.bf16.mxu0 0
        %5095 = vmatpush2.bf16.msra.mxu0 0
        %5096 = vmatprep.subr.bf16.mxu0 0
        %5097 = vmatpush2.bf16.msra.mxu0 0
        %5098 = vmatprep.subr.bf16.mxu0 0
        %5099 = vmatpush2.bf16.msra.mxu0 0
        %5100 = vmatprep.subr.bf16.mxu0 0
        %5101 = vmatpush2.bf16.msra.mxu0 0
        %5102 = vmatprep.subr.bf16.mxu0 0
        %5103 = vmatpush2.bf16.msra.mxu0 0
        %5104 = vmatprep.subr.bf16.mxu0 0
        %5105 = vmatpush2.bf16.msra.mxu0 0
        %5106 = vmatprep.mubr.bf16.mxu0 0
        %5107 = vmatmul.mubr.bf16.gmra.mxu0 %v4881
        %v5108 = vpop.f32.mrf.mxu0
        %v5109 = vadd.f32 0.0, %v5108
        %v5110 = vpop.f32.mrf.mxu0
        %v5111 = vadd.f32 0.0, %v5110
        %v5112 = vpop.f32.mrf.mxu0
        %v5113 = vpop.f32.mrf.mxu0
        %5114 = vdwg.mxu0
        %5115 = vmatprep.subr.bf16.mxu0 %v5041
        %5116 = vmatpush1.bf16.msra.mxu0 %v5040
        %5117 = vmatprep.subr.bf16.mxu0 %v5037
        %5118 = vmatpush1.bf16.msra.mxu0 %v5036
        %5119 = vmatprep.subr.bf16.mxu0 %v5033
        %5120 = vmatpush1.bf16.msra.mxu0 %v5032
        %5121 = vmatprep.subr.bf16.mxu0 %v5029
        %5122 = vmatpush1.bf16.msra.mxu0 %v5028
        %5123 = vmatprep.subr.bf16.mxu0 %v5025
        %5124 = vmatpush1.bf16.msra.mxu0 %v5024
        %5125 = vmatprep.subr.bf16.mxu0 %v5021
        %5126 = vmatpush1.bf16.msra.mxu0 %v5020
        %5127 = vmatprep.subr.bf16.mxu0 %v5017
        %5128 = vmatpush1.bf16.msra.mxu0 %v5016
        %5129 = vmatprep.subr.bf16.mxu0 %v5013
        %5130 = vmatpush1.bf16.msra.mxu0 %v5012
        %5131 = vmatprep.subr.bf16.mxu0 0
        %5132 = vmatpush2.bf16.msra.mxu0 0
        %5133 = vmatprep.subr.bf16.mxu0 0
        %5134 = vmatpush2.bf16.msra.mxu0 0
        %5135 = vmatprep.subr.bf16.mxu0 0
        %5136 = vmatpush2.bf16.msra.mxu0 0
        %5137 = vmatprep.subr.bf16.mxu0 0
        %5138 = vmatpush2.bf16.msra.mxu0 0
        %5139 = vmatprep.subr.bf16.mxu0 0
        %5140 = vmatpush2.bf16.msra.mxu0 0
        %5141 = vmatprep.subr.bf16.mxu0 0
        %5142 = vmatpush2.bf16.msra.mxu0 0
        %5143 = vmatprep.subr.bf16.mxu0 0
        %5144 = vmatpush2.bf16.msra.mxu0 0
        %5145 = vmatprep.subr.bf16.mxu0 0
        %5146 = vmatpush2.bf16.msra.mxu0 0
        %5147 = vmatprep.mubr.bf16.mxu0 0
        %5148 = vmatmul.mubr.bf16.gmra.mxu0 %v4881
        %v5149 = vpop.f32.mrf.mxu0
        %v5150 = vadd.f32 0.0, %v5149
        %v5151 = vpop.f32.mrf.mxu0
        %v5152 = vadd.f32 0.0, %v5151
        %v5153 = vpop.f32.mrf.mxu0
        %v5154 = vpop.f32.mrf.mxu0
        %5155 = vdwg.mxu0
        %v5156 = vadd.f32 %v4877, %v5109
        %v5157 = vadd.f32 %v4878, %v5111
        %v5158 = vadd.f32 %v4879, %v5150
        %v5159 = vadd.f32 %v4880, %v5152
        %v5160 = vsub.f32 0.0, %v5156
        %v5161 = vsub.f32 0.0, %v5157
        %v5162 = vsub.f32 0.0, %v5158
        %v5163 = vmul.f32 %v5160, 1.442695
        %v5164 = vpow.pop %v5163
        %v5165 = vmul.f32 %v5161, 1.442695
        %v5166 = vpow.pop %v5165
        %v5167 = vmul.f32 %v5162, 1.442695
        %v5168 = vpow.pop %v5167
        %v5169 = vadd.f32 %v5164, 1.0
        %v5170 = vadd.f32 %v5166, 1.0
        %v5171 = vadd.f32 %v5168, 1.0
        %v5172 = vrcp.pop %v5169
        %v5173 = vrcp.pop %v5170
        %v5174 = vrcp.pop %v5171
        %v5175 = vtanh.pop %v5159
        %v5176 = vmul.f32 %v5173, %v4873
        %v5177 = vmul.f32 %v5172, %v5175
        %v5178 = vadd.f32 %v5176, %v5177
        %v5179 = vtanh.pop %v5178
        %v5180 = vmul.f32 %v5174, %v5179
        %s5181 = sadd.s32 %s265, 12
        %v5182 = vstv %s5181
        %vm5183 = vcmp.lt.s32.totalorder %v5182, %v264
        %v5184 = vsel %vm5183, 1, 0
        %5185 = vset.pattern.permute.xlu0 0
        %5186 = vperm.xlu0 %5185, %v5184
        %v5187 = vpop.permute.xlu0 %5186
        %vm5188 = vcmp.eq.s32.totalorder %v5187, 1
        %v5189 = vsel %vm5188, %v5180, 0.0
        %v5191 = vcombine.high %v5189, %v5189
        %v5193 = vunpack.c.l.s4 1966171168
        %v5194 = vunpack.c.0.s8 %v5193
        %v5195 = vlaneseq
        %v5196 = vshrl.u32 %v5195, 7
        %v5197 = vsub.s32 %v5194, %v5196
        %v5198 = vrot.slane %v5189, %v5197
        %v5200 = vunpack.c.l.s4 1966171168
        %v5201 = vunpack.c.0.s8 %v5200
        %v5202 = vlaneseq
        %v5203 = vshrl.u32 %v5202, 7
        %v5204 = vsub.s32 %v5201, %v5203
        %v5205 = vrot.slane %v5191, %v5204
        %v5206 = vcombine.high %v5198, %v5198
        %v5207 = vcombine.high %v5205, %v5205
        %v5209 = vunpack.c.l.s4 1966171168
        %v5210 = vunpack.c.0.s8 %v5209
        %v5211 = vlaneseq
        %v5212 = vshrl.u32 %v5211, 7
        %v5213 = vsub.s32 %v5210, %v5212
        %v5214 = vrot.slane %v5198, %v5213
        %v5216 = vunpack.c.l.s4 1966171168
        %v5217 = vunpack.c.0.s8 %v5216
        %v5218 = vlaneseq
        %v5219 = vshrl.u32 %v5218, 7
        %v5220 = vsub.s32 %v5217, %v5219
        %v5221 = vrot.slane %v5205, %v5220
        %v5223 = vunpack.c.l.s4 1966171168
        %v5224 = vunpack.c.0.s8 %v5223
        %v5225 = vlaneseq
        %v5226 = vshrl.u32 %v5225, 7
        %v5227 = vsub.s32 %v5224, %v5226
        %v5228 = vrot.slane %v5206, %v5227
        %v5230 = vunpack.c.l.s4 1966171168
        %v5231 = vunpack.c.0.s8 %v5230
        %v5232 = vlaneseq
        %v5233 = vshrl.u32 %v5232, 7
        %v5234 = vsub.s32 %v5231, %v5233
        %v5235 = vrot.slane %v5207, %v5234
        %v5236 = vcombine.high %v5214, %v5214
        %v5237 = vcombine.high %v5221, %v5221
        %v5238 = vcombine.high %v5228, %v5228
        %v5239 = vcombine.high %v5235, %v5235
        %5248 = vst [vmem:[%s250 + $0xc] sm:$0x1] %v5214
        %5249 = vst [vmem:[%s250 + $0x1c] sm:$0x1] %v5228
        %5250 = vst [vmem:[%s250 + $0x2c] sm:$0x1] %v5236
        %5251 = vst [vmem:[%s250 + $0x3c] sm:$0x1] %v5238
        %5252 = vst [vmem:[%s250 + $0x4c] sm:$0x1] %v5221
        %5253 = vst [vmem:[%s250 + $0x5c] sm:$0x1] %v5235
        %5254 = vst [vmem:[%s250 + $0x6c] sm:$0x1] %v5237
        %5255 = vst [vmem:[%s250 + $0x7c] sm:$0x1] %v5239
        %v5256 = vsel %vm5188, %v5180, %v4872
        %v5257 = vsel %vm5188, %v5178, %v4873
        %s5258 = scalar_lea.vmem %s224, 208 [#allocation4]
        %v5259 = vld [vmem:[%s5258] sm:$0xff]
        %v5260 = vld [vmem:[%s5258 + $0x8] sm:$0xff]
        %v5261 = vunpack.c.l.bf16 %v5259
        %v5262 = vunpack.c.h.bf16 %v5259
        %v5263 = vunpack.c.l.bf16 %v5260
        %v5264 = vunpack.c.h.bf16 %v5260
        %v5265 = vpack.c.bf16 %v5256, %v5256
        %v5266 = vld [vmem:[#allocation7] sm:$0xff]
        %v5267 = vld [vmem:[#allocation7 + $0x8] sm:$0xff]
        %v5268 = vld [vmem:[#allocation7 + $0x10] sm:$0xff]
        %v5269 = vld [vmem:[#allocation7 + $0x18] sm:$0xff]
        %v5270 = vld [vmem:[#allocation7 + $0x20] sm:$0xff]
        %v5271 = vld [vmem:[#allocation7 + $0x28] sm:$0xff]
        %v5272 = vld [vmem:[#allocation7 + $0x30] sm:$0xff]
        %v5273 = vld [vmem:[#allocation7 + $0x38] sm:$0xff]
        %v5274 = vld [vmem:[#allocation7 + $0x40] sm:$0xff]
        %v5275 = vld [vmem:[#allocation7 + $0x48] sm:$0xff]
        %v5276 = vld [vmem:[#allocation7 + $0x50] sm:$0xff]
        %v5277 = vld [vmem:[#allocation7 + $0x58] sm:$0xff]
        %v5278 = vld [vmem:[#allocation7 + $0x60] sm:$0xff]
        %v5279 = vld [vmem:[#allocation7 + $0x68] sm:$0xff]
        %v5280 = vld [vmem:[#allocation7 + $0x70] sm:$0xff]
        %v5281 = vld [vmem:[#allocation7 + $0x78] sm:$0xff]
        %v5282 = vld [vmem:[#allocation7 + $0x80] sm:$0xff]
        %v5283 = vld [vmem:[#allocation7 + $0x88] sm:$0xff]
        %v5284 = vld [vmem:[#allocation7 + $0x90] sm:$0xff]
        %v5285 = vld [vmem:[#allocation7 + $0x98] sm:$0xff]
        %v5286 = vld [vmem:[#allocation7 + $0xa0] sm:$0xff]
        %v5287 = vld [vmem:[#allocation7 + $0xa8] sm:$0xff]
        %v5288 = vld [vmem:[#allocation7 + $0xb0] sm:$0xff]
        %v5289 = vld [vmem:[#allocation7 + $0xb8] sm:$0xff]
        %v5290 = vld [vmem:[#allocation7 + $0xc0] sm:$0xff]
        %v5291 = vld [vmem:[#allocation7 + $0xc8] sm:$0xff]
        %v5292 = vld [vmem:[#allocation7 + $0xd0] sm:$0xff]
        %v5293 = vld [vmem:[#allocation7 + $0xd8] sm:$0xff]
        %v5294 = vld [vmem:[#allocation7 + $0xe0] sm:$0xff]
        %v5295 = vld [vmem:[#allocation7 + $0xe8] sm:$0xff]
        %v5296 = vld [vmem:[#allocation7 + $0xf0] sm:$0xff]
        %v5297 = vld [vmem:[#allocation7 + $0xf8] sm:$0xff]
        %v5330 = vunpack.c.l.b16 %v5266
        %v5331 = vunpack.c.h.b16 %v5266
        %v5332 = vunpack.c.l.b16 %v5267
        %v5333 = vunpack.c.h.b16 %v5267
        %v5334 = vunpack.c.l.b16 %v5268
        %v5335 = vunpack.c.h.b16 %v5268
        %v5336 = vunpack.c.l.b16 %v5269
        %v5337 = vunpack.c.h.b16 %v5269
        %v5338 = vunpack.c.l.b16 %v5270
        %v5339 = vunpack.c.h.b16 %v5270
        %v5340 = vunpack.c.l.b16 %v5271
        %v5341 = vunpack.c.h.b16 %v5271
        %v5342 = vunpack.c.l.b16 %v5272
        %v5343 = vunpack.c.h.b16 %v5272
        %v5344 = vunpack.c.l.b16 %v5273
        %v5345 = vunpack.c.h.b16 %v5273
        %v5346 = vunpack.c.l.b16 %v5274
        %v5347 = vunpack.c.h.b16 %v5274
        %v5348 = vunpack.c.l.b16 %v5275
        %v5349 = vunpack.c.h.b16 %v5275
        %v5350 = vunpack.c.l.b16 %v5276
        %v5351 = vunpack.c.h.b16 %v5276
        %v5352 = vunpack.c.l.b16 %v5277
        %v5353 = vunpack.c.h.b16 %v5277
        %v5354 = vunpack.c.l.b16 %v5278
        %v5355 = vunpack.c.h.b16 %v5278
        %v5356 = vunpack.c.l.b16 %v5279
        %v5357 = vunpack.c.h.b16 %v5279
        %v5358 = vunpack.c.l.b16 %v5280
        %v5359 = vunpack.c.h.b16 %v5280
        %v5360 = vunpack.c.l.b16 %v5281
        %v5361 = vunpack.c.h.b16 %v5281
        %v5362 = vunpack.c.l.b16 %v5282
        %v5363 = vunpack.c.h.b16 %v5282
        %v5364 = vunpack.c.l.b16 %v5283
        %v5365 = vunpack.c.h.b16 %v5283
        %v5366 = vunpack.c.l.b16 %v5284
        %v5367 = vunpack.c.h.b16 %v5284
        %v5368 = vunpack.c.l.b16 %v5285
        %v5369 = vunpack.c.h.b16 %v5285
        %v5370 = vunpack.c.l.b16 %v5286
        %v5371 = vunpack.c.h.b16 %v5286
        %v5372 = vunpack.c.l.b16 %v5287
        %v5373 = vunpack.c.h.b16 %v5287
        %v5374 = vunpack.c.l.b16 %v5288
        %v5375 = vunpack.c.h.b16 %v5288
        %v5376 = vunpack.c.l.b16 %v5289
        %v5377 = vunpack.c.h.b16 %v5289
        %v5378 = vunpack.c.l.b16 %v5290
        %v5379 = vunpack.c.h.b16 %v5290
        %v5380 = vunpack.c.l.b16 %v5291
        %v5381 = vunpack.c.h.b16 %v5291
        %v5382 = vunpack.c.l.b16 %v5292
        %v5383 = vunpack.c.h.b16 %v5292
        %v5384 = vunpack.c.l.b16 %v5293
        %v5385 = vunpack.c.h.b16 %v5293
        %v5386 = vunpack.c.l.b16 %v5294
        %v5387 = vunpack.c.h.b16 %v5294
        %v5388 = vunpack.c.l.b16 %v5295
        %v5389 = vunpack.c.h.b16 %v5295
        %v5390 = vunpack.c.l.b16 %v5296
        %v5391 = vunpack.c.h.b16 %v5296
        %v5392 = vunpack.c.l.b16 %v5297
        %v5393 = vunpack.c.h.b16 %v5297
        %v5394 = vpack.c.b16 %v5334, %v5330
        %v5395 = vpack.c.b16 %v5335, %v5331
        %v5396 = vpack.c.b16 %v5336, %v5332
        %v5397 = vpack.c.b16 %v5337, %v5333
        %v5398 = vpack.c.b16 %v5342, %v5338
        %v5399 = vpack.c.b16 %v5343, %v5339
        %v5400 = vpack.c.b16 %v5344, %v5340
        %v5401 = vpack.c.b16 %v5345, %v5341
        %v5402 = vpack.c.b16 %v5350, %v5346
        %v5403 = vpack.c.b16 %v5351, %v5347
        %v5404 = vpack.c.b16 %v5352, %v5348
        %v5405 = vpack.c.b16 %v5353, %v5349
        %v5406 = vpack.c.b16 %v5358, %v5354
        %v5407 = vpack.c.b16 %v5359, %v5355
        %v5408 = vpack.c.b16 %v5360, %v5356
        %v5409 = vpack.c.b16 %v5361, %v5357
        %v5410 = vpack.c.b16 %v5366, %v5362
        %v5411 = vpack.c.b16 %v5367, %v5363
        %v5412 = vpack.c.b16 %v5368, %v5364
        %v5413 = vpack.c.b16 %v5369, %v5365
        %v5414 = vpack.c.b16 %v5374, %v5370
        %v5415 = vpack.c.b16 %v5375, %v5371
        %v5416 = vpack.c.b16 %v5376, %v5372
        %v5417 = vpack.c.b16 %v5377, %v5373
        %v5418 = vpack.c.b16 %v5382, %v5378
        %v5419 = vpack.c.b16 %v5383, %v5379
        %v5420 = vpack.c.b16 %v5384, %v5380
        %v5421 = vpack.c.b16 %v5385, %v5381
        %v5422 = vpack.c.b16 %v5390, %v5386
        %v5423 = vpack.c.b16 %v5391, %v5387
        %v5424 = vpack.c.b16 %v5392, %v5388
        %v5425 = vpack.c.b16 %v5393, %v5389
        %5458 = vmatprep.subr.bf16.mxu0 %v5423
        %5459 = vmatpush1.bf16.msra.mxu0 %v5422
        %5460 = vmatprep.subr.bf16.mxu0 %v5419
        %5461 = vmatpush1.bf16.msra.mxu0 %v5418
        %5462 = vmatprep.subr.bf16.mxu0 %v5415
        %5463 = vmatpush1.bf16.msra.mxu0 %v5414
        %5464 = vmatprep.subr.bf16.mxu0 %v5411
        %5465 = vmatpush1.bf16.msra.mxu0 %v5410
        %5466 = vmatprep.subr.bf16.mxu0 %v5407
        %5467 = vmatpush1.bf16.msra.mxu0 %v5406
        %5468 = vmatprep.subr.bf16.mxu0 %v5403
        %5469 = vmatpush1.bf16.msra.mxu0 %v5402
        %5470 = vmatprep.subr.bf16.mxu0 %v5399
        %5471 = vmatpush1.bf16.msra.mxu0 %v5398
        %5472 = vmatprep.subr.bf16.mxu0 %v5395
        %5473 = vmatpush1.bf16.msra.mxu0 %v5394
        %5474 = vmatprep.subr.bf16.mxu0 0
        %5475 = vmatpush2.bf16.msra.mxu0 0
        %5476 = vmatprep.subr.bf16.mxu0 0
        %5477 = vmatpush2.bf16.msra.mxu0 0
        %5478 = vmatprep.subr.bf16.mxu0 0
        %5479 = vmatpush2.bf16.msra.mxu0 0
        %5480 = vmatprep.subr.bf16.mxu0 0
        %5481 = vmatpush2.bf16.msra.mxu0 0
        %5482 = vmatprep.subr.bf16.mxu0 0
        %5483 = vmatpush2.bf16.msra.mxu0 0
        %5484 = vmatprep.subr.bf16.mxu0 0
        %5485 = vmatpush2.bf16.msra.mxu0 0
        %5486 = vmatprep.subr.bf16.mxu0 0
        %5487 = vmatpush2.bf16.msra.mxu0 0
        %5488 = vmatprep.subr.bf16.mxu0 0
        %5489 = vmatpush2.bf16.msra.mxu0 0
        %5490 = vmatprep.mubr.bf16.mxu0 0
        %5491 = vmatmul.mubr.bf16.gmra.mxu0 %v5265
        %v5492 = vpop.f32.mrf.mxu0
        %v5493 = vadd.f32 0.0, %v5492
        %v5494 = vpop.f32.mrf.mxu0
        %v5495 = vadd.f32 0.0, %v5494
        %v5496 = vpop.f32.mrf.mxu0
        %v5497 = vpop.f32.mrf.mxu0
        %5498 = vdwg.mxu0
        %5499 = vmatprep.subr.bf16.mxu0 %v5425
        %5500 = vmatpush1.bf16.msra.mxu0 %v5424
        %5501 = vmatprep.subr.bf16.mxu0 %v5421
        %5502 = vmatpush1.bf16.msra.mxu0 %v5420
        %5503 = vmatprep.subr.bf16.mxu0 %v5417
        %5504 = vmatpush1.bf16.msra.mxu0 %v5416
        %5505 = vmatprep.subr.bf16.mxu0 %v5413
        %5506 = vmatpush1.bf16.msra.mxu0 %v5412
        %5507 = vmatprep.subr.bf16.mxu0 %v5409
        %5508 = vmatpush1.bf16.msra.mxu0 %v5408
        %5509 = vmatprep.subr.bf16.mxu0 %v5405
        %5510 = vmatpush1.bf16.msra.mxu0 %v5404
        %5511 = vmatprep.subr.bf16.mxu0 %v5401
        %5512 = vmatpush1.bf16.msra.mxu0 %v5400
        %5513 = vmatprep.subr.bf16.mxu0 %v5397
        %5514 = vmatpush1.bf16.msra.mxu0 %v5396
        %5515 = vmatprep.subr.bf16.mxu0 0
        %5516 = vmatpush2.bf16.msra.mxu0 0
        %5517 = vmatprep.subr.bf16.mxu0 0
        %5518 = vmatpush2.bf16.msra.mxu0 0
        %5519 = vmatprep.subr.bf16.mxu0 0
        %5520 = vmatpush2.bf16.msra.mxu0 0
        %5521 = vmatprep.subr.bf16.mxu0 0
        %5522 = vmatpush2.bf16.msra.mxu0 0
        %5523 = vmatprep.subr.bf16.mxu0 0
        %5524 = vmatpush2.bf16.msra.mxu0 0
        %5525 = vmatprep.subr.bf16.mxu0 0
        %5526 = vmatpush2.bf16.msra.mxu0 0
        %5527 = vmatprep.subr.bf16.mxu0 0
        %5528 = vmatpush2.bf16.msra.mxu0 0
        %5529 = vmatprep.subr.bf16.mxu0 0
        %5530 = vmatpush2.bf16.msra.mxu0 0
        %5531 = vmatprep.mubr.bf16.mxu0 0
        %5532 = vmatmul.mubr.bf16.gmra.mxu0 %v5265
        %v5533 = vpop.f32.mrf.mxu0
        %v5534 = vadd.f32 0.0, %v5533
        %v5535 = vpop.f32.mrf.mxu0
        %v5536 = vadd.f32 0.0, %v5535
        %v5537 = vpop.f32.mrf.mxu0
        %v5538 = vpop.f32.mrf.mxu0
        %5539 = vdwg.mxu0
        %v5540 = vadd.f32 %v5261, %v5493
        %v5541 = vadd.f32 %v5262, %v5495
        %v5542 = vadd.f32 %v5263, %v5534
        %v5543 = vadd.f32 %v5264, %v5536
        %v5544 = vsub.f32 0.0, %v5540
        %v5545 = vsub.f32 0.0, %v5541
        %v5546 = vsub.f32 0.0, %v5542
        %v5547 = vmul.f32 %v5544, 1.442695
        %v5548 = vpow.pop %v5547
        %v5549 = vmul.f32 %v5545, 1.442695
        %v5550 = vpow.pop %v5549
        %v5551 = vmul.f32 %v5546, 1.442695
        %v5552 = vpow.pop %v5551
        %v5553 = vadd.f32 %v5548, 1.0
        %v5554 = vadd.f32 %v5550, 1.0
        %v5555 = vadd.f32 %v5552, 1.0
        %v5556 = vrcp.pop %v5553
        %v5557 = vrcp.pop %v5554
        %v5558 = vrcp.pop %v5555
        %v5559 = vtanh.pop %v5543
        %v5560 = vmul.f32 %v5557, %v5257
        %v5561 = vmul.f32 %v5556, %v5559
        %v5562 = vadd.f32 %v5560, %v5561
        %v5563 = vtanh.pop %v5562
        %v5564 = vmul.f32 %v5558, %v5563
        %s5565 = sadd.s32 %s265, 13
        %v5566 = vstv %s5565
        %vm5567 = vcmp.lt.s32.totalorder %v5566, %v264
        %v5568 = vsel %vm5567, 1, 0
        %5569 = vset.pattern.permute.xlu0 0
        %5570 = vperm.xlu0 %5569, %v5568
        %v5571 = vpop.permute.xlu0 %5570
        %vm5572 = vcmp.eq.s32.totalorder %v5571, 1
        %v5573 = vsel %vm5572, %v5564, 0.0
        %v5575 = vcombine.high %v5573, %v5573
        %v5577 = vunpack.c.l.s4 1966171168
        %v5578 = vunpack.c.0.s8 %v5577
        %v5579 = vlaneseq
        %v5580 = vshrl.u32 %v5579, 7
        %v5581 = vsub.s32 %v5578, %v5580
        %v5582 = vrot.slane %v5573, %v5581
        %v5584 = vunpack.c.l.s4 1966171168
        %v5585 = vunpack.c.0.s8 %v5584
        %v5586 = vlaneseq
        %v5587 = vshrl.u32 %v5586, 7
        %v5588 = vsub.s32 %v5585, %v5587
        %v5589 = vrot.slane %v5575, %v5588
        %v5590 = vcombine.high %v5582, %v5582
        %v5591 = vcombine.high %v5589, %v5589
        %v5593 = vunpack.c.l.s4 1966171168
        %v5594 = vunpack.c.0.s8 %v5593
        %v5595 = vlaneseq
        %v5596 = vshrl.u32 %v5595, 7
        %v5597 = vsub.s32 %v5594, %v5596
        %v5598 = vrot.slane %v5582, %v5597
        %v5600 = vunpack.c.l.s4 1966171168
        %v5601 = vunpack.c.0.s8 %v5600
        %v5602 = vlaneseq
        %v5603 = vshrl.u32 %v5602, 7
        %v5604 = vsub.s32 %v5601, %v5603
        %v5605 = vrot.slane %v5589, %v5604
        %v5607 = vunpack.c.l.s4 1966171168
        %v5608 = vunpack.c.0.s8 %v5607
        %v5609 = vlaneseq
        %v5610 = vshrl.u32 %v5609, 7
        %v5611 = vsub.s32 %v5608, %v5610
        %v5612 = vrot.slane %v5590, %v5611
        %v5614 = vunpack.c.l.s4 1966171168
        %v5615 = vunpack.c.0.s8 %v5614
        %v5616 = vlaneseq
        %v5617 = vshrl.u32 %v5616, 7
        %v5618 = vsub.s32 %v5615, %v5617
        %v5619 = vrot.slane %v5591, %v5618
        %v5620 = vcombine.high %v5598, %v5598
        %v5621 = vcombine.high %v5605, %v5605
        %v5622 = vcombine.high %v5612, %v5612
        %v5623 = vcombine.high %v5619, %v5619
        %5632 = vst [vmem:[%s250 + $0xd] sm:$0x1] %v5598
        %5633 = vst [vmem:[%s250 + $0x1d] sm:$0x1] %v5612
        %5634 = vst [vmem:[%s250 + $0x2d] sm:$0x1] %v5620
        %5635 = vst [vmem:[%s250 + $0x3d] sm:$0x1] %v5622
        %5636 = vst [vmem:[%s250 + $0x4d] sm:$0x1] %v5605
        %5637 = vst [vmem:[%s250 + $0x5d] sm:$0x1] %v5619
        %5638 = vst [vmem:[%s250 + $0x6d] sm:$0x1] %v5621
        %5639 = vst [vmem:[%s250 + $0x7d] sm:$0x1] %v5623
        %v5640 = vsel %vm5572, %v5564, %v5256
        %v5641 = vsel %vm5572, %v5562, %v5257
        %s5642 = scalar_lea.vmem %s224, 224 [#allocation4]
        %v5643 = vld [vmem:[%s5642] sm:$0xff]
        %v5644 = vld [vmem:[%s5642 + $0x8] sm:$0xff]
        %v5645 = vunpack.c.l.bf16 %v5643
        %v5646 = vunpack.c.h.bf16 %v5643
        %v5647 = vunpack.c.l.bf16 %v5644
        %v5648 = vunpack.c.h.bf16 %v5644
        %v5649 = vpack.c.bf16 %v5640, %v5640
        %v5650 = vld [vmem:[#allocation7] sm:$0xff]
        %v5651 = vld [vmem:[#allocation7 + $0x8] sm:$0xff]
        %v5652 = vld [vmem:[#allocation7 + $0x10] sm:$0xff]
        %v5653 = vld [vmem:[#allocation7 + $0x18] sm:$0xff]
        %v5654 = vld [vmem:[#allocation7 + $0x20] sm:$0xff]
        %v5655 = vld [vmem:[#allocation7 + $0x28] sm:$0xff]
        %v5656 = vld [vmem:[#allocation7 + $0x30] sm:$0xff]
        %v5657 = vld [vmem:[#allocation7 + $0x38] sm:$0xff]
        %v5658 = vld [vmem:[#allocation7 + $0x40] sm:$0xff]
        %v5659 = vld [vmem:[#allocation7 + $0x48] sm:$0xff]
        %v5660 = vld [vmem:[#allocation7 + $0x50] sm:$0xff]
        %v5661 = vld [vmem:[#allocation7 + $0x58] sm:$0xff]
        %v5662 = vld [vmem:[#allocation7 + $0x60] sm:$0xff]
        %v5663 = vld [vmem:[#allocation7 + $0x68] sm:$0xff]
        %v5664 = vld [vmem:[#allocation7 + $0x70] sm:$0xff]
        %v5665 = vld [vmem:[#allocation7 + $0x78] sm:$0xff]
        %v5666 = vld [vmem:[#allocation7 + $0x80] sm:$0xff]
        %v5667 = vld [vmem:[#allocation7 + $0x88] sm:$0xff]
        %v5668 = vld [vmem:[#allocation7 + $0x90] sm:$0xff]
        %v5669 = vld [vmem:[#allocation7 + $0x98] sm:$0xff]
        %v5670 = vld [vmem:[#allocation7 + $0xa0] sm:$0xff]
        %v5671 = vld [vmem:[#allocation7 + $0xa8] sm:$0xff]
        %v5672 = vld [vmem:[#allocation7 + $0xb0] sm:$0xff]
        %v5673 = vld [vmem:[#allocation7 + $0xb8] sm:$0xff]
        %v5674 = vld [vmem:[#allocation7 + $0xc0] sm:$0xff]
        %v5675 = vld [vmem:[#allocation7 + $0xc8] sm:$0xff]
        %v5676 = vld [vmem:[#allocation7 + $0xd0] sm:$0xff]
        %v5677 = vld [vmem:[#allocation7 + $0xd8] sm:$0xff]
        %v5678 = vld [vmem:[#allocation7 + $0xe0] sm:$0xff]
        %v5679 = vld [vmem:[#allocation7 + $0xe8] sm:$0xff]
        %v5680 = vld [vmem:[#allocation7 + $0xf0] sm:$0xff]
        %v5681 = vld [vmem:[#allocation7 + $0xf8] sm:$0xff]
        %v5714 = vunpack.c.l.b16 %v5650
        %v5715 = vunpack.c.h.b16 %v5650
        %v5716 = vunpack.c.l.b16 %v5651
        %v5717 = vunpack.c.h.b16 %v5651
        %v5718 = vunpack.c.l.b16 %v5652
        %v5719 = vunpack.c.h.b16 %v5652
        %v5720 = vunpack.c.l.b16 %v5653
        %v5721 = vunpack.c.h.b16 %v5653
        %v5722 = vunpack.c.l.b16 %v5654
        %v5723 = vunpack.c.h.b16 %v5654
        %v5724 = vunpack.c.l.b16 %v5655
        %v5725 = vunpack.c.h.b16 %v5655
        %v5726 = vunpack.c.l.b16 %v5656
        %v5727 = vunpack.c.h.b16 %v5656
        %v5728 = vunpack.c.l.b16 %v5657
        %v5729 = vunpack.c.h.b16 %v5657
        %v5730 = vunpack.c.l.b16 %v5658
        %v5731 = vunpack.c.h.b16 %v5658
        %v5732 = vunpack.c.l.b16 %v5659
        %v5733 = vunpack.c.h.b16 %v5659
        %v5734 = vunpack.c.l.b16 %v5660
        %v5735 = vunpack.c.h.b16 %v5660
        %v5736 = vunpack.c.l.b16 %v5661
        %v5737 = vunpack.c.h.b16 %v5661
        %v5738 = vunpack.c.l.b16 %v5662
        %v5739 = vunpack.c.h.b16 %v5662
        %v5740 = vunpack.c.l.b16 %v5663
        %v5741 = vunpack.c.h.b16 %v5663
        %v5742 = vunpack.c.l.b16 %v5664
        %v5743 = vunpack.c.h.b16 %v5664
        %v5744 = vunpack.c.l.b16 %v5665
        %v5745 = vunpack.c.h.b16 %v5665
        %v5746 = vunpack.c.l.b16 %v5666
        %v5747 = vunpack.c.h.b16 %v5666
        %v5748 = vunpack.c.l.b16 %v5667
        %v5749 = vunpack.c.h.b16 %v5667
        %v5750 = vunpack.c.l.b16 %v5668
        %v5751 = vunpack.c.h.b16 %v5668
        %v5752 = vunpack.c.l.b16 %v5669
        %v5753 = vunpack.c.h.b16 %v5669
        %v5754 = vunpack.c.l.b16 %v5670
        %v5755 = vunpack.c.h.b16 %v5670
        %v5756 = vunpack.c.l.b16 %v5671
        %v5757 = vunpack.c.h.b16 %v5671
        %v5758 = vunpack.c.l.b16 %v5672
        %v5759 = vunpack.c.h.b16 %v5672
        %v5760 = vunpack.c.l.b16 %v5673
        %v5761 = vunpack.c.h.b16 %v5673
        %v5762 = vunpack.c.l.b16 %v5674
        %v5763 = vunpack.c.h.b16 %v5674
        %v5764 = vunpack.c.l.b16 %v5675
        %v5765 = vunpack.c.h.b16 %v5675
        %v5766 = vunpack.c.l.b16 %v5676
        %v5767 = vunpack.c.h.b16 %v5676
        %v5768 = vunpack.c.l.b16 %v5677
        %v5769 = vunpack.c.h.b16 %v5677
        %v5770 = vunpack.c.l.b16 %v5678
        %v5771 = vunpack.c.h.b16 %v5678
        %v5772 = vunpack.c.l.b16 %v5679
        %v5773 = vunpack.c.h.b16 %v5679
        %v5774 = vunpack.c.l.b16 %v5680
        %v5775 = vunpack.c.h.b16 %v5680
        %v5776 = vunpack.c.l.b16 %v5681
        %v5777 = vunpack.c.h.b16 %v5681
        %v5778 = vpack.c.b16 %v5718, %v5714
        %v5779 = vpack.c.b16 %v5719, %v5715
        %v5780 = vpack.c.b16 %v5720, %v5716
        %v5781 = vpack.c.b16 %v5721, %v5717
        %v5782 = vpack.c.b16 %v5726, %v5722
        %v5783 = vpack.c.b16 %v5727, %v5723
        %v5784 = vpack.c.b16 %v5728, %v5724
        %v5785 = vpack.c.b16 %v5729, %v5725
        %v5786 = vpack.c.b16 %v5734, %v5730
        %v5787 = vpack.c.b16 %v5735, %v5731
        %v5788 = vpack.c.b16 %v5736, %v5732
        %v5789 = vpack.c.b16 %v5737, %v5733
        %v5790 = vpack.c.b16 %v5742, %v5738
        %v5791 = vpack.c.b16 %v5743, %v5739
        %v5792 = vpack.c.b16 %v5744, %v5740
        %v5793 = vpack.c.b16 %v5745, %v5741
        %v5794 = vpack.c.b16 %v5750, %v5746
        %v5795 = vpack.c.b16 %v5751, %v5747
        %v5796 = vpack.c.b16 %v5752, %v5748
        %v5797 = vpack.c.b16 %v5753, %v5749
        %v5798 = vpack.c.b16 %v5758, %v5754
        %v5799 = vpack.c.b16 %v5759, %v5755
        %v5800 = vpack.c.b16 %v5760, %v5756
        %v5801 = vpack.c.b16 %v5761, %v5757
        %v5802 = vpack.c.b16 %v5766, %v5762
        %v5803 = vpack.c.b16 %v5767, %v5763
        %v5804 = vpack.c.b16 %v5768, %v5764
        %v5805 = vpack.c.b16 %v5769, %v5765
        %v5806 = vpack.c.b16 %v5774, %v5770
        %v5807 = vpack.c.b16 %v5775, %v5771
        %v5808 = vpack.c.b16 %v5776, %v5772
        %v5809 = vpack.c.b16 %v5777, %v5773
        %5842 = vmatprep.subr.bf16.mxu0 %v5807
        %5843 = vmatpush1.bf16.msra.mxu0 %v5806
        %5844 = vmatprep.subr.bf16.mxu0 %v5803
        %5845 = vmatpush1.bf16.msra.mxu0 %v5802
        %5846 = vmatprep.subr.bf16.mxu0 %v5799
        %5847 = vmatpush1.bf16.msra.mxu0 %v5798
        %5848 = vmatprep.subr.bf16.mxu0 %v5795
        %5849 = vmatpush1.bf16.msra.mxu0 %v5794
        %5850 = vmatprep.subr.bf16.mxu0 %v5791
        %5851 = vmatpush1.bf16.msra.mxu0 %v5790
        %5852 = vmatprep.subr.bf16.mxu0 %v5787
        %5853 = vmatpush1.bf16.msra.mxu0 %v5786
        %5854 = vmatprep.subr.bf16.mxu0 %v5783
        %5855 = vmatpush1.bf16.msra.mxu0 %v5782
        %5856 = vmatprep.subr.bf16.mxu0 %v5779
        %5857 = vmatpush1.bf16.msra.mxu0 %v5778
        %5858 = vmatprep.subr.bf16.mxu0 0
        %5859 = vmatpush2.bf16.msra.mxu0 0
        %5860 = vmatprep.subr.bf16.mxu0 0
        %5861 = vmatpush2.bf16.msra.mxu0 0
        %5862 = vmatprep.subr.bf16.mxu0 0
        %5863 = vmatpush2.bf16.msra.mxu0 0
        %5864 = vmatprep.subr.bf16.mxu0 0
        %5865 = vmatpush2.bf16.msra.mxu0 0
        %5866 = vmatprep.subr.bf16.mxu0 0
        %5867 = vmatpush2.bf16.msra.mxu0 0
        %5868 = vmatprep.subr.bf16.mxu0 0
        %5869 = vmatpush2.bf16.msra.mxu0 0
        %5870 = vmatprep.subr.bf16.mxu0 0
        %5871 = vmatpush2.bf16.msra.mxu0 0
        %5872 = vmatprep.subr.bf16.mxu0 0
        %5873 = vmatpush2.bf16.msra.mxu0 0
        %5874 = vmatprep.mubr.bf16.mxu0 0
        %5875 = vmatmul.mubr.bf16.gmra.mxu0 %v5649
        %v5876 = vpop.f32.mrf.mxu0
        %v5877 = vadd.f32 0.0, %v5876
        %v5878 = vpop.f32.mrf.mxu0
        %v5879 = vadd.f32 0.0, %v5878
        %v5880 = vpop.f32.mrf.mxu0
        %v5881 = vpop.f32.mrf.mxu0
        %5882 = vdwg.mxu0
        %5883 = vmatprep.subr.bf16.mxu0 %v5809
        %5884 = vmatpush1.bf16.msra.mxu0 %v5808
        %5885 = vmatprep.subr.bf16.mxu0 %v5805
        %5886 = vmatpush1.bf16.msra.mxu0 %v5804
        %5887 = vmatprep.subr.bf16.mxu0 %v5801
        %5888 = vmatpush1.bf16.msra.mxu0 %v5800
        %5889 = vmatprep.subr.bf16.mxu0 %v5797
        %5890 = vmatpush1.bf16.msra.mxu0 %v5796
        %5891 = vmatprep.subr.bf16.mxu0 %v5793
        %5892 = vmatpush1.bf16.msra.mxu0 %v5792
        %5893 = vmatprep.subr.bf16.mxu0 %v5789
        %5894 = vmatpush1.bf16.msra.mxu0 %v5788
        %5895 = vmatprep.subr.bf16.mxu0 %v5785
        %5896 = vmatpush1.bf16.msra.mxu0 %v5784
        %5897 = vmatprep.subr.bf16.mxu0 %v5781
        %5898 = vmatpush1.bf16.msra.mxu0 %v5780
        %5899 = vmatprep.subr.bf16.mxu0 0
        %5900 = vmatpush2.bf16.msra.mxu0 0
        %5901 = vmatprep.subr.bf16.mxu0 0
        %5902 = vmatpush2.bf16.msra.mxu0 0
        %5903 = vmatprep.subr.bf16.mxu0 0
        %5904 = vmatpush2.bf16.msra.mxu0 0
        %5905 = vmatprep.subr.bf16.mxu0 0
        %5906 = vmatpush2.bf16.msra.mxu0 0
        %5907 = vmatprep.subr.bf16.mxu0 0
        %5908 = vmatpush2.bf16.msra.mxu0 0
        %5909 = vmatprep.subr.bf16.mxu0 0
        %5910 = vmatpush2.bf16.msra.mxu0 0
        %5911 = vmatprep.subr.bf16.mxu0 0
        %5912 = vmatpush2.bf16.msra.mxu0 0
        %5913 = vmatprep.subr.bf16.mxu0 0
        %5914 = vmatpush2.bf16.msra.mxu0 0
        %5915 = vmatprep.mubr.bf16.mxu0 0
        %5916 = vmatmul.mubr.bf16.gmra.mxu0 %v5649
        %v5917 = vpop.f32.mrf.mxu0
        %v5918 = vadd.f32 0.0, %v5917
        %v5919 = vpop.f32.mrf.mxu0
        %v5920 = vadd.f32 0.0, %v5919
        %v5921 = vpop.f32.mrf.mxu0
        %v5922 = vpop.f32.mrf.mxu0
        %5923 = vdwg.mxu0
        %v5924 = vadd.f32 %v5645, %v5877
        %v5925 = vadd.f32 %v5646, %v5879
        %v5926 = vadd.f32 %v5647, %v5918
        %v5927 = vadd.f32 %v5648, %v5920
        %v5928 = vsub.f32 0.0, %v5924
        %v5929 = vsub.f32 0.0, %v5925
        %v5930 = vsub.f32 0.0, %v5926
        %v5931 = vmul.f32 %v5928, 1.442695
        %v5932 = vpow.pop %v5931
        %v5933 = vmul.f32 %v5929, 1.442695
        %v5934 = vpow.pop %v5933
        %v5935 = vmul.f32 %v5930, 1.442695
        %v5936 = vpow.pop %v5935
        %v5937 = vadd.f32 %v5932, 1.0
        %v5938 = vadd.f32 %v5934, 1.0
        %v5939 = vadd.f32 %v5936, 1.0
        %v5940 = vrcp.pop %v5937
        %v5941 = vrcp.pop %v5938
        %v5942 = vrcp.pop %v5939
        %v5943 = vtanh.pop %v5927
        %v5944 = vmul.f32 %v5941, %v5641
        %v5945 = vmul.f32 %v5940, %v5943
        %v5946 = vadd.f32 %v5944, %v5945
        %v5947 = vtanh.pop %v5946
        %v5948 = vmul.f32 %v5942, %v5947
        %s5949 = sadd.s32 %s265, 14
        %v5950 = vstv %s5949
        %vm5951 = vcmp.lt.s32.totalorder %v5950, %v264
        %v5952 = vsel %vm5951, 1, 0
        %5953 = vset.pattern.permute.xlu0 0
        %5954 = vperm.xlu0 %5953, %v5952
        %v5955 = vpop.permute.xlu0 %5954
        %vm5956 = vcmp.eq.s32.totalorder %v5955, 1
        %v5957 = vsel %vm5956, %v5948, 0.0
        %v5959 = vcombine.high %v5957, %v5957
        %v5961 = vunpack.c.l.s4 1966171168
        %v5962 = vunpack.c.0.s8 %v5961
        %v5963 = vlaneseq
        %v5964 = vshrl.u32 %v5963, 7
        %v5965 = vsub.s32 %v5962, %v5964
        %v5966 = vrot.slane %v5957, %v5965
        %v5968 = vunpack.c.l.s4 1966171168
        %v5969 = vunpack.c.0.s8 %v5968
        %v5970 = vlaneseq
        %v5971 = vshrl.u32 %v5970, 7
        %v5972 = vsub.s32 %v5969, %v5971
        %v5973 = vrot.slane %v5959, %v5972
        %v5974 = vcombine.high %v5966, %v5966
        %v5975 = vcombine.high %v5973, %v5973
        %v5977 = vunpack.c.l.s4 1966171168
        %v5978 = vunpack.c.0.s8 %v5977
        %v5979 = vlaneseq
        %v5980 = vshrl.u32 %v5979, 7
        %v5981 = vsub.s32 %v5978, %v5980
        %v5982 = vrot.slane %v5966, %v5981
        %v5984 = vunpack.c.l.s4 1966171168
        %v5985 = vunpack.c.0.s8 %v5984
        %v5986 = vlaneseq
        %v5987 = vshrl.u32 %v5986, 7
        %v5988 = vsub.s32 %v5985, %v5987
        %v5989 = vrot.slane %v5973, %v5988
        %v5991 = vunpack.c.l.s4 1966171168
        %v5992 = vunpack.c.0.s8 %v5991
        %v5993 = vlaneseq
        %v5994 = vshrl.u32 %v5993, 7
        %v5995 = vsub.s32 %v5992, %v5994
        %v5996 = vrot.slane %v5974, %v5995
        %v5998 = vunpack.c.l.s4 1966171168
        %v5999 = vunpack.c.0.s8 %v5998
        %v6000 = vlaneseq
        %v6001 = vshrl.u32 %v6000, 7
        %v6002 = vsub.s32 %v5999, %v6001
        %v6003 = vrot.slane %v5975, %v6002
        %v6004 = vcombine.high %v5982, %v5982
        %v6005 = vcombine.high %v5989, %v5989
        %v6006 = vcombine.high %v5996, %v5996
        %v6007 = vcombine.high %v6003, %v6003
        %6016 = vst [vmem:[%s250 + $0xe] sm:$0x1] %v5982
        %6017 = vst [vmem:[%s250 + $0x1e] sm:$0x1] %v5996
        %6018 = vst [vmem:[%s250 + $0x2e] sm:$0x1] %v6004
        %6019 = vst [vmem:[%s250 + $0x3e] sm:$0x1] %v6006
        %6020 = vst [vmem:[%s250 + $0x4e] sm:$0x1] %v5989
        %6021 = vst [vmem:[%s250 + $0x5e] sm:$0x1] %v6003
        %6022 = vst [vmem:[%s250 + $0x6e] sm:$0x1] %v6005
        %6023 = vst [vmem:[%s250 + $0x7e] sm:$0x1] %v6007
        %v6024 = vsel %vm5956, %v5948, %v5640
        %v6025 = vsel %vm5956, %v5946, %v5641
        %s6026 = scalar_lea.vmem %s224, 240 [#allocation4]
        %v6027 = vld [vmem:[%s6026] sm:$0xff]
        %v6028 = vld [vmem:[%s6026 + $0x8] sm:$0xff]
        %v6029 = vunpack.c.l.bf16 %v6027
        %v6030 = vunpack.c.h.bf16 %v6027
        %v6031 = vunpack.c.l.bf16 %v6028
        %v6032 = vunpack.c.h.bf16 %v6028
        %v6033 = vpack.c.bf16 %v6024, %v6024
        %v6034 = vld [vmem:[#allocation7] sm:$0xff]
        %v6035 = vld [vmem:[#allocation7 + $0x8] sm:$0xff]
        %v6036 = vld [vmem:[#allocation7 + $0x10] sm:$0xff]
        %v6037 = vld [vmem:[#allocation7 + $0x18] sm:$0xff]
        %v6038 = vld [vmem:[#allocation7 + $0x20] sm:$0xff]
        %v6039 = vld [vmem:[#allocation7 + $0x28] sm:$0xff]
        %v6040 = vld [vmem:[#allocation7 + $0x30] sm:$0xff]
        %v6041 = vld [vmem:[#allocation7 + $0x38] sm:$0xff]
        %v6042 = vld [vmem:[#allocation7 + $0x40] sm:$0xff]
        %v6043 = vld [vmem:[#allocation7 + $0x48] sm:$0xff]
        %v6044 = vld [vmem:[#allocation7 + $0x50] sm:$0xff]
        %v6045 = vld [vmem:[#allocation7 + $0x58] sm:$0xff]
        %v6046 = vld [vmem:[#allocation7 + $0x60] sm:$0xff]
        %v6047 = vld [vmem:[#allocation7 + $0x68] sm:$0xff]
        %v6048 = vld [vmem:[#allocation7 + $0x70] sm:$0xff]
        %v6049 = vld [vmem:[#allocation7 + $0x78] sm:$0xff]
        %v6050 = vld [vmem:[#allocation7 + $0x80] sm:$0xff]
        %v6051 = vld [vmem:[#allocation7 + $0x88] sm:$0xff]
        %v6052 = vld [vmem:[#allocation7 + $0x90] sm:$0xff]
        %v6053 = vld [vmem:[#allocation7 + $0x98] sm:$0xff]
        %v6054 = vld [vmem:[#allocation7 + $0xa0] sm:$0xff]
        %v6055 = vld [vmem:[#allocation7 + $0xa8] sm:$0xff]
        %v6056 = vld [vmem:[#allocation7 + $0xb0] sm:$0xff]
        %v6057 = vld [vmem:[#allocation7 + $0xb8] sm:$0xff]
        %v6058 = vld [vmem:[#allocation7 + $0xc0] sm:$0xff]
        %v6059 = vld [vmem:[#allocation7 + $0xc8] sm:$0xff]
        %v6060 = vld [vmem:[#allocation7 + $0xd0] sm:$0xff]
        %v6061 = vld [vmem:[#allocation7 + $0xd8] sm:$0xff]
        %v6062 = vld [vmem:[#allocation7 + $0xe0] sm:$0xff]
        %v6063 = vld [vmem:[#allocation7 + $0xe8] sm:$0xff]
        %v6064 = vld [vmem:[#allocation7 + $0xf0] sm:$0xff]
        %v6065 = vld [vmem:[#allocation7 + $0xf8] sm:$0xff]
        %v6098 = vunpack.c.l.b16 %v6034
        %v6099 = vunpack.c.h.b16 %v6034
        %v6100 = vunpack.c.l.b16 %v6035
        %v6101 = vunpack.c.h.b16 %v6035
        %v6102 = vunpack.c.l.b16 %v6036
        %v6103 = vunpack.c.h.b16 %v6036
        %v6104 = vunpack.c.l.b16 %v6037
        %v6105 = vunpack.c.h.b16 %v6037
        %v6106 = vunpack.c.l.b16 %v6038
        %v6107 = vunpack.c.h.b16 %v6038
        %v6108 = vunpack.c.l.b16 %v6039
        %v6109 = vunpack.c.h.b16 %v6039
        %v6110 = vunpack.c.l.b16 %v6040
        %v6111 = vunpack.c.h.b16 %v6040
        %v6112 = vunpack.c.l.b16 %v6041
        %v6113 = vunpack.c.h.b16 %v6041
        %v6114 = vunpack.c.l.b16 %v6042
        %v6115 = vunpack.c.h.b16 %v6042
        %v6116 = vunpack.c.l.b16 %v6043
        %v6117 = vunpack.c.h.b16 %v6043
        %v6118 = vunpack.c.l.b16 %v6044
        %v6119 = vunpack.c.h.b16 %v6044
        %v6120 = vunpack.c.l.b16 %v6045
        %v6121 = vunpack.c.h.b16 %v6045
        %v6122 = vunpack.c.l.b16 %v6046
        %v6123 = vunpack.c.h.b16 %v6046
        %v6124 = vunpack.c.l.b16 %v6047
        %v6125 = vunpack.c.h.b16 %v6047
        %v6126 = vunpack.c.l.b16 %v6048
        %v6127 = vunpack.c.h.b16 %v6048
        %v6128 = vunpack.c.l.b16 %v6049
        %v6129 = vunpack.c.h.b16 %v6049
        %v6130 = vunpack.c.l.b16 %v6050
        %v6131 = vunpack.c.h.b16 %v6050
        %v6132 = vunpack.c.l.b16 %v6051
        %v6133 = vunpack.c.h.b16 %v6051
        %v6134 = vunpack.c.l.b16 %v6052
        %v6135 = vunpack.c.h.b16 %v6052
        %v6136 = vunpack.c.l.b16 %v6053
        %v6137 = vunpack.c.h.b16 %v6053
        %v6138 = vunpack.c.l.b16 %v6054
        %v6139 = vunpack.c.h.b16 %v6054
        %v6140 = vunpack.c.l.b16 %v6055
        %v6141 = vunpack.c.h.b16 %v6055
        %v6142 = vunpack.c.l.b16 %v6056
        %v6143 = vunpack.c.h.b16 %v6056
        %v6144 = vunpack.c.l.b16 %v6057
        %v6145 = vunpack.c.h.b16 %v6057
        %v6146 = vunpack.c.l.b16 %v6058
        %v6147 = vunpack.c.h.b16 %v6058
        %v6148 = vunpack.c.l.b16 %v6059
        %v6149 = vunpack.c.h.b16 %v6059
        %v6150 = vunpack.c.l.b16 %v6060
        %v6151 = vunpack.c.h.b16 %v6060
        %v6152 = vunpack.c.l.b16 %v6061
        %v6153 = vunpack.c.h.b16 %v6061
        %v6154 = vunpack.c.l.b16 %v6062
        %v6155 = vunpack.c.h.b16 %v6062
        %v6156 = vunpack.c.l.b16 %v6063
        %v6157 = vunpack.c.h.b16 %v6063
        %v6158 = vunpack.c.l.b16 %v6064
        %v6159 = vunpack.c.h.b16 %v6064
        %v6160 = vunpack.c.l.b16 %v6065
        %v6161 = vunpack.c.h.b16 %v6065
        %v6162 = vpack.c.b16 %v6102, %v6098
        %v6163 = vpack.c.b16 %v6103, %v6099
        %v6164 = vpack.c.b16 %v6104, %v6100
        %v6165 = vpack.c.b16 %v6105, %v6101
        %v6166 = vpack.c.b16 %v6110, %v6106
        %v6167 = vpack.c.b16 %v6111, %v6107
        %v6168 = vpack.c.b16 %v6112, %v6108
        %v6169 = vpack.c.b16 %v6113, %v6109
        %v6170 = vpack.c.b16 %v6118, %v6114
        %v6171 = vpack.c.b16 %v6119, %v6115
        %v6172 = vpack.c.b16 %v6120, %v6116
        %v6173 = vpack.c.b16 %v6121, %v6117
        %v6174 = vpack.c.b16 %v6126, %v6122
        %v6175 = vpack.c.b16 %v6127, %v6123
        %v6176 = vpack.c.b16 %v6128, %v6124
        %v6177 = vpack.c.b16 %v6129, %v6125
        %v6178 = vpack.c.b16 %v6134, %v6130
        %v6179 = vpack.c.b16 %v6135, %v6131
        %v6180 = vpack.c.b16 %v6136, %v6132
        %v6181 = vpack.c.b16 %v6137, %v6133
        %v6182 = vpack.c.b16 %v6142, %v6138
        %v6183 = vpack.c.b16 %v6143, %v6139
        %v6184 = vpack.c.b16 %v6144, %v6140
        %v6185 = vpack.c.b16 %v6145, %v6141
        %v6186 = vpack.c.b16 %v6150, %v6146
        %v6187 = vpack.c.b16 %v6151, %v6147
        %v6188 = vpack.c.b16 %v6152, %v6148
        %v6189 = vpack.c.b16 %v6153, %v6149
        %v6190 = vpack.c.b16 %v6158, %v6154
        %v6191 = vpack.c.b16 %v6159, %v6155
        %v6192 = vpack.c.b16 %v6160, %v6156
        %v6193 = vpack.c.b16 %v6161, %v6157
        %6226 = vmatprep.subr.bf16.mxu0 %v6191
        %6227 = vmatpush1.bf16.msra.mxu0 %v6190
        %6228 = vmatprep.subr.bf16.mxu0 %v6187
        %6229 = vmatpush1.bf16.msra.mxu0 %v6186
        %6230 = vmatprep.subr.bf16.mxu0 %v6183
        %6231 = vmatpush1.bf16.msra.mxu0 %v6182
        %6232 = vmatprep.subr.bf16.mxu0 %v6179
        %6233 = vmatpush1.bf16.msra.mxu0 %v6178
        %6234 = vmatprep.subr.bf16.mxu0 %v6175
        %6235 = vmatpush1.bf16.msra.mxu0 %v6174
        %6236 = vmatprep.subr.bf16.mxu0 %v6171
        %6237 = vmatpush1.bf16.msra.mxu0 %v6170
        %6238 = vmatprep.subr.bf16.mxu0 %v6167
        %6239 = vmatpush1.bf16.msra.mxu0 %v6166
        %6240 = vmatprep.subr.bf16.mxu0 %v6163
        %6241 = vmatpush1.bf16.msra.mxu0 %v6162
        %6242 = vmatprep.subr.bf16.mxu0 0
        %6243 = vmatpush2.bf16.msra.mxu0 0
        %6244 = vmatprep.subr.bf16.mxu0 0
        %6245 = vmatpush2.bf16.msra.mxu0 0
        %6246 = vmatprep.subr.bf16.mxu0 0
        %6247 = vmatpush2.bf16.msra.mxu0 0
        %6248 = vmatprep.subr.bf16.mxu0 0
        %6249 = vmatpush2.bf16.msra.mxu0 0
        %6250 = vmatprep.subr.bf16.mxu0 0
        %6251 = vmatpush2.bf16.msra.mxu0 0
        %6252 = vmatprep.subr.bf16.mxu0 0
        %6253 = vmatpush2.bf16.msra.mxu0 0
        %6254 = vmatprep.subr.bf16.mxu0 0
        %6255 = vmatpush2.bf16.msra.mxu0 0
        %6256 = vmatprep.subr.bf16.mxu0 0
        %6257 = vmatpush2.bf16.msra.mxu0 0
        %6258 = vmatprep.mubr.bf16.mxu0 0
        %6259 = vmatmul.mubr.bf16.gmra.mxu0 %v6033
        %v6260 = vpop.f32.mrf.mxu0
        %v6261 = vadd.f32 0.0, %v6260
        %v6262 = vpop.f32.mrf.mxu0
        %v6263 = vadd.f32 0.0, %v6262
        %v6264 = vpop.f32.mrf.mxu0
        %v6265 = vpop.f32.mrf.mxu0
        %6266 = vdwg.mxu0
        %6267 = vmatprep.subr.bf16.mxu0 %v6193
        %6268 = vmatpush1.bf16.msra.mxu0 %v6192
        %6269 = vmatprep.subr.bf16.mxu0 %v6189
        %6270 = vmatpush1.bf16.msra.mxu0 %v6188
        %6271 = vmatprep.subr.bf16.mxu0 %v6185
        %6272 = vmatpush1.bf16.msra.mxu0 %v6184
        %6273 = vmatprep.subr.bf16.mxu0 %v6181
        %6274 = vmatpush1.bf16.msra.mxu0 %v6180
        %6275 = vmatprep.subr.bf16.mxu0 %v6177
        %6276 = vmatpush1.bf16.msra.mxu0 %v6176
        %6277 = vmatprep.subr.bf16.mxu0 %v6173
        %6278 = vmatpush1.bf16.msra.mxu0 %v6172
        %6279 = vmatprep.subr.bf16.mxu0 %v6169
        %6280 = vmatpush1.bf16.msra.mxu0 %v6168
        %6281 = vmatprep.subr.bf16.mxu0 %v6165
        %6282 = vmatpush1.bf16.msra.mxu0 %v6164
        %6283 = vmatprep.subr.bf16.mxu0 0
        %6284 = vmatpush2.bf16.msra.mxu0 0
        %6285 = vmatprep.subr.bf16.mxu0 0
        %6286 = vmatpush2.bf16.msra.mxu0 0
        %6287 = vmatprep.subr.bf16.mxu0 0
        %6288 = vmatpush2.bf16.msra.mxu0 0
        %6289 = vmatprep.subr.bf16.mxu0 0
        %6290 = vmatpush2.bf16.msra.mxu0 0
        %6291 = vmatprep.subr.bf16.mxu0 0
        %6292 = vmatpush2.bf16.msra.mxu0 0
        %6293 = vmatprep.subr.bf16.mxu0 0
        %6294 = vmatpush2.bf16.msra.mxu0 0
        %6295 = vmatprep.subr.bf16.mxu0 0
        %6296 = vmatpush2.bf16.msra.mxu0 0
        %6297 = vmatprep.subr.bf16.mxu0 0
        %6298 = vmatpush2.bf16.msra.mxu0 0
        %6299 = vmatprep.mubr.bf16.mxu0 0
        %6300 = vmatmul.mubr.bf16.gmra.mxu0 %v6033
        %v6301 = vpop.f32.mrf.mxu0
        %v6302 = vadd.f32 0.0, %v6301
        %v6303 = vpop.f32.mrf.mxu0
        %v6304 = vadd.f32 0.0, %v6303
        %v6305 = vpop.f32.mrf.mxu0
        %v6306 = vpop.f32.mrf.mxu0
        %6307 = vdwg.mxu0
        %v6308 = vadd.f32 %v6029, %v6261
        %v6309 = vadd.f32 %v6030, %v6263
        %v6310 = vadd.f32 %v6031, %v6302
        %v6311 = vadd.f32 %v6032, %v6304
        %v6312 = vsub.f32 0.0, %v6308
        %v6313 = vsub.f32 0.0, %v6309
        %v6314 = vsub.f32 0.0, %v6310
        %v6315 = vmul.f32 %v6312, 1.442695
        %v6316 = vpow.pop %v6315
        %v6317 = vmul.f32 %v6313, 1.442695
        %v6318 = vpow.pop %v6317
        %v6319 = vmul.f32 %v6314, 1.442695
        %v6320 = vpow.pop %v6319
        %v6321 = vadd.f32 %v6316, 1.0
        %v6322 = vadd.f32 %v6318, 1.0
        %v6323 = vadd.f32 %v6320, 1.0
        %v6324 = vrcp.pop %v6321
        %v6325 = vrcp.pop %v6322
        %v6326 = vrcp.pop %v6323
        %v6327 = vtanh.pop %v6311
        %v6328 = vmul.f32 %v6325, %v6025
        %v6329 = vmul.f32 %v6324, %v6327
        %v6330 = vadd.f32 %v6328, %v6329
        %v6331 = vtanh.pop %v6330
        %v6332 = vmul.f32 %v6326, %v6331
        %s6333 = sadd.s32 %s265, 15
        %v6334 = vstv %s6333
        %vm6335 = vcmp.lt.s32.totalorder %v6334, %v264
        %v6336 = vsel %vm6335, 1, 0
        %6337 = vset.pattern.permute.xlu0 0
        %6338 = vperm.xlu0 %6337, %v6336
        %v6339 = vpop.permute.xlu0 %6338
        %vm6340 = vcmp.eq.s32.totalorder %v6339, 1
        %v6341 = vsel %vm6340, %v6332, 0.0
        %v6343 = vcombine.high %v6341, %v6341
        %v6345 = vunpack.c.l.s4 1966171168
        %v6346 = vunpack.c.0.s8 %v6345
        %v6347 = vlaneseq
        %v6348 = vshrl.u32 %v6347, 7
        %v6349 = vsub.s32 %v6346, %v6348
        %v6350 = vrot.slane %v6341, %v6349
        %v6352 = vunpack.c.l.s4 1966171168
        %v6353 = vunpack.c.0.s8 %v6352
        %v6354 = vlaneseq
        %v6355 = vshrl.u32 %v6354, 7
        %v6356 = vsub.s32 %v6353, %v6355
        %v6357 = vrot.slane %v6343, %v6356
        %v6358 = vcombine.high %v6350, %v6350
        %v6359 = vcombine.high %v6357, %v6357
        %v6361 = vunpack.c.l.s4 1966171168
        %v6362 = vunpack.c.0.s8 %v6361
        %v6363 = vlaneseq
        %v6364 = vshrl.u32 %v6363, 7
        %v6365 = vsub.s32 %v6362, %v6364
        %v6366 = vrot.slane %v6350, %v6365
        %v6368 = vunpack.c.l.s4 1966171168
        %v6369 = vunpack.c.0.s8 %v6368
        %v6370 = vlaneseq
        %v6371 = vshrl.u32 %v6370, 7
        %v6372 = vsub.s32 %v6369, %v6371
        %v6373 = vrot.slane %v6357, %v6372
        %v6375 = vunpack.c.l.s4 1966171168
        %v6376 = vunpack.c.0.s8 %v6375
        %v6377 = vlaneseq
        %v6378 = vshrl.u32 %v6377, 7
        %v6379 = vsub.s32 %v6376, %v6378
        %v6380 = vrot.slane %v6358, %v6379
        %v6382 = vunpack.c.l.s4 1966171168
        %v6383 = vunpack.c.0.s8 %v6382
        %v6384 = vlaneseq
        %v6385 = vshrl.u32 %v6384, 7
        %v6386 = vsub.s32 %v6383, %v6385
        %v6387 = vrot.slane %v6359, %v6386
        %v6388 = vcombine.high %v6366, %v6366
        %v6389 = vcombine.high %v6373, %v6373
        %v6390 = vcombine.high %v6380, %v6380
        %v6391 = vcombine.high %v6387, %v6387
        %6400 = vst [vmem:[%s250 + $0xf] sm:$0x1] %v6366
        %6401 = vst [vmem:[%s250 + $0x1f] sm:$0x1] %v6380
        %6402 = vst [vmem:[%s250 + $0x2f] sm:$0x1] %v6388
        %6403 = vst [vmem:[%s250 + $0x3f] sm:$0x1] %v6390
        %6404 = vst [vmem:[%s250 + $0x4f] sm:$0x1] %v6373
        %6405 = vst [vmem:[%s250 + $0x5f] sm:$0x1] %v6387
        %6406 = vst [vmem:[%s250 + $0x6f] sm:$0x1] %v6389
        %6407 = vst [vmem:[%s250 + $0x7f] sm:$0x1] %v6391
        %v6408 = vsel %vm6340, %v6332, %v6024
        %v6409 = vsel %vm6340, %v6330, %v6025
        %6410 = vst [vmem:[#allocation2] sm:$0xff] %v6408
        %6411 = vst [vmem:[#allocation3] sm:$0xff] %v6409
        %p6412 = scmp.eq.s32.totalorder %s25, 1
        // Predicated region
        $region45: #{tpu_custom_call.1} parent=31 // pred_check
          %p6413 = pneg %p6412
        $region46: #{tpu_custom_call.1} parent=31 // pred_check_branch
          %6415 = sbr.rel (%p6413) target = $region48
        $region47: #{tpu_custom_call.1} parent=31 // pred_region
          %6416 = vst [vmem:[#allocation10] sm:$0xff] %v6408
          %6417 = vst [vmem:[#allocation12] sm:$0xff] %v6409
        $region48: #{tpu_custom_call.1} parent=31 // pred_fallthru
          _
        %s6418 = sand.u32 %s101, 1
        %s6419 = scalar_lea.sflag [#allocation6], %s6418
        %s6420 = sand.u32 %s101, 1
        %s6421 = smul.addr %s6420, 128
        %s6422 = scalar_lea.vmem [#allocation9], %s6421
        // Predicated region
        $region49: #{tpu_custom_call.1} parent=31 // pred_check
          %p6423 = pneg %p111
        $region50: #{tpu_custom_call.1} parent=31 // pred_check_branch
          %6425 = sbr.rel (%p6423) target = $region52
        $region51: #{tpu_custom_call.1} parent=31 // pred_region
          #allocation14 [shape = 'u32[6]{0}', space=smem, size = 0x18, scoped, tag = 'DMA stride descriptor']
          %s6426 = smul.u32 2, %s25
          %s6428 = ssub.s32 2048, 2048
          %6429 = vsyncadd %s6419, %s6428
          %s6430 = smul.addr %s6426, 128
          %s6431 = scalar_lea.hbm %s3, %s6430
          %s6433 = sshll.u32 1, 14
          %s6434 = sxor.u32 4294967295, %s6433
          %s6437 = sshll.u32 7, 18
          %s6438 = sxor.u32 4294967295, %s6437
          %s6439 = sand.u32 0, %s6438
          %s6441 = sor.u32 %s6439, 0
          %s6442 = sshll.u32 %s6422, 4
          %s6443 = int_to_ptr.vmem [resolvable:$true] %s6442
          %6449 = sst [smem:[#allocation14]] 256
          %s6450 = scalar_lea.smem [#allocation14], 1
          %6451 = sst [smem:[%s6450]] 512
          %s6452 = scalar_lea.smem [#allocation14], 2
          %6453 = sst [smem:[%s6452]] 2
          %s6454 = scalar_lea.smem [#allocation14], 3
          %6455 = sst [smem:[%s6454]] 128
          %s6456 = scalar_lea.smem [#allocation14], 4
          %6457 = sst [smem:[%s6456]] 128
          %s6458 = scalar_lea.smem [#allocation14], 5
          %6459 = sst [smem:[%s6458]] 8
          %6461 = dma.general %s6443, 2048, %s6431, %s6419, 131072, [#allocation14], %s6441, 0
        $region52: #{tpu_custom_call.1} parent=31 // pred_fallthru
          _
        // Predicated region
        $region53: #{tpu_custom_call.1} parent=31 // pred_check
          %p6462 = pneg %p132
        $region54: #{tpu_custom_call.1} parent=31 // pred_check_branch
          %6464 = sbr.rel (%p6462) target = $region56
        $region55: #{tpu_custom_call.1} parent=31 // pred_region
          %s6466 = ssub.s32 128, 128
          %6467 = vsyncadd [#allocation11], %s6466
          %s6469 = sshll.u32 [#allocation10], 4
          %s6470 = int_to_ptr.vmem [resolvable:$true] %s6469
          %6472 = dma.vmem_to_hbm [thread:$0]  %s6470, 128, %s4, [#allocation11]
        $region56: #{tpu_custom_call.1} parent=31 // pred_fallthru
          _
        // Predicated region
        $region57: #{tpu_custom_call.1} parent=31 // pred_check
          %p6473 = pneg %p153
        $region58: #{tpu_custom_call.1} parent=31 // pred_check_branch
          %6475 = sbr.rel (%p6473) target = $region60
        $region59: #{tpu_custom_call.1} parent=31 // pred_region
          %s6477 = ssub.s32 128, 128
          %6478 = vsyncadd [#allocation11], %s6477
          %s6480 = sshll.u32 [#allocation12], 4
          %s6481 = int_to_ptr.vmem [resolvable:$true] %s6480
          %6483 = dma.vmem_to_hbm [thread:$0]  %s6481, 128, %s5, [#allocation11]
        $region60: #{tpu_custom_call.1} parent=31 // pred_fallthru
          _
        // Predicated region
        $region61: #{tpu_custom_call.1} parent=31 // pred_check
          %p6484 = pneg %p132
        $region62: #{tpu_custom_call.1} parent=31 // pred_check_branch
          %6486 = sbr.rel (%p6484) target = $region64
        $region63: #{tpu_custom_call.1} parent=31 // pred_region
          %6487 = dma.done [#allocation11], 128
        $region64: #{tpu_custom_call.1} parent=31 // pred_fallthru
          _
        // Predicated region
        $region65: #{tpu_custom_call.1} parent=31 // pred_check
          %p6488 = pneg %p153
        $region66: #{tpu_custom_call.1} parent=31 // pred_check_branch
          %6490 = sbr.rel (%p6488) target = $region68
        $region67: #{tpu_custom_call.1} parent=31 // pred_region
          %6491 = dma.done [#allocation11], 128
        $region68: #{tpu_custom_call.1} parent=31 // pred_fallthru
          _
      $region32: #{tpu_custom_call.1} parent=5 // pred_fallthru
        _
      %p6492 = scmp.le.s32.totalorder 2, %s20
      // Predicated region
      $region69: #{tpu_custom_call.1} parent=5 // pred_check
        %p6493 = pneg %p6492
      $region70: #{tpu_custom_call.1} parent=5 // pred_check_branch
        %6495 = sbr.rel (%p6493) target = $region72
      $region71: #{tpu_custom_call.1} parent=5 // pred_region
        %s6496 = ssub.s32 %s20, 2
        // Predicated region
        $region73: #{tpu_custom_call.1} parent=71 // pred_check
          %p6497 = pneg %p117
        $region74: #{tpu_custom_call.1} parent=71 // pred_check_branch
          %6499 = sbr.rel (%p6497) target = $region76
        $region75: #{tpu_custom_call.1} parent=71 // pred_region
          %s6500 = sand.u32 %s102, 1
          %s6501 = scalar_lea.sflag [#allocation6], %s6500
          %s6502 = sand.u32 %s102, 1
          %s6503 = smul.addr %s6502, 128
          %s6504 = scalar_lea.vmem [#allocation9], %s6503
          %6505 = dma.done %s6501, 2048
        $region76: #{tpu_custom_call.1} parent=71 // pred_fallthru
          _
      $region72: #{tpu_custom_call.1} parent=5 // pred_fallthru
        _
    $region6: #{tpu_custom_call.1} parent=1 // loop_footer
      %s24 = sadd.s32 1, %s20
    $region7: #{tpu_custom_call.1} parent=1 // loop_footer_branch
      %19 = sbr.rel target = $region3
    $region8: #{tpu_custom_call.1} parent=1 // loop_exit
      _
    %6506 = vsyncpa [#allocation5], 1
    %s6507 = scalar_lea.sflag [#allocation5], 1
    %6508 = vsyncpa %s6507, 1
    %6509 = vsyncpa [#allocation8], 1
    %6510 = vsyncpa [#allocation6], 1
    %s6511 = scalar_lea.sflag [#allocation6], 1
    %6512 = vsyncpa %s6511, 1
    %6513 = vsyncpa [#allocation11], 1

</llo_original>
